<compile_context>
chip_gen: v7x
topology: tpu7x:2x2x1
jax: 0.10.0
libtpu: 0.0.40
codegen_flags: <defaults>
</compile_context>

<pallas_src>
import jax
import jax.numpy as jnp
from jax.experimental import pallas as pl
from jax.experimental.pallas import tpu as pltpu

# Small hyper-parameters consistent with the module's opt fields.
NUM_TOKENS = 64    # num_tokens
CHAR_DIM = 16      # opt.char_dim
LATENT_DIM = 32    # opt.latent_dim
MXLEN = 8          # opt.mxlen == time_steps; opt.chinese=True => steps == time_steps
BATCH = 4
SOS_ID = 1         # unused by forward()
VOCAB_PAD = 128    # output projection padded to one full 128-lane tile


def seq2seq_attention_kernel(
    # data
    x_ref, tgt_ref,                          # embedded inputs / targets, (T*B, C)
    # encoder lstm1 input path (dense folded into lstm1 W_ih)
    wxg1_ref, bxg1_ref,
    # lstm1 / lstm2 recurrent weights (lstm2 fused over cat([h1, h2]))
    whh1_ref, b1g_ref, whh2_ref, b2g_ref,
    # folded attention score weights (attn_layer1 @ attn_layer2)
    wesc_ref, whsc_ref, bsc_ref,
    # folded combine -> lstm2 input-gate path (context half / target half)
    wencg2_ref, wtgtg2_ref, btgtg2_ref,
    # output projection (lane-padded to 128)
    wo_ref, bo_ref,
    # constant 0/1 selection matrices (torch raw .view()+bmm + softmax groups)
    mflat_ref, gsum_ref, tile_ref,
    # outputs
    out_ref, h1_ref, c1_ref, h2_ref, c2_ref,
    # scratch
    enc_ref, hdec_ref,
):
    TB, L = enc_ref.shape
    B = mflat_ref.shape[0]
    T = TB // B

    def mm(a, b):
        # bf16 MXU operands, f32 accumulation (weights arrive pre-cast to bf16).
        return jnp.dot(a.astype(jnp.bfloat16), b.astype(jnp.bfloat16),
                       preferred_element_type=jnp.float32)

    def lstm_cell(gates, c):
        # PyTorch gate order: i, f, g, o.  Elementwise/EUP math stays in f32.
        i = jax.nn.sigmoid(gates[:, 0 * L:1 * L])
        f = jax.nn.sigmoid(gates[:, 1 * L:2 * L])
        g = jnp.tanh(gates[:, 2 * L:3 * L])
        o = jax.nn.sigmoid(gates[:, 3 * L:4 * L])
        c_new = f * c + i * g
        return o * jnp.tanh(c_new), c_new

    # Load weights once.
    whh1 = whh1_ref[...]; b1g = b1g_ref[...]
    whh2 = whh2_ref[...]; b2g = b2g_ref[...]
    whsc = whsc_ref[...]
    mflat = mflat_ref[...]; gsum = gsum_ref[...]; tile = tile_ref[...]

    # Hoisted input-to-hidden projections: one batched matmul for all T steps.
    enc_g1 = mm(x_ref[...], wxg1_ref[...]) + bxg1_ref[...]          # (TB, 4L)
    dec_g2 = mm(tgt_ref[...], wtgtg2_ref[...]) + btgtg2_ref[...]    # (TB, 4L)

    zeros = jnp.zeros((B, L), jnp.float32)
    h1, c1, h2, c2 = zeros, zeros, zeros, zeros

    # ------------------------------ encoder ------------------------------
    for t in range(T):
        gates1 = enc_g1[t * B:(t + 1) * B, :] + mm(h1, whh1)
        h1, c1 = lstm_cell(gates1, c1)
        # lstm2 input = cat([zeros, h1]); zero half folded away, recurrent
        # + input-to-hidden matmuls fused over cat([h1, h2]).
        gates2 = mm(jnp.concatenate([h1, h2], axis=-1), whh2) + b2g
        h2, c2 = lstm_cell(gates2, c2)
        enc_ref[t * B:(t + 1) * B, :] = h2

    # --------------------- attention precompute (hoisted) ----------------
    enc_all = enc_ref[...]                                   # (TB, L)
    # Encoder part of the folded attn_layer1->attn_layer2 scores, computed once.
    score_e = mm(enc_all, wesc_ref[...]) + bsc_ref[...]      # (TB, 1)
    score_e = score_e - jnp.max(score_e)                     # hoisted softmax shift
    # Encoder part of the folded combine->lstm2 input-gate contribution.
    enc_g2 = mm(enc_all, wencg2_ref[...])                    # (TB, 4L)

    # ------------------------------ decoder ------------------------------
    for t in range(T):
        # lstm1 step with all-zero input.
        gates1 = mm(h1, whh1) + b1g
        h1, c1 = lstm_cell(gates1, c1)

        # Folded attention: scores, per-time-step softmax over the batch dim
        # (torch dim=1), and the raw .view()+bmm context, all via constant
        # selection matrices -> 4 tiny matmuls, one exp, one approx reciprocal.
        h_sc = mm(h2, whsc)                                  # (B, 1)
        e = jnp.exp(score_e + mm(tile, h_sc))                # (TB, 1)
        p = e * pl.reciprocal(mm(gsum, e), approx=True)      # softmax probs
        ctx_g = mm(mflat, p * enc_g2)                        # (B, 4L)

        # lstm2 gates: hoisted target/combine part + context part + fused
        # recurrent part over cat([h1, h2]) (all biases folded into dec_g2).
        gates2 = (dec_g2[t * B:(t + 1) * B, :] + ctx_g
                  + mm(jnp.concatenate([h1, h2], axis=-1), whh2))
        h2, c2 = lstm_cell(gates2, c2)
        hdec_ref[t * B:(t + 1) * B, :] = h2

    # Deferred output projection: one matmul + one lane-dense (128-wide) store.
    out_ref[...] = mm(hdec_ref[...], wo_ref[...]) + bo_ref[...]
    h1_ref[...] = h1
    c1_ref[...] = c1
    h2_ref[...] = h2
    c2_ref[...] = c2


def init_params(key):
    L, C, V = LATENT_DIM, CHAR_DIM, NUM_TOKENS
    ks = iter(jax.random.split(key, 24))

    def uni(k, shape, fan_in):
        bnd = float(fan_in) ** -0.5
        return jax.random.uniform(k, shape, jnp.float32, -bnd, bnd)

    p = {}
    p["embedding"] = jax.random.normal(next(ks), (V, C), jnp.float32)
    p["dense_w"] = uni(next(ks), (L, C), C)
    p["dense_b"] = uni(next(ks), (L,), C)
    p["lstm1_wih"] = uni(next(ks), (4 * L, L), L)
    p["lstm1_whh"] = uni(next(ks), (4 * L, L), L)
    p["lstm1_bih"] = uni(next(ks), (4 * L,), L)
    p["lstm1_bhh"] = uni(next(ks), (4 * L,), L)
    p["lstm2_wih"] = uni(next(ks), (4 * L, 2 * L), L)
    p["lstm2_whh"] = uni(next(ks), (4 * L, L), L)
    p["lstm2_bih"] = uni(next(ks), (4 * L,), L)
    p["lstm2_bhh"] = uni(next(ks), (4 * L,), L)
    p["attn1_w"] = uni(next(ks), (32, 2 * L), 2 * L)
    p["attn1_b"] = uni(next(ks), (32,), 2 * L)
    p["attn2_w"] = uni(next(ks), (1, 32), 32)
    p["attn2_b"] = uni(next(ks), (1,), 32)
    p["combine_w"] = uni(next(ks), (L, 2 * L), 2 * L)
    p["combine_b"] = uni(next(ks), (L,), 2 * L)
    p["out_w"] = uni(next(ks), (V, L), L)
    p["out_b"] = uni(next(ks), (V,), L)
    return p


def new_seq2seq_attention_forward(params, inputs, targets):
    T, B = inputs.shape
    C, L, V = CHAR_DIM, LATENT_DIM, NUM_TOKENS
    VP = VOCAB_PAD
    f32, bf16 = jnp.float32, jnp.bfloat16

    # Embedding gather = glue in plain JAX; everything else runs in the kernel.
    # TODO(synk): nn.Embedding lookup stays outside the kernel (data-dependent gather).
    x_emb = jnp.take(params["embedding"], inputs, axis=0).astype(f32).reshape(T * B, C)
    tgt_emb = jnp.take(params["embedding"], targets, axis=0).astype(f32).reshape(T * B, C)

    # Weight folds are done once, at full precision, in a *scoped* context
    # (replaces the previous global jax_default_matmul_precision mutation).
    with jax.default_matmul_precision("highest"):
        wd = params["dense_w"].T                 # (C, L)
        bd = params["dense_b"][None, :]
        wih1 = params["lstm1_wih"].T             # (L, 4L)
        whh1 = params["lstm1_whh"].T             # (L, 4L)
        b1g = (params["lstm1_bih"] + params["lstm1_bhh"])[None, :]
        wih2 = params["lstm2_wih"]               # (4L, 2L)
        wih2_att = wih2[:, :L].T                 # (L, 4L): attention_embedded half
        wih2_h1 = wih2[:, L:].T                  # (L, 4L): outputs1 (h1) half
        whh2 = params["lstm2_whh"].T             # (L, 4L)
        b2g = (params["lstm2_bih"] + params["lstm2_bhh"])[None, :]
        w1e = params["attn1_w"][:, :L].T         # (L, 32) encoder half of attn1
        w1h = params["attn1_w"][:, L:].T         # (L, 32) hidden half of attn1
        b1a = params["attn1_b"][None, :]
        w2a = params["attn2_w"].T                # (32, 1)
        b2a = params["attn2_b"][None, :]
        wcd = params["combine_w"][:, :L].T       # (L, L) decoder-input half
        wcc = params["combine_w"][:, L:].T       # (L, L) context half
        bc = params["combine_b"][None, :]
        wo = params["out_w"].T                   # (L, V)
        bo = params["out_b"][None, :]

        # ---- algebraic folds (purely linear chains, done once on weights) ----
        w_x_g1 = wd @ wih1                       # dense -> lstm1 W_ih
        b_x_g1 = bd @ wih1 + b1g
        w_hh2 = jnp.concatenate([wih2_h1, whh2], axis=0)   # (2L, 4L), acts on cat([h1,h2])
        w_enc_sc = w1e @ w2a                     # attn1 -> attn2 fold (encoder part)
        w_h_sc = w1h @ w2a                       # attn1 -> attn2 fold (hidden part)
        b_sc = b1a @ w2a + b2a                   # (1, 1)
        w_enc_g2 = wcc @ wih2_att                # context -> combine -> lstm2 W_ih
        w_tgt_g2 = wd @ wcd @ wih2_att           # target -> dense -> combine -> lstm2 W_ih
        b_tgt_g2 = (bd @ wcd + bc) @ wih2_att + b2g
        # Output projection padded to a full 128-lane tile for a dense store.
        wo_p = jnp.zeros((L, VP), f32).at[:, :V].set(wo)
        bo_p = jnp.zeros((1, VP), f32).at[:, :V].set(bo)

    # Constant 0/1 selection matrices, flat index f = s * B + b:
    #   m_flat: torch's raw .view()+bmm of softmaxed weights with encoder outputs
    #   gsum:   per-time-step softmax groups (softmax over the batch dim, dim=1)
    #   tile:   replication of the hidden score over encoder steps
    f = jnp.arange(T * B)
    m_flat = (f[None, :] // T == jnp.arange(B)[:, None]).astype(f32)   # (B, T*B)
    gsum = (f[:, None] // B == f[None, :] // B).astype(f32)            # (T*B, T*B)
    tile = (f[:, None] % B == jnp.arange(B)[None, :]).astype(f32)      # (T*B, B)

    cast = lambda w: w.astype(bf16)              # MXU operands in bf16
    args = (
        x_emb, tgt_emb,
        cast(w_x_g1), b_x_g1,
        cast(whh1), b1g, cast(w_hh2), b2g,
        cast(w_enc_sc), cast(w_h_sc), b_sc,
        cast(w_enc_g2), cast(w_tgt_g2), b_tgt_g2,
        cast(wo_p), bo_p,
        cast(m_flat), cast(gsum), cast(tile),
    )
    out_shapes = (
        jax.ShapeDtypeStruct((T * B, VP), f32),
        jax.ShapeDtypeStruct((B, L), f32),
        jax.ShapeDtypeStruct((B, L), f32),
        jax.ShapeDtypeStruct((B, L), f32),
        jax.ShapeDtypeStruct((B, L), f32),
    )
    vmem = pl.BlockSpec(memory_space=pltpu.MemorySpace.VMEM)
    out_flat, h1, c1, h2, c2 = pl.pallas_call(
        seq2seq_attention_kernel,
        out_shape=out_shapes,
        in_specs=[vmem] * len(args),
        out_specs=tuple([vmem] * len(out_shapes)),
        scratch_shapes=[pltpu.VMEM((T * B, L), f32),    # encoder h2 sequence
                        pltpu.VMEM((T * B, L), f32)],   # decoder h2 sequence
    )(*args)
    dec_out = out_flat[:, :V].reshape(T, B, V)
    # hidden tuples in torch format: (num_layers=1, B, L)
    return dec_out, (h1[None], c1[None]), (h2[None], c2[None])


def reference_forward(params, inputs, targets):
    """Pure-JAX mirror of the torch forward (incl. raw .view + bmm semantics)."""
    T, B = inputs.shape
    L = LATENT_DIM

    def dense(x):
        return x @ params["dense_w"].T + params["dense_b"]

    def lstm_step(x, h, c, pre):
        gates = (x @ params[pre + "_wih"].T + params[pre + "_bih"]
                 + h @ params[pre + "_whh"].T + params[pre + "_bhh"])
        i = jax.nn.sigmoid(gates[:, :L]); f = jax.nn.sigmoid(gates[:, L:2 * L])
        g = jnp.tanh(gates[:, 2 * L:3 * L]); o = jax.nn.sigmoid(gates[:, 3 * L:])
        c = f * c + i * g
        h = o * jnp.tanh(c)
        return h, c

    emb_in = dense(jnp.take(params["embedding"], inputs, axis=0))
    emb_tg = dense(jnp.take(params["embedding"], targets, axis=0))

    z = jnp.zeros((B, L), jnp.float32)
    h1, c1, h2, c2 = z, z, z, z
    enc = []
    for t in range(T):
        h1, c1 = lstm_step(emb_in[t], h1, c1, "lstm1")
        x2 = jnp.concatenate([jnp.zeros((B, L), jnp.float32), h1], axis=-1)
        h2, c2 = lstm_step(x2, h2, c2, "lstm2")
        enc.append(h2)
    enc = jnp.stack(enc)                                     # (T, B, L)

    outs = []
    for t in range(T):
        h1, c1 = lstm_step(jnp.zeros((B, L), jnp.float32), h1, c1, "lstm1")
        hidden_state = jnp.broadcast_to(h2[None], (T, B, L))
        aw = jnp.concatenate([enc, hidden_state], 2) @ params["attn1_w"].T + params["attn1_b"]
        aw = aw @ params["attn2_w"].T + params["attn2_b"]    # (T, B, 1)
        aw = jax.nn.softmax(aw, axis=1)
        weights = aw.reshape(B, -1, T)                       # raw view, as in torch
        outputs_v = enc.reshape(B, T, -1)
        ctx = jnp.einsum("bit,btl->bil", weights, outputs_v).reshape(1, B, -1)[0]
        att = jnp.concatenate([emb_tg[t], ctx], 1) @ params["combine_w"].T + params["combine_b"]
        x2 = jnp.concatenate([att, h1], axis=-1)
        h2, c2 = lstm_step(x2, h2, c2, "lstm2")
        outs.append(h2 @ params["out_w"].T + params["out_b"])
    return jnp.stack(outs), (h1[None], c1[None]), (h2[None], c2[None])


if __name__ == "__main__":
    key = jax.random.PRNGKey(0)
    k_p, k_i, k_t = jax.random.split(key, 3)
    params = init_params(k_p)
    inputs = jax.random.randint(k_i, (MXLEN, BATCH), 0, NUM_TOKENS, dtype=jnp.int32)
    targets = jax.random.randint(k_t, (MXLEN, BATCH), 0, NUM_TOKENS, dtype=jnp.int32)

    dec_out, hid1, hid2 = new_seq2seq_attention_forward(params, inputs, targets)
    jax.block_until_ready(dec_out)

    with jax.default_matmul_precision("highest"):
        ref_out, ref_h1, ref_h2 = reference_forward(params, inputs, targets)
    jax.block_until_ready(ref_out)

    # bf16 MXU operands + algebraic weight refolding over 16 recurrent steps
    # => slightly looser tolerance than the pure-f32 variant needed.
    for a, b in zip((dec_out, *hid1, *hid2), (ref_out, *ref_h1, *ref_h2)):
        assert a.shape == b.shape, (a.shape, b.shape)
        assert jnp.allclose(a, b, rtol=3e-2, atol=3e-2), float(jnp.max(jnp.abs(a - b)))

    print("KERNEL_OK")
</pallas_src>

<mosaic_0001>
module attributes {stable_mosaic.version = 11 : i64} {
  func.func @seq2seq_attention_kernel(%arg0: memref<32x16xf32, #tpu.memory_space<vmem>>, %arg1: memref<32x16xf32, #tpu.memory_space<vmem>>, %arg2: memref<16x128xbf16, #tpu.memory_space<vmem>>, %arg3: memref<1x128xf32, #tpu.memory_space<vmem>>, %arg4: memref<32x128xbf16, #tpu.memory_space<vmem>>, %arg5: memref<1x128xf32, #tpu.memory_space<vmem>>, %arg6: memref<64x128xbf16, #tpu.memory_space<vmem>>, %arg7: memref<1x128xf32, #tpu.memory_space<vmem>>, %arg8: memref<32x1xbf16, #tpu.memory_space<vmem>>, %arg9: memref<32x1xbf16, #tpu.memory_space<vmem>>, %arg10: memref<1x1xf32, #tpu.memory_space<vmem>>, %arg11: memref<32x128xbf16, #tpu.memory_space<vmem>>, %arg12: memref<16x128xbf16, #tpu.memory_space<vmem>>, %arg13: memref<1x128xf32, #tpu.memory_space<vmem>>, %arg14: memref<32x128xbf16, #tpu.memory_space<vmem>>, %arg15: memref<1x128xf32, #tpu.memory_space<vmem>>, %arg16: memref<4x32xbf16, #tpu.memory_space<vmem>>, %arg17: memref<32x32xbf16, #tpu.memory_space<vmem>>, %arg18: memref<32x4xbf16, #tpu.memory_space<vmem>>, %arg19: memref<32x128xf32, #tpu.memory_space<vmem>>, %arg20: memref<4x32xf32, #tpu.memory_space<vmem>>, %arg21: memref<4x32xf32, #tpu.memory_space<vmem>>, %arg22: memref<4x32xf32, #tpu.memory_space<vmem>>, %arg23: memref<4x32xf32, #tpu.memory_space<vmem>>, %arg24: memref<32x32xf32, #tpu.memory_space<vmem>>, %arg25: memref<32x32xf32, #tpu.memory_space<vmem>>) attributes {dimension_semantics = [], scalar_prefetch = 0 : i64, scratch_operands = 2 : i64, tpu.core_type = #tpu.core_type<tc>} {
    %c0 = arith.constant 0 : index
    %c0_0 = arith.constant 0 : index
    %0 = vector.load %arg4[%c0, %c0_0] : memref<32x128xbf16, #tpu.memory_space<vmem>>, vector<32x128xbf16>
    %c0_1 = arith.constant 0 : index
    %c0_2 = arith.constant 0 : index
    %1 = vector.load %arg5[%c0_1, %c0_2] : memref<1x128xf32, #tpu.memory_space<vmem>>, vector<1x128xf32>
    %c0_3 = arith.constant 0 : index
    %c0_4 = arith.constant 0 : index
    %2 = vector.load %arg6[%c0_3, %c0_4] : memref<64x128xbf16, #tpu.memory_space<vmem>>, vector<64x128xbf16>
    %c0_5 = arith.constant 0 : index
    %c0_6 = arith.constant 0 : index
    %3 = vector.load %arg7[%c0_5, %c0_6] : memref<1x128xf32, #tpu.memory_space<vmem>>, vector<1x128xf32>
    %c0_7 = arith.constant 0 : index
    %c0_8 = arith.constant 0 : index
    %4 = vector.load %arg9[%c0_7, %c0_8] : memref<32x1xbf16, #tpu.memory_space<vmem>>, vector<32x1xbf16>
    %c0_9 = arith.constant 0 : index
    %c0_10 = arith.constant 0 : index
    %5 = vector.load %arg16[%c0_9, %c0_10] : memref<4x32xbf16, #tpu.memory_space<vmem>>, vector<4x32xbf16>
    %c0_11 = arith.constant 0 : index
    %c0_12 = arith.constant 0 : index
    %6 = vector.load %arg17[%c0_11, %c0_12] : memref<32x32xbf16, #tpu.memory_space<vmem>>, vector<32x32xbf16>
    %c0_13 = arith.constant 0 : index
    %c0_14 = arith.constant 0 : index
    %7 = vector.load %arg18[%c0_13, %c0_14] : memref<32x4xbf16, #tpu.memory_space<vmem>>, vector<32x4xbf16>
    %c0_15 = arith.constant 0 : index
    %c0_16 = arith.constant 0 : index
    %8 = vector.load %arg0[%c0_15, %c0_16] : memref<32x16xf32, #tpu.memory_space<vmem>>, vector<32x16xf32>
    %c0_17 = arith.constant 0 : index
    %c0_18 = arith.constant 0 : index
    %9 = vector.load %arg2[%c0_17, %c0_18] : memref<16x128xbf16, #tpu.memory_space<vmem>>, vector<16x128xbf16>
    %10 = arith.truncf %8 : vector<32x16xf32> to vector<32x16xbf16>
    %cst = arith.constant dense<0.000000e+00> : vector<32x128xf32>
    %11 = tpu.matmul %10, %9, %cst {dimension_numbers = #tpu.dot_dimension_numbers<[1], [0], [0], [1], [0, 0, 1, 1], [], []>} : vector<32x16xbf16>, vector<16x128xbf16>, vector<32x128xf32> -> vector<32x128xf32>
    %c0_19 = arith.constant 0 : index
    %c0_20 = arith.constant 0 : index
    %12 = vector.load %arg3[%c0_19, %c0_20] : memref<1x128xf32, #tpu.memory_space<vmem>>, vector<1x128xf32>
    %13 = vector.broadcast %12 : vector<1x128xf32> to vector<32x128xf32>
    %14 = arith.addf %11, %13 : vector<32x128xf32>
    %c0_21 = arith.constant 0 : index
    %c0_22 = arith.constant 0 : index
    %15 = vector.load %arg1[%c0_21, %c0_22] : memref<32x16xf32, #tpu.memory_space<vmem>>, vector<32x16xf32>
    %c0_23 = arith.constant 0 : index
    %c0_24 = arith.constant 0 : index
    %16 = vector.load %arg12[%c0_23, %c0_24] : memref<16x128xbf16, #tpu.memory_space<vmem>>, vector<16x128xbf16>
    %17 = arith.truncf %15 : vector<32x16xf32> to vector<32x16xbf16>
    %cst_25 = arith.constant dense<0.000000e+00> : vector<32x128xf32>
    %18 = tpu.matmul %17, %16, %cst_25 {dimension_numbers = #tpu.dot_dimension_numbers<[1], [0], [0], [1], [0, 0, 1, 1], [], []>} : vector<32x16xbf16>, vector<16x128xbf16>, vector<32x128xf32> -> vector<32x128xf32>
    %c0_26 = arith.constant 0 : index
    %c0_27 = arith.constant 0 : index
    %19 = vector.load %arg13[%c0_26, %c0_27] : memref<1x128xf32, #tpu.memory_space<vmem>>, vector<1x128xf32>
    %20 = vector.broadcast %19 : vector<1x128xf32> to vector<32x128xf32>
    %21 = arith.addf %18, %20 : vector<32x128xf32>
    %cst_28 = arith.constant 0.000000e+00 : f32
    %22 = vector.broadcast %cst_28 : f32 to vector<4x32xf32>
    %23 = vector.extract_strided_slice %14 {offsets = [0, 0], sizes = [4, 128], strides = [1, 1]} : vector<32x128xf32> to vector<4x128xf32>
    %24 = arith.truncf %22 : vector<4x32xf32> to vector<4x32xbf16>
    %cst_29 = arith.constant dense<0.000000e+00> : vector<4x128xf32>
    %25 = tpu.matmul %24, %0, %cst_29 {dimension_numbers = #tpu.dot_dimension_numbers<[1], [0], [0], [1], [0, 0, 1, 1], [], []>} : vector<4x32xbf16>, vector<32x128xbf16>, vector<4x128xf32> -> vector<4x128xf32>
    %26 = arith.addf %23, %25 : vector<4x128xf32>
    %27 = vector.extract_strided_slice %26 {offsets = [0, 0], sizes = [4, 32], strides = [1, 1]} : vector<4x128xf32> to vector<4x32xf32>
    %28 = arith.negf %27 : vector<4x32xf32>
    %29 = math.exp %28 : vector<4x32xf32>
    %cst_30 = arith.constant 1.000000e+00 : f32
    %30 = vector.broadcast %cst_30 : f32 to vector<4x32xf32>
    %31 = arith.addf %30, %29 : vector<4x32xf32>
    %32 = arith.divf %30, %31 : vector<4x32xf32>
    %33 = vector.extract_strided_slice %26 {offsets = [0, 32], sizes = [4, 32], strides = [1, 1]} : vector<4x128xf32> to vector<4x32xf32>
    %34 = arith.negf %33 : vector<4x32xf32>
    %35 = math.exp %34 : vector<4x32xf32>
    %cst_31 = arith.constant 1.000000e+00 : f32
    %36 = vector.broadcast %cst_31 : f32 to vector<4x32xf32>
    %37 = arith.addf %36, %35 : vector<4x32xf32>
    %38 = arith.divf %36, %37 : vector<4x32xf32>
    %39 = vector.extract_strided_slice %26 {offsets = [0, 64], sizes = [4, 32], strides = [1, 1]} : vector<4x128xf32> to vector<4x32xf32>
    %40 = math.tanh %39 : vector<4x32xf32>
    %41 = vector.extract_strided_slice %26 {offsets = [0, 96], sizes = [4, 32], strides = [1, 1]} : vector<4x128xf32> to vector<4x32xf32>
    %42 = arith.negf %41 : vector<4x32xf32>
    %43 = math.exp %42 : vector<4x32xf32>
    %cst_32 = arith.constant 1.000000e+00 : f32
    %44 = vector.broadcast %cst_32 : f32 to vector<4x32xf32>
    %45 = arith.addf %44, %43 : vector<4x32xf32>
    %46 = arith.divf %44, %45 : vector<4x32xf32>
    %47 = arith.mulf %38, %22 : vector<4x32xf32>
    %48 = arith.mulf %32, %40 : vector<4x32xf32>
    %49 = arith.addf %47, %48 : vector<4x32xf32>
    %50 = math.tanh %49 : vector<4x32xf32>
    %51 = arith.mulf %46, %50 : vector<4x32xf32>
    %52 = tpu.concatenate %51, %22 in 1 : vector<4x32xf32>, vector<4x32xf32> -> vector<4x64xf32>
    %53 = arith.truncf %52 : vector<4x64xf32> to vector<4x64xbf16>
    %cst_33 = arith.constant dense<0.000000e+00> : vector<4x128xf32>
    %54 = tpu.matmul %53, %2, %cst_33 {dimension_numbers = #tpu.dot_dimension_numbers<[1], [0], [0], [1], [0, 0, 1, 1], [], []>} : vector<4x64xbf16>, vector<64x128xbf16>, vector<4x128xf32> -> vector<4x128xf32>
    %55 = vector.broadcast %3 : vector<1x128xf32> to vector<4x128xf32>
    %56 = arith.addf %54, %55 : vector<4x128xf32>
    %57 = vector.extract_strided_slice %56 {offsets = [0, 0], sizes = [4, 32], strides = [1, 1]} : vector<4x128xf32> to vector<4x32xf32>
    %58 = arith.negf %57 : vector<4x32xf32>
    %59 = math.exp %58 : vector<4x32xf32>
    %cst_34 = arith.constant 1.000000e+00 : f32
    %60 = vector.broadcast %cst_34 : f32 to vector<4x32xf32>
    %61 = arith.addf %60, %59 : vector<4x32xf32>
    %62 = arith.divf %60, %61 : vector<4x32xf32>
    %63 = vector.extract_strided_slice %56 {offsets = [0, 32], sizes = [4, 32], strides = [1, 1]} : vector<4x128xf32> to vector<4x32xf32>
    %64 = arith.negf %63 : vector<4x32xf32>
    %65 = math.exp %64 : vector<4x32xf32>
    %cst_35 = arith.constant 1.000000e+00 : f32
    %66 = vector.broadcast %cst_35 : f32 to vector<4x32xf32>
    %67 = arith.addf %66, %65 : vector<4x32xf32>
    %68 = arith.divf %66, %67 : vector<4x32xf32>
    %69 = vector.extract_strided_slice %56 {offsets = [0, 64], sizes = [4, 32], strides = [1, 1]} : vector<4x128xf32> to vector<4x32xf32>
    %70 = math.tanh %69 : vector<4x32xf32>
    %71 = vector.extract_strided_slice %56 {offsets = [0, 96], sizes = [4, 32], strides = [1, 1]} : vector<4x128xf32> to vector<4x32xf32>
    %72 = arith.negf %71 : vector<4x32xf32>
    %73 = math.exp %72 : vector<4x32xf32>
    %cst_36 = arith.constant 1.000000e+00 : f32
    %74 = vector.broadcast %cst_36 : f32 to vector<4x32xf32>
    %75 = arith.addf %74, %73 : vector<4x32xf32>
    %76 = arith.divf %74, %75 : vector<4x32xf32>
    %77 = arith.mulf %68, %22 : vector<4x32xf32>
    %78 = arith.mulf %62, %70 : vector<4x32xf32>
    %79 = arith.addf %77, %78 : vector<4x32xf32>
    %80 = math.tanh %79 : vector<4x32xf32>
    %81 = arith.mulf %76, %80 : vector<4x32xf32>
    %c0_37 = arith.constant 0 : index
    %c0_38 = arith.constant 0 : index
    %82 = vector.load %arg24[%c0_37, %c0_38] : memref<32x32xf32, #tpu.memory_space<vmem>>, vector<4x32xf32>
    tpu.vector_store %arg24[%c0_37, %c0_38], %81 {strides = array<i32>} : memref<32x32xf32, #tpu.memory_space<vmem>>, vector<4x32xf32>,
    %83 = vector.extract_strided_slice %14 {offsets = [4, 0], sizes = [4, 128], strides = [1, 1]} : vector<32x128xf32> to vector<4x128xf32>
    %84 = arith.truncf %51 : vector<4x32xf32> to vector<4x32xbf16>
    %cst_39 = arith.constant dense<0.000000e+00> : vector<4x128xf32>
    %85 = tpu.matmul %84, %0, %cst_39 {dimension_numbers = #tpu.dot_dimension_numbers<[1], [0], [0], [1], [0, 0, 1, 1], [], []>} : vector<4x32xbf16>, vector<32x128xbf16>, vector<4x128xf32> -> vector<4x128xf32>
    %86 = arith.addf %83, %85 : vector<4x128xf32>
    %87 = vector.extract_strided_slice %86 {offsets = [0, 0], sizes = [4, 32], strides = [1, 1]} : vector<4x128xf32> to vector<4x32xf32>
    %88 = arith.negf %87 : vector<4x32xf32>
    %89 = math.exp %88 : vector<4x32xf32>
    %cst_40 = arith.constant 1.000000e+00 : f32
    %90 = vector.broadcast %cst_40 : f32 to vector<4x32xf32>
    %91 = arith.addf %90, %89 : vector<4x32xf32>
    %92 = arith.divf %90, %91 : vector<4x32xf32>
    %93 = vector.extract_strided_slice %86 {offsets = [0, 32], sizes = [4, 32], strides = [1, 1]} : vector<4x128xf32> to vector<4x32xf32>
    %94 = arith.negf %93 : vector<4x32xf32>
    %95 = math.exp %94 : vector<4x32xf32>
    %cst_41 = arith.constant 1.000000e+00 : f32
    %96 = vector.broadcast %cst_41 : f32 to vector<4x32xf32>
    %97 = arith.addf %96, %95 : vector<4x32xf32>
    %98 = arith.divf %96, %97 : vector<4x32xf32>
    %99 = vector.extract_strided_slice %86 {offsets = [0, 64], sizes = [4, 32], strides = [1, 1]} : vector<4x128xf32> to vector<4x32xf32>
    %100 = math.tanh %99 : vector<4x32xf32>
    %101 = vector.extract_strided_slice %86 {offsets = [0, 96], sizes = [4, 32], strides = [1, 1]} : vector<4x128xf32> to vector<4x32xf32>
    %102 = arith.negf %101 : vector<4x32xf32>
    %103 = math.exp %102 : vector<4x32xf32>
    %cst_42 = arith.constant 1.000000e+00 : f32
    %104 = vector.broadcast %cst_42 : f32 to vector<4x32xf32>
    %105 = arith.addf %104, %103 : vector<4x32xf32>
    %106 = arith.divf %104, %105 : vector<4x32xf32>
    %107 = arith.mulf %98, %49 : vector<4x32xf32>
    %108 = arith.mulf %92, %100 : vector<4x32xf32>
    %109 = arith.addf %107, %108 : vector<4x32xf32>
    %110 = math.tanh %109 : vector<4x32xf32>
    %111 = arith.mulf %106, %110 : vector<4x32xf32>
    %112 = tpu.concatenate %111, %81 in 1 : vector<4x32xf32>, vector<4x32xf32> -> vector<4x64xf32>
    %113 = arith.truncf %112 : vector<4x64xf32> to vector<4x64xbf16>
    %cst_43 = arith.constant dense<0.000000e+00> : vector<4x128xf32>
    %114 = tpu.matmul %113, %2, %cst_43 {dimension_numbers = #tpu.dot_dimension_numbers<[1], [0], [0], [1], [0, 0, 1, 1], [], []>} : vector<4x64xbf16>, vector<64x128xbf16>, vector<4x128xf32> -> vector<4x128xf32>
    %115 = vector.broadcast %3 : vector<1x128xf32> to vector<4x128xf32>
    %116 = arith.addf %114, %115 : vector<4x128xf32>
    %117 = vector.extract_strided_slice %116 {offsets = [0, 0], sizes = [4, 32], strides = [1, 1]} : vector<4x128xf32> to vector<4x32xf32>
    %118 = arith.negf %117 : vector<4x32xf32>
    %119 = math.exp %118 : vector<4x32xf32>
    %cst_44 = arith.constant 1.000000e+00 : f32
    %120 = vector.broadcast %cst_44 : f32 to vector<4x32xf32>
    %121 = arith.addf %120, %119 : vector<4x32xf32>
    %122 = arith.divf %120, %121 : vector<4x32xf32>
    %123 = vector.extract_strided_slice %116 {offsets = [0, 32], sizes = [4, 32], strides = [1, 1]} : vector<4x128xf32> to vector<4x32xf32>
    %124 = arith.negf %123 : vector<4x32xf32>
    %125 = math.exp %124 : vector<4x32xf32>
    %cst_45 = arith.constant 1.000000e+00 : f32
    %126 = vector.broadcast %cst_45 : f32 to vector<4x32xf32>
    %127 = arith.addf %126, %125 : vector<4x32xf32>
    %128 = arith.divf %126, %127 : vector<4x32xf32>
    %129 = vector.extract_strided_slice %116 {offsets = [0, 64], sizes = [4, 32], strides = [1, 1]} : vector<4x128xf32> to vector<4x32xf32>
    %130 = math.tanh %129 : vector<4x32xf32>
    %131 = vector.extract_strided_slice %116 {offsets = [0, 96], sizes = [4, 32], strides = [1, 1]} : vector<4x128xf32> to vector<4x32xf32>
    %132 = arith.negf %131 : vector<4x32xf32>
    %133 = math.exp %132 : vector<4x32xf32>
    %cst_46 = arith.constant 1.000000e+00 : f32
    %134 = vector.broadcast %cst_46 : f32 to vector<4x32xf32>
    %135 = arith.addf %134, %133 : vector<4x32xf32>
    %136 = arith.divf %134, %135 : vector<4x32xf32>
    %137 = arith.mulf %128, %79 : vector<4x32xf32>
    %138 = arith.mulf %122, %130 : vector<4x32xf32>
    %139 = arith.addf %137, %138 : vector<4x32xf32>
    %140 = math.tanh %139 : vector<4x32xf32>
    %141 = arith.mulf %136, %140 : vector<4x32xf32>
    %c4 = arith.constant 4 : index
    %c0_47 = arith.constant 0 : index
    %142 = vector.load %arg24[%c4, %c0_47] : memref<32x32xf32, #tpu.memory_space<vmem>>, vector<4x32xf32>
    tpu.vector_store %arg24[%c4, %c0_47], %141 {strides = array<i32>} : memref<32x32xf32, #tpu.memory_space<vmem>>, vector<4x32xf32>,
    %143 = vector.extract_strided_slice %14 {offsets = [8, 0], sizes = [4, 128], strides = [1, 1]} : vector<32x128xf32> to vector<4x128xf32>
    %144 = arith.truncf %111 : vector<4x32xf32> to vector<4x32xbf16>
    %cst_48 = arith.constant dense<0.000000e+00> : vector<4x128xf32>
    %145 = tpu.matmul %144, %0, %cst_48 {dimension_numbers = #tpu.dot_dimension_numbers<[1], [0], [0], [1], [0, 0, 1, 1], [], []>} : vector<4x32xbf16>, vector<32x128xbf16>, vector<4x128xf32> -> vector<4x128xf32>
    %146 = arith.addf %143, %145 : vector<4x128xf32>
    %147 = vector.extract_strided_slice %146 {offsets = [0, 0], sizes = [4, 32], strides = [1, 1]} : vector<4x128xf32> to vector<4x32xf32>
    %148 = arith.negf %147 : vector<4x32xf32>
    %149 = math.exp %148 : vector<4x32xf32>
    %cst_49 = arith.constant 1.000000e+00 : f32
    %150 = vector.broadcast %cst_49 : f32 to vector<4x32xf32>
    %151 = arith.addf %150, %149 : vector<4x32xf32>
    %152 = arith.divf %150, %151 : vector<4x32xf32>
    %153 = vector.extract_strided_slice %146 {offsets = [0, 32], sizes = [4, 32], strides = [1, 1]} : vector<4x128xf32> to vector<4x32xf32>
    %154 = arith.negf %153 : vector<4x32xf32>
    %155 = math.exp %154 : vector<4x32xf32>
    %cst_50 = arith.constant 1.000000e+00 : f32
    %156 = vector.broadcast %cst_50 : f32 to vector<4x32xf32>
    %157 = arith.addf %156, %155 : vector<4x32xf32>
    %158 = arith.divf %156, %157 : vector<4x32xf32>
    %159 = vector.extract_strided_slice %146 {offsets = [0, 64], sizes = [4, 32], strides = [1, 1]} : vector<4x128xf32> to vector<4x32xf32>
    %160 = math.tanh %159 : vector<4x32xf32>
    %161 = vector.extract_strided_slice %146 {offsets = [0, 96], sizes = [4, 32], strides = [1, 1]} : vector<4x128xf32> to vector<4x32xf32>
    %162 = arith.negf %161 : vector<4x32xf32>
    %163 = math.exp %162 : vector<4x32xf32>
    %cst_51 = arith.constant 1.000000e+00 : f32
    %164 = vector.broadcast %cst_51 : f32 to vector<4x32xf32>
    %165 = arith.addf %164, %163 : vector<4x32xf32>
    %166 = arith.divf %164, %165 : vector<4x32xf32>
    %167 = arith.mulf %158, %109 : vector<4x32xf32>
    %168 = arith.mulf %152, %160 : vector<4x32xf32>
    %169 = arith.addf %167, %168 : vector<4x32xf32>
    %170 = math.tanh %169 : vector<4x32xf32>
    %171 = arith.mulf %166, %170 : vector<4x32xf32>
    %172 = tpu.concatenate %171, %141 in 1 : vector<4x32xf32>, vector<4x32xf32> -> vector<4x64xf32>
    %173 = arith.truncf %172 : vector<4x64xf32> to vector<4x64xbf16>
    %cst_52 = arith.constant dense<0.000000e+00> : vector<4x128xf32>
    %174 = tpu.matmul %173, %2, %cst_52 {dimension_numbers = #tpu.dot_dimension_numbers<[1], [0], [0], [1], [0, 0, 1, 1], [], []>} : vector<4x64xbf16>, vector<64x128xbf16>, vector<4x128xf32> -> vector<4x128xf32>
    %175 = vector.broadcast %3 : vector<1x128xf32> to vector<4x128xf32>
    %176 = arith.addf %174, %175 : vector<4x128xf32>
    %177 = vector.extract_strided_slice %176 {offsets = [0, 0], sizes = [4, 32], strides = [1, 1]} : vector<4x128xf32> to vector<4x32xf32>
    %178 = arith.negf %177 : vector<4x32xf32>
    %179 = math.exp %178 : vector<4x32xf32>
    %cst_53 = arith.constant 1.000000e+00 : f32
    %180 = vector.broadcast %cst_53 : f32 to vector<4x32xf32>
    %181 = arith.addf %180, %179 : vector<4x32xf32>
    %182 = arith.divf %180, %181 : vector<4x32xf32>
    %183 = vector.extract_strided_slice %176 {offsets = [0, 32], sizes = [4, 32], strides = [1, 1]} : vector<4x128xf32> to vector<4x32xf32>
    %184 = arith.negf %183 : vector<4x32xf32>
    %185 = math.exp %184 : vector<4x32xf32>
    %cst_54 = arith.constant 1.000000e+00 : f32
    %186 = vector.broadcast %cst_54 : f32 to vector<4x32xf32>
    %187 = arith.addf %186, %185 : vector<4x32xf32>
    %188 = arith.divf %186, %187 : vector<4x32xf32>
    %189 = vector.extract_strided_slice %176 {offsets = [0, 64], sizes = [4, 32], strides = [1, 1]} : vector<4x128xf32> to vector<4x32xf32>
    %190 = math.tanh %189 : vector<4x32xf32>
    %191 = vector.extract_strided_slice %176 {offsets = [0, 96], sizes = [4, 32], strides = [1, 1]} : vector<4x128xf32> to vector<4x32xf32>
    %192 = arith.negf %191 : vector<4x32xf32>
    %193 = math.exp %192 : vector<4x32xf32>
    %cst_55 = arith.constant 1.000000e+00 : f32
    %194 = vector.broadcast %cst_55 : f32 to vector<4x32xf32>
    %195 = arith.addf %194, %193 : vector<4x32xf32>
    %196 = arith.divf %194, %195 : vector<4x32xf32>
    %197 = arith.mulf %188, %139 : vector<4x32xf32>
    %198 = arith.mulf %182, %190 : vector<4x32xf32>
    %199 = arith.addf %197, %198 : vector<4x32xf32>
    %200 = math.tanh %199 : vector<4x32xf32>
    %201 = arith.mulf %196, %200 : vector<4x32xf32>
    %c8 = arith.constant 8 : index
    %c0_56 = arith.constant 0 : index
    %202 = vector.load %arg24[%c8, %c0_56] : memref<32x32xf32, #tpu.memory_space<vmem>>, vector<4x32xf32>
    tpu.vector_store %arg24[%c8, %c0_56], %201 {strides = array<i32>} : memref<32x32xf32, #tpu.memory_space<vmem>>, vector<4x32xf32>,
    %203 = vector.extract_strided_slice %14 {offsets = [12, 0], sizes = [4, 128], strides = [1, 1]} : vector<32x128xf32> to vector<4x128xf32>
    %204 = arith.truncf %171 : vector<4x32xf32> to vector<4x32xbf16>
    %cst_57 = arith.constant dense<0.000000e+00> : vector<4x128xf32>
    %205 = tpu.matmul %204, %0, %cst_57 {dimension_numbers = #tpu.dot_dimension_numbers<[1], [0], [0], [1], [0, 0, 1, 1], [], []>} : vector<4x32xbf16>, vector<32x128xbf16>, vector<4x128xf32> -> vector<4x128xf32>
    %206 = arith.addf %203, %205 : vector<4x128xf32>
    %207 = vector.extract_strided_slice %206 {offsets = [0, 0], sizes = [4, 32], strides = [1, 1]} : vector<4x128xf32> to vector<4x32xf32>
    %208 = arith.negf %207 : vector<4x32xf32>
    %209 = math.exp %208 : vector<4x32xf32>
    %cst_58 = arith.constant 1.000000e+00 : f32
    %210 = vector.broadcast %cst_58 : f32 to vector<4x32xf32>
    %211 = arith.addf %210, %209 : vector<4x32xf32>
    %212 = arith.divf %210, %211 : vector<4x32xf32>
    %213 = vector.extract_strided_slice %206 {offsets = [0, 32], sizes = [4, 32], strides = [1, 1]} : vector<4x128xf32> to vector<4x32xf32>
    %214 = arith.negf %213 : vector<4x32xf32>
    %215 = math.exp %214 : vector<4x32xf32>
    %cst_59 = arith.constant 1.000000e+00 : f32
    %216 = vector.broadcast %cst_59 : f32 to vector<4x32xf32>
    %217 = arith.addf %216, %215 : vector<4x32xf32>
    %218 = arith.divf %216, %217 : vector<4x32xf32>
    %219 = vector.extract_strided_slice %206 {offsets = [0, 64], sizes = [4, 32], strides = [1, 1]} : vector<4x128xf32> to vector<4x32xf32>
    %220 = math.tanh %219 : vector<4x32xf32>
    %221 = vector.extract_strided_slice %206 {offsets = [0, 96], sizes = [4, 32], strides = [1, 1]} : vector<4x128xf32> to vector<4x32xf32>
    %222 = arith.negf %221 : vector<4x32xf32>
    %223 = math.exp %222 : vector<4x32xf32>
    %cst_60 = arith.constant 1.000000e+00 : f32
    %224 = vector.broadcast %cst_60 : f32 to vector<4x32xf32>
    %225 = arith.addf %224, %223 : vector<4x32xf32>
    %226 = arith.divf %224, %225 : vector<4x32xf32>
    %227 = arith.mulf %218, %169 : vector<4x32xf32>
    %228 = arith.mulf %212, %220 : vector<4x32xf32>
    %229 = arith.addf %227, %228 : vector<4x32xf32>
    %230 = math.tanh %229 : vector<4x32xf32>
    %231 = arith.mulf %226, %230 : vector<4x32xf32>
    %232 = tpu.concatenate %231, %201 in 1 : vector<4x32xf32>, vector<4x32xf32> -> vector<4x64xf32>
    %233 = arith.truncf %232 : vector<4x64xf32> to vector<4x64xbf16>
    %cst_61 = arith.constant dense<0.000000e+00> : vector<4x128xf32>
    %234 = tpu.matmul %233, %2, %cst_61 {dimension_numbers = #tpu.dot_dimension_numbers<[1], [0], [0], [1], [0, 0, 1, 1], [], []>} : vector<4x64xbf16>, vector<64x128xbf16>, vector<4x128xf32> -> vector<4x128xf32>
    %235 = vector.broadcast %3 : vector<1x128xf32> to vector<4x128xf32>
    %236 = arith.addf %234, %235 : vector<4x128xf32>
    %237 = vector.extract_strided_slice %236 {offsets = [0, 0], sizes = [4, 32], strides = [1, 1]} : vector<4x128xf32> to vector<4x32xf32>
    %238 = arith.negf %237 : vector<4x32xf32>
    %239 = math.exp %238 : vector<4x32xf32>
    %cst_62 = arith.constant 1.000000e+00 : f32
    %240 = vector.broadcast %cst_62 : f32 to vector<4x32xf32>
    %241 = arith.addf %240, %239 : vector<4x32xf32>
    %242 = arith.divf %240, %241 : vector<4x32xf32>
    %243 = vector.extract_strided_slice %236 {offsets = [0, 32], sizes = [4, 32], strides = [1, 1]} : vector<4x128xf32> to vector<4x32xf32>
    %244 = arith.negf %243 : vector<4x32xf32>
    %245 = math.exp %244 : vector<4x32xf32>
    %cst_63 = arith.constant 1.000000e+00 : f32
    %246 = vector.broadcast %cst_63 : f32 to vector<4x32xf32>
    %247 = arith.addf %246, %245 : vector<4x32xf32>
    %248 = arith.divf %246, %247 : vector<4x32xf32>
    %249 = vector.extract_strided_slice %236 {offsets = [0, 64], sizes = [4, 32], strides = [1, 1]} : vector<4x128xf32> to vector<4x32xf32>
    %250 = math.tanh %249 : vector<4x32xf32>
    %251 = vector.extract_strided_slice %236 {offsets = [0, 96], sizes = [4, 32], strides = [1, 1]} : vector<4x128xf32> to vector<4x32xf32>
    %252 = arith.negf %251 : vector<4x32xf32>
    %253 = math.exp %252 : vector<4x32xf32>
    %cst_64 = arith.constant 1.000000e+00 : f32
    %254 = vector.broadcast %cst_64 : f32 to vector<4x32xf32>
    %255 = arith.addf %254, %253 : vector<4x32xf32>
    %256 = arith.divf %254, %255 : vector<4x32xf32>
    %257 = arith.mulf %248, %199 : vector<4x32xf32>
    %258 = arith.mulf %242, %250 : vector<4x32xf32>
    %259 = arith.addf %257, %258 : vector<4x32xf32>
    %260 = math.tanh %259 : vector<4x32xf32>
    %261 = arith.mulf %256, %260 : vector<4x32xf32>
    %c12 = arith.constant 12 : index
    %c0_65 = arith.constant 0 : index
    %262 = vector.load %arg24[%c12, %c0_65] : memref<32x32xf32, #tpu.memory_space<vmem>>, vector<4x32xf32>
    tpu.vector_store %arg24[%c12, %c0_65], %261 {strides = array<i32>} : memref<32x32xf32, #tpu.memory_space<vmem>>, vector<4x32xf32>,
    %263 = vector.extract_strided_slice %14 {offsets = [16, 0], sizes = [4, 128], strides = [1, 1]} : vector<32x128xf32> to vector<4x128xf32>
    %264 = arith.truncf %231 : vector<4x32xf32> to vector<4x32xbf16>
    %cst_66 = arith.constant dense<0.000000e+00> : vector<4x128xf32>
    %265 = tpu.matmul %264, %0, %cst_66 {dimension_numbers = #tpu.dot_dimension_numbers<[1], [0], [0], [1], [0, 0, 1, 1], [], []>} : vector<4x32xbf16>, vector<32x128xbf16>, vector<4x128xf32> -> vector<4x128xf32>
    %266 = arith.addf %263, %265 : vector<4x128xf32>
    %267 = vector.extract_strided_slice %266 {offsets = [0, 0], sizes = [4, 32], strides = [1, 1]} : vector<4x128xf32> to vector<4x32xf32>
    %268 = arith.negf %267 : vector<4x32xf32>
    %269 = math.exp %268 : vector<4x32xf32>
    %cst_67 = arith.constant 1.000000e+00 : f32
    %270 = vector.broadcast %cst_67 : f32 to vector<4x32xf32>
    %271 = arith.addf %270, %269 : vector<4x32xf32>
    %272 = arith.divf %270, %271 : vector<4x32xf32>
    %273 = vector.extract_strided_slice %266 {offsets = [0, 32], sizes = [4, 32], strides = [1, 1]} : vector<4x128xf32> to vector<4x32xf32>
    %274 = arith.negf %273 : vector<4x32xf32>
    %275 = math.exp %274 : vector<4x32xf32>
    %cst_68 = arith.constant 1.000000e+00 : f32
    %276 = vector.broadcast %cst_68 : f32 to vector<4x32xf32>
    %277 = arith.addf %276, %275 : vector<4x32xf32>
    %278 = arith.divf %276, %277 : vector<4x32xf32>
    %279 = vector.extract_strided_slice %266 {offsets = [0, 64], sizes = [4, 32], strides = [1, 1]} : vector<4x128xf32> to vector<4x32xf32>
    %280 = math.tanh %279 : vector<4x32xf32>
    %281 = vector.extract_strided_slice %266 {offsets = [0, 96], sizes = [4, 32], strides = [1, 1]} : vector<4x128xf32> to vector<4x32xf32>
    %282 = arith.negf %281 : vector<4x32xf32>
    %283 = math.exp %282 : vector<4x32xf32>
    %cst_69 = arith.constant 1.000000e+00 : f32
    %284 = vector.broadcast %cst_69 : f32 to vector<4x32xf32>
    %285 = arith.addf %284, %283 : vector<4x32xf32>
    %286 = arith.divf %284, %285 : vector<4x32xf32>
    %287 = arith.mulf %278, %229 : vector<4x32xf32>
    %288 = arith.mulf %272, %280 : vector<4x32xf32>
    %289 = arith.addf %287, %288 : vector<4x32xf32>
    %290 = math.tanh %289 : vector<4x32xf32>
    %291 = arith.mulf %286, %290 : vector<4x32xf32>
    %292 = tpu.concatenate %291, %261 in 1 : vector<4x32xf32>, vector<4x32xf32> -> vector<4x64xf32>
    %293 = arith.truncf %292 : vector<4x64xf32> to vector<4x64xbf16>
    %cst_70 = arith.constant dense<0.000000e+00> : vector<4x128xf32>
    %294 = tpu.matmul %293, %2, %cst_70 {dimension_numbers = #tpu.dot_dimension_numbers<[1], [0], [0], [1], [0, 0, 1, 1], [], []>} : vector<4x64xbf16>, vector<64x128xbf16>, vector<4x128xf32> -> vector<4x128xf32>
    %295 = vector.broadcast %3 : vector<1x128xf32> to vector<4x128xf32>
    %296 = arith.addf %294, %295 : vector<4x128xf32>
    %297 = vector.extract_strided_slice %296 {offsets = [0, 0], sizes = [4, 32], strides = [1, 1]} : vector<4x128xf32> to vector<4x32xf32>
    %298 = arith.negf %297 : vector<4x32xf32>
    %299 = math.exp %298 : vector<4x32xf32>
    %cst_71 = arith.constant 1.000000e+00 : f32
    %300 = vector.broadcast %cst_71 : f32 to vector<4x32xf32>
    %301 = arith.addf %300, %299 : vector<4x32xf32>
    %302 = arith.divf %300, %301 : vector<4x32xf32>
    %303 = vector.extract_strided_slice %296 {offsets = [0, 32], sizes = [4, 32], strides = [1, 1]} : vector<4x128xf32> to vector<4x32xf32>
    %304 = arith.negf %303 : vector<4x32xf32>
    %305 = math.exp %304 : vector<4x32xf32>
    %cst_72 = arith.constant 1.000000e+00 : f32
    %306 = vector.broadcast %cst_72 : f32 to vector<4x32xf32>
    %307 = arith.addf %306, %305 : vector<4x32xf32>
    %308 = arith.divf %306, %307 : vector<4x32xf32>
    %309 = vector.extract_strided_slice %296 {offsets = [0, 64], sizes = [4, 32], strides = [1, 1]} : vector<4x128xf32> to vector<4x32xf32>
    %310 = math.tanh %309 : vector<4x32xf32>
    %311 = vector.extract_strided_slice %296 {offsets = [0, 96], sizes = [4, 32], strides = [1, 1]} : vector<4x128xf32> to vector<4x32xf32>
    %312 = arith.negf %311 : vector<4x32xf32>
    %313 = math.exp %312 : vector<4x32xf32>
    %cst_73 = arith.constant 1.000000e+00 : f32
    %314 = vector.broadcast %cst_73 : f32 to vector<4x32xf32>
    %315 = arith.addf %314, %313 : vector<4x32xf32>
    %316 = arith.divf %314, %315 : vector<4x32xf32>
    %317 = arith.mulf %308, %259 : vector<4x32xf32>
    %318 = arith.mulf %302, %310 : vector<4x32xf32>
    %319 = arith.addf %317, %318 : vector<4x32xf32>
    %320 = math.tanh %319 : vector<4x32xf32>
    %321 = arith.mulf %316, %320 : vector<4x32xf32>
    %c16 = arith.constant 16 : index
    %c0_74 = arith.constant 0 : index
    %322 = vector.load %arg24[%c16, %c0_74] : memref<32x32xf32, #tpu.memory_space<vmem>>, vector<4x32xf32>
    tpu.vector_store %arg24[%c16, %c0_74], %321 {strides = array<i32>} : memref<32x32xf32, #tpu.memory_space<vmem>>, vector<4x32xf32>,
    %323 = vector.extract_strided_slice %14 {offsets = [20, 0], sizes = [4, 128], strides = [1, 1]} : vector<32x128xf32> to vector<4x128xf32>
    %324 = arith.truncf %291 : vector<4x32xf32> to vector<4x32xbf16>
    %cst_75 = arith.constant dense<0.000000e+00> : vector<4x128xf32>
    %325 = tpu.matmul %324, %0, %cst_75 {dimension_numbers = #tpu.dot_dimension_numbers<[1], [0], [0], [1], [0, 0, 1, 1], [], []>} : vector<4x32xbf16>, vector<32x128xbf16>, vector<4x128xf32> -> vector<4x128xf32>
    %326 = arith.addf %323, %325 : vector<4x128xf32>
    %327 = vector.extract_strided_slice %326 {offsets = [0, 0], sizes = [4, 32], strides = [1, 1]} : vector<4x128xf32> to vector<4x32xf32>
    %328 = arith.negf %327 : vector<4x32xf32>
    %329 = math.exp %328 : vector<4x32xf32>
    %cst_76 = arith.constant 1.000000e+00 : f32
    %330 = vector.broadcast %cst_76 : f32 to vector<4x32xf32>
    %331 = arith.addf %330, %329 : vector<4x32xf32>
    %332 = arith.divf %330, %331 : vector<4x32xf32>
    %333 = vector.extract_strided_slice %326 {offsets = [0, 32], sizes = [4, 32], strides = [1, 1]} : vector<4x128xf32> to vector<4x32xf32>
    %334 = arith.negf %333 : vector<4x32xf32>
    %335 = math.exp %334 : vector<4x32xf32>
    %cst_77 = arith.constant 1.000000e+00 : f32
    %336 = vector.broadcast %cst_77 : f32 to vector<4x32xf32>
    %337 = arith.addf %336, %335 : vector<4x32xf32>
    %338 = arith.divf %336, %337 : vector<4x32xf32>
    %339 = vector.extract_strided_slice %326 {offsets = [0, 64], sizes = [4, 32], strides = [1, 1]} : vector<4x128xf32> to vector<4x32xf32>
    %340 = math.tanh %339 : vector<4x32xf32>
    %341 = vector.extract_strided_slice %326 {offsets = [0, 96], sizes = [4, 32], strides = [1, 1]} : vector<4x128xf32> to vector<4x32xf32>
    %342 = arith.negf %341 : vector<4x32xf32>
    %343 = math.exp %342 : vector<4x32xf32>
    %cst_78 = arith.constant 1.000000e+00 : f32
    %344 = vector.broadcast %cst_78 : f32 to vector<4x32xf32>
    %345 = arith.addf %344, %343 : vector<4x32xf32>
    %346 = arith.divf %344, %345 : vector<4x32xf32>
    %347 = arith.mulf %338, %289 : vector<4x32xf32>
    %348 = arith.mulf %332, %340 : vector<4x32xf32>
    %349 = arith.addf %347, %348 : vector<4x32xf32>
    %350 = math.tanh %349 : vector<4x32xf32>
    %351 = arith.mulf %346, %350 : vector<4x32xf32>
    %352 = tpu.concatenate %351, %321 in 1 : vector<4x32xf32>, vector<4x32xf32> -> vector<4x64xf32>
    %353 = arith.truncf %352 : vector<4x64xf32> to vector<4x64xbf16>
    %cst_79 = arith.constant dense<0.000000e+00> : vector<4x128xf32>
    %354 = tpu.matmul %353, %2, %cst_79 {dimension_numbers = #tpu.dot_dimension_numbers<[1], [0], [0], [1], [0, 0, 1, 1], [], []>} : vector<4x64xbf16>, vector<64x128xbf16>, vector<4x128xf32> -> vector<4x128xf32>
    %355 = vector.broadcast %3 : vector<1x128xf32> to vector<4x128xf32>
    %356 = arith.addf %354, %355 : vector<4x128xf32>
    %357 = vector.extract_strided_slice %356 {offsets = [0, 0], sizes = [4, 32], strides = [1, 1]} : vector<4x128xf32> to vector<4x32xf32>
    %358 = arith.negf %357 : vector<4x32xf32>
    %359 = math.exp %358 : vector<4x32xf32>
    %cst_80 = arith.constant 1.000000e+00 : f32
    %360 = vector.broadcast %cst_80 : f32 to vector<4x32xf32>
    %361 = arith.addf %360, %359 : vector<4x32xf32>
    %362 = arith.divf %360, %361 : vector<4x32xf32>
    %363 = vector.extract_strided_slice %356 {offsets = [0, 32], sizes = [4, 32], strides = [1, 1]} : vector<4x128xf32> to vector<4x32xf32>
    %364 = arith.negf %363 : vector<4x32xf32>
    %365 = math.exp %364 : vector<4x32xf32>
    %cst_81 = arith.constant 1.000000e+00 : f32
    %366 = vector.broadcast %cst_81 : f32 to vector<4x32xf32>
    %367 = arith.addf %366, %365 : vector<4x32xf32>
    %368 = arith.divf %366, %367 : vector<4x32xf32>
    %369 = vector.extract_strided_slice %356 {offsets = [0, 64], sizes = [4, 32], strides = [1, 1]} : vector<4x128xf32> to vector<4x32xf32>
    %370 = math.tanh %369 : vector<4x32xf32>
    %371 = vector.extract_strided_slice %356 {offsets = [0, 96], sizes = [4, 32], strides = [1, 1]} : vector<4x128xf32> to vector<4x32xf32>
    %372 = arith.negf %371 : vector<4x32xf32>
    %373 = math.exp %372 : vector<4x32xf32>
    %cst_82 = arith.constant 1.000000e+00 : f32
    %374 = vector.broadcast %cst_82 : f32 to vector<4x32xf32>
    %375 = arith.addf %374, %373 : vector<4x32xf32>
    %376 = arith.divf %374, %375 : vector<4x32xf32>
    %377 = arith.mulf %368, %319 : vector<4x32xf32>
    %378 = arith.mulf %362, %370 : vector<4x32xf32>
    %379 = arith.addf %377, %378 : vector<4x32xf32>
    %380 = math.tanh %379 : vector<4x32xf32>
    %381 = arith.mulf %376, %380 : vector<4x32xf32>
    %c20 = arith.constant 20 : index
    %c0_83 = arith.constant 0 : index
    %382 = vector.load %arg24[%c20, %c0_83] : memref<32x32xf32, #tpu.memory_space<vmem>>, vector<4x32xf32>
    tpu.vector_store %arg24[%c20, %c0_83], %381 {strides = array<i32>} : memref<32x32xf32, #tpu.memory_space<vmem>>, vector<4x32xf32>,
    %383 = vector.extract_strided_slice %14 {offsets = [24, 0], sizes = [4, 128], strides = [1, 1]} : vector<32x128xf32> to vector<4x128xf32>
    %384 = arith.truncf %351 : vector<4x32xf32> to vector<4x32xbf16>
    %cst_84 = arith.constant dense<0.000000e+00> : vector<4x128xf32>
    %385 = tpu.matmul %384, %0, %cst_84 {dimension_numbers = #tpu.dot_dimension_numbers<[1], [0], [0], [1], [0, 0, 1, 1], [], []>} : vector<4x32xbf16>, vector<32x128xbf16>, vector<4x128xf32> -> vector<4x128xf32>
    %386 = arith.addf %383, %385 : vector<4x128xf32>
    %387 = vector.extract_strided_slice %386 {offsets = [0, 0], sizes = [4, 32], strides = [1, 1]} : vector<4x128xf32> to vector<4x32xf32>
    %388 = arith.negf %387 : vector<4x32xf32>
    %389 = math.exp %388 : vector<4x32xf32>
    %cst_85 = arith.constant 1.000000e+00 : f32
    %390 = vector.broadcast %cst_85 : f32 to vector<4x32xf32>
    %391 = arith.addf %390, %389 : vector<4x32xf32>
    %392 = arith.divf %390, %391 : vector<4x32xf32>
    %393 = vector.extract_strided_slice %386 {offsets = [0, 32], sizes = [4, 32], strides = [1, 1]} : vector<4x128xf32> to vector<4x32xf32>
    %394 = arith.negf %393 : vector<4x32xf32>
    %395 = math.exp %394 : vector<4x32xf32>
    %cst_86 = arith.constant 1.000000e+00 : f32
    %396 = vector.broadcast %cst_86 : f32 to vector<4x32xf32>
    %397 = arith.addf %396, %395 : vector<4x32xf32>
    %398 = arith.divf %396, %397 : vector<4x32xf32>
    %399 = vector.extract_strided_slice %386 {offsets = [0, 64], sizes = [4, 32], strides = [1, 1]} : vector<4x128xf32> to vector<4x32xf32>
    %400 = math.tanh %399 : vector<4x32xf32>
    %401 = vector.extract_strided_slice %386 {offsets = [0, 96], sizes = [4, 32], strides = [1, 1]} : vector<4x128xf32> to vector<4x32xf32>
    %402 = arith.negf %401 : vector<4x32xf32>
    %403 = math.exp %402 : vector<4x32xf32>
    %cst_87 = arith.constant 1.000000e+00 : f32
    %404 = vector.broadcast %cst_87 : f32 to vector<4x32xf32>
    %405 = arith.addf %404, %403 : vector<4x32xf32>
    %406 = arith.divf %404, %405 : vector<4x32xf32>
    %407 = arith.mulf %398, %349 : vector<4x32xf32>
    %408 = arith.mulf %392, %400 : vector<4x32xf32>
    %409 = arith.addf %407, %408 : vector<4x32xf32>
    %410 = math.tanh %409 : vector<4x32xf32>
    %411 = arith.mulf %406, %410 : vector<4x32xf32>
    %412 = tpu.concatenate %411, %381 in 1 : vector<4x32xf32>, vector<4x32xf32> -> vector<4x64xf32>
    %413 = arith.truncf %412 : vector<4x64xf32> to vector<4x64xbf16>
    %cst_88 = arith.constant dense<0.000000e+00> : vector<4x128xf32>
    %414 = tpu.matmul %413, %2, %cst_88 {dimension_numbers = #tpu.dot_dimension_numbers<[1], [0], [0], [1], [0, 0, 1, 1], [], []>} : vector<4x64xbf16>, vector<64x128xbf16>, vector<4x128xf32> -> vector<4x128xf32>
    %415 = vector.broadcast %3 : vector<1x128xf32> to vector<4x128xf32>
    %416 = arith.addf %414, %415 : vector<4x128xf32>
    %417 = vector.extract_strided_slice %416 {offsets = [0, 0], sizes = [4, 32], strides = [1, 1]} : vector<4x128xf32> to vector<4x32xf32>
    %418 = arith.negf %417 : vector<4x32xf32>
    %419 = math.exp %418 : vector<4x32xf32>
    %cst_89 = arith.constant 1.000000e+00 : f32
    %420 = vector.broadcast %cst_89 : f32 to vector<4x32xf32>
    %421 = arith.addf %420, %419 : vector<4x32xf32>
    %422 = arith.divf %420, %421 : vector<4x32xf32>
    %423 = vector.extract_strided_slice %416 {offsets = [0, 32], sizes = [4, 32], strides = [1, 1]} : vector<4x128xf32> to vector<4x32xf32>
    %424 = arith.negf %423 : vector<4x32xf32>
    %425 = math.exp %424 : vector<4x32xf32>
    %cst_90 = arith.constant 1.000000e+00 : f32
    %426 = vector.broadcast %cst_90 : f32 to vector<4x32xf32>
    %427 = arith.addf %426, %425 : vector<4x32xf32>
    %428 = arith.divf %426, %427 : vector<4x32xf32>
    %429 = vector.extract_strided_slice %416 {offsets = [0, 64], sizes = [4, 32], strides = [1, 1]} : vector<4x128xf32> to vector<4x32xf32>
    %430 = math.tanh %429 : vector<4x32xf32>
    %431 = vector.extract_strided_slice %416 {offsets = [0, 96], sizes = [4, 32], strides = [1, 1]} : vector<4x128xf32> to vector<4x32xf32>
    %432 = arith.negf %431 : vector<4x32xf32>
    %433 = math.exp %432 : vector<4x32xf32>
    %cst_91 = arith.constant 1.000000e+00 : f32
    %434 = vector.broadcast %cst_91 : f32 to vector<4x32xf32>
    %435 = arith.addf %434, %433 : vector<4x32xf32>
    %436 = arith.divf %434, %435 : vector<4x32xf32>
    %437 = arith.mulf %428, %379 : vector<4x32xf32>
    %438 = arith.mulf %422, %430 : vector<4x32xf32>
    %439 = arith.addf %437, %438 : vector<4x32xf32>
    %440 = math.tanh %439 : vector<4x32xf32>
    %441 = arith.mulf %436, %440 : vector<4x32xf32>
    %c24 = arith.constant 24 : index
    %c0_92 = arith.constant 0 : index
    %442 = vector.load %arg24[%c24, %c0_92] : memref<32x32xf32, #tpu.memory_space<vmem>>, vector<4x32xf32>
    tpu.vector_store %arg24[%c24, %c0_92], %441 {strides = array<i32>} : memref<32x32xf32, #tpu.memory_space<vmem>>, vector<4x32xf32>,
    %443 = vector.extract_strided_slice %14 {offsets = [28, 0], sizes = [4, 128], strides = [1, 1]} : vector<32x128xf32> to vector<4x128xf32>
    %444 = arith.truncf %411 : vector<4x32xf32> to vector<4x32xbf16>
    %cst_93 = arith.constant dense<0.000000e+00> : vector<4x128xf32>
    %445 = tpu.matmul %444, %0, %cst_93 {dimension_numbers = #tpu.dot_dimension_numbers<[1], [0], [0], [1], [0, 0, 1, 1], [], []>} : vector<4x32xbf16>, vector<32x128xbf16>, vector<4x128xf32> -> vector<4x128xf32>
    %446 = arith.addf %443, %445 : vector<4x128xf32>
    %447 = vector.extract_strided_slice %446 {offsets = [0, 0], sizes = [4, 32], strides = [1, 1]} : vector<4x128xf32> to vector<4x32xf32>
    %448 = arith.negf %447 : vector<4x32xf32>
    %449 = math.exp %448 : vector<4x32xf32>
    %cst_94 = arith.constant 1.000000e+00 : f32
    %450 = vector.broadcast %cst_94 : f32 to vector<4x32xf32>
    %451 = arith.addf %450, %449 : vector<4x32xf32>
    %452 = arith.divf %450, %451 : vector<4x32xf32>
    %453 = vector.extract_strided_slice %446 {offsets = [0, 32], sizes = [4, 32], strides = [1, 1]} : vector<4x128xf32> to vector<4x32xf32>
    %454 = arith.negf %453 : vector<4x32xf32>
    %455 = math.exp %454 : vector<4x32xf32>
    %cst_95 = arith.constant 1.000000e+00 : f32
    %456 = vector.broadcast %cst_95 : f32 to vector<4x32xf32>
    %457 = arith.addf %456, %455 : vector<4x32xf32>
    %458 = arith.divf %456, %457 : vector<4x32xf32>
    %459 = vector.extract_strided_slice %446 {offsets = [0, 64], sizes = [4, 32], strides = [1, 1]} : vector<4x128xf32> to vector<4x32xf32>
    %460 = math.tanh %459 : vector<4x32xf32>
    %461 = vector.extract_strided_slice %446 {offsets = [0, 96], sizes = [4, 32], strides = [1, 1]} : vector<4x128xf32> to vector<4x32xf32>
    %462 = arith.negf %461 : vector<4x32xf32>
    %463 = math.exp %462 : vector<4x32xf32>
    %cst_96 = arith.constant 1.000000e+00 : f32
    %464 = vector.broadcast %cst_96 : f32 to vector<4x32xf32>
    %465 = arith.addf %464, %463 : vector<4x32xf32>
    %466 = arith.divf %464, %465 : vector<4x32xf32>
    %467 = arith.mulf %458, %409 : vector<4x32xf32>
    %468 = arith.mulf %452, %460 : vector<4x32xf32>
    %469 = arith.addf %467, %468 : vector<4x32xf32>
    %470 = math.tanh %469 : vector<4x32xf32>
    %471 = arith.mulf %466, %470 : vector<4x32xf32>
    %472 = tpu.concatenate %471, %441 in 1 : vector<4x32xf32>, vector<4x32xf32> -> vector<4x64xf32>
    %473 = arith.truncf %472 : vector<4x64xf32> to vector<4x64xbf16>
    %cst_97 = arith.constant dense<0.000000e+00> : vector<4x128xf32>
    %474 = tpu.matmul %473, %2, %cst_97 {dimension_numbers = #tpu.dot_dimension_numbers<[1], [0], [0], [1], [0, 0, 1, 1], [], []>} : vector<4x64xbf16>, vector<64x128xbf16>, vector<4x128xf32> -> vector<4x128xf32>
    %475 = vector.broadcast %3 : vector<1x128xf32> to vector<4x128xf32>
    %476 = arith.addf %474, %475 : vector<4x128xf32>
    %477 = vector.extract_strided_slice %476 {offsets = [0, 0], sizes = [4, 32], strides = [1, 1]} : vector<4x128xf32> to vector<4x32xf32>
    %478 = arith.negf %477 : vector<4x32xf32>
    %479 = math.exp %478 : vector<4x32xf32>
    %cst_98 = arith.constant 1.000000e+00 : f32
    %480 = vector.broadcast %cst_98 : f32 to vector<4x32xf32>
    %481 = arith.addf %480, %479 : vector<4x32xf32>
    %482 = arith.divf %480, %481 : vector<4x32xf32>
    %483 = vector.extract_strided_slice %476 {offsets = [0, 32], sizes = [4, 32], strides = [1, 1]} : vector<4x128xf32> to vector<4x32xf32>
    %484 = arith.negf %483 : vector<4x32xf32>
    %485 = math.exp %484 : vector<4x32xf32>
    %cst_99 = arith.constant 1.000000e+00 : f32
    %486 = vector.broadcast %cst_99 : f32 to vector<4x32xf32>
    %487 = arith.addf %486, %485 : vector<4x32xf32>
    %488 = arith.divf %486, %487 : vector<4x32xf32>
    %489 = vector.extract_strided_slice %476 {offsets = [0, 64], sizes = [4, 32], strides = [1, 1]} : vector<4x128xf32> to vector<4x32xf32>
    %490 = math.tanh %489 : vector<4x32xf32>
    %491 = vector.extract_strided_slice %476 {offsets = [0, 96], sizes = [4, 32], strides = [1, 1]} : vector<4x128xf32> to vector<4x32xf32>
    %492 = arith.negf %491 : vector<4x32xf32>
    %493 = math.exp %492 : vector<4x32xf32>
    %cst_100 = arith.constant 1.000000e+00 : f32
    %494 = vector.broadcast %cst_100 : f32 to vector<4x32xf32>
    %495 = arith.addf %494, %493 : vector<4x32xf32>
    %496 = arith.divf %494, %495 : vector<4x32xf32>
    %497 = arith.mulf %488, %439 : vector<4x32xf32>
    %498 = arith.mulf %482, %490 : vector<4x32xf32>
    %499 = arith.addf %497, %498 : vector<4x32xf32>
    %500 = math.tanh %499 : vector<4x32xf32>
    %501 = arith.mulf %496, %500 : vector<4x32xf32>
    %c28 = arith.constant 28 : index
    %c0_101 = arith.constant 0 : index
    %502 = vector.load %arg24[%c28, %c0_101] : memref<32x32xf32, #tpu.memory_space<vmem>>, vector<4x32xf32>
    tpu.vector_store %arg24[%c28, %c0_101], %501 {strides = array<i32>} : memref<32x32xf32, #tpu.memory_space<vmem>>, vector<4x32xf32>,
    %c0_102 = arith.constant 0 : index
    %c0_103 = arith.constant 0 : index
    %503 = vector.load %arg24[%c0_102, %c0_103] : memref<32x32xf32, #tpu.memory_space<vmem>>, vector<32x32xf32>
    %c0_104 = arith.constant 0 : index
    %c0_105 = arith.constant 0 : index
    %504 = vector.load %arg8[%c0_104, %c0_105] : memref<32x1xbf16, #tpu.memory_space<vmem>>, vector<32x1xbf16>
    %505 = arith.truncf %503 : vector<32x32xf32> to vector<32x32xbf16>
    %cst_106 = arith.constant dense<0.000000e+00> : vector<32x1xf32>
    %506 = tpu.matmul %505, %504, %cst_106 {dimension_numbers = #tpu.dot_dimension_numbers<[1], [0], [0], [1], [0, 0, 1, 1], [], []>} : vector<32x32xbf16>, vector<32x1xbf16>, vector<32x1xf32> -> vector<32x1xf32>
    %c0_107 = arith.constant 0 : index
    %c0_108 = arith.constant 0 : index
    %507 = vector.load %arg10[%c0_107, %c0_108] : memref<1x1xf32, #tpu.memory_space<vmem>>, vector<1x1xf32>
    %508 = vector.broadcast %507 : vector<1x1xf32> to vector<32x1xf32>
    %509 = arith.addf %506, %508 : vector<32x1xf32>
    %510 = vector.shape_cast %509 : vector<32x1xf32> to vector<1x32x1xf32>
    %cst_109 = arith.constant dense<0xFF800000> : vector<1xf32>
    %511 = vector.multi_reduction <maximumf>, %510, %cst_109 [1, 2] : vector<1x32x1xf32> to vector<1xf32>
    %512 = vector.shape_cast %511 : vector<1xf32> to vector<1x1x1xf32>
    %513 = vector.extract %512[0, 0, 0] : f32 from vector<1x1x1xf32>
    %514 = vector.broadcast %513 : f32 to vector<32x1xf32>
    %515 = arith.subf %509, %514 : vector<32x1xf32>
    %c0_110 = arith.constant 0 : index
    %c0_111 = arith.constant 0 : index
    %516 = vector.load %arg11[%c0_110, %c0_111] : memref<32x128xbf16, #tpu.memory_space<vmem>>, vector<32x128xbf16>
    %517 = arith.truncf %503 : vector<32x32xf32> to vector<32x32xbf16>
    %cst_112 = arith.constant dense<0.000000e+00> : vector<32x128xf32>
    %518 = tpu.matmul %517, %516, %cst_112 {dimension_numbers = #tpu.dot_dimension_numbers<[1], [0], [0], [1], [0, 0, 1, 1], [], []>} : vector<32x32xbf16>, vector<32x128xbf16>, vector<32x128xf32> -> vector<32x128xf32>
    %519 = arith.truncf %471 : vector<4x32xf32> to vector<4x32xbf16>
    %cst_113 = arith.constant dense<0.000000e+00> : vector<4x128xf32>
    %520 = tpu.matmul %519, %0, %cst_113 {dimension_numbers = #tpu.dot_dimension_numbers<[1], [0], [0], [1], [0, 0, 1, 1], [], []>} : vector<4x32xbf16>, vector<32x128xbf16>, vector<4x128xf32> -> vector<4x128xf32>
    %521 = vector.broadcast %1 : vector<1x128xf32> to vector<4x128xf32>
    %522 = arith.addf %520, %521 : vector<4x128xf32>
    %523 = vector.extract_strided_slice %522 {offsets = [0, 0], sizes = [4, 32], strides = [1, 1]} : vector<4x128xf32> to vector<4x32xf32>
    %524 = arith.negf %523 : vector<4x32xf32>
    %525 = math.exp %524 : vector<4x32xf32>
    %cst_114 = arith.constant 1.000000e+00 : f32
    %526 = vector.broadcast %cst_114 : f32 to vector<4x32xf32>
    %527 = arith.addf %526, %525 : vector<4x32xf32>
    %528 = arith.divf %526, %527 : vector<4x32xf32>
    %529 = vector.extract_strided_slice %522 {offsets = [0, 32], sizes = [4, 32], strides = [1, 1]} : vector<4x128xf32> to vector<4x32xf32>
    %530 = arith.negf %529 : vector<4x32xf32>
    %531 = math.exp %530 : vector<4x32xf32>
    %cst_115 = arith.constant 1.000000e+00 : f32
    %532 = vector.broadcast %cst_115 : f32 to vector<4x32xf32>
    %533 = arith.addf %532, %531 : vector<4x32xf32>
    %534 = arith.divf %532, %533 : vector<4x32xf32>
    %535 = vector.extract_strided_slice %522 {offsets = [0, 64], sizes = [4, 32], strides = [1, 1]} : vector<4x128xf32> to vector<4x32xf32>
    %536 = math.tanh %535 : vector<4x32xf32>
    %537 = vector.extract_strided_slice %522 {offsets = [0, 96], sizes = [4, 32], strides = [1, 1]} : vector<4x128xf32> to vector<4x32xf32>
    %538 = arith.negf %537 : vector<4x32xf32>
    %539 = math.exp %538 : vector<4x32xf32>
    %cst_116 = arith.constant 1.000000e+00 : f32
    %540 = vector.broadcast %cst_116 : f32 to vector<4x32xf32>
    %541 = arith.addf %540, %539 : vector<4x32xf32>
    %542 = arith.divf %540, %541 : vector<4x32xf32>
    %543 = arith.mulf %534, %469 : vector<4x32xf32>
    %544 = arith.mulf %528, %536 : vector<4x32xf32>
    %545 = arith.addf %543, %544 : vector<4x32xf32>
    %546 = math.tanh %545 : vector<4x32xf32>
    %547 = arith.mulf %542, %546 : vector<4x32xf32>
    %548 = arith.truncf %501 : vector<4x32xf32> to vector<4x32xbf16>
    %cst_117 = arith.constant dense<0.000000e+00> : vector<4x1xf32>
    %549 = tpu.matmul %548, %4, %cst_117 {dimension_numbers = #tpu.dot_dimension_numbers<[1], [0], [0], [1], [0, 0, 1, 1], [], []>} : vector<4x32xbf16>, vector<32x1xbf16>, vector<4x1xf32> -> vector<4x1xf32>
    %550 = arith.truncf %549 : vector<4x1xf32> to vector<4x1xbf16>
    %cst_118 = arith.constant dense<0.000000e+00> : vector<32x1xf32>
    %551 = tpu.matmul %7, %550, %cst_118 {dimension_numbers = #tpu.dot_dimension_numbers<[1], [0], [0], [1], [0, 0, 1, 1], [], []>} : vector<32x4xbf16>, vector<4x1xbf16>, vector<32x1xf32> -> vector<32x1xf32>
    %552 = arith.addf %515, %551 : vector<32x1xf32>
    %553 = math.exp %552 : vector<32x1xf32>
    %554 = arith.truncf %553 : vector<32x1xf32> to vector<32x1xbf16>
    %cst_119 = arith.constant dense<0.000000e+00> : vector<32x1xf32>
    %555 = tpu.matmul %6, %554, %cst_119 {dimension_numbers = #tpu.dot_dimension_numbers<[1], [0], [0], [1], [0, 0, 1, 1], [], []>} : vector<32x32xbf16>, vector<32x1xbf16>, vector<32x1xf32> -> vector<32x1xf32>
    %556 = tpu.reciprocal %555 {approx = true} : vector<32x1xf32> -> vector<32x1xf32>
    %557 = arith.mulf %553, %556 : vector<32x1xf32>
    %558 = vector.broadcast %557 : vector<32x1xf32> to vector<32x128xf32>
    %559 = arith.mulf %558, %518 : vector<32x128xf32>
    %560 = arith.truncf %559 : vector<32x128xf32> to vector<32x128xbf16>
    %cst_120 = arith.constant dense<0.000000e+00> : vector<4x128xf32>
    %561 = tpu.matmul %5, %560, %cst_120 {dimension_numbers = #tpu.dot_dimension_numbers<[1], [0], [0], [1], [0, 0, 1, 1], [], []>} : vector<4x32xbf16>, vector<32x128xbf16>, vector<4x128xf32> -> vector<4x128xf32>
    %562 = vector.extract_strided_slice %21 {offsets = [0, 0], sizes = [4, 128], strides = [1, 1]} : vector<32x128xf32> to vector<4x128xf32>
    %563 = arith.addf %562, %561 : vector<4x128xf32>
    %564 = tpu.concatenate %547, %501 in 1 : vector<4x32xf32>, vector<4x32xf32> -> vector<4x64xf32>
    %565 = arith.truncf %564 : vector<4x64xf32> to vector<4x64xbf16>
    %cst_121 = arith.constant dense<0.000000e+00> : vector<4x128xf32>
    %566 = tpu.matmul %565, %2, %cst_121 {dimension_numbers = #tpu.dot_dimension_numbers<[1], [0], [0], [1], [0, 0, 1, 1], [], []>} : vector<4x64xbf16>, vector<64x128xbf16>, vector<4x128xf32> -> vector<4x128xf32>
    %567 = arith.addf %563, %566 : vector<4x128xf32>
    %568 = vector.extract_strided_slice %567 {offsets = [0, 0], sizes = [4, 32], strides = [1, 1]} : vector<4x128xf32> to vector<4x32xf32>
    %569 = arith.negf %568 : vector<4x32xf32>
    %570 = math.exp %569 : vector<4x32xf32>
    %cst_122 = arith.constant 1.000000e+00 : f32
    %571 = vector.broadcast %cst_122 : f32 to vector<4x32xf32>
    %572 = arith.addf %571, %570 : vector<4x32xf32>
    %573 = arith.divf %571, %572 : vector<4x32xf32>
    %574 = vector.extract_strided_slice %567 {offsets = [0, 32], sizes = [4, 32], strides = [1, 1]} : vector<4x128xf32> to vector<4x32xf32>
    %575 = arith.negf %574 : vector<4x32xf32>
    %576 = math.exp %575 : vector<4x32xf32>
    %cst_123 = arith.constant 1.000000e+00 : f32
    %577 = vector.broadcast %cst_123 : f32 to vector<4x32xf32>
    %578 = arith.addf %577, %576 : vector<4x32xf32>
    %579 = arith.divf %577, %578 : vector<4x32xf32>
    %580 = vector.extract_strided_slice %567 {offsets = [0, 64], sizes = [4, 32], strides = [1, 1]} : vector<4x128xf32> to vector<4x32xf32>
    %581 = math.tanh %580 : vector<4x32xf32>
    %582 = vector.extract_strided_slice %567 {offsets = [0, 96], sizes = [4, 32], strides = [1, 1]} : vector<4x128xf32> to vector<4x32xf32>
    %583 = arith.negf %582 : vector<4x32xf32>
    %584 = math.exp %583 : vector<4x32xf32>
    %cst_124 = arith.constant 1.000000e+00 : f32
    %585 = vector.broadcast %cst_124 : f32 to vector<4x32xf32>
    %586 = arith.addf %585, %584 : vector<4x32xf32>
    %587 = arith.divf %585, %586 : vector<4x32xf32>
    %588 = arith.mulf %579, %499 : vector<4x32xf32>
    %589 = arith.mulf %573, %581 : vector<4x32xf32>
    %590 = arith.addf %588, %589 : vector<4x32xf32>
    %591 = math.tanh %590 : vector<4x32xf32>
    %592 = arith.mulf %587, %591 : vector<4x32xf32>
    %c0_125 = arith.constant 0 : index
    %c0_126 = arith.constant 0 : index
    %593 = vector.load %arg25[%c0_125, %c0_126] : memref<32x32xf32, #tpu.memory_space<vmem>>, vector<4x32xf32>
    tpu.vector_store %arg25[%c0_125, %c0_126], %592 {strides = array<i32>} : memref<32x32xf32, #tpu.memory_space<vmem>>, vector<4x32xf32>,
    %594 = arith.truncf %547 : vector<4x32xf32> to vector<4x32xbf16>
    %cst_127 = arith.constant dense<0.000000e+00> : vector<4x128xf32>
    %595 = tpu.matmul %594, %0, %cst_127 {dimension_numbers = #tpu.dot_dimension_numbers<[1], [0], [0], [1], [0, 0, 1, 1], [], []>} : vector<4x32xbf16>, vector<32x128xbf16>, vector<4x128xf32> -> vector<4x128xf32>
    %596 = vector.broadcast %1 : vector<1x128xf32> to vector<4x128xf32>
    %597 = arith.addf %595, %596 : vector<4x128xf32>
    %598 = vector.extract_strided_slice %597 {offsets = [0, 0], sizes = [4, 32], strides = [1, 1]} : vector<4x128xf32> to vector<4x32xf32>
    %599 = arith.negf %598 : vector<4x32xf32>
    %600 = math.exp %599 : vector<4x32xf32>
    %cst_128 = arith.constant 1.000000e+00 : f32
    %601 = vector.broadcast %cst_128 : f32 to vector<4x32xf32>
    %602 = arith.addf %601, %600 : vector<4x32xf32>
    %603 = arith.divf %601, %602 : vector<4x32xf32>
    %604 = vector.extract_strided_slice %597 {offsets = [0, 32], sizes = [4, 32], strides = [1, 1]} : vector<4x128xf32> to vector<4x32xf32>
    %605 = arith.negf %604 : vector<4x32xf32>
    %606 = math.exp %605 : vector<4x32xf32>
    %cst_129 = arith.constant 1.000000e+00 : f32
    %607 = vector.broadcast %cst_129 : f32 to vector<4x32xf32>
    %608 = arith.addf %607, %606 : vector<4x32xf32>
    %609 = arith.divf %607, %608 : vector<4x32xf32>
    %610 = vector.extract_strided_slice %597 {offsets = [0, 64], sizes = [4, 32], strides = [1, 1]} : vector<4x128xf32> to vector<4x32xf32>
    %611 = math.tanh %610 : vector<4x32xf32>
    %612 = vector.extract_strided_slice %597 {offsets = [0, 96], sizes = [4, 32], strides = [1, 1]} : vector<4x128xf32> to vector<4x32xf32>
    %613 = arith.negf %612 : vector<4x32xf32>
    %614 = math.exp %613 : vector<4x32xf32>
    %cst_130 = arith.constant 1.000000e+00 : f32
    %615 = vector.broadcast %cst_130 : f32 to vector<4x32xf32>
    %616 = arith.addf %615, %614 : vector<4x32xf32>
    %617 = arith.divf %615, %616 : vector<4x32xf32>
    %618 = arith.mulf %609, %545 : vector<4x32xf32>
    %619 = arith.mulf %603, %611 : vector<4x32xf32>
    %620 = arith.addf %618, %619 : vector<4x32xf32>
    %621 = math.tanh %620 : vector<4x32xf32>
    %622 = arith.mulf %617, %621 : vector<4x32xf32>
    %623 = arith.truncf %592 : vector<4x32xf32> to vector<4x32xbf16>
    %cst_131 = arith.constant dense<0.000000e+00> : vector<4x1xf32>
    %624 = tpu.matmul %623, %4, %cst_131 {dimension_numbers = #tpu.dot_dimension_numbers<[1], [0], [0], [1], [0, 0, 1, 1], [], []>} : vector<4x32xbf16>, vector<32x1xbf16>, vector<4x1xf32> -> vector<4x1xf32>
    %625 = arith.truncf %624 : vector<4x1xf32> to vector<4x1xbf16>
    %cst_132 = arith.constant dense<0.000000e+00> : vector<32x1xf32>
    %626 = tpu.matmul %7, %625, %cst_132 {dimension_numbers = #tpu.dot_dimension_numbers<[1], [0], [0], [1], [0, 0, 1, 1], [], []>} : vector<32x4xbf16>, vector<4x1xbf16>, vector<32x1xf32> -> vector<32x1xf32>
    %627 = arith.addf %515, %626 : vector<32x1xf32>
    %628 = math.exp %627 : vector<32x1xf32>
    %629 = arith.truncf %628 : vector<32x1xf32> to vector<32x1xbf16>
    %cst_133 = arith.constant dense<0.000000e+00> : vector<32x1xf32>
    %630 = tpu.matmul %6, %629, %cst_133 {dimension_numbers = #tpu.dot_dimension_numbers<[1], [0], [0], [1], [0, 0, 1, 1], [], []>} : vector<32x32xbf16>, vector<32x1xbf16>, vector<32x1xf32> -> vector<32x1xf32>
    %631 = tpu.reciprocal %630 {approx = true} : vector<32x1xf32> -> vector<32x1xf32>
    %632 = arith.mulf %628, %631 : vector<32x1xf32>
    %633 = vector.broadcast %632 : vector<32x1xf32> to vector<32x128xf32>
    %634 = arith.mulf %633, %518 : vector<32x128xf32>
    %635 = arith.truncf %634 : vector<32x128xf32> to vector<32x128xbf16>
    %cst_134 = arith.constant dense<0.000000e+00> : vector<4x128xf32>
    %636 = tpu.matmul %5, %635, %cst_134 {dimension_numbers = #tpu.dot_dimension_numbers<[1], [0], [0], [1], [0, 0, 1, 1], [], []>} : vector<4x32xbf16>, vector<32x128xbf16>, vector<4x128xf32> -> vector<4x128xf32>
    %637 = vector.extract_strided_slice %21 {offsets = [4, 0], sizes = [4, 128], strides = [1, 1]} : vector<32x128xf32> to vector<4x128xf32>
    %638 = arith.addf %637, %636 : vector<4x128xf32>
    %639 = tpu.concatenate %622, %592 in 1 : vector<4x32xf32>, vector<4x32xf32> -> vector<4x64xf32>
    %640 = arith.truncf %639 : vector<4x64xf32> to vector<4x64xbf16>
    %cst_135 = arith.constant dense<0.000000e+00> : vector<4x128xf32>
    %641 = tpu.matmul %640, %2, %cst_135 {dimension_numbers = #tpu.dot_dimension_numbers<[1], [0], [0], [1], [0, 0, 1, 1], [], []>} : vector<4x64xbf16>, vector<64x128xbf16>, vector<4x128xf32> -> vector<4x128xf32>
    %642 = arith.addf %638, %641 : vector<4x128xf32>
    %643 = vector.extract_strided_slice %642 {offsets = [0, 0], sizes = [4, 32], strides = [1, 1]} : vector<4x128xf32> to vector<4x32xf32>
    %644 = arith.negf %643 : vector<4x32xf32>
    %645 = math.exp %644 : vector<4x32xf32>
    %cst_136 = arith.constant 1.000000e+00 : f32
    %646 = vector.broadcast %cst_136 : f32 to vector<4x32xf32>
    %647 = arith.addf %646, %645 : vector<4x32xf32>
    %648 = arith.divf %646, %647 : vector<4x32xf32>
    %649 = vector.extract_strided_slice %642 {offsets = [0, 32], sizes = [4, 32], strides = [1, 1]} : vector<4x128xf32> to vector<4x32xf32>
    %650 = arith.negf %649 : vector<4x32xf32>
    %651 = math.exp %650 : vector<4x32xf32>
    %cst_137 = arith.constant 1.000000e+00 : f32
    %652 = vector.broadcast %cst_137 : f32 to vector<4x32xf32>
    %653 = arith.addf %652, %651 : vector<4x32xf32>
    %654 = arith.divf %652, %653 : vector<4x32xf32>
    %655 = vector.extract_strided_slice %642 {offsets = [0, 64], sizes = [4, 32], strides = [1, 1]} : vector<4x128xf32> to vector<4x32xf32>
    %656 = math.tanh %655 : vector<4x32xf32>
    %657 = vector.extract_strided_slice %642 {offsets = [0, 96], sizes = [4, 32], strides = [1, 1]} : vector<4x128xf32> to vector<4x32xf32>
    %658 = arith.negf %657 : vector<4x32xf32>
    %659 = math.exp %658 : vector<4x32xf32>
    %cst_138 = arith.constant 1.000000e+00 : f32
    %660 = vector.broadcast %cst_138 : f32 to vector<4x32xf32>
    %661 = arith.addf %660, %659 : vector<4x32xf32>
    %662 = arith.divf %660, %661 : vector<4x32xf32>
    %663 = arith.mulf %654, %590 : vector<4x32xf32>
    %664 = arith.mulf %648, %656 : vector<4x32xf32>
    %665 = arith.addf %663, %664 : vector<4x32xf32>
    %666 = math.tanh %665 : vector<4x32xf32>
    %667 = arith.mulf %662, %666 : vector<4x32xf32>
    %c4_139 = arith.constant 4 : index
    %c0_140 = arith.constant 0 : index
    %668 = vector.load %arg25[%c4_139, %c0_140] : memref<32x32xf32, #tpu.memory_space<vmem>>, vector<4x32xf32>
    tpu.vector_store %arg25[%c4_139, %c0_140], %667 {strides = array<i32>} : memref<32x32xf32, #tpu.memory_space<vmem>>, vector<4x32xf32>,
    %669 = arith.truncf %622 : vector<4x32xf32> to vector<4x32xbf16>
    %cst_141 = arith.constant dense<0.000000e+00> : vector<4x128xf32>
    %670 = tpu.matmul %669, %0, %cst_141 {dimension_numbers = #tpu.dot_dimension_numbers<[1], [0], [0], [1], [0, 0, 1, 1], [], []>} : vector<4x32xbf16>, vector<32x128xbf16>, vector<4x128xf32> -> vector<4x128xf32>
    %671 = vector.broadcast %1 : vector<1x128xf32> to vector<4x128xf32>
    %672 = arith.addf %670, %671 : vector<4x128xf32>
    %673 = vector.extract_strided_slice %672 {offsets = [0, 0], sizes = [4, 32], strides = [1, 1]} : vector<4x128xf32> to vector<4x32xf32>
    %674 = arith.negf %673 : vector<4x32xf32>
    %675 = math.exp %674 : vector<4x32xf32>
    %cst_142 = arith.constant 1.000000e+00 : f32
    %676 = vector.broadcast %cst_142 : f32 to vector<4x32xf32>
    %677 = arith.addf %676, %675 : vector<4x32xf32>
    %678 = arith.divf %676, %677 : vector<4x32xf32>
    %679 = vector.extract_strided_slice %672 {offsets = [0, 32], sizes = [4, 32], strides = [1, 1]} : vector<4x128xf32> to vector<4x32xf32>
    %680 = arith.negf %679 : vector<4x32xf32>
    %681 = math.exp %680 : vector<4x32xf32>
    %cst_143 = arith.constant 1.000000e+00 : f32
    %682 = vector.broadcast %cst_143 : f32 to vector<4x32xf32>
    %683 = arith.addf %682, %681 : vector<4x32xf32>
    %684 = arith.divf %682, %683 : vector<4x32xf32>
    %685 = vector.extract_strided_slice %672 {offsets = [0, 64], sizes = [4, 32], strides = [1, 1]} : vector<4x128xf32> to vector<4x32xf32>
    %686 = math.tanh %685 : vector<4x32xf32>
    %687 = vector.extract_strided_slice %672 {offsets = [0, 96], sizes = [4, 32], strides = [1, 1]} : vector<4x128xf32> to vector<4x32xf32>
    %688 = arith.negf %687 : vector<4x32xf32>
    %689 = math.exp %688 : vector<4x32xf32>
    %cst_144 = arith.constant 1.000000e+00 : f32
    %690 = vector.broadcast %cst_144 : f32 to vector<4x32xf32>
    %691 = arith.addf %690, %689 : vector<4x32xf32>
    %692 = arith.divf %690, %691 : vector<4x32xf32>
    %693 = arith.mulf %684, %620 : vector<4x32xf32>
    %694 = arith.mulf %678, %686 : vector<4x32xf32>
    %695 = arith.addf %693, %694 : vector<4x32xf32>
    %696 = math.tanh %695 : vector<4x32xf32>
    %697 = arith.mulf %692, %696 : vector<4x32xf32>
    %698 = arith.truncf %667 : vector<4x32xf32> to vector<4x32xbf16>
    %cst_145 = arith.constant dense<0.000000e+00> : vector<4x1xf32>
    %699 = tpu.matmul %698, %4, %cst_145 {dimension_numbers = #tpu.dot_dimension_numbers<[1], [0], [0], [1], [0, 0, 1, 1], [], []>} : vector<4x32xbf16>, vector<32x1xbf16>, vector<4x1xf32> -> vector<4x1xf32>
    %700 = arith.truncf %699 : vector<4x1xf32> to vector<4x1xbf16>
    %cst_146 = arith.constant dense<0.000000e+00> : vector<32x1xf32>
    %701 = tpu.matmul %7, %700, %cst_146 {dimension_numbers = #tpu.dot_dimension_numbers<[1], [0], [0], [1], [0, 0, 1, 1], [], []>} : vector<32x4xbf16>, vector<4x1xbf16>, vector<32x1xf32> -> vector<32x1xf32>
    %702 = arith.addf %515, %701 : vector<32x1xf32>
    %703 = math.exp %702 : vector<32x1xf32>
    %704 = arith.truncf %703 : vector<32x1xf32> to vector<32x1xbf16>
    %cst_147 = arith.constant dense<0.000000e+00> : vector<32x1xf32>
    %705 = tpu.matmul %6, %704, %cst_147 {dimension_numbers = #tpu.dot_dimension_numbers<[1], [0], [0], [1], [0, 0, 1, 1], [], []>} : vector<32x32xbf16>, vector<32x1xbf16>, vector<32x1xf32> -> vector<32x1xf32>
    %706 = tpu.reciprocal %705 {approx = true} : vector<32x1xf32> -> vector<32x1xf32>
    %707 = arith.mulf %703, %706 : vector<32x1xf32>
    %708 = vector.broadcast %707 : vector<32x1xf32> to vector<32x128xf32>
    %709 = arith.mulf %708, %518 : vector<32x128xf32>
    %710 = arith.truncf %709 : vector<32x128xf32> to vector<32x128xbf16>
    %cst_148 = arith.constant dense<0.000000e+00> : vector<4x128xf32>
    %711 = tpu.matmul %5, %710, %cst_148 {dimension_numbers = #tpu.dot_dimension_numbers<[1], [0], [0], [1], [0, 0, 1, 1], [], []>} : vector<4x32xbf16>, vector<32x128xbf16>, vector<4x128xf32> -> vector<4x128xf32>
    %712 = vector.extract_strided_slice %21 {offsets = [8, 0], sizes = [4, 128], strides = [1, 1]} : vector<32x128xf32> to vector<4x128xf32>
    %713 = arith.addf %712, %711 : vector<4x128xf32>
    %714 = tpu.concatenate %697, %667 in 1 : vector<4x32xf32>, vector<4x32xf32> -> vector<4x64xf32>
    %715 = arith.truncf %714 : vector<4x64xf32> to vector<4x64xbf16>
    %cst_149 = arith.constant dense<0.000000e+00> : vector<4x128xf32>
    %716 = tpu.matmul %715, %2, %cst_149 {dimension_numbers = #tpu.dot_dimension_numbers<[1], [0], [0], [1], [0, 0, 1, 1], [], []>} : vector<4x64xbf16>, vector<64x128xbf16>, vector<4x128xf32> -> vector<4x128xf32>
    %717 = arith.addf %713, %716 : vector<4x128xf32>
    %718 = vector.extract_strided_slice %717 {offsets = [0, 0], sizes = [4, 32], strides = [1, 1]} : vector<4x128xf32> to vector<4x32xf32>
    %719 = arith.negf %718 : vector<4x32xf32>
    %720 = math.exp %719 : vector<4x32xf32>
    %cst_150 = arith.constant 1.000000e+00 : f32
    %721 = vector.broadcast %cst_150 : f32 to vector<4x32xf32>
    %722 = arith.addf %721, %720 : vector<4x32xf32>
    %723 = arith.divf %721, %722 : vector<4x32xf32>
    %724 = vector.extract_strided_slice %717 {offsets = [0, 32], sizes = [4, 32], strides = [1, 1]} : vector<4x128xf32> to vector<4x32xf32>
    %725 = arith.negf %724 : vector<4x32xf32>
    %726 = math.exp %725 : vector<4x32xf32>
    %cst_151 = arith.constant 1.000000e+00 : f32
    %727 = vector.broadcast %cst_151 : f32 to vector<4x32xf32>
    %728 = arith.addf %727, %726 : vector<4x32xf32>
    %729 = arith.divf %727, %728 : vector<4x32xf32>
    %730 = vector.extract_strided_slice %717 {offsets = [0, 64], sizes = [4, 32], strides = [1, 1]} : vector<4x128xf32> to vector<4x32xf32>
    %731 = math.tanh %730 : vector<4x32xf32>
    %732 = vector.extract_strided_slice %717 {offsets = [0, 96], sizes = [4, 32], strides = [1, 1]} : vector<4x128xf32> to vector<4x32xf32>
    %733 = arith.negf %732 : vector<4x32xf32>
    %734 = math.exp %733 : vector<4x32xf32>
    %cst_152 = arith.constant 1.000000e+00 : f32
    %735 = vector.broadcast %cst_152 : f32 to vector<4x32xf32>
    %736 = arith.addf %735, %734 : vector<4x32xf32>
    %737 = arith.divf %735, %736 : vector<4x32xf32>
    %738 = arith.mulf %729, %665 : vector<4x32xf32>
    %739 = arith.mulf %723, %731 : vector<4x32xf32>
    %740 = arith.addf %738, %739 : vector<4x32xf32>
    %741 = math.tanh %740 : vector<4x32xf32>
    %742 = arith.mulf %737, %741 : vector<4x32xf32>
    %c8_153 = arith.constant 8 : index
    %c0_154 = arith.constant 0 : index
    %743 = vector.load %arg25[%c8_153, %c0_154] : memref<32x32xf32, #tpu.memory_space<vmem>>, vector<4x32xf32>
    tpu.vector_store %arg25[%c8_153, %c0_154], %742 {strides = array<i32>} : memref<32x32xf32, #tpu.memory_space<vmem>>, vector<4x32xf32>,
    %744 = arith.truncf %697 : vector<4x32xf32> to vector<4x32xbf16>
    %cst_155 = arith.constant dense<0.000000e+00> : vector<4x128xf32>
    %745 = tpu.matmul %744, %0, %cst_155 {dimension_numbers = #tpu.dot_dimension_numbers<[1], [0], [0], [1], [0, 0, 1, 1], [], []>} : vector<4x32xbf16>, vector<32x128xbf16>, vector<4x128xf32> -> vector<4x128xf32>
    %746 = vector.broadcast %1 : vector<1x128xf32> to vector<4x128xf32>
    %747 = arith.addf %745, %746 : vector<4x128xf32>
    %748 = vector.extract_strided_slice %747 {offsets = [0, 0], sizes = [4, 32], strides = [1, 1]} : vector<4x128xf32> to vector<4x32xf32>
    %749 = arith.negf %748 : vector<4x32xf32>
    %750 = math.exp %749 : vector<4x32xf32>
    %cst_156 = arith.constant 1.000000e+00 : f32
    %751 = vector.broadcast %cst_156 : f32 to vector<4x32xf32>
    %752 = arith.addf %751, %750 : vector<4x32xf32>
    %753 = arith.divf %751, %752 : vector<4x32xf32>
    %754 = vector.extract_strided_slice %747 {offsets = [0, 32], sizes = [4, 32], strides = [1, 1]} : vector<4x128xf32> to vector<4x32xf32>
    %755 = arith.negf %754 : vector<4x32xf32>
    %756 = math.exp %755 : vector<4x32xf32>
    %cst_157 = arith.constant 1.000000e+00 : f32
    %757 = vector.broadcast %cst_157 : f32 to vector<4x32xf32>
    %758 = arith.addf %757, %756 : vector<4x32xf32>
    %759 = arith.divf %757, %758 : vector<4x32xf32>
    %760 = vector.extract_strided_slice %747 {offsets = [0, 64], sizes = [4, 32], strides = [1, 1]} : vector<4x128xf32> to vector<4x32xf32>
    %761 = math.tanh %760 : vector<4x32xf32>
    %762 = vector.extract_strided_slice %747 {offsets = [0, 96], sizes = [4, 32], strides = [1, 1]} : vector<4x128xf32> to vector<4x32xf32>
    %763 = arith.negf %762 : vector<4x32xf32>
    %764 = math.exp %763 : vector<4x32xf32>
    %cst_158 = arith.constant 1.000000e+00 : f32
    %765 = vector.broadcast %cst_158 : f32 to vector<4x32xf32>
    %766 = arith.addf %765, %764 : vector<4x32xf32>
    %767 = arith.divf %765, %766 : vector<4x32xf32>
    %768 = arith.mulf %759, %695 : vector<4x32xf32>
    %769 = arith.mulf %753, %761 : vector<4x32xf32>
    %770 = arith.addf %768, %769 : vector<4x32xf32>
    %771 = math.tanh %770 : vector<4x32xf32>
    %772 = arith.mulf %767, %771 : vector<4x32xf32>
    %773 = arith.truncf %742 : vector<4x32xf32> to vector<4x32xbf16>
    %cst_159 = arith.constant dense<0.000000e+00> : vector<4x1xf32>
    %774 = tpu.matmul %773, %4, %cst_159 {dimension_numbers = #tpu.dot_dimension_numbers<[1], [0], [0], [1], [0, 0, 1, 1], [], []>} : vector<4x32xbf16>, vector<32x1xbf16>, vector<4x1xf32> -> vector<4x1xf32>
    %775 = arith.truncf %774 : vector<4x1xf32> to vector<4x1xbf16>
    %cst_160 = arith.constant dense<0.000000e+00> : vector<32x1xf32>
    %776 = tpu.matmul %7, %775, %cst_160 {dimension_numbers = #tpu.dot_dimension_numbers<[1], [0], [0], [1], [0, 0, 1, 1], [], []>} : vector<32x4xbf16>, vector<4x1xbf16>, vector<32x1xf32> -> vector<32x1xf32>
    %777 = arith.addf %515, %776 : vector<32x1xf32>
    %778 = math.exp %777 : vector<32x1xf32>
    %779 = arith.truncf %778 : vector<32x1xf32> to vector<32x1xbf16>
    %cst_161 = arith.constant dense<0.000000e+00> : vector<32x1xf32>
    %780 = tpu.matmul %6, %779, %cst_161 {dimension_numbers = #tpu.dot_dimension_numbers<[1], [0], [0], [1], [0, 0, 1, 1], [], []>} : vector<32x32xbf16>, vector<32x1xbf16>, vector<32x1xf32> -> vector<32x1xf32>
    %781 = tpu.reciprocal %780 {approx = true} : vector<32x1xf32> -> vector<32x1xf32>
    %782 = arith.mulf %778, %781 : vector<32x1xf32>
    %783 = vector.broadcast %782 : vector<32x1xf32> to vector<32x128xf32>
    %784 = arith.mulf %783, %518 : vector<32x128xf32>
    %785 = arith.truncf %784 : vector<32x128xf32> to vector<32x128xbf16>
    %cst_162 = arith.constant dense<0.000000e+00> : vector<4x128xf32>
    %786 = tpu.matmul %5, %785, %cst_162 {dimension_numbers = #tpu.dot_dimension_numbers<[1], [0], [0], [1], [0, 0, 1, 1], [], []>} : vector<4x32xbf16>, vector<32x128xbf16>, vector<4x128xf32> -> vector<4x128xf32>
    %787 = vector.extract_strided_slice %21 {offsets = [12, 0], sizes = [4, 128], strides = [1, 1]} : vector<32x128xf32> to vector<4x128xf32>
    %788 = arith.addf %787, %786 : vector<4x128xf32>
    %789 = tpu.concatenate %772, %742 in 1 : vector<4x32xf32>, vector<4x32xf32> -> vector<4x64xf32>
    %790 = arith.truncf %789 : vector<4x64xf32> to vector<4x64xbf16>
    %cst_163 = arith.constant dense<0.000000e+00> : vector<4x128xf32>
    %791 = tpu.matmul %790, %2, %cst_163 {dimension_numbers = #tpu.dot_dimension_numbers<[1], [0], [0], [1], [0, 0, 1, 1], [], []>} : vector<4x64xbf16>, vector<64x128xbf16>, vector<4x128xf32> -> vector<4x128xf32>
    %792 = arith.addf %788, %791 : vector<4x128xf32>
    %793 = vector.extract_strided_slice %792 {offsets = [0, 0], sizes = [4, 32], strides = [1, 1]} : vector<4x128xf32> to vector<4x32xf32>
    %794 = arith.negf %793 : vector<4x32xf32>
    %795 = math.exp %794 : vector<4x32xf32>
    %cst_164 = arith.constant 1.000000e+00 : f32
    %796 = vector.broadcast %cst_164 : f32 to vector<4x32xf32>
    %797 = arith.addf %796, %795 : vector<4x32xf32>
    %798 = arith.divf %796, %797 : vector<4x32xf32>
    %799 = vector.extract_strided_slice %792 {offsets = [0, 32], sizes = [4, 32], strides = [1, 1]} : vector<4x128xf32> to vector<4x32xf32>
    %800 = arith.negf %799 : vector<4x32xf32>
    %801 = math.exp %800 : vector<4x32xf32>
    %cst_165 = arith.constant 1.000000e+00 : f32
    %802 = vector.broadcast %cst_165 : f32 to vector<4x32xf32>
    %803 = arith.addf %802, %801 : vector<4x32xf32>
    %804 = arith.divf %802, %803 : vector<4x32xf32>
    %805 = vector.extract_strided_slice %792 {offsets = [0, 64], sizes = [4, 32], strides = [1, 1]} : vector<4x128xf32> to vector<4x32xf32>
    %806 = math.tanh %805 : vector<4x32xf32>
    %807 = vector.extract_strided_slice %792 {offsets = [0, 96], sizes = [4, 32], strides = [1, 1]} : vector<4x128xf32> to vector<4x32xf32>
    %808 = arith.negf %807 : vector<4x32xf32>
    %809 = math.exp %808 : vector<4x32xf32>
    %cst_166 = arith.constant 1.000000e+00 : f32
    %810 = vector.broadcast %cst_166 : f32 to vector<4x32xf32>
    %811 = arith.addf %810, %809 : vector<4x32xf32>
    %812 = arith.divf %810, %811 : vector<4x32xf32>
    %813 = arith.mulf %804, %740 : vector<4x32xf32>
    %814 = arith.mulf %798, %806 : vector<4x32xf32>
    %815 = arith.addf %813, %814 : vector<4x32xf32>
    %816 = math.tanh %815 : vector<4x32xf32>
    %817 = arith.mulf %812, %816 : vector<4x32xf32>
    %c12_167 = arith.constant 12 : index
    %c0_168 = arith.constant 0 : index
    %818 = vector.load %arg25[%c12_167, %c0_168] : memref<32x32xf32, #tpu.memory_space<vmem>>, vector<4x32xf32>
    tpu.vector_store %arg25[%c12_167, %c0_168], %817 {strides = array<i32>} : memref<32x32xf32, #tpu.memory_space<vmem>>, vector<4x32xf32>,
    %819 = arith.truncf %772 : vector<4x32xf32> to vector<4x32xbf16>
    %cst_169 = arith.constant dense<0.000000e+00> : vector<4x128xf32>
    %820 = tpu.matmul %819, %0, %cst_169 {dimension_numbers = #tpu.dot_dimension_numbers<[1], [0], [0], [1], [0, 0, 1, 1], [], []>} : vector<4x32xbf16>, vector<32x128xbf16>, vector<4x128xf32> -> vector<4x128xf32>
    %821 = vector.broadcast %1 : vector<1x128xf32> to vector<4x128xf32>
    %822 = arith.addf %820, %821 : vector<4x128xf32>
    %823 = vector.extract_strided_slice %822 {offsets = [0, 0], sizes = [4, 32], strides = [1, 1]} : vector<4x128xf32> to vector<4x32xf32>
    %824 = arith.negf %823 : vector<4x32xf32>
    %825 = math.exp %824 : vector<4x32xf32>
    %cst_170 = arith.constant 1.000000e+00 : f32
    %826 = vector.broadcast %cst_170 : f32 to vector<4x32xf32>
    %827 = arith.addf %826, %825 : vector<4x32xf32>
    %828 = arith.divf %826, %827 : vector<4x32xf32>
    %829 = vector.extract_strided_slice %822 {offsets = [0, 32], sizes = [4, 32], strides = [1, 1]} : vector<4x128xf32> to vector<4x32xf32>
    %830 = arith.negf %829 : vector<4x32xf32>
    %831 = math.exp %830 : vector<4x32xf32>
    %cst_171 = arith.constant 1.000000e+00 : f32
    %832 = vector.broadcast %cst_171 : f32 to vector<4x32xf32>
    %833 = arith.addf %832, %831 : vector<4x32xf32>
    %834 = arith.divf %832, %833 : vector<4x32xf32>
    %835 = vector.extract_strided_slice %822 {offsets = [0, 64], sizes = [4, 32], strides = [1, 1]} : vector<4x128xf32> to vector<4x32xf32>
    %836 = math.tanh %835 : vector<4x32xf32>
    %837 = vector.extract_strided_slice %822 {offsets = [0, 96], sizes = [4, 32], strides = [1, 1]} : vector<4x128xf32> to vector<4x32xf32>
    %838 = arith.negf %837 : vector<4x32xf32>
    %839 = math.exp %838 : vector<4x32xf32>
    %cst_172 = arith.constant 1.000000e+00 : f32
    %840 = vector.broadcast %cst_172 : f32 to vector<4x32xf32>
    %841 = arith.addf %840, %839 : vector<4x32xf32>
    %842 = arith.divf %840, %841 : vector<4x32xf32>
    %843 = arith.mulf %834, %770 : vector<4x32xf32>
    %844 = arith.mulf %828, %836 : vector<4x32xf32>
    %845 = arith.addf %843, %844 : vector<4x32xf32>
    %846 = math.tanh %845 : vector<4x32xf32>
    %847 = arith.mulf %842, %846 : vector<4x32xf32>
    %848 = arith.truncf %817 : vector<4x32xf32> to vector<4x32xbf16>
    %cst_173 = arith.constant dense<0.000000e+00> : vector<4x1xf32>
    %849 = tpu.matmul %848, %4, %cst_173 {dimension_numbers = #tpu.dot_dimension_numbers<[1], [0], [0], [1], [0, 0, 1, 1], [], []>} : vector<4x32xbf16>, vector<32x1xbf16>, vector<4x1xf32> -> vector<4x1xf32>
    %850 = arith.truncf %849 : vector<4x1xf32> to vector<4x1xbf16>
    %cst_174 = arith.constant dense<0.000000e+00> : vector<32x1xf32>
    %851 = tpu.matmul %7, %850, %cst_174 {dimension_numbers = #tpu.dot_dimension_numbers<[1], [0], [0], [1], [0, 0, 1, 1], [], []>} : vector<32x4xbf16>, vector<4x1xbf16>, vector<32x1xf32> -> vector<32x1xf32>
    %852 = arith.addf %515, %851 : vector<32x1xf32>
    %853 = math.exp %852 : vector<32x1xf32>
    %854 = arith.truncf %853 : vector<32x1xf32> to vector<32x1xbf16>
    %cst_175 = arith.constant dense<0.000000e+00> : vector<32x1xf32>
    %855 = tpu.matmul %6, %854, %cst_175 {dimension_numbers = #tpu.dot_dimension_numbers<[1], [0], [0], [1], [0, 0, 1, 1], [], []>} : vector<32x32xbf16>, vector<32x1xbf16>, vector<32x1xf32> -> vector<32x1xf32>
    %856 = tpu.reciprocal %855 {approx = true} : vector<32x1xf32> -> vector<32x1xf32>
    %857 = arith.mulf %853, %856 : vector<32x1xf32>
    %858 = vector.broadcast %857 : vector<32x1xf32> to vector<32x128xf32>
    %859 = arith.mulf %858, %518 : vector<32x128xf32>
    %860 = arith.truncf %859 : vector<32x128xf32> to vector<32x128xbf16>
    %cst_176 = arith.constant dense<0.000000e+00> : vector<4x128xf32>
    %861 = tpu.matmul %5, %860, %cst_176 {dimension_numbers = #tpu.dot_dimension_numbers<[1], [0], [0], [1], [0, 0, 1, 1], [], []>} : vector<4x32xbf16>, vector<32x128xbf16>, vector<4x128xf32> -> vector<4x128xf32>
    %862 = vector.extract_strided_slice %21 {offsets = [16, 0], sizes = [4, 128], strides = [1, 1]} : vector<32x128xf32> to vector<4x128xf32>
    %863 = arith.addf %862, %861 : vector<4x128xf32>
    %864 = tpu.concatenate %847, %817 in 1 : vector<4x32xf32>, vector<4x32xf32> -> vector<4x64xf32>
    %865 = arith.truncf %864 : vector<4x64xf32> to vector<4x64xbf16>
    %cst_177 = arith.constant dense<0.000000e+00> : vector<4x128xf32>
    %866 = tpu.matmul %865, %2, %cst_177 {dimension_numbers = #tpu.dot_dimension_numbers<[1], [0], [0], [1], [0, 0, 1, 1], [], []>} : vector<4x64xbf16>, vector<64x128xbf16>, vector<4x128xf32> -> vector<4x128xf32>
    %867 = arith.addf %863, %866 : vector<4x128xf32>
    %868 = vector.extract_strided_slice %867 {offsets = [0, 0], sizes = [4, 32], strides = [1, 1]} : vector<4x128xf32> to vector<4x32xf32>
    %869 = arith.negf %868 : vector<4x32xf32>
    %870 = math.exp %869 : vector<4x32xf32>
    %cst_178 = arith.constant 1.000000e+00 : f32
    %871 = vector.broadcast %cst_178 : f32 to vector<4x32xf32>
    %872 = arith.addf %871, %870 : vector<4x32xf32>
    %873 = arith.divf %871, %872 : vector<4x32xf32>
    %874 = vector.extract_strided_slice %867 {offsets = [0, 32], sizes = [4, 32], strides = [1, 1]} : vector<4x128xf32> to vector<4x32xf32>
    %875 = arith.negf %874 : vector<4x32xf32>
    %876 = math.exp %875 : vector<4x32xf32>
    %cst_179 = arith.constant 1.000000e+00 : f32
    %877 = vector.broadcast %cst_179 : f32 to vector<4x32xf32>
    %878 = arith.addf %877, %876 : vector<4x32xf32>
    %879 = arith.divf %877, %878 : vector<4x32xf32>
    %880 = vector.extract_strided_slice %867 {offsets = [0, 64], sizes = [4, 32], strides = [1, 1]} : vector<4x128xf32> to vector<4x32xf32>
    %881 = math.tanh %880 : vector<4x32xf32>
    %882 = vector.extract_strided_slice %867 {offsets = [0, 96], sizes = [4, 32], strides = [1, 1]} : vector<4x128xf32> to vector<4x32xf32>
    %883 = arith.negf %882 : vector<4x32xf32>
    %884 = math.exp %883 : vector<4x32xf32>
    %cst_180 = arith.constant 1.000000e+00 : f32
    %885 = vector.broadcast %cst_180 : f32 to vector<4x32xf32>
    %886 = arith.addf %885, %884 : vector<4x32xf32>
    %887 = arith.divf %885, %886 : vector<4x32xf32>
    %888 = arith.mulf %879, %815 : vector<4x32xf32>
    %889 = arith.mulf %873, %881 : vector<4x32xf32>
    %890 = arith.addf %888, %889 : vector<4x32xf32>
    %891 = math.tanh %890 : vector<4x32xf32>
    %892 = arith.mulf %887, %891 : vector<4x32xf32>
    %c16_181 = arith.constant 16 : index
    %c0_182 = arith.constant 0 : index
    %893 = vector.load %arg25[%c16_181, %c0_182] : memref<32x32xf32, #tpu.memory_space<vmem>>, vector<4x32xf32>
    tpu.vector_store %arg25[%c16_181, %c0_182], %892 {strides = array<i32>} : memref<32x32xf32, #tpu.memory_space<vmem>>, vector<4x32xf32>,
    %894 = arith.truncf %847 : vector<4x32xf32> to vector<4x32xbf16>
    %cst_183 = arith.constant dense<0.000000e+00> : vector<4x128xf32>
    %895 = tpu.matmul %894, %0, %cst_183 {dimension_numbers = #tpu.dot_dimension_numbers<[1], [0], [0], [1], [0, 0, 1, 1], [], []>} : vector<4x32xbf16>, vector<32x128xbf16>, vector<4x128xf32> -> vector<4x128xf32>
    %896 = vector.broadcast %1 : vector<1x128xf32> to vector<4x128xf32>
    %897 = arith.addf %895, %896 : vector<4x128xf32>
    %898 = vector.extract_strided_slice %897 {offsets = [0, 0], sizes = [4, 32], strides = [1, 1]} : vector<4x128xf32> to vector<4x32xf32>
    %899 = arith.negf %898 : vector<4x32xf32>
    %900 = math.exp %899 : vector<4x32xf32>
    %cst_184 = arith.constant 1.000000e+00 : f32
    %901 = vector.broadcast %cst_184 : f32 to vector<4x32xf32>
    %902 = arith.addf %901, %900 : vector<4x32xf32>
    %903 = arith.divf %901, %902 : vector<4x32xf32>
    %904 = vector.extract_strided_slice %897 {offsets = [0, 32], sizes = [4, 32], strides = [1, 1]} : vector<4x128xf32> to vector<4x32xf32>
    %905 = arith.negf %904 : vector<4x32xf32>
    %906 = math.exp %905 : vector<4x32xf32>
    %cst_185 = arith.constant 1.000000e+00 : f32
    %907 = vector.broadcast %cst_185 : f32 to vector<4x32xf32>
    %908 = arith.addf %907, %906 : vector<4x32xf32>
    %909 = arith.divf %907, %908 : vector<4x32xf32>
    %910 = vector.extract_strided_slice %897 {offsets = [0, 64], sizes = [4, 32], strides = [1, 1]} : vector<4x128xf32> to vector<4x32xf32>
    %911 = math.tanh %910 : vector<4x32xf32>
    %912 = vector.extract_strided_slice %897 {offsets = [0, 96], sizes = [4, 32], strides = [1, 1]} : vector<4x128xf32> to vector<4x32xf32>
    %913 = arith.negf %912 : vector<4x32xf32>
    %914 = math.exp %913 : vector<4x32xf32>
    %cst_186 = arith.constant 1.000000e+00 : f32
    %915 = vector.broadcast %cst_186 : f32 to vector<4x32xf32>
    %916 = arith.addf %915, %914 : vector<4x32xf32>
    %917 = arith.divf %915, %916 : vector<4x32xf32>
    %918 = arith.mulf %909, %845 : vector<4x32xf32>
    %919 = arith.mulf %903, %911 : vector<4x32xf32>
    %920 = arith.addf %918, %919 : vector<4x32xf32>
    %921 = math.tanh %920 : vector<4x32xf32>
    %922 = arith.mulf %917, %921 : vector<4x32xf32>
    %923 = arith.truncf %892 : vector<4x32xf32> to vector<4x32xbf16>
    %cst_187 = arith.constant dense<0.000000e+00> : vector<4x1xf32>
    %924 = tpu.matmul %923, %4, %cst_187 {dimension_numbers = #tpu.dot_dimension_numbers<[1], [0], [0], [1], [0, 0, 1, 1], [], []>} : vector<4x32xbf16>, vector<32x1xbf16>, vector<4x1xf32> -> vector<4x1xf32>
    %925 = arith.truncf %924 : vector<4x1xf32> to vector<4x1xbf16>
    %cst_188 = arith.constant dense<0.000000e+00> : vector<32x1xf32>
    %926 = tpu.matmul %7, %925, %cst_188 {dimension_numbers = #tpu.dot_dimension_numbers<[1], [0], [0], [1], [0, 0, 1, 1], [], []>} : vector<32x4xbf16>, vector<4x1xbf16>, vector<32x1xf32> -> vector<32x1xf32>
    %927 = arith.addf %515, %926 : vector<32x1xf32>
    %928 = math.exp %927 : vector<32x1xf32>
    %929 = arith.truncf %928 : vector<32x1xf32> to vector<32x1xbf16>
    %cst_189 = arith.constant dense<0.000000e+00> : vector<32x1xf32>
    %930 = tpu.matmul %6, %929, %cst_189 {dimension_numbers = #tpu.dot_dimension_numbers<[1], [0], [0], [1], [0, 0, 1, 1], [], []>} : vector<32x32xbf16>, vector<32x1xbf16>, vector<32x1xf32> -> vector<32x1xf32>
    %931 = tpu.reciprocal %930 {approx = true} : vector<32x1xf32> -> vector<32x1xf32>
    %932 = arith.mulf %928, %931 : vector<32x1xf32>
    %933 = vector.broadcast %932 : vector<32x1xf32> to vector<32x128xf32>
    %934 = arith.mulf %933, %518 : vector<32x128xf32>
    %935 = arith.truncf %934 : vector<32x128xf32> to vector<32x128xbf16>
    %cst_190 = arith.constant dense<0.000000e+00> : vector<4x128xf32>
    %936 = tpu.matmul %5, %935, %cst_190 {dimension_numbers = #tpu.dot_dimension_numbers<[1], [0], [0], [1], [0, 0, 1, 1], [], []>} : vector<4x32xbf16>, vector<32x128xbf16>, vector<4x128xf32> -> vector<4x128xf32>
    %937 = vector.extract_strided_slice %21 {offsets = [20, 0], sizes = [4, 128], strides = [1, 1]} : vector<32x128xf32> to vector<4x128xf32>
    %938 = arith.addf %937, %936 : vector<4x128xf32>
    %939 = tpu.concatenate %922, %892 in 1 : vector<4x32xf32>, vector<4x32xf32> -> vector<4x64xf32>
    %940 = arith.truncf %939 : vector<4x64xf32> to vector<4x64xbf16>
    %cst_191 = arith.constant dense<0.000000e+00> : vector<4x128xf32>
    %941 = tpu.matmul %940, %2, %cst_191 {dimension_numbers = #tpu.dot_dimension_numbers<[1], [0], [0], [1], [0, 0, 1, 1], [], []>} : vector<4x64xbf16>, vector<64x128xbf16>, vector<4x128xf32> -> vector<4x128xf32>
    %942 = arith.addf %938, %941 : vector<4x128xf32>
    %943 = vector.extract_strided_slice %942 {offsets = [0, 0], sizes = [4, 32], strides = [1, 1]} : vector<4x128xf32> to vector<4x32xf32>
    %944 = arith.negf %943 : vector<4x32xf32>
    %945 = math.exp %944 : vector<4x32xf32>
    %cst_192 = arith.constant 1.000000e+00 : f32
    %946 = vector.broadcast %cst_192 : f32 to vector<4x32xf32>
    %947 = arith.addf %946, %945 : vector<4x32xf32>
    %948 = arith.divf %946, %947 : vector<4x32xf32>
    %949 = vector.extract_strided_slice %942 {offsets = [0, 32], sizes = [4, 32], strides = [1, 1]} : vector<4x128xf32> to vector<4x32xf32>
    %950 = arith.negf %949 : vector<4x32xf32>
    %951 = math.exp %950 : vector<4x32xf32>
    %cst_193 = arith.constant 1.000000e+00 : f32
    %952 = vector.broadcast %cst_193 : f32 to vector<4x32xf32>
    %953 = arith.addf %952, %951 : vector<4x32xf32>
    %954 = arith.divf %952, %953 : vector<4x32xf32>
    %955 = vector.extract_strided_slice %942 {offsets = [0, 64], sizes = [4, 32], strides = [1, 1]} : vector<4x128xf32> to vector<4x32xf32>
    %956 = math.tanh %955 : vector<4x32xf32>
    %957 = vector.extract_strided_slice %942 {offsets = [0, 96], sizes = [4, 32], strides = [1, 1]} : vector<4x128xf32> to vector<4x32xf32>
    %958 = arith.negf %957 : vector<4x32xf32>
    %959 = math.exp %958 : vector<4x32xf32>
    %cst_194 = arith.constant 1.000000e+00 : f32
    %960 = vector.broadcast %cst_194 : f32 to vector<4x32xf32>
    %961 = arith.addf %960, %959 : vector<4x32xf32>
    %962 = arith.divf %960, %961 : vector<4x32xf32>
    %963 = arith.mulf %954, %890 : vector<4x32xf32>
    %964 = arith.mulf %948, %956 : vector<4x32xf32>
    %965 = arith.addf %963, %964 : vector<4x32xf32>
    %966 = math.tanh %965 : vector<4x32xf32>
    %967 = arith.mulf %962, %966 : vector<4x32xf32>
    %c20_195 = arith.constant 20 : index
    %c0_196 = arith.constant 0 : index
    %968 = vector.load %arg25[%c20_195, %c0_196] : memref<32x32xf32, #tpu.memory_space<vmem>>, vector<4x32xf32>
    tpu.vector_store %arg25[%c20_195, %c0_196], %967 {strides = array<i32>} : memref<32x32xf32, #tpu.memory_space<vmem>>, vector<4x32xf32>,
    %969 = arith.truncf %922 : vector<4x32xf32> to vector<4x32xbf16>
    %cst_197 = arith.constant dense<0.000000e+00> : vector<4x128xf32>
    %970 = tpu.matmul %969, %0, %cst_197 {dimension_numbers = #tpu.dot_dimension_numbers<[1], [0], [0], [1], [0, 0, 1, 1], [], []>} : vector<4x32xbf16>, vector<32x128xbf16>, vector<4x128xf32> -> vector<4x128xf32>
    %971 = vector.broadcast %1 : vector<1x128xf32> to vector<4x128xf32>
    %972 = arith.addf %970, %971 : vector<4x128xf32>
    %973 = vector.extract_strided_slice %972 {offsets = [0, 0], sizes = [4, 32], strides = [1, 1]} : vector<4x128xf32> to vector<4x32xf32>
    %974 = arith.negf %973 : vector<4x32xf32>
    %975 = math.exp %974 : vector<4x32xf32>
    %cst_198 = arith.constant 1.000000e+00 : f32
    %976 = vector.broadcast %cst_198 : f32 to vector<4x32xf32>
    %977 = arith.addf %976, %975 : vector<4x32xf32>
    %978 = arith.divf %976, %977 : vector<4x32xf32>
    %979 = vector.extract_strided_slice %972 {offsets = [0, 32], sizes = [4, 32], strides = [1, 1]} : vector<4x128xf32> to vector<4x32xf32>
    %980 = arith.negf %979 : vector<4x32xf32>
    %981 = math.exp %980 : vector<4x32xf32>
    %cst_199 = arith.constant 1.000000e+00 : f32
    %982 = vector.broadcast %cst_199 : f32 to vector<4x32xf32>
    %983 = arith.addf %982, %981 : vector<4x32xf32>
    %984 = arith.divf %982, %983 : vector<4x32xf32>
    %985 = vector.extract_strided_slice %972 {offsets = [0, 64], sizes = [4, 32], strides = [1, 1]} : vector<4x128xf32> to vector<4x32xf32>
    %986 = math.tanh %985 : vector<4x32xf32>
    %987 = vector.extract_strided_slice %972 {offsets = [0, 96], sizes = [4, 32], strides = [1, 1]} : vector<4x128xf32> to vector<4x32xf32>
    %988 = arith.negf %987 : vector<4x32xf32>
    %989 = math.exp %988 : vector<4x32xf32>
    %cst_200 = arith.constant 1.000000e+00 : f32
    %990 = vector.broadcast %cst_200 : f32 to vector<4x32xf32>
    %991 = arith.addf %990, %989 : vector<4x32xf32>
    %992 = arith.divf %990, %991 : vector<4x32xf32>
    %993 = arith.mulf %984, %920 : vector<4x32xf32>
    %994 = arith.mulf %978, %986 : vector<4x32xf32>
    %995 = arith.addf %993, %994 : vector<4x32xf32>
    %996 = math.tanh %995 : vector<4x32xf32>
    %997 = arith.mulf %992, %996 : vector<4x32xf32>
    %998 = arith.truncf %967 : vector<4x32xf32> to vector<4x32xbf16>
    %cst_201 = arith.constant dense<0.000000e+00> : vector<4x1xf32>
    %999 = tpu.matmul %998, %4, %cst_201 {dimension_numbers = #tpu.dot_dimension_numbers<[1], [0], [0], [1], [0, 0, 1, 1], [], []>} : vector<4x32xbf16>, vector<32x1xbf16>, vector<4x1xf32> -> vector<4x1xf32>
    %1000 = arith.truncf %999 : vector<4x1xf32> to vector<4x1xbf16>
    %cst_202 = arith.constant dense<0.000000e+00> : vector<32x1xf32>
    %1001 = tpu.matmul %7, %1000, %cst_202 {dimension_numbers = #tpu.dot_dimension_numbers<[1], [0], [0], [1], [0, 0, 1, 1], [], []>} : vector<32x4xbf16>, vector<4x1xbf16>, vector<32x1xf32> -> vector<32x1xf32>
    %1002 = arith.addf %515, %1001 : vector<32x1xf32>
    %1003 = math.exp %1002 : vector<32x1xf32>
    %1004 = arith.truncf %1003 : vector<32x1xf32> to vector<32x1xbf16>
    %cst_203 = arith.constant dense<0.000000e+00> : vector<32x1xf32>
    %1005 = tpu.matmul %6, %1004, %cst_203 {dimension_numbers = #tpu.dot_dimension_numbers<[1], [0], [0], [1], [0, 0, 1, 1], [], []>} : vector<32x32xbf16>, vector<32x1xbf16>, vector<32x1xf32> -> vector<32x1xf32>
    %1006 = tpu.reciprocal %1005 {approx = true} : vector<32x1xf32> -> vector<32x1xf32>
    %1007 = arith.mulf %1003, %1006 : vector<32x1xf32>
    %1008 = vector.broadcast %1007 : vector<32x1xf32> to vector<32x128xf32>
    %1009 = arith.mulf %1008, %518 : vector<32x128xf32>
    %1010 = arith.truncf %1009 : vector<32x128xf32> to vector<32x128xbf16>
    %cst_204 = arith.constant dense<0.000000e+00> : vector<4x128xf32>
    %1011 = tpu.matmul %5, %1010, %cst_204 {dimension_numbers = #tpu.dot_dimension_numbers<[1], [0], [0], [1], [0, 0, 1, 1], [], []>} : vector<4x32xbf16>, vector<32x128xbf16>, vector<4x128xf32> -> vector<4x128xf32>
    %1012 = vector.extract_strided_slice %21 {offsets = [24, 0], sizes = [4, 128], strides = [1, 1]} : vector<32x128xf32> to vector<4x128xf32>
    %1013 = arith.addf %1012, %1011 : vector<4x128xf32>
    %1014 = tpu.concatenate %997, %967 in 1 : vector<4x32xf32>, vector<4x32xf32> -> vector<4x64xf32>
    %1015 = arith.truncf %1014 : vector<4x64xf32> to vector<4x64xbf16>
    %cst_205 = arith.constant dense<0.000000e+00> : vector<4x128xf32>
    %1016 = tpu.matmul %1015, %2, %cst_205 {dimension_numbers = #tpu.dot_dimension_numbers<[1], [0], [0], [1], [0, 0, 1, 1], [], []>} : vector<4x64xbf16>, vector<64x128xbf16>, vector<4x128xf32> -> vector<4x128xf32>
    %1017 = arith.addf %1013, %1016 : vector<4x128xf32>
    %1018 = vector.extract_strided_slice %1017 {offsets = [0, 0], sizes = [4, 32], strides = [1, 1]} : vector<4x128xf32> to vector<4x32xf32>
    %1019 = arith.negf %1018 : vector<4x32xf32>
    %1020 = math.exp %1019 : vector<4x32xf32>
    %cst_206 = arith.constant 1.000000e+00 : f32
    %1021 = vector.broadcast %cst_206 : f32 to vector<4x32xf32>
    %1022 = arith.addf %1021, %1020 : vector<4x32xf32>
    %1023 = arith.divf %1021, %1022 : vector<4x32xf32>
    %1024 = vector.extract_strided_slice %1017 {offsets = [0, 32], sizes = [4, 32], strides = [1, 1]} : vector<4x128xf32> to vector<4x32xf32>
    %1025 = arith.negf %1024 : vector<4x32xf32>
    %1026 = math.exp %1025 : vector<4x32xf32>
    %cst_207 = arith.constant 1.000000e+00 : f32
    %1027 = vector.broadcast %cst_207 : f32 to vector<4x32xf32>
    %1028 = arith.addf %1027, %1026 : vector<4x32xf32>
    %1029 = arith.divf %1027, %1028 : vector<4x32xf32>
    %1030 = vector.extract_strided_slice %1017 {offsets = [0, 64], sizes = [4, 32], strides = [1, 1]} : vector<4x128xf32> to vector<4x32xf32>
    %1031 = math.tanh %1030 : vector<4x32xf32>
    %1032 = vector.extract_strided_slice %1017 {offsets = [0, 96], sizes = [4, 32], strides = [1, 1]} : vector<4x128xf32> to vector<4x32xf32>
    %1033 = arith.negf %1032 : vector<4x32xf32>
    %1034 = math.exp %1033 : vector<4x32xf32>
    %cst_208 = arith.constant 1.000000e+00 : f32
    %1035 = vector.broadcast %cst_208 : f32 to vector<4x32xf32>
    %1036 = arith.addf %1035, %1034 : vector<4x32xf32>
    %1037 = arith.divf %1035, %1036 : vector<4x32xf32>
    %1038 = arith.mulf %1029, %965 : vector<4x32xf32>
    %1039 = arith.mulf %1023, %1031 : vector<4x32xf32>
    %1040 = arith.addf %1038, %1039 : vector<4x32xf32>
    %1041 = math.tanh %1040 : vector<4x32xf32>
    %1042 = arith.mulf %1037, %1041 : vector<4x32xf32>
    %c24_209 = arith.constant 24 : index
    %c0_210 = arith.constant 0 : index
    %1043 = vector.load %arg25[%c24_209, %c0_210] : memref<32x32xf32, #tpu.memory_space<vmem>>, vector<4x32xf32>
    tpu.vector_store %arg25[%c24_209, %c0_210], %1042 {strides = array<i32>} : memref<32x32xf32, #tpu.memory_space<vmem>>, vector<4x32xf32>,
    %1044 = arith.truncf %997 : vector<4x32xf32> to vector<4x32xbf16>
    %cst_211 = arith.constant dense<0.000000e+00> : vector<4x128xf32>
    %1045 = tpu.matmul %1044, %0, %cst_211 {dimension_numbers = #tpu.dot_dimension_numbers<[1], [0], [0], [1], [0, 0, 1, 1], [], []>} : vector<4x32xbf16>, vector<32x128xbf16>, vector<4x128xf32> -> vector<4x128xf32>
    %1046 = vector.broadcast %1 : vector<1x128xf32> to vector<4x128xf32>
    %1047 = arith.addf %1045, %1046 : vector<4x128xf32>
    %1048 = vector.extract_strided_slice %1047 {offsets = [0, 0], sizes = [4, 32], strides = [1, 1]} : vector<4x128xf32> to vector<4x32xf32>
    %1049 = arith.negf %1048 : vector<4x32xf32>
    %1050 = math.exp %1049 : vector<4x32xf32>
    %cst_212 = arith.constant 1.000000e+00 : f32
    %1051 = vector.broadcast %cst_212 : f32 to vector<4x32xf32>
    %1052 = arith.addf %1051, %1050 : vector<4x32xf32>
    %1053 = arith.divf %1051, %1052 : vector<4x32xf32>
    %1054 = vector.extract_strided_slice %1047 {offsets = [0, 32], sizes = [4, 32], strides = [1, 1]} : vector<4x128xf32> to vector<4x32xf32>
    %1055 = arith.negf %1054 : vector<4x32xf32>
    %1056 = math.exp %1055 : vector<4x32xf32>
    %cst_213 = arith.constant 1.000000e+00 : f32
    %1057 = vector.broadcast %cst_213 : f32 to vector<4x32xf32>
    %1058 = arith.addf %1057, %1056 : vector<4x32xf32>
    %1059 = arith.divf %1057, %1058 : vector<4x32xf32>
    %1060 = vector.extract_strided_slice %1047 {offsets = [0, 64], sizes = [4, 32], strides = [1, 1]} : vector<4x128xf32> to vector<4x32xf32>
    %1061 = math.tanh %1060 : vector<4x32xf32>
    %1062 = vector.extract_strided_slice %1047 {offsets = [0, 96], sizes = [4, 32], strides = [1, 1]} : vector<4x128xf32> to vector<4x32xf32>
    %1063 = arith.negf %1062 : vector<4x32xf32>
    %1064 = math.exp %1063 : vector<4x32xf32>
    %cst_214 = arith.constant 1.000000e+00 : f32
    %1065 = vector.broadcast %cst_214 : f32 to vector<4x32xf32>
    %1066 = arith.addf %1065, %1064 : vector<4x32xf32>
    %1067 = arith.divf %1065, %1066 : vector<4x32xf32>
    %1068 = arith.mulf %1059, %995 : vector<4x32xf32>
    %1069 = arith.mulf %1053, %1061 : vector<4x32xf32>
    %1070 = arith.addf %1068, %1069 : vector<4x32xf32>
    %1071 = math.tanh %1070 : vector<4x32xf32>
    %1072 = arith.mulf %1067, %1071 : vector<4x32xf32>
    %1073 = arith.truncf %1042 : vector<4x32xf32> to vector<4x32xbf16>
    %cst_215 = arith.constant dense<0.000000e+00> : vector<4x1xf32>
    %1074 = tpu.matmul %1073, %4, %cst_215 {dimension_numbers = #tpu.dot_dimension_numbers<[1], [0], [0], [1], [0, 0, 1, 1], [], []>} : vector<4x32xbf16>, vector<32x1xbf16>, vector<4x1xf32> -> vector<4x1xf32>
    %1075 = arith.truncf %1074 : vector<4x1xf32> to vector<4x1xbf16>
    %cst_216 = arith.constant dense<0.000000e+00> : vector<32x1xf32>
    %1076 = tpu.matmul %7, %1075, %cst_216 {dimension_numbers = #tpu.dot_dimension_numbers<[1], [0], [0], [1], [0, 0, 1, 1], [], []>} : vector<32x4xbf16>, vector<4x1xbf16>, vector<32x1xf32> -> vector<32x1xf32>
    %1077 = arith.addf %515, %1076 : vector<32x1xf32>
    %1078 = math.exp %1077 : vector<32x1xf32>
    %1079 = arith.truncf %1078 : vector<32x1xf32> to vector<32x1xbf16>
    %cst_217 = arith.constant dense<0.000000e+00> : vector<32x1xf32>
    %1080 = tpu.matmul %6, %1079, %cst_217 {dimension_numbers = #tpu.dot_dimension_numbers<[1], [0], [0], [1], [0, 0, 1, 1], [], []>} : vector<32x32xbf16>, vector<32x1xbf16>, vector<32x1xf32> -> vector<32x1xf32>
    %1081 = tpu.reciprocal %1080 {approx = true} : vector<32x1xf32> -> vector<32x1xf32>
    %1082 = arith.mulf %1078, %1081 : vector<32x1xf32>
    %1083 = vector.broadcast %1082 : vector<32x1xf32> to vector<32x128xf32>
    %1084 = arith.mulf %1083, %518 : vector<32x128xf32>
    %1085 = arith.truncf %1084 : vector<32x128xf32> to vector<32x128xbf16>
    %cst_218 = arith.constant dense<0.000000e+00> : vector<4x128xf32>
    %1086 = tpu.matmul %5, %1085, %cst_218 {dimension_numbers = #tpu.dot_dimension_numbers<[1], [0], [0], [1], [0, 0, 1, 1], [], []>} : vector<4x32xbf16>, vector<32x128xbf16>, vector<4x128xf32> -> vector<4x128xf32>
    %1087 = vector.extract_strided_slice %21 {offsets = [28, 0], sizes = [4, 128], strides = [1, 1]} : vector<32x128xf32> to vector<4x128xf32>
    %1088 = arith.addf %1087, %1086 : vector<4x128xf32>
    %1089 = tpu.concatenate %1072, %1042 in 1 : vector<4x32xf32>, vector<4x32xf32> -> vector<4x64xf32>
    %1090 = arith.truncf %1089 : vector<4x64xf32> to vector<4x64xbf16>
    %cst_219 = arith.constant dense<0.000000e+00> : vector<4x128xf32>
    %1091 = tpu.matmul %1090, %2, %cst_219 {dimension_numbers = #tpu.dot_dimension_numbers<[1], [0], [0], [1], [0, 0, 1, 1], [], []>} : vector<4x64xbf16>, vector<64x128xbf16>, vector<4x128xf32> -> vector<4x128xf32>
    %1092 = arith.addf %1088, %1091 : vector<4x128xf32>
    %1093 = vector.extract_strided_slice %1092 {offsets = [0, 0], sizes = [4, 32], strides = [1, 1]} : vector<4x128xf32> to vector<4x32xf32>
    %1094 = arith.negf %1093 : vector<4x32xf32>
    %1095 = math.exp %1094 : vector<4x32xf32>
    %cst_220 = arith.constant 1.000000e+00 : f32
    %1096 = vector.broadcast %cst_220 : f32 to vector<4x32xf32>
    %1097 = arith.addf %1096, %1095 : vector<4x32xf32>
    %1098 = arith.divf %1096, %1097 : vector<4x32xf32>
    %1099 = vector.extract_strided_slice %1092 {offsets = [0, 32], sizes = [4, 32], strides = [1, 1]} : vector<4x128xf32> to vector<4x32xf32>
    %1100 = arith.negf %1099 : vector<4x32xf32>
    %1101 = math.exp %1100 : vector<4x32xf32>
    %cst_221 = arith.constant 1.000000e+00 : f32
    %1102 = vector.broadcast %cst_221 : f32 to vector<4x32xf32>
    %1103 = arith.addf %1102, %1101 : vector<4x32xf32>
    %1104 = arith.divf %1102, %1103 : vector<4x32xf32>
    %1105 = vector.extract_strided_slice %1092 {offsets = [0, 64], sizes = [4, 32], strides = [1, 1]} : vector<4x128xf32> to vector<4x32xf32>
    %1106 = math.tanh %1105 : vector<4x32xf32>
    %1107 = vector.extract_strided_slice %1092 {offsets = [0, 96], sizes = [4, 32], strides = [1, 1]} : vector<4x128xf32> to vector<4x32xf32>
    %1108 = arith.negf %1107 : vector<4x32xf32>
    %1109 = math.exp %1108 : vector<4x32xf32>
    %cst_222 = arith.constant 1.000000e+00 : f32
    %1110 = vector.broadcast %cst_222 : f32 to vector<4x32xf32>
    %1111 = arith.addf %1110, %1109 : vector<4x32xf32>
    %1112 = arith.divf %1110, %1111 : vector<4x32xf32>
    %1113 = arith.mulf %1104, %1040 : vector<4x32xf32>
    %1114 = arith.mulf %1098, %1106 : vector<4x32xf32>
    %1115 = arith.addf %1113, %1114 : vector<4x32xf32>
    %1116 = math.tanh %1115 : vector<4x32xf32>
    %1117 = arith.mulf %1112, %1116 : vector<4x32xf32>
    %c28_223 = arith.constant 28 : index
    %c0_224 = arith.constant 0 : index
    %1118 = vector.load %arg25[%c28_223, %c0_224] : memref<32x32xf32, #tpu.memory_space<vmem>>, vector<4x32xf32>
    tpu.vector_store %arg25[%c28_223, %c0_224], %1117 {strides = array<i32>} : memref<32x32xf32, #tpu.memory_space<vmem>>, vector<4x32xf32>,
    %c0_225 = arith.constant 0 : index
    %c0_226 = arith.constant 0 : index
    %1119 = vector.load %arg25[%c0_225, %c0_226] : memref<32x32xf32, #tpu.memory_space<vmem>>, vector<32x32xf32>
    %c0_227 = arith.constant 0 : index
    %c0_228 = arith.constant 0 : index
    %1120 = vector.load %arg14[%c0_227, %c0_228] : memref<32x128xbf16, #tpu.memory_space<vmem>>, vector<32x128xbf16>
    %1121 = arith.truncf %1119 : vector<32x32xf32> to vector<32x32xbf16>
    %cst_229 = arith.constant dense<0.000000e+00> : vector<32x128xf32>
    %1122 = tpu.matmul %1121, %1120, %cst_229 {dimension_numbers = #tpu.dot_dimension_numbers<[1], [0], [0], [1], [0, 0, 1, 1], [], []>} : vector<32x32xbf16>, vector<32x128xbf16>, vector<32x128xf32> -> vector<32x128xf32>
    %c0_230 = arith.constant 0 : index
    %c0_231 = arith.constant 0 : index
    %1123 = vector.load %arg15[%c0_230, %c0_231] : memref<1x128xf32, #tpu.memory_space<vmem>>, vector<1x128xf32>
    %1124 = vector.broadcast %1123 : vector<1x128xf32> to vector<32x128xf32>
    %1125 = arith.addf %1122, %1124 : vector<32x128xf32>
    %c0_232 = arith.constant 0 : index
    %c0_233 = arith.constant 0 : index
    %1126 = vector.load %arg19[%c0_232, %c0_233] : memref<32x128xf32, #tpu.memory_space<vmem>>, vector<32x128xf32>
    tpu.vector_store %arg19[%c0_232, %c0_233], %1125 {strides = array<i32>} : memref<32x128xf32, #tpu.memory_space<vmem>>, vector<32x128xf32>,
    %c0_234 = arith.constant 0 : index
    %c0_235 = arith.constant 0 : index
    %1127 = vector.load %arg20[%c0_234, %c0_235] : memref<4x32xf32, #tpu.memory_space<vmem>>, vector<4x32xf32>
    tpu.vector_store %arg20[%c0_234, %c0_235], %1072 {strides = array<i32>} : memref<4x32xf32, #tpu.memory_space<vmem>>, vector<4x32xf32>,
    %c0_236 = arith.constant 0 : index
    %c0_237 = arith.constant 0 : index
    %1128 = vector.load %arg21[%c0_236, %c0_237] : memref<4x32xf32, #tpu.memory_space<vmem>>, vector<4x32xf32>
    tpu.vector_store %arg21[%c0_236, %c0_237], %1070 {strides = array<i32>} : memref<4x32xf32, #tpu.memory_space<vmem>>, vector<4x32xf32>,
    %c0_238 = arith.constant 0 : index
    %c0_239 = arith.constant 0 : index
    %1129 = vector.load %arg22[%c0_238, %c0_239] : memref<4x32xf32, #tpu.memory_space<vmem>>, vector<4x32xf32>
    tpu.vector_store %arg22[%c0_238, %c0_239], %1117 {strides = array<i32>} : memref<4x32xf32, #tpu.memory_space<vmem>>, vector<4x32xf32>,
    %c0_240 = arith.constant 0 : index
    %c0_241 = arith.constant 0 : index
    %1130 = vector.load %arg23[%c0_240, %c0_241] : memref<4x32xf32, #tpu.memory_space<vmem>>, vector<4x32xf32>
    tpu.vector_store %arg23[%c0_240, %c0_241], %1115 {strides = array<i32>} : memref<4x32xf32, #tpu.memory_space<vmem>>, vector<4x32xf32>,
    return
  }
}

</mosaic_0001>

<llo_original>
// kernel: tpu_custom_call.1
$region0: #{tpu_custom_call.1}
  #allocation0 [shape = 'u32[]', space=smem, size = 0x4, offset = 0x4, fixed_abs, tag = 'smem constant byte address 0x4 - core index']
  #allocation1 [shape = 'u32[144,128]{1,0:T(1,128)}', space=vmem, size = 0x12000, scoped, tag = 'internal scratch']
  #allocation2 [shape = 'f32[32,32]{1,0:T(8,128)}', space=vmem, size = 0x4000, scoped, tag = 'scratch operand']
  #allocation3 [shape = 'f32[32,32]{1,0:T(8,128)}', space=vmem, size = 0x4000, scoped, tag = 'scratch operand']
  #allocation4 [shape = 'f32[1,1]{1,0:T(1,128)S(1)}', space=vmem, size = 0x200, scoped, tag = 'scoped memory for tpu_custom_call.1']
  %s0 = inlined_call_operand.vmem [shape: f32[32,16], index: 0, kind: input, shape index: {}]
  %s1 = inlined_call_operand.vmem [shape: f32[32,16], index: 1, kind: input, shape index: {}]
  %s2 = inlined_call_operand.vmem [shape: bf16[16,128], index: 2, kind: input, shape index: {}]
  %s3 = inlined_call_operand.vmem [shape: f32[1,128], index: 3, kind: input, shape index: {}]
  %s4 = inlined_call_operand.vmem [shape: bf16[32,128], index: 4, kind: input, shape index: {}]
  %s5 = inlined_call_operand.vmem [shape: f32[1,128], index: 5, kind: input, shape index: {}]
  %s6 = inlined_call_operand.vmem [shape: bf16[64,128], index: 6, kind: input, shape index: {}]
  %s7 = inlined_call_operand.vmem [shape: f32[1,128], index: 7, kind: input, shape index: {}]
  %s8 = inlined_call_operand.vmem [shape: bf16[32,1], index: 8, kind: input, shape index: {}]
  %s9 = inlined_call_operand.vmem [shape: bf16[32,1], index: 9, kind: input, shape index: {}]
  %s10 = inlined_call_operand.<no memory space> [shape: f32[1,1], index: 10, kind: input, shape index: {}]
  %s11 = inlined_call_operand.vmem [shape: bf16[32,128], index: 11, kind: input, shape index: {}]
  %s12 = inlined_call_operand.vmem [shape: bf16[16,128], index: 12, kind: input, shape index: {}]
  %s13 = inlined_call_operand.vmem [shape: f32[1,128], index: 13, kind: input, shape index: {}]
  %s14 = inlined_call_operand.vmem [shape: bf16[32,128], index: 14, kind: input, shape index: {}]
  %s15 = inlined_call_operand.vmem [shape: f32[1,128], index: 15, kind: input, shape index: {}]
  %s16 = inlined_call_operand.vmem [shape: bf16[4,32], index: 16, kind: input, shape index: {}]
  %s17 = inlined_call_operand.vmem [shape: bf16[32,32], index: 17, kind: input, shape index: {}]
  %s18 = inlined_call_operand.vmem [shape: bf16[32,4], index: 18, kind: input, shape index: {}]
  %s19 = inlined_call_operand.hbm [shape: f32[32,128], index: 19, kind: output, shape index: {0}]
  %s20 = inlined_call_operand.hbm [shape: f32[4,32], index: 20, kind: output, shape index: {1}]
  %s21 = inlined_call_operand.hbm [shape: f32[4,32], index: 21, kind: output, shape index: {2}]
  %s22 = inlined_call_operand.hbm [shape: f32[4,32], index: 22, kind: output, shape index: {3}]
  %s23 = inlined_call_operand.hbm [shape: f32[4,32], index: 23, kind: output, shape index: {4}]
  %24 = xla_tuple %s19, %s20, %s21, %s22, %s23
  %s25 = sld [smem:[#allocation0]]
  $region118: #{tpu_custom_call.1} parent=0
    _
  %s27 = ssub.s32 1, %s25
  %s28 = scalar_select 0, %s27, %s25
  %v29 = vstv %s10
  %30 = vst [vmem:[#allocation4] sm:$0x1] %v29
  $region1: #{tpu_custom_call.1} parent=0
    #allocation5 [shape = 'u8[16384]{0}', space=vmem, size = 0x4000, scoped, tag = 'output window, operand 0, single buffered']
    #allocation6 [shape = 's32[1]{0}', space=sflag, size = 0x4, scoped, tag = 'scoped memory for tpu_custom_call.1']
    #allocation7 [shape = 'u8[2048]{0}', space=vmem, size = 0x800, scoped, tag = 'output window, operand 1, single buffered']
    #allocation8 [shape = 's32[1]{0}', space=sflag, size = 0x4, scoped, tag = 'scoped memory for tpu_custom_call.1']
    #allocation9 [shape = 'u8[2048]{0}', space=vmem, size = 0x800, scoped, tag = 'output window, operand 2, single buffered']
    #allocation10 [shape = 'u8[2048]{0}', space=vmem, size = 0x800, scoped, tag = 'output window, operand 3, single buffered']
    #allocation11 [shape = 's32[1]{0}', space=sflag, size = 0x4, scoped, tag = 'scoped memory for tpu_custom_call.1']
    #allocation12 [shape = 'u8[2048]{0}', space=vmem, size = 0x800, scoped, tag = 'output window, operand 4, single buffered']
    %31 = vsyncpa [#allocation6], 0
    %32 = vsyncpa [#allocation8], 0
    %33 = vsyncpa [#allocation11], 0
    // Predicated region
    $region2: #{tpu_custom_call.1} parent=1 // pred_check
      _
    $region3: #{tpu_custom_call.1} parent=1 // pred_check_branch
      %35 = sbr.rel (0) target = $region5
    $region4: #{tpu_custom_call.1} parent=1 // pred_region
      _
    $region5: #{tpu_custom_call.1} parent=1 // pred_fallthru
      _
    // Predicated region
    $region6: #{tpu_custom_call.1} parent=1 // pred_check
      _
    $region7: #{tpu_custom_call.1} parent=1 // pred_check_branch
      %37 = sbr.rel (0) target = $region9
    $region8: #{tpu_custom_call.1} parent=1 // pred_region
      _
    $region9: #{tpu_custom_call.1} parent=1 // pred_fallthru
      _
    // Predicated region
    $region10: #{tpu_custom_call.1} parent=1 // pred_check
      _
    $region11: #{tpu_custom_call.1} parent=1 // pred_check_branch
      %39 = sbr.rel (0) target = $region13
    $region12: #{tpu_custom_call.1} parent=1 // pred_region
      _
    $region13: #{tpu_custom_call.1} parent=1 // pred_fallthru
      _
    // Predicated region
    $region14: #{tpu_custom_call.1} parent=1 // pred_check
      _
    $region15: #{tpu_custom_call.1} parent=1 // pred_check_branch
      %41 = sbr.rel (0) target = $region17
    $region16: #{tpu_custom_call.1} parent=1 // pred_region
      _
    $region17: #{tpu_custom_call.1} parent=1 // pred_fallthru
      _
    // Predicated region
    $region18: #{tpu_custom_call.1} parent=1 // pred_check
      _
    $region19: #{tpu_custom_call.1} parent=1 // pred_check_branch
      %43 = sbr.rel (0) target = $region21
    $region20: #{tpu_custom_call.1} parent=1 // pred_region
      _
    $region21: #{tpu_custom_call.1} parent=1 // pred_fallthru
      _
    // Predicated region
    $region22: #{tpu_custom_call.1} parent=1 // pred_check
      _
    $region23: #{tpu_custom_call.1} parent=1 // pred_check_branch
      %45 = sbr.rel (0) target = $region25
    $region24: #{tpu_custom_call.1} parent=1 // pred_region
      _
    $region25: #{tpu_custom_call.1} parent=1 // pred_fallthru
      _
    // Predicated region
    $region26: #{tpu_custom_call.1} parent=1 // pred_check
      _
    $region27: #{tpu_custom_call.1} parent=1 // pred_check_branch
      %47 = sbr.rel (0) target = $region29
    $region28: #{tpu_custom_call.1} parent=1 // pred_region
      _
    $region29: #{tpu_custom_call.1} parent=1 // pred_fallthru
      _
    // Predicated region
    $region30: #{tpu_custom_call.1} parent=1 // pred_check
      _
    $region31: #{tpu_custom_call.1} parent=1 // pred_check_branch
      %49 = sbr.rel (0) target = $region33
    $region32: #{tpu_custom_call.1} parent=1 // pred_region
      _
    $region33: #{tpu_custom_call.1} parent=1 // pred_fallthru
      _
    // Predicated region
    $region34: #{tpu_custom_call.1} parent=1 // pred_check
      _
    $region35: #{tpu_custom_call.1} parent=1 // pred_check_branch
      %51 = sbr.rel (0) target = $region37
    $region36: #{tpu_custom_call.1} parent=1 // pred_region
      _
    $region37: #{tpu_custom_call.1} parent=1 // pred_fallthru
      _
    // Predicated region
    $region38: #{tpu_custom_call.1} parent=1 // pred_check
      _
    $region39: #{tpu_custom_call.1} parent=1 // pred_check_branch
      %53 = sbr.rel (0) target = $region41
    $region40: #{tpu_custom_call.1} parent=1 // pred_region
      _
    $region41: #{tpu_custom_call.1} parent=1 // pred_fallthru
      _
    // Predicated region
    $region42: #{tpu_custom_call.1} parent=1 // pred_check
      _
    $region43: #{tpu_custom_call.1} parent=1 // pred_check_branch
      %55 = sbr.rel (0) target = $region45
    $region44: #{tpu_custom_call.1} parent=1 // pred_region
      _
    $region45: #{tpu_custom_call.1} parent=1 // pred_fallthru
      _
    // Predicated region
    $region46: #{tpu_custom_call.1} parent=1 // pred_check
      _
    $region47: #{tpu_custom_call.1} parent=1 // pred_check_branch
      %57 = sbr.rel (0) target = $region49
    $region48: #{tpu_custom_call.1} parent=1 // pred_region
      _
    $region49: #{tpu_custom_call.1} parent=1 // pred_fallthru
      _
    // Predicated region
    $region50: #{tpu_custom_call.1} parent=1 // pred_check
      _
    $region51: #{tpu_custom_call.1} parent=1 // pred_check_branch
      %59 = sbr.rel (0) target = $region53
    $region52: #{tpu_custom_call.1} parent=1 // pred_region
      _
    $region53: #{tpu_custom_call.1} parent=1 // pred_fallthru
      _
    // Predicated region
    $region54: #{tpu_custom_call.1} parent=1 // pred_check
      _
    $region55: #{tpu_custom_call.1} parent=1 // pred_check_branch
      %61 = sbr.rel (0) target = $region57
    $region56: #{tpu_custom_call.1} parent=1 // pred_region
      _
    $region57: #{tpu_custom_call.1} parent=1 // pred_fallthru
      _
    // Predicated region
    $region58: #{tpu_custom_call.1} parent=1 // pred_check
      _
    $region59: #{tpu_custom_call.1} parent=1 // pred_check_branch
      %63 = sbr.rel (0) target = $region61
    $region60: #{tpu_custom_call.1} parent=1 // pred_region
      _
    $region61: #{tpu_custom_call.1} parent=1 // pred_fallthru
      _
    // Predicated region
    $region62: #{tpu_custom_call.1} parent=1 // pred_check
      _
    $region63: #{tpu_custom_call.1} parent=1 // pred_check_branch
      %65 = sbr.rel (0) target = $region65
    $region64: #{tpu_custom_call.1} parent=1 // pred_region
      _
    $region65: #{tpu_custom_call.1} parent=1 // pred_fallthru
      _
    // Predicated region
    $region66: #{tpu_custom_call.1} parent=1 // pred_check
      _
    $region67: #{tpu_custom_call.1} parent=1 // pred_check_branch
      %67 = sbr.rel (0) target = $region69
    $region68: #{tpu_custom_call.1} parent=1 // pred_region
      _
    $region69: #{tpu_custom_call.1} parent=1 // pred_fallthru
      _
    // Predicated region
    $region70: #{tpu_custom_call.1} parent=1 // pred_check
      _
    $region71: #{tpu_custom_call.1} parent=1 // pred_check_branch
      %69 = sbr.rel (0) target = $region73
    $region72: #{tpu_custom_call.1} parent=1 // pred_region
      _
    $region73: #{tpu_custom_call.1} parent=1 // pred_fallthru
      _
    // Predicated region
    $region74: #{tpu_custom_call.1} parent=1 // pred_check
      _
    $region75: #{tpu_custom_call.1} parent=1 // pred_check_branch
      %71 = sbr.rel (0) target = $region77
    $region76: #{tpu_custom_call.1} parent=1 // pred_region
      _
    $region77: #{tpu_custom_call.1} parent=1 // pred_fallthru
      _
    %v73 = vld [vmem:[%s4] sm:$0xf]
    %v74 = vld [vmem:[%s4 + $0x4] sm:$0xf]
    %v75 = vld [vmem:[%s4 + $0x8] sm:$0xf]
    %v76 = vld [vmem:[%s4 + $0xc] sm:$0xf]
    %v77 = vld [vmem:[%s5] sm:$0x1]
    %v78 = vld [vmem:[%s6] sm:$0xf]
    %v79 = vld [vmem:[%s6 + $0x4] sm:$0xf]
    %v80 = vld [vmem:[%s6 + $0x8] sm:$0xf]
    %v81 = vld [vmem:[%s6 + $0xc] sm:$0xf]
    %v82 = vld [vmem:[%s6 + $0x10] sm:$0xf]
    %v83 = vld [vmem:[%s6 + $0x14] sm:$0xf]
    %v84 = vld [vmem:[%s6 + $0x18] sm:$0xf]
    %v85 = vld [vmem:[%s6 + $0x1c] sm:$0xf]
    %v86 = vld [vmem:[%s7] sm:$0x1]
    %v87 = vld [vmem:[%s9] sm:$0xf]
    %v88 = vld [vmem:[%s9 + $0x4] sm:$0xf]
    %v89 = vld [vmem:[%s9 + $0x8] sm:$0xf]
    %v90 = vld [vmem:[%s9 + $0xc] sm:$0xf]
    %v91 = vld [vmem:[%s16] sm:$0x3]
    %v92 = vld [vmem:[%s17] sm:$0xf]
    %v93 = vld [vmem:[%s17 + $0x4] sm:$0xf]
    %v94 = vld [vmem:[%s17 + $0x8] sm:$0xf]
    %v95 = vld [vmem:[%s17 + $0xc] sm:$0xf]
    %v96 = vld [vmem:[%s18] sm:$0xf]
    %v97 = vld [vmem:[%s18 + $0x4] sm:$0xf]
    %v98 = vld [vmem:[%s18 + $0x8] sm:$0xf]
    %v99 = vld [vmem:[%s18 + $0xc] sm:$0xf]
    %v100 = vld [vmem:[%s0] sm:$0xff]
    %v101 = vld [vmem:[%s0 + $0x8] sm:$0xff]
    %v102 = vld [vmem:[%s0 + $0x10] sm:$0xff]
    %v103 = vld [vmem:[%s0 + $0x18] sm:$0xff]
    %v104 = vld [vmem:[%s2] sm:$0xf]
    %v105 = vld [vmem:[%s2 + $0x4] sm:$0xf]
    %v106 = vpack.c.bf16 %v101, %v100
    %v107 = vpack.c.bf16 %v103, %v102
    %v108 = vld [vmem:[%s3] sm:$0x1]
    %v110 = vlaneseq
    %v111 = vshrl.u32 %v110, 7
    %v112 = vsub.s32 0, %v111
    %v113 = vrot.slane %v108, %v112
    %v117 = vunpack.c.l.b16 %v104
    %v118 = vunpack.c.l.b16 %v105
    %v119 = vpack.c.b16 %v118, %v117
    %vm121 = vcmask 130048
    %v123 = vsel %vm121, %v106, 0
    %v126 = vsel %vm121, %v107, 0
    %128 = vmatprep.subr.bf16.mxu0 0
    %129 = vmatpush1.bf16.msra.mxu0 %v119
    %130 = vmatprep.subr.bf16.mxu0 0
    %131 = vmatpush1.bf16.msra.mxu0 0
    %132 = vmatprep.subr.bf16.mxu0 0
    %133 = vmatpush1.bf16.msra.mxu0 0
    %134 = vmatprep.subr.bf16.mxu0 0
    %135 = vmatpush1.bf16.msra.mxu0 0
    %136 = vmatprep.subr.bf16.mxu0 0
    %137 = vmatpush1.bf16.msra.mxu0 0
    %138 = vmatprep.subr.bf16.mxu0 0
    %139 = vmatpush1.bf16.msra.mxu0 0
    %140 = vmatprep.subr.bf16.mxu0 0
    %141 = vmatpush1.bf16.msra.mxu0 0
    %142 = vmatprep.subr.bf16.mxu0 0
    %143 = vmatpush1.bf16.msra.mxu0 0
    %144 = vmatprep.subr.bf16.mxu0 0
    %145 = vmatpush1.bf16.msra.mxu0 0
    %146 = vmatprep.subr.bf16.mxu0 0
    %147 = vmatpush1.bf16.msra.mxu0 0
    %148 = vmatprep.subr.bf16.mxu0 0
    %149 = vmatpush1.bf16.msra.mxu0 0
    %150 = vmatprep.subr.bf16.mxu0 0
    %151 = vmatpush1.bf16.msra.mxu0 0
    %152 = vmatprep.subr.bf16.mxu0 0
    %153 = vmatpush1.bf16.msra.mxu0 0
    %154 = vmatprep.subr.bf16.mxu0 0
    %155 = vmatpush1.bf16.msra.mxu0 0
    %156 = vmatprep.subr.bf16.mxu0 0
    %157 = vmatpush1.bf16.msra.mxu0 0
    %158 = vmatprep.subr.bf16.mxu0 0
    %159 = vmatpush1.bf16.msra.mxu0 0
    %160 = vmatprep.mubr.bf16.mxu0 0
    %161 = vmatmul.mubr.bf16.gmra.mrb[0].mxu0 %v123
    %v162 = vpop.f32.mrb[0].mxu0
    %v163 = vadd.f32 %v113, %v162
    %v164 = vpop.f32.mrb[0].mxu0
    %v165 = vpop.f32.mrb[0].mxu0
    %v166 = vadd.f32 %v113, %v165
    %v167 = vpop.f32.mrb[0].mxu0
    %168 = vmatprep.mubr.bf16.mxu0 0
    %169 = vmatmul.mubr.bf16.gmra.mrb[0].mxu0 %v126
    %v170 = vpop.f32.mrb[0].mxu0
    %v171 = vadd.f32 %v113, %v170
    %v172 = vpop.f32.mrb[0].mxu0
    %v173 = vpop.f32.mrb[0].mxu0
    %v174 = vadd.f32 %v113, %v173
    %v175 = vpop.f32.mrb[0].mxu0
    %176 = vdwg.mxu0
    %v177 = vld [vmem:[%s1] sm:$0xff]
    %v178 = vld [vmem:[%s1 + $0x8] sm:$0xff]
    %v179 = vld [vmem:[%s1 + $0x10] sm:$0xff]
    %v180 = vld [vmem:[%s1 + $0x18] sm:$0xff]
    %v181 = vld [vmem:[%s12] sm:$0xf]
    %v182 = vld [vmem:[%s12 + $0x4] sm:$0xf]
    %v183 = vpack.c.bf16 %v178, %v177
    %v184 = vpack.c.bf16 %v180, %v179
    %v185 = vld [vmem:[%s13] sm:$0x1]
    %v187 = vlaneseq
    %v188 = vshrl.u32 %v187, 7
    %v189 = vsub.s32 0, %v188
    %v190 = vrot.slane %v185, %v189
    %v194 = vunpack.c.l.b16 %v181
    %v195 = vunpack.c.l.b16 %v182
    %v196 = vpack.c.b16 %v195, %v194
    %v199 = vsel %vm121, %v183, 0
    %v202 = vsel %vm121, %v184, 0
    %204 = vmatprep.subr.bf16.mxu0 0
    %205 = vmatpush1.bf16.msra.mxu0 %v196
    %206 = vmatprep.subr.bf16.mxu0 0
    %207 = vmatpush1.bf16.msra.mxu0 0
    %208 = vmatprep.subr.bf16.mxu0 0
    %209 = vmatpush1.bf16.msra.mxu0 0
    %210 = vmatprep.subr.bf16.mxu0 0
    %211 = vmatpush1.bf16.msra.mxu0 0
    %212 = vmatprep.subr.bf16.mxu0 0
    %213 = vmatpush1.bf16.msra.mxu0 0
    %214 = vmatprep.subr.bf16.mxu0 0
    %215 = vmatpush1.bf16.msra.mxu0 0
    %216 = vmatprep.subr.bf16.mxu0 0
    %217 = vmatpush1.bf16.msra.mxu0 0
    %218 = vmatprep.subr.bf16.mxu0 0
    %219 = vmatpush1.bf16.msra.mxu0 0
    %220 = vmatprep.subr.bf16.mxu0 0
    %221 = vmatpush1.bf16.msra.mxu0 0
    %222 = vmatprep.subr.bf16.mxu0 0
    %223 = vmatpush1.bf16.msra.mxu0 0
    %224 = vmatprep.subr.bf16.mxu0 0
    %225 = vmatpush1.bf16.msra.mxu0 0
    %226 = vmatprep.subr.bf16.mxu0 0
    %227 = vmatpush1.bf16.msra.mxu0 0
    %228 = vmatprep.subr.bf16.mxu0 0
    %229 = vmatpush1.bf16.msra.mxu0 0
    %230 = vmatprep.subr.bf16.mxu0 0
    %231 = vmatpush1.bf16.msra.mxu0 0
    %232 = vmatprep.subr.bf16.mxu0 0
    %233 = vmatpush1.bf16.msra.mxu0 0
    %234 = vmatprep.subr.bf16.mxu0 0
    %235 = vmatpush1.bf16.msra.mxu0 0
    %236 = vmatprep.mubr.bf16.mxu0 0
    %237 = vmatmul.mubr.bf16.gmra.mrb[0].mxu0 %v199
    %v238 = vpop.f32.mrb[0].mxu0
    %v239 = vadd.f32 %v190, %v238
    %v240 = vpop.f32.mrb[0].mxu0
    %v241 = vpop.f32.mrb[0].mxu0
    %v242 = vadd.f32 %v190, %v241
    %v243 = vpop.f32.mrb[0].mxu0
    %244 = vmatprep.mubr.bf16.mxu0 0
    %245 = vmatmul.mubr.bf16.gmra.mrb[0].mxu0 %v202
    %v246 = vpop.f32.mrb[0].mxu0
    %v247 = vadd.f32 %v190, %v246
    %v248 = vpop.f32.mrb[0].mxu0
    %v249 = vpop.f32.mrb[0].mxu0
    %v250 = vadd.f32 %v190, %v249
    %v251 = vpop.f32.mrb[0].mxu0
    %252 = vdwg.mxu0
    %v257 = vunpack.c.l.b16 %v73
    %v258 = vunpack.c.l.b16 %v74
    %v259 = vunpack.c.l.b16 %v75
    %v260 = vunpack.c.l.b16 %v76
    %v261 = vpack.c.b16 %v258, %v257
    %v262 = vpack.c.b16 %v260, %v259
    %vm265 = vcmask 261120
    %v267 = vsel %vm265, 0, 0
    %269 = vmatprep.subr.bf16.mxu0 0
    %270 = vmatpush1.bf16.msra.mxu0 %v261
    %271 = vmatprep.subr.bf16.mxu0 0
    %272 = vmatpush1.bf16.msra.mxu0 %v262
    %273 = vmatprep.subr.bf16.mxu0 0
    %274 = vmatpush1.bf16.msra.mxu0 0
    %275 = vmatprep.subr.bf16.mxu0 0
    %276 = vmatpush1.bf16.msra.mxu0 0
    %277 = vmatprep.subr.bf16.mxu0 0
    %278 = vmatpush1.bf16.msra.mxu0 0
    %279 = vmatprep.subr.bf16.mxu0 0
    %280 = vmatpush1.bf16.msra.mxu0 0
    %281 = vmatprep.subr.bf16.mxu0 0
    %282 = vmatpush1.bf16.msra.mxu0 0
    %283 = vmatprep.subr.bf16.mxu0 0
    %284 = vmatpush1.bf16.msra.mxu0 0
    %285 = vmatprep.subr.bf16.mxu0 0
    %286 = vmatpush1.bf16.msra.mxu0 0
    %287 = vmatprep.subr.bf16.mxu0 0
    %288 = vmatpush1.bf16.msra.mxu0 0
    %289 = vmatprep.subr.bf16.mxu0 0
    %290 = vmatpush1.bf16.msra.mxu0 0
    %291 = vmatprep.subr.bf16.mxu0 0
    %292 = vmatpush1.bf16.msra.mxu0 0
    %293 = vmatprep.subr.bf16.mxu0 0
    %294 = vmatpush1.bf16.msra.mxu0 0
    %295 = vmatprep.subr.bf16.mxu0 0
    %296 = vmatpush1.bf16.msra.mxu0 0
    %297 = vmatprep.subr.bf16.mxu0 0
    %298 = vmatpush1.bf16.msra.mxu0 0
    %299 = vmatprep.subr.bf16.mxu0 0
    %300 = vmatpush1.bf16.msra.mxu0 0
    %301 = vmatprep.mubr.bf16.mxu0 0
    %302 = vmatmul.mubr.bf16.gmra.mrb[0].mxu0 %v267
    %v303 = vpop.f32.mrb[0].mxu0
    %v304 = vadd.f32 0.0, %v303
    %v305 = vpop.f32.mrb[0].mxu0
    %v306 = vpop.f32.mrb[0].mxu0
    %v307 = vpop.f32.mrb[0].mxu0
    %308 = vdwg.mxu0
    %v309 = vadd.f32 %v163, %v304
    %v310 = vxor.u32 %v309, 2147483648
    %v311 = vmul.f32 %v310, 1.442695
    %v312 = vpow.pop %v311
    %v313 = vadd.f32 %v312, 1.0
    %v314 = vrcp.pop %v313
    %v315 = vmul.f32 1.0, %v314
    %v316 = vtanh.pop %v309
    %v317 = vmul.f32 %v315, 0.0
    %319 = vrot.lane.b32.xlu0 %v316, 64
    %v320 = vpop.permute.xlu0 %319
    %v322 = vmul.f32 %v315, %v320
    %324 = vrot.lane.b32.xlu0 %v322, 32
    %v325 = vpop.permute.xlu0 %324
    %v327 = vadd.f32 %v317, %v325
    %v328 = vtanh.pop %v327
    %330 = vrot.lane.b32.xlu0 %v328, 64
    %v331 = vpop.permute.xlu0 %330
    %v333 = vmul.f32 %v315, %v331
    %335 = vrot.lane.b32.xlu0 %v333, 32
    %v336 = vpop.permute.xlu0 %335
    %v338 = vsel %vm265, %v336, 0.0
    %v339 = vpack.c.bf16 %v338, %v338
    %v341 = vlaneseq
    %v342 = vshrl.u32 %v341, 7
    %v343 = vsub.s32 0, %v342
    %v344 = vrot.slane %v86, %v343
    %v354 = vunpack.c.l.b16 %v78
    %v355 = vunpack.c.l.b16 %v79
    %v356 = vunpack.c.l.b16 %v80
    %v357 = vunpack.c.l.b16 %v81
    %v358 = vunpack.c.l.b16 %v82
    %v359 = vunpack.c.l.b16 %v83
    %v360 = vunpack.c.l.b16 %v84
    %v361 = vunpack.c.l.b16 %v85
    %v362 = vpack.c.b16 %v355, %v354
    %v363 = vpack.c.b16 %v357, %v356
    %v364 = vpack.c.b16 %v359, %v358
    %v365 = vpack.c.b16 %v361, %v360
    %vm370 = vcmask 523264
    %v372 = vsel %vm370, %v339, 0
    %374 = vmatprep.subr.bf16.mxu0 0
    %375 = vmatpush1.bf16.msra.mxu0 %v362
    %376 = vmatprep.subr.bf16.mxu0 0
    %377 = vmatpush1.bf16.msra.mxu0 %v363
    %378 = vmatprep.subr.bf16.mxu0 0
    %379 = vmatpush1.bf16.msra.mxu0 %v364
    %380 = vmatprep.subr.bf16.mxu0 0
    %381 = vmatpush1.bf16.msra.mxu0 %v365
    %382 = vmatprep.subr.bf16.mxu0 0
    %383 = vmatpush1.bf16.msra.mxu0 0
    %384 = vmatprep.subr.bf16.mxu0 0
    %385 = vmatpush1.bf16.msra.mxu0 0
    %386 = vmatprep.subr.bf16.mxu0 0
    %387 = vmatpush1.bf16.msra.mxu0 0
    %388 = vmatprep.subr.bf16.mxu0 0
    %389 = vmatpush1.bf16.msra.mxu0 0
    %390 = vmatprep.subr.bf16.mxu0 0
    %391 = vmatpush1.bf16.msra.mxu0 0
    %392 = vmatprep.subr.bf16.mxu0 0
    %393 = vmatpush1.bf16.msra.mxu0 0
    %394 = vmatprep.subr.bf16.mxu0 0
    %395 = vmatpush1.bf16.msra.mxu0 0
    %396 = vmatprep.subr.bf16.mxu0 0
    %397 = vmatpush1.bf16.msra.mxu0 0
    %398 = vmatprep.subr.bf16.mxu0 0
    %399 = vmatpush1.bf16.msra.mxu0 0
    %400 = vmatprep.subr.bf16.mxu0 0
    %401 = vmatpush1.bf16.msra.mxu0 0
    %402 = vmatprep.subr.bf16.mxu0 0
    %403 = vmatpush1.bf16.msra.mxu0 0
    %404 = vmatprep.subr.bf16.mxu0 0
    %405 = vmatpush1.bf16.msra.mxu0 0
    %406 = vmatprep.mubr.bf16.mxu0 0
    %407 = vmatmul.mubr.bf16.gmra.mrb[0].mxu0 %v372
    %v408 = vpop.f32.mrb[0].mxu0
    %v409 = vadd.f32 %v344, %v408
    %v410 = vpop.f32.mrb[0].mxu0
    %v411 = vpop.f32.mrb[0].mxu0
    %v412 = vpop.f32.mrb[0].mxu0
    %413 = vdwg.mxu0
    %v414 = vxor.u32 %v409, 2147483648
    %v415 = vmul.f32 %v414, 1.442695
    %v416 = vpow.pop %v415
    %v417 = vadd.f32 %v416, 1.0
    %v418 = vrcp.pop %v417
    %v419 = vmul.f32 1.0, %v418
    %v420 = vtanh.pop %v409
    %v421 = vmul.f32 %v419, 0.0
    %423 = vrot.lane.b32.xlu0 %v420, 64
    %v424 = vpop.permute.xlu0 %423
    %v426 = vmul.f32 %v419, %v424
    %428 = vrot.lane.b32.xlu0 %v426, 32
    %v429 = vpop.permute.xlu0 %428
    %v431 = vadd.f32 %v421, %v429
    %v432 = vtanh.pop %v431
    %434 = vrot.lane.b32.xlu0 %v432, 64
    %v435 = vpop.permute.xlu0 %434
    %v437 = vmul.f32 %v419, %v435
    %439 = vrot.lane.b32.xlu0 %v437, 32
    %v440 = vpop.permute.xlu0 %439
    %vm442 = vcmask 257024
    %443 = vst.msk [vmem:[#allocation2] sm:$0xf] %vm442, %v440
    %v444 = vpack.c.bf16 %v333, %v333
    %446 = vrot.lane.b32.xlu0 %v444, 32
    %v447 = vpop.permute.xlu0 %446
    %v449 = vsel %vm265, %v447, 0
    %451 = vmatprep.subr.bf16.mxu0 0
    %452 = vmatpush1.bf16.msra.mxu0 %v261
    %453 = vmatprep.subr.bf16.mxu0 0
    %454 = vmatpush1.bf16.msra.mxu0 %v262
    %455 = vmatprep.subr.bf16.mxu0 0
    %456 = vmatpush1.bf16.msra.mxu0 0
    %457 = vmatprep.subr.bf16.mxu0 0
    %458 = vmatpush1.bf16.msra.mxu0 0
    %459 = vmatprep.subr.bf16.mxu0 0
    %460 = vmatpush1.bf16.msra.mxu0 0
    %461 = vmatprep.subr.bf16.mxu0 0
    %462 = vmatpush1.bf16.msra.mxu0 0
    %463 = vmatprep.subr.bf16.mxu0 0
    %464 = vmatpush1.bf16.msra.mxu0 0
    %465 = vmatprep.subr.bf16.mxu0 0
    %466 = vmatpush1.bf16.msra.mxu0 0
    %467 = vmatprep.subr.bf16.mxu0 0
    %468 = vmatpush1.bf16.msra.mxu0 0
    %469 = vmatprep.subr.bf16.mxu0 0
    %470 = vmatpush1.bf16.msra.mxu0 0
    %471 = vmatprep.subr.bf16.mxu0 0
    %472 = vmatpush1.bf16.msra.mxu0 0
    %473 = vmatprep.subr.bf16.mxu0 0
    %474 = vmatpush1.bf16.msra.mxu0 0
    %475 = vmatprep.subr.bf16.mxu0 0
    %476 = vmatpush1.bf16.msra.mxu0 0
    %477 = vmatprep.subr.bf16.mxu0 0
    %478 = vmatpush1.bf16.msra.mxu0 0
    %479 = vmatprep.subr.bf16.mxu0 0
    %480 = vmatpush1.bf16.msra.mxu0 0
    %481 = vmatprep.subr.bf16.mxu0 0
    %482 = vmatpush1.bf16.msra.mxu0 0
    %483 = vmatprep.mubr.bf16.mxu0 0
    %484 = vmatmul.mubr.bf16.gmra.mrb[0].mxu0 %v449
    %v485 = vpop.f32.mrb[0].mxu0
    %v486 = vadd.f32 0.0, %v485
    %v487 = vpop.f32.mrb[0].mxu0
    %v488 = vpop.f32.mrb[0].mxu0
    %v489 = vpop.f32.mrb[0].mxu0
    %490 = vdwg.mxu0
    %v492 = vrot.slane %v486, 4
    %v494 = vadd.f32 %v163, %v492
    %v495 = vxor.u32 %v494, 2147483648
    %v496 = vmul.f32 %v495, 1.442695
    %v497 = vpow.pop %v496
    %v498 = vadd.f32 %v497, 1.0
    %v499 = vrcp.pop %v498
    %v500 = vmul.f32 1.0, %v499
    %v501 = vtanh.pop %v494
    %v503 = vrot.slane %v327, 4
    %v505 = vmul.f32 %v500, %v503
    %507 = vrot.lane.b32.xlu0 %v501, 64
    %v508 = vpop.permute.xlu0 %507
    %v510 = vmul.f32 %v500, %v508
    %512 = vrot.lane.b32.xlu0 %v510, 32
    %v513 = vpop.permute.xlu0 %512
    %v515 = vadd.f32 %v505, %v513
    %v516 = vtanh.pop %v515
    %518 = vrot.lane.b32.xlu0 %v516, 64
    %v519 = vpop.permute.xlu0 %518
    %v521 = vmul.f32 %v500, %v519
    %523 = vrot.lane.b32.xlu0 %v521, 32
    %v524 = vpop.permute.xlu0 %523
    %v526 = vrot.slane %v437, 4
    %527 = vrot.lane.b32.xlu0 %v526, 64
    %v528 = vpop.permute.xlu0 %527
    %v530 = vsel %vm265, %v524, %v528
    %v531 = vpack.c.bf16 %v530, %v530
    %v533 = vrot.slane %v531, 2
    %v535 = vsel %vm370, %v533, 0
    %537 = vmatprep.subr.bf16.mxu0 0
    %538 = vmatpush1.bf16.msra.mxu0 %v362
    %539 = vmatprep.subr.bf16.mxu0 0
    %540 = vmatpush1.bf16.msra.mxu0 %v363
    %541 = vmatprep.subr.bf16.mxu0 0
    %542 = vmatpush1.bf16.msra.mxu0 %v364
    %543 = vmatprep.subr.bf16.mxu0 0
    %544 = vmatpush1.bf16.msra.mxu0 %v365
    %545 = vmatprep.subr.bf16.mxu0 0
    %546 = vmatpush1.bf16.msra.mxu0 0
    %547 = vmatprep.subr.bf16.mxu0 0
    %548 = vmatpush1.bf16.msra.mxu0 0
    %549 = vmatprep.subr.bf16.mxu0 0
    %550 = vmatpush1.bf16.msra.mxu0 0
    %551 = vmatprep.subr.bf16.mxu0 0
    %552 = vmatpush1.bf16.msra.mxu0 0
    %553 = vmatprep.subr.bf16.mxu0 0
    %554 = vmatpush1.bf16.msra.mxu0 0
    %555 = vmatprep.subr.bf16.mxu0 0
    %556 = vmatpush1.bf16.msra.mxu0 0
    %557 = vmatprep.subr.bf16.mxu0 0
    %558 = vmatpush1.bf16.msra.mxu0 0
    %559 = vmatprep.subr.bf16.mxu0 0
    %560 = vmatpush1.bf16.msra.mxu0 0
    %561 = vmatprep.subr.bf16.mxu0 0
    %562 = vmatpush1.bf16.msra.mxu0 0
    %563 = vmatprep.subr.bf16.mxu0 0
    %564 = vmatpush1.bf16.msra.mxu0 0
    %565 = vmatprep.subr.bf16.mxu0 0
    %566 = vmatpush1.bf16.msra.mxu0 0
    %567 = vmatprep.subr.bf16.mxu0 0
    %568 = vmatpush1.bf16.msra.mxu0 0
    %569 = vmatprep.mubr.bf16.mxu0 0
    %570 = vmatmul.mubr.bf16.gmra.mrb[0].mxu0 %v535
    %v571 = vpop.f32.mrb[0].mxu0
    %v572 = vadd.f32 %v344, %v571
    %v573 = vpop.f32.mrb[0].mxu0
    %v574 = vpop.f32.mrb[0].mxu0
    %v575 = vpop.f32.mrb[0].mxu0
    %576 = vdwg.mxu0
    %v577 = vxor.u32 %v572, 2147483648
    %v578 = vmul.f32 %v577, 1.442695
    %v579 = vpow.pop %v578
    %v580 = vadd.f32 %v579, 1.0
    %v581 = vrcp.pop %v580
    %v582 = vmul.f32 1.0, %v581
    %v583 = vtanh.pop %v572
    %v584 = vmul.f32 %v582, %v431
    %586 = vrot.lane.b32.xlu0 %v583, 64
    %v587 = vpop.permute.xlu0 %586
    %v589 = vmul.f32 %v582, %v587
    %591 = vrot.lane.b32.xlu0 %v589, 32
    %v592 = vpop.permute.xlu0 %591
    %v594 = vadd.f32 %v584, %v592
    %v595 = vtanh.pop %v594
    %597 = vrot.lane.b32.xlu0 %v595, 64
    %v598 = vpop.permute.xlu0 %597
    %v600 = vmul.f32 %v582, %v598
    %602 = vrot.lane.b32.xlu0 %v600, 32
    %v603 = vpop.permute.xlu0 %602
    %605 = vst.msk [vmem:[#allocation2 + $0x4] sm:$0xf] %vm442, %v603
    %v606 = vpack.c.bf16 %v521, %v521
    %v608 = vrot.slane %v606, 2
    %609 = vrot.lane.b32.xlu0 %v608, 32
    %v610 = vpop.permute.xlu0 %609
    %v612 = vsel %vm265, %v610, 0
    %614 = vmatprep.subr.bf16.mxu0 0
    %615 = vmatpush1.bf16.msra.mxu0 %v261
    %616 = vmatprep.subr.bf16.mxu0 0
    %617 = vmatpush1.bf16.msra.mxu0 %v262
    %618 = vmatprep.subr.bf16.mxu0 0
    %619 = vmatpush1.bf16.msra.mxu0 0
    %620 = vmatprep.subr.bf16.mxu0 0
    %621 = vmatpush1.bf16.msra.mxu0 0
    %622 = vmatprep.subr.bf16.mxu0 0
    %623 = vmatpush1.bf16.msra.mxu0 0
    %624 = vmatprep.subr.bf16.mxu0 0
    %625 = vmatpush1.bf16.msra.mxu0 0
    %626 = vmatprep.subr.bf16.mxu0 0
    %627 = vmatpush1.bf16.msra.mxu0 0
    %628 = vmatprep.subr.bf16.mxu0 0
    %629 = vmatpush1.bf16.msra.mxu0 0
    %630 = vmatprep.subr.bf16.mxu0 0
    %631 = vmatpush1.bf16.msra.mxu0 0
    %632 = vmatprep.subr.bf16.mxu0 0
    %633 = vmatpush1.bf16.msra.mxu0 0
    %634 = vmatprep.subr.bf16.mxu0 0
    %635 = vmatpush1.bf16.msra.mxu0 0
    %636 = vmatprep.subr.bf16.mxu0 0
    %637 = vmatpush1.bf16.msra.mxu0 0
    %638 = vmatprep.subr.bf16.mxu0 0
    %639 = vmatpush1.bf16.msra.mxu0 0
    %640 = vmatprep.subr.bf16.mxu0 0
    %641 = vmatpush1.bf16.msra.mxu0 0
    %642 = vmatprep.subr.bf16.mxu0 0
    %643 = vmatpush1.bf16.msra.mxu0 0
    %644 = vmatprep.subr.bf16.mxu0 0
    %645 = vmatpush1.bf16.msra.mxu0 0
    %646 = vmatprep.mubr.bf16.mxu0 0
    %647 = vmatmul.mubr.bf16.gmra.mrb[0].mxu0 %v612
    %v648 = vpop.f32.mrb[0].mxu0
    %v649 = vadd.f32 0.0, %v648
    %v650 = vpop.f32.mrb[0].mxu0
    %v651 = vpop.f32.mrb[0].mxu0
    %v652 = vpop.f32.mrb[0].mxu0
    %653 = vdwg.mxu0
    %v654 = vadd.f32 %v166, %v649
    %v655 = vxor.u32 %v654, 2147483648
    %v656 = vmul.f32 %v655, 1.442695
    %v657 = vpow.pop %v656
    %v658 = vadd.f32 %v657, 1.0
    %v659 = vrcp.pop %v658
    %v660 = vmul.f32 1.0, %v659
    %v661 = vtanh.pop %v654
    %v663 = vrot.slane %v515, 4
    %v665 = vmul.f32 %v660, %v663
    %667 = vrot.lane.b32.xlu0 %v661, 64
    %v668 = vpop.permute.xlu0 %667
    %v670 = vmul.f32 %v660, %v668
    %672 = vrot.lane.b32.xlu0 %v670, 32
    %v673 = vpop.permute.xlu0 %672
    %v675 = vadd.f32 %v665, %v673
    %v676 = vtanh.pop %v675
    %678 = vrot.lane.b32.xlu0 %v676, 64
    %v679 = vpop.permute.xlu0 %678
    %v681 = vmul.f32 %v660, %v679
    %683 = vrot.lane.b32.xlu0 %v681, 32
    %v684 = vpop.permute.xlu0 %683
    %686 = vrot.lane.b32.xlu0 %v600, 64
    %v687 = vpop.permute.xlu0 %686
    %v689 = vsel %vm265, %v684, %v687
    %v690 = vpack.c.bf16 %v689, %v689
    %v692 = vsel %vm370, %v690, 0
    %694 = vmatprep.subr.bf16.mxu0 0
    %695 = vmatpush1.bf16.msra.mxu0 %v362
    %696 = vmatprep.subr.bf16.mxu0 0
    %697 = vmatpush1.bf16.msra.mxu0 %v363
    %698 = vmatprep.subr.bf16.mxu0 0
    %699 = vmatpush1.bf16.msra.mxu0 %v364
    %700 = vmatprep.subr.bf16.mxu0 0
    %701 = vmatpush1.bf16.msra.mxu0 %v365
    %702 = vmatprep.subr.bf16.mxu0 0
    %703 = vmatpush1.bf16.msra.mxu0 0
    %704 = vmatprep.subr.bf16.mxu0 0
    %705 = vmatpush1.bf16.msra.mxu0 0
    %706 = vmatprep.subr.bf16.mxu0 0
    %707 = vmatpush1.bf16.msra.mxu0 0
    %708 = vmatprep.subr.bf16.mxu0 0
    %709 = vmatpush1.bf16.msra.mxu0 0
    %710 = vmatprep.subr.bf16.mxu0 0
    %711 = vmatpush1.bf16.msra.mxu0 0
    %712 = vmatprep.subr.bf16.mxu0 0
    %713 = vmatpush1.bf16.msra.mxu0 0
    %714 = vmatprep.subr.bf16.mxu0 0
    %715 = vmatpush1.bf16.msra.mxu0 0
    %716 = vmatprep.subr.bf16.mxu0 0
    %717 = vmatpush1.bf16.msra.mxu0 0
    %718 = vmatprep.subr.bf16.mxu0 0
    %719 = vmatpush1.bf16.msra.mxu0 0
    %720 = vmatprep.subr.bf16.mxu0 0
    %721 = vmatpush1.bf16.msra.mxu0 0
    %722 = vmatprep.subr.bf16.mxu0 0
    %723 = vmatpush1.bf16.msra.mxu0 0
    %724 = vmatprep.subr.bf16.mxu0 0
    %725 = vmatpush1.bf16.msra.mxu0 0
    %726 = vmatprep.mubr.bf16.mxu0 0
    %727 = vmatmul.mubr.bf16.gmra.mrb[0].mxu0 %v692
    %v728 = vpop.f32.mrb[0].mxu0
    %v729 = vadd.f32 %v344, %v728
    %v730 = vpop.f32.mrb[0].mxu0
    %v731 = vpop.f32.mrb[0].mxu0
    %v732 = vpop.f32.mrb[0].mxu0
    %733 = vdwg.mxu0
    %v734 = vxor.u32 %v729, 2147483648
    %v735 = vmul.f32 %v734, 1.442695
    %v736 = vpow.pop %v735
    %v737 = vadd.f32 %v736, 1.0
    %v738 = vrcp.pop %v737
    %v739 = vmul.f32 1.0, %v738
    %v740 = vtanh.pop %v729
    %v741 = vmul.f32 %v739, %v594
    %743 = vrot.lane.b32.xlu0 %v740, 64
    %v744 = vpop.permute.xlu0 %743
    %v746 = vmul.f32 %v739, %v744
    %748 = vrot.lane.b32.xlu0 %v746, 32
    %v749 = vpop.permute.xlu0 %748
    %v751 = vadd.f32 %v741, %v749
    %v752 = vtanh.pop %v751
    %754 = vrot.lane.b32.xlu0 %v752, 64
    %v755 = vpop.permute.xlu0 %754
    %v757 = vmul.f32 %v739, %v755
    %759 = vrot.lane.b32.xlu0 %v757, 32
    %v760 = vpop.permute.xlu0 %759
    %762 = vst.msk [vmem:[#allocation2 + $0x8] sm:$0xf] %vm442, %v760
    %v763 = vpack.c.bf16 %v681, %v681
    %765 = vrot.lane.b32.xlu0 %v763, 32
    %v766 = vpop.permute.xlu0 %765
    %v768 = vsel %vm265, %v766, 0
    %770 = vmatprep.subr.bf16.mxu0 0
    %771 = vmatpush1.bf16.msra.mxu0 %v261
    %772 = vmatprep.subr.bf16.mxu0 0
    %773 = vmatpush1.bf16.msra.mxu0 %v262
    %774 = vmatprep.subr.bf16.mxu0 0
    %775 = vmatpush1.bf16.msra.mxu0 0
    %776 = vmatprep.subr.bf16.mxu0 0
    %777 = vmatpush1.bf16.msra.mxu0 0
    %778 = vmatprep.subr.bf16.mxu0 0
    %779 = vmatpush1.bf16.msra.mxu0 0
    %780 = vmatprep.subr.bf16.mxu0 0
    %781 = vmatpush1.bf16.msra.mxu0 0
    %782 = vmatprep.subr.bf16.mxu0 0
    %783 = vmatpush1.bf16.msra.mxu0 0
    %784 = vmatprep.subr.bf16.mxu0 0
    %785 = vmatpush1.bf16.msra.mxu0 0
    %786 = vmatprep.subr.bf16.mxu0 0
    %787 = vmatpush1.bf16.msra.mxu0 0
    %788 = vmatprep.subr.bf16.mxu0 0
    %789 = vmatpush1.bf16.msra.mxu0 0
    %790 = vmatprep.subr.bf16.mxu0 0
    %791 = vmatpush1.bf16.msra.mxu0 0
    %792 = vmatprep.subr.bf16.mxu0 0
    %793 = vmatpush1.bf16.msra.mxu0 0
    %794 = vmatprep.subr.bf16.mxu0 0
    %795 = vmatpush1.bf16.msra.mxu0 0
    %796 = vmatprep.subr.bf16.mxu0 0
    %797 = vmatpush1.bf16.msra.mxu0 0
    %798 = vmatprep.subr.bf16.mxu0 0
    %799 = vmatpush1.bf16.msra.mxu0 0
    %800 = vmatprep.subr.bf16.mxu0 0
    %801 = vmatpush1.bf16.msra.mxu0 0
    %802 = vmatprep.mubr.bf16.mxu0 0
    %803 = vmatmul.mubr.bf16.gmra.mrb[0].mxu0 %v768
    %v804 = vpop.f32.mrb[0].mxu0
    %v805 = vadd.f32 0.0, %v804
    %v806 = vpop.f32.mrb[0].mxu0
    %v807 = vpop.f32.mrb[0].mxu0
    %v808 = vpop.f32.mrb[0].mxu0
    %809 = vdwg.mxu0
    %v811 = vrot.slane %v805, 4
    %v813 = vadd.f32 %v166, %v811
    %v814 = vxor.u32 %v813, 2147483648
    %v815 = vmul.f32 %v814, 1.442695
    %v816 = vpow.pop %v815
    %v817 = vadd.f32 %v816, 1.0
    %v818 = vrcp.pop %v817
    %v819 = vmul.f32 1.0, %v818
    %v820 = vtanh.pop %v813
    %v822 = vrot.slane %v675, 4
    %v824 = vmul.f32 %v819, %v822
    %826 = vrot.lane.b32.xlu0 %v820, 64
    %v827 = vpop.permute.xlu0 %826
    %v829 = vmul.f32 %v819, %v827
    %831 = vrot.lane.b32.xlu0 %v829, 32
    %v832 = vpop.permute.xlu0 %831
    %v834 = vadd.f32 %v824, %v832
    %v835 = vtanh.pop %v834
    %837 = vrot.lane.b32.xlu0 %v835, 64
    %v838 = vpop.permute.xlu0 %837
    %v840 = vmul.f32 %v819, %v838
    %842 = vrot.lane.b32.xlu0 %v840, 32
    %v843 = vpop.permute.xlu0 %842
    %v845 = vrot.slane %v757, 4
    %846 = vrot.lane.b32.xlu0 %v845, 64
    %v847 = vpop.permute.xlu0 %846
    %v849 = vsel %vm265, %v843, %v847
    %v850 = vpack.c.bf16 %v849, %v849
    %v852 = vrot.slane %v850, 2
    %v854 = vsel %vm370, %v852, 0
    %856 = vmatprep.subr.bf16.mxu0 0
    %857 = vmatpush1.bf16.msra.mxu0 %v362
    %858 = vmatprep.subr.bf16.mxu0 0
    %859 = vmatpush1.bf16.msra.mxu0 %v363
    %860 = vmatprep.subr.bf16.mxu0 0
    %861 = vmatpush1.bf16.msra.mxu0 %v364
    %862 = vmatprep.subr.bf16.mxu0 0
    %863 = vmatpush1.bf16.msra.mxu0 %v365
    %864 = vmatprep.subr.bf16.mxu0 0
    %865 = vmatpush1.bf16.msra.mxu0 0
    %866 = vmatprep.subr.bf16.mxu0 0
    %867 = vmatpush1.bf16.msra.mxu0 0
    %868 = vmatprep.subr.bf16.mxu0 0
    %869 = vmatpush1.bf16.msra.mxu0 0
    %870 = vmatprep.subr.bf16.mxu0 0
    %871 = vmatpush1.bf16.msra.mxu0 0
    %872 = vmatprep.subr.bf16.mxu0 0
    %873 = vmatpush1.bf16.msra.mxu0 0
    %874 = vmatprep.subr.bf16.mxu0 0
    %875 = vmatpush1.bf16.msra.mxu0 0
    %876 = vmatprep.subr.bf16.mxu0 0
    %877 = vmatpush1.bf16.msra.mxu0 0
    %878 = vmatprep.subr.bf16.mxu0 0
    %879 = vmatpush1.bf16.msra.mxu0 0
    %880 = vmatprep.subr.bf16.mxu0 0
    %881 = vmatpush1.bf16.msra.mxu0 0
    %882 = vmatprep.subr.bf16.mxu0 0
    %883 = vmatpush1.bf16.msra.mxu0 0
    %884 = vmatprep.subr.bf16.mxu0 0
    %885 = vmatpush1.bf16.msra.mxu0 0
    %886 = vmatprep.subr.bf16.mxu0 0
    %887 = vmatpush1.bf16.msra.mxu0 0
    %888 = vmatprep.mubr.bf16.mxu0 0
    %889 = vmatmul.mubr.bf16.gmra.mrb[0].mxu0 %v854
    %v890 = vpop.f32.mrb[0].mxu0
    %v891 = vadd.f32 %v344, %v890
    %v892 = vpop.f32.mrb[0].mxu0
    %v893 = vpop.f32.mrb[0].mxu0
    %v894 = vpop.f32.mrb[0].mxu0
    %895 = vdwg.mxu0
    %v896 = vxor.u32 %v891, 2147483648
    %v897 = vmul.f32 %v896, 1.442695
    %v898 = vpow.pop %v897
    %v899 = vadd.f32 %v898, 1.0
    %v900 = vrcp.pop %v899
    %v901 = vmul.f32 1.0, %v900
    %v902 = vtanh.pop %v891
    %v903 = vmul.f32 %v901, %v751
    %905 = vrot.lane.b32.xlu0 %v902, 64
    %v906 = vpop.permute.xlu0 %905
    %v908 = vmul.f32 %v901, %v906
    %910 = vrot.lane.b32.xlu0 %v908, 32
    %v911 = vpop.permute.xlu0 %910
    %v913 = vadd.f32 %v903, %v911
    %v914 = vtanh.pop %v913
    %916 = vrot.lane.b32.xlu0 %v914, 64
    %v917 = vpop.permute.xlu0 %916
    %v919 = vmul.f32 %v901, %v917
    %921 = vrot.lane.b32.xlu0 %v919, 32
    %v922 = vpop.permute.xlu0 %921
    %924 = vst.msk [vmem:[#allocation2 + $0xc] sm:$0xf] %vm442, %v922
    %v925 = vpack.c.bf16 %v840, %v840
    %v927 = vrot.slane %v925, 2
    %928 = vrot.lane.b32.xlu0 %v927, 32
    %v929 = vpop.permute.xlu0 %928
    %v931 = vsel %vm265, %v929, 0
    %933 = vmatprep.subr.bf16.mxu0 0
    %934 = vmatpush1.bf16.msra.mxu0 %v261
    %935 = vmatprep.subr.bf16.mxu0 0
    %936 = vmatpush1.bf16.msra.mxu0 %v262
    %937 = vmatprep.subr.bf16.mxu0 0
    %938 = vmatpush1.bf16.msra.mxu0 0
    %939 = vmatprep.subr.bf16.mxu0 0
    %940 = vmatpush1.bf16.msra.mxu0 0
    %941 = vmatprep.subr.bf16.mxu0 0
    %942 = vmatpush1.bf16.msra.mxu0 0
    %943 = vmatprep.subr.bf16.mxu0 0
    %944 = vmatpush1.bf16.msra.mxu0 0
    %945 = vmatprep.subr.bf16.mxu0 0
    %946 = vmatpush1.bf16.msra.mxu0 0
    %947 = vmatprep.subr.bf16.mxu0 0
    %948 = vmatpush1.bf16.msra.mxu0 0
    %949 = vmatprep.subr.bf16.mxu0 0
    %950 = vmatpush1.bf16.msra.mxu0 0
    %951 = vmatprep.subr.bf16.mxu0 0
    %952 = vmatpush1.bf16.msra.mxu0 0
    %953 = vmatprep.subr.bf16.mxu0 0
    %954 = vmatpush1.bf16.msra.mxu0 0
    %955 = vmatprep.subr.bf16.mxu0 0
    %956 = vmatpush1.bf16.msra.mxu0 0
    %957 = vmatprep.subr.bf16.mxu0 0
    %958 = vmatpush1.bf16.msra.mxu0 0
    %959 = vmatprep.subr.bf16.mxu0 0
    %960 = vmatpush1.bf16.msra.mxu0 0
    %961 = vmatprep.subr.bf16.mxu0 0
    %962 = vmatpush1.bf16.msra.mxu0 0
    %963 = vmatprep.subr.bf16.mxu0 0
    %964 = vmatpush1.bf16.msra.mxu0 0
    %965 = vmatprep.mubr.bf16.mxu0 0
    %966 = vmatmul.mubr.bf16.gmra.mrb[0].mxu0 %v931
    %v967 = vpop.f32.mrb[0].mxu0
    %v968 = vadd.f32 0.0, %v967
    %v969 = vpop.f32.mrb[0].mxu0
    %v970 = vpop.f32.mrb[0].mxu0
    %v971 = vpop.f32.mrb[0].mxu0
    %972 = vdwg.mxu0
    %v973 = vadd.f32 %v171, %v968
    %v974 = vxor.u32 %v973, 2147483648
    %v975 = vmul.f32 %v974, 1.442695
    %v976 = vpow.pop %v975
    %v977 = vadd.f32 %v976, 1.0
    %v978 = vrcp.pop %v977
    %v979 = vmul.f32 1.0, %v978
    %v980 = vtanh.pop %v973
    %v982 = vrot.slane %v834, 4
    %v984 = vmul.f32 %v979, %v982
    %986 = vrot.lane.b32.xlu0 %v980, 64
    %v987 = vpop.permute.xlu0 %986
    %v989 = vmul.f32 %v979, %v987
    %991 = vrot.lane.b32.xlu0 %v989, 32
    %v992 = vpop.permute.xlu0 %991
    %v994 = vadd.f32 %v984, %v992
    %v995 = vtanh.pop %v994
    %997 = vrot.lane.b32.xlu0 %v995, 64
    %v998 = vpop.permute.xlu0 %997
    %v1000 = vmul.f32 %v979, %v998
    %1002 = vrot.lane.b32.xlu0 %v1000, 32
    %v1003 = vpop.permute.xlu0 %1002
    %1005 = vrot.lane.b32.xlu0 %v919, 64
    %v1006 = vpop.permute.xlu0 %1005
    %v1008 = vsel %vm265, %v1003, %v1006
    %v1009 = vpack.c.bf16 %v1008, %v1008
    %v1011 = vsel %vm370, %v1009, 0
    %1013 = vmatprep.subr.bf16.mxu0 0
    %1014 = vmatpush1.bf16.msra.mxu0 %v362
    %1015 = vmatprep.subr.bf16.mxu0 0
    %1016 = vmatpush1.bf16.msra.mxu0 %v363
    %1017 = vmatprep.subr.bf16.mxu0 0
    %1018 = vmatpush1.bf16.msra.mxu0 %v364
    %1019 = vmatprep.subr.bf16.mxu0 0
    %1020 = vmatpush1.bf16.msra.mxu0 %v365
    %1021 = vmatprep.subr.bf16.mxu0 0
    %1022 = vmatpush1.bf16.msra.mxu0 0
    %1023 = vmatprep.subr.bf16.mxu0 0
    %1024 = vmatpush1.bf16.msra.mxu0 0
    %1025 = vmatprep.subr.bf16.mxu0 0
    %1026 = vmatpush1.bf16.msra.mxu0 0
    %1027 = vmatprep.subr.bf16.mxu0 0
    %1028 = vmatpush1.bf16.msra.mxu0 0
    %1029 = vmatprep.subr.bf16.mxu0 0
    %1030 = vmatpush1.bf16.msra.mxu0 0
    %1031 = vmatprep.subr.bf16.mxu0 0
    %1032 = vmatpush1.bf16.msra.mxu0 0
    %1033 = vmatprep.subr.bf16.mxu0 0
    %1034 = vmatpush1.bf16.msra.mxu0 0
    %1035 = vmatprep.subr.bf16.mxu0 0
    %1036 = vmatpush1.bf16.msra.mxu0 0
    %1037 = vmatprep.subr.bf16.mxu0 0
    %1038 = vmatpush1.bf16.msra.mxu0 0
    %1039 = vmatprep.subr.bf16.mxu0 0
    %1040 = vmatpush1.bf16.msra.mxu0 0
    %1041 = vmatprep.subr.bf16.mxu0 0
    %1042 = vmatpush1.bf16.msra.mxu0 0
    %1043 = vmatprep.subr.bf16.mxu0 0
    %1044 = vmatpush1.bf16.msra.mxu0 0
    %1045 = vmatprep.mubr.bf16.mxu0 0
    %1046 = vmatmul.mubr.bf16.gmra.mrb[0].mxu0 %v1011
    %v1047 = vpop.f32.mrb[0].mxu0
    %v1048 = vadd.f32 %v344, %v1047
    %v1049 = vpop.f32.mrb[0].mxu0
    %v1050 = vpop.f32.mrb[0].mxu0
    %v1051 = vpop.f32.mrb[0].mxu0
    %1052 = vdwg.mxu0
    %v1053 = vxor.u32 %v1048, 2147483648
    %v1054 = vmul.f32 %v1053, 1.442695
    %v1055 = vpow.pop %v1054
    %v1056 = vadd.f32 %v1055, 1.0
    %v1057 = vrcp.pop %v1056
    %v1058 = vmul.f32 1.0, %v1057
    %v1059 = vtanh.pop %v1048
    %v1060 = vmul.f32 %v1058, %v913
    %1062 = vrot.lane.b32.xlu0 %v1059, 64
    %v1063 = vpop.permute.xlu0 %1062
    %v1065 = vmul.f32 %v1058, %v1063
    %1067 = vrot.lane.b32.xlu0 %v1065, 32
    %v1068 = vpop.permute.xlu0 %1067
    %v1070 = vadd.f32 %v1060, %v1068
    %v1071 = vtanh.pop %v1070
    %1073 = vrot.lane.b32.xlu0 %v1071, 64
    %v1074 = vpop.permute.xlu0 %1073
    %v1076 = vmul.f32 %v1058, %v1074
    %1078 = vrot.lane.b32.xlu0 %v1076, 32
    %v1079 = vpop.permute.xlu0 %1078
    %1081 = vst.msk [vmem:[#allocation2 + $0x10] sm:$0xf] %vm442, %v1079
    %v1082 = vpack.c.bf16 %v1000, %v1000
    %1084 = vrot.lane.b32.xlu0 %v1082, 32
    %v1085 = vpop.permute.xlu0 %1084
    %v1087 = vsel %vm265, %v1085, 0
    %1089 = vmatprep.subr.bf16.mxu0 0
    %1090 = vmatpush1.bf16.msra.mxu0 %v261
    %1091 = vmatprep.subr.bf16.mxu0 0
    %1092 = vmatpush1.bf16.msra.mxu0 %v262
    %1093 = vmatprep.subr.bf16.mxu0 0
    %1094 = vmatpush1.bf16.msra.mxu0 0
    %1095 = vmatprep.subr.bf16.mxu0 0
    %1096 = vmatpush1.bf16.msra.mxu0 0
    %1097 = vmatprep.subr.bf16.mxu0 0
    %1098 = vmatpush1.bf16.msra.mxu0 0
    %1099 = vmatprep.subr.bf16.mxu0 0
    %1100 = vmatpush1.bf16.msra.mxu0 0
    %1101 = vmatprep.subr.bf16.mxu0 0
    %1102 = vmatpush1.bf16.msra.mxu0 0
    %1103 = vmatprep.subr.bf16.mxu0 0
    %1104 = vmatpush1.bf16.msra.mxu0 0
    %1105 = vmatprep.subr.bf16.mxu0 0
    %1106 = vmatpush1.bf16.msra.mxu0 0
    %1107 = vmatprep.subr.bf16.mxu0 0
    %1108 = vmatpush1.bf16.msra.mxu0 0
    %1109 = vmatprep.subr.bf16.mxu0 0
    %1110 = vmatpush1.bf16.msra.mxu0 0
    %1111 = vmatprep.subr.bf16.mxu0 0
    %1112 = vmatpush1.bf16.msra.mxu0 0
    %1113 = vmatprep.subr.bf16.mxu0 0
    %1114 = vmatpush1.bf16.msra.mxu0 0
    %1115 = vmatprep.subr.bf16.mxu0 0
    %1116 = vmatpush1.bf16.msra.mxu0 0
    %1117 = vmatprep.subr.bf16.mxu0 0
    %1118 = vmatpush1.bf16.msra.mxu0 0
    %1119 = vmatprep.subr.bf16.mxu0 0
    %1120 = vmatpush1.bf16.msra.mxu0 0
    %1121 = vmatprep.mubr.bf16.mxu0 0
    %1122 = vmatmul.mubr.bf16.gmra.mrb[0].mxu0 %v1087
    %v1123 = vpop.f32.mrb[0].mxu0
    %v1124 = vadd.f32 0.0, %v1123
    %v1125 = vpop.f32.mrb[0].mxu0
    %v1126 = vpop.f32.mrb[0].mxu0
    %v1127 = vpop.f32.mrb[0].mxu0
    %1128 = vdwg.mxu0
    %v1130 = vrot.slane %v1124, 4
    %v1132 = vadd.f32 %v171, %v1130
    %v1133 = vxor.u32 %v1132, 2147483648
    %v1134 = vmul.f32 %v1133, 1.442695
    %v1135 = vpow.pop %v1134
    %v1136 = vadd.f32 %v1135, 1.0
    %v1137 = vrcp.pop %v1136
    %v1138 = vmul.f32 1.0, %v1137
    %v1139 = vtanh.pop %v1132
    %v1141 = vrot.slane %v994, 4
    %v1143 = vmul.f32 %v1138, %v1141
    %1145 = vrot.lane.b32.xlu0 %v1139, 64
    %v1146 = vpop.permute.xlu0 %1145
    %v1148 = vmul.f32 %v1138, %v1146
    %1150 = vrot.lane.b32.xlu0 %v1148, 32
    %v1151 = vpop.permute.xlu0 %1150
    %v1153 = vadd.f32 %v1143, %v1151
    %v1154 = vtanh.pop %v1153
    %1156 = vrot.lane.b32.xlu0 %v1154, 64
    %v1157 = vpop.permute.xlu0 %1156
    %v1159 = vmul.f32 %v1138, %v1157
    %1161 = vrot.lane.b32.xlu0 %v1159, 32
    %v1162 = vpop.permute.xlu0 %1161
    %v1164 = vrot.slane %v1076, 4
    %1165 = vrot.lane.b32.xlu0 %v1164, 64
    %v1166 = vpop.permute.xlu0 %1165
    %v1168 = vsel %vm265, %v1162, %v1166
    %v1169 = vpack.c.bf16 %v1168, %v1168
    %v1171 = vrot.slane %v1169, 2
    %v1173 = vsel %vm370, %v1171, 0
    %1175 = vmatprep.subr.bf16.mxu0 0
    %1176 = vmatpush1.bf16.msra.mxu0 %v362
    %1177 = vmatprep.subr.bf16.mxu0 0
    %1178 = vmatpush1.bf16.msra.mxu0 %v363
    %1179 = vmatprep.subr.bf16.mxu0 0
    %1180 = vmatpush1.bf16.msra.mxu0 %v364
    %1181 = vmatprep.subr.bf16.mxu0 0
    %1182 = vmatpush1.bf16.msra.mxu0 %v365
    %1183 = vmatprep.subr.bf16.mxu0 0
    %1184 = vmatpush1.bf16.msra.mxu0 0
    %1185 = vmatprep.subr.bf16.mxu0 0
    %1186 = vmatpush1.bf16.msra.mxu0 0
    %1187 = vmatprep.subr.bf16.mxu0 0
    %1188 = vmatpush1.bf16.msra.mxu0 0
    %1189 = vmatprep.subr.bf16.mxu0 0
    %1190 = vmatpush1.bf16.msra.mxu0 0
    %1191 = vmatprep.subr.bf16.mxu0 0
    %1192 = vmatpush1.bf16.msra.mxu0 0
    %1193 = vmatprep.subr.bf16.mxu0 0
    %1194 = vmatpush1.bf16.msra.mxu0 0
    %1195 = vmatprep.subr.bf16.mxu0 0
    %1196 = vmatpush1.bf16.msra.mxu0 0
    %1197 = vmatprep.subr.bf16.mxu0 0
    %1198 = vmatpush1.bf16.msra.mxu0 0
    %1199 = vmatprep.subr.bf16.mxu0 0
    %1200 = vmatpush1.bf16.msra.mxu0 0
    %1201 = vmatprep.subr.bf16.mxu0 0
    %1202 = vmatpush1.bf16.msra.mxu0 0
    %1203 = vmatprep.subr.bf16.mxu0 0
    %1204 = vmatpush1.bf16.msra.mxu0 0
    %1205 = vmatprep.subr.bf16.mxu0 0
    %1206 = vmatpush1.bf16.msra.mxu0 0
    %1207 = vmatprep.mubr.bf16.mxu0 0
    %1208 = vmatmul.mubr.bf16.gmra.mrb[0].mxu0 %v1173
    %v1209 = vpop.f32.mrb[0].mxu0
    %v1210 = vadd.f32 %v344, %v1209
    %v1211 = vpop.f32.mrb[0].mxu0
    %v1212 = vpop.f32.mrb[0].mxu0
    %v1213 = vpop.f32.mrb[0].mxu0
    %1214 = vdwg.mxu0
    %v1215 = vxor.u32 %v1210, 2147483648
    %v1216 = vmul.f32 %v1215, 1.442695
    %v1217 = vpow.pop %v1216
    %v1218 = vadd.f32 %v1217, 1.0
    %v1219 = vrcp.pop %v1218
    %v1220 = vmul.f32 1.0, %v1219
    %v1221 = vtanh.pop %v1210
    %v1222 = vmul.f32 %v1220, %v1070
    %1224 = vrot.lane.b32.xlu0 %v1221, 64
    %v1225 = vpop.permute.xlu0 %1224
    %v1227 = vmul.f32 %v1220, %v1225
    %1229 = vrot.lane.b32.xlu0 %v1227, 32
    %v1230 = vpop.permute.xlu0 %1229
    %v1232 = vadd.f32 %v1222, %v1230
    %v1233 = vtanh.pop %v1232
    %1235 = vrot.lane.b32.xlu0 %v1233, 64
    %v1236 = vpop.permute.xlu0 %1235
    %v1238 = vmul.f32 %v1220, %v1236
    %1240 = vrot.lane.b32.xlu0 %v1238, 32
    %v1241 = vpop.permute.xlu0 %1240
    %1243 = vst.msk [vmem:[#allocation2 + $0x14] sm:$0xf] %vm442, %v1241
    %v1244 = vpack.c.bf16 %v1159, %v1159
    %v1246 = vrot.slane %v1244, 2
    %1247 = vrot.lane.b32.xlu0 %v1246, 32
    %v1248 = vpop.permute.xlu0 %1247
    %v1250 = vsel %vm265, %v1248, 0
    %1252 = vmatprep.subr.bf16.mxu0 0
    %1253 = vmatpush1.bf16.msra.mxu0 %v261
    %1254 = vmatprep.subr.bf16.mxu0 0
    %1255 = vmatpush1.bf16.msra.mxu0 %v262
    %1256 = vmatprep.subr.bf16.mxu0 0
    %1257 = vmatpush1.bf16.msra.mxu0 0
    %1258 = vmatprep.subr.bf16.mxu0 0
    %1259 = vmatpush1.bf16.msra.mxu0 0
    %1260 = vmatprep.subr.bf16.mxu0 0
    %1261 = vmatpush1.bf16.msra.mxu0 0
    %1262 = vmatprep.subr.bf16.mxu0 0
    %1263 = vmatpush1.bf16.msra.mxu0 0
    %1264 = vmatprep.subr.bf16.mxu0 0
    %1265 = vmatpush1.bf16.msra.mxu0 0
    %1266 = vmatprep.subr.bf16.mxu0 0
    %1267 = vmatpush1.bf16.msra.mxu0 0
    %1268 = vmatprep.subr.bf16.mxu0 0
    %1269 = vmatpush1.bf16.msra.mxu0 0
    %1270 = vmatprep.subr.bf16.mxu0 0
    %1271 = vmatpush1.bf16.msra.mxu0 0
    %1272 = vmatprep.subr.bf16.mxu0 0
    %1273 = vmatpush1.bf16.msra.mxu0 0
    %1274 = vmatprep.subr.bf16.mxu0 0
    %1275 = vmatpush1.bf16.msra.mxu0 0
    %1276 = vmatprep.subr.bf16.mxu0 0
    %1277 = vmatpush1.bf16.msra.mxu0 0
    %1278 = vmatprep.subr.bf16.mxu0 0
    %1279 = vmatpush1.bf16.msra.mxu0 0
    %1280 = vmatprep.subr.bf16.mxu0 0
    %1281 = vmatpush1.bf16.msra.mxu0 0
    %1282 = vmatprep.subr.bf16.mxu0 0
    %1283 = vmatpush1.bf16.msra.mxu0 0
    %1284 = vmatprep.mubr.bf16.mxu0 0
    %1285 = vmatmul.mubr.bf16.gmra.mrb[0].mxu0 %v1250
    %v1286 = vpop.f32.mrb[0].mxu0
    %v1287 = vadd.f32 0.0, %v1286
    %v1288 = vpop.f32.mrb[0].mxu0
    %v1289 = vpop.f32.mrb[0].mxu0
    %v1290 = vpop.f32.mrb[0].mxu0
    %1291 = vdwg.mxu0
    %v1292 = vadd.f32 %v174, %v1287
    %v1293 = vxor.u32 %v1292, 2147483648
    %v1294 = vmul.f32 %v1293, 1.442695
    %v1295 = vpow.pop %v1294
    %v1296 = vadd.f32 %v1295, 1.0
    %v1297 = vrcp.pop %v1296
    %v1298 = vmul.f32 1.0, %v1297
    %v1299 = vtanh.pop %v1292
    %v1301 = vrot.slane %v1153, 4
    %v1303 = vmul.f32 %v1298, %v1301
    %1305 = vrot.lane.b32.xlu0 %v1299, 64
    %v1306 = vpop.permute.xlu0 %1305
    %v1308 = vmul.f32 %v1298, %v1306
    %1310 = vrot.lane.b32.xlu0 %v1308, 32
    %v1311 = vpop.permute.xlu0 %1310
    %v1313 = vadd.f32 %v1303, %v1311
    %v1314 = vtanh.pop %v1313
    %1316 = vrot.lane.b32.xlu0 %v1314, 64
    %v1317 = vpop.permute.xlu0 %1316
    %v1319 = vmul.f32 %v1298, %v1317
    %1321 = vrot.lane.b32.xlu0 %v1319, 32
    %v1322 = vpop.permute.xlu0 %1321
    %1324 = vrot.lane.b32.xlu0 %v1238, 64
    %v1325 = vpop.permute.xlu0 %1324
    %v1327 = vsel %vm265, %v1322, %v1325
    %v1328 = vpack.c.bf16 %v1327, %v1327
    %v1330 = vsel %vm370, %v1328, 0
    %1332 = vmatprep.subr.bf16.mxu0 0
    %1333 = vmatpush1.bf16.msra.mxu0 %v362
    %1334 = vmatprep.subr.bf16.mxu0 0
    %1335 = vmatpush1.bf16.msra.mxu0 %v363
    %1336 = vmatprep.subr.bf16.mxu0 0
    %1337 = vmatpush1.bf16.msra.mxu0 %v364
    %1338 = vmatprep.subr.bf16.mxu0 0
    %1339 = vmatpush1.bf16.msra.mxu0 %v365
    %1340 = vmatprep.subr.bf16.mxu0 0
    %1341 = vmatpush1.bf16.msra.mxu0 0
    %1342 = vmatprep.subr.bf16.mxu0 0
    %1343 = vmatpush1.bf16.msra.mxu0 0
    %1344 = vmatprep.subr.bf16.mxu0 0
    %1345 = vmatpush1.bf16.msra.mxu0 0
    %1346 = vmatprep.subr.bf16.mxu0 0
    %1347 = vmatpush1.bf16.msra.mxu0 0
    %1348 = vmatprep.subr.bf16.mxu0 0
    %1349 = vmatpush1.bf16.msra.mxu0 0
    %1350 = vmatprep.subr.bf16.mxu0 0
    %1351 = vmatpush1.bf16.msra.mxu0 0
    %1352 = vmatprep.subr.bf16.mxu0 0
    %1353 = vmatpush1.bf16.msra.mxu0 0
    %1354 = vmatprep.subr.bf16.mxu0 0
    %1355 = vmatpush1.bf16.msra.mxu0 0
    %1356 = vmatprep.subr.bf16.mxu0 0
    %1357 = vmatpush1.bf16.msra.mxu0 0
    %1358 = vmatprep.subr.bf16.mxu0 0
    %1359 = vmatpush1.bf16.msra.mxu0 0
    %1360 = vmatprep.subr.bf16.mxu0 0
    %1361 = vmatpush1.bf16.msra.mxu0 0
    %1362 = vmatprep.subr.bf16.mxu0 0
    %1363 = vmatpush1.bf16.msra.mxu0 0
    %1364 = vmatprep.mubr.bf16.mxu0 0
    %1365 = vmatmul.mubr.bf16.gmra.mrb[0].mxu0 %v1330
    %v1366 = vpop.f32.mrb[0].mxu0
    %v1367 = vadd.f32 %v344, %v1366
    %v1368 = vpop.f32.mrb[0].mxu0
    %v1369 = vpop.f32.mrb[0].mxu0
    %v1370 = vpop.f32.mrb[0].mxu0
    %1371 = vdwg.mxu0
    %v1372 = vxor.u32 %v1367, 2147483648
    %v1373 = vmul.f32 %v1372, 1.442695
    %v1374 = vpow.pop %v1373
    %v1375 = vadd.f32 %v1374, 1.0
    %v1376 = vrcp.pop %v1375
    %v1377 = vmul.f32 1.0, %v1376
    %v1378 = vtanh.pop %v1367
    %v1379 = vmul.f32 %v1377, %v1232
    %1381 = vrot.lane.b32.xlu0 %v1378, 64
    %v1382 = vpop.permute.xlu0 %1381
    %v1384 = vmul.f32 %v1377, %v1382
    %1386 = vrot.lane.b32.xlu0 %v1384, 32
    %v1387 = vpop.permute.xlu0 %1386
    %v1389 = vadd.f32 %v1379, %v1387
    %v1390 = vtanh.pop %v1389
    %1392 = vrot.lane.b32.xlu0 %v1390, 64
    %v1393 = vpop.permute.xlu0 %1392
    %v1395 = vmul.f32 %v1377, %v1393
    %1397 = vrot.lane.b32.xlu0 %v1395, 32
    %v1398 = vpop.permute.xlu0 %1397
    %1400 = vst.msk [vmem:[#allocation2 + $0x18] sm:$0xf] %vm442, %v1398
    %v1401 = vpack.c.bf16 %v1319, %v1319
    %1403 = vrot.lane.b32.xlu0 %v1401, 32
    %v1404 = vpop.permute.xlu0 %1403
    %v1406 = vsel %vm265, %v1404, 0
    %1408 = vmatprep.subr.bf16.mxu0 0
    %1409 = vmatpush1.bf16.msra.mxu0 %v261
    %1410 = vmatprep.subr.bf16.mxu0 0
    %1411 = vmatpush1.bf16.msra.mxu0 %v262
    %1412 = vmatprep.subr.bf16.mxu0 0
    %1413 = vmatpush1.bf16.msra.mxu0 0
    %1414 = vmatprep.subr.bf16.mxu0 0
    %1415 = vmatpush1.bf16.msra.mxu0 0
    %1416 = vmatprep.subr.bf16.mxu0 0
    %1417 = vmatpush1.bf16.msra.mxu0 0
    %1418 = vmatprep.subr.bf16.mxu0 0
    %1419 = vmatpush1.bf16.msra.mxu0 0
    %1420 = vmatprep.subr.bf16.mxu0 0
    %1421 = vmatpush1.bf16.msra.mxu0 0
    %1422 = vmatprep.subr.bf16.mxu0 0
    %1423 = vmatpush1.bf16.msra.mxu0 0
    %1424 = vmatprep.subr.bf16.mxu0 0
    %1425 = vmatpush1.bf16.msra.mxu0 0
    %1426 = vmatprep.subr.bf16.mxu0 0
    %1427 = vmatpush1.bf16.msra.mxu0 0
    %1428 = vmatprep.subr.bf16.mxu0 0
    %1429 = vmatpush1.bf16.msra.mxu0 0
    %1430 = vmatprep.subr.bf16.mxu0 0
    %1431 = vmatpush1.bf16.msra.mxu0 0
    %1432 = vmatprep.subr.bf16.mxu0 0
    %1433 = vmatpush1.bf16.msra.mxu0 0
    %1434 = vmatprep.subr.bf16.mxu0 0
    %1435 = vmatpush1.bf16.msra.mxu0 0
    %1436 = vmatprep.subr.bf16.mxu0 0
    %1437 = vmatpush1.bf16.msra.mxu0 0
    %1438 = vmatprep.subr.bf16.mxu0 0
    %1439 = vmatpush1.bf16.msra.mxu0 0
    %1440 = vmatprep.mubr.bf16.mxu0 0
    %1441 = vmatmul.mubr.bf16.gmra.mrb[0].mxu0 %v1406
    %v1442 = vpop.f32.mrb[0].mxu0
    %v1443 = vadd.f32 0.0, %v1442
    %v1444 = vpop.f32.mrb[0].mxu0
    %v1445 = vpop.f32.mrb[0].mxu0
    %v1446 = vpop.f32.mrb[0].mxu0
    %1447 = vdwg.mxu0
    %v1449 = vrot.slane %v1443, 4
    %v1451 = vadd.f32 %v174, %v1449
    %v1452 = vxor.u32 %v1451, 2147483648
    %v1453 = vmul.f32 %v1452, 1.442695
    %v1454 = vpow.pop %v1453
    %v1455 = vadd.f32 %v1454, 1.0
    %v1456 = vrcp.pop %v1455
    %v1457 = vmul.f32 1.0, %v1456
    %v1458 = vtanh.pop %v1451
    %v1460 = vrot.slane %v1313, 4
    %v1462 = vmul.f32 %v1457, %v1460
    %1464 = vrot.lane.b32.xlu0 %v1458, 64
    %v1465 = vpop.permute.xlu0 %1464
    %v1467 = vmul.f32 %v1457, %v1465
    %1469 = vrot.lane.b32.xlu0 %v1467, 32
    %v1470 = vpop.permute.xlu0 %1469
    %v1472 = vadd.f32 %v1462, %v1470
    %v1473 = vtanh.pop %v1472
    %1475 = vrot.lane.b32.xlu0 %v1473, 64
    %v1476 = vpop.permute.xlu0 %1475
    %v1478 = vmul.f32 %v1457, %v1476
    %1480 = vrot.lane.b32.xlu0 %v1478, 32
    %v1481 = vpop.permute.xlu0 %1480
    %v1483 = vrot.slane %v1395, 4
    %1484 = vrot.lane.b32.xlu0 %v1483, 64
    %v1485 = vpop.permute.xlu0 %1484
    %v1487 = vsel %vm265, %v1481, %v1485
    %v1488 = vpack.c.bf16 %v1487, %v1487
    %v1490 = vrot.slane %v1488, 2
    %v1492 = vsel %vm370, %v1490, 0
    %1494 = vmatprep.subr.bf16.mxu0 0
    %1495 = vmatpush1.bf16.msra.mxu0 %v362
    %1496 = vmatprep.subr.bf16.mxu0 0
    %1497 = vmatpush1.bf16.msra.mxu0 %v363
    %1498 = vmatprep.subr.bf16.mxu0 0
    %1499 = vmatpush1.bf16.msra.mxu0 %v364
    %1500 = vmatprep.subr.bf16.mxu0 0
    %1501 = vmatpush1.bf16.msra.mxu0 %v365
    %1502 = vmatprep.subr.bf16.mxu0 0
    %1503 = vmatpush1.bf16.msra.mxu0 0
    %1504 = vmatprep.subr.bf16.mxu0 0
    %1505 = vmatpush1.bf16.msra.mxu0 0
    %1506 = vmatprep.subr.bf16.mxu0 0
    %1507 = vmatpush1.bf16.msra.mxu0 0
    %1508 = vmatprep.subr.bf16.mxu0 0
    %1509 = vmatpush1.bf16.msra.mxu0 0
    %1510 = vmatprep.subr.bf16.mxu0 0
    %1511 = vmatpush1.bf16.msra.mxu0 0
    %1512 = vmatprep.subr.bf16.mxu0 0
    %1513 = vmatpush1.bf16.msra.mxu0 0
    %1514 = vmatprep.subr.bf16.mxu0 0
    %1515 = vmatpush1.bf16.msra.mxu0 0
    %1516 = vmatprep.subr.bf16.mxu0 0
    %1517 = vmatpush1.bf16.msra.mxu0 0
    %1518 = vmatprep.subr.bf16.mxu0 0
    %1519 = vmatpush1.bf16.msra.mxu0 0
    %1520 = vmatprep.subr.bf16.mxu0 0
    %1521 = vmatpush1.bf16.msra.mxu0 0
    %1522 = vmatprep.subr.bf16.mxu0 0
    %1523 = vmatpush1.bf16.msra.mxu0 0
    %1524 = vmatprep.subr.bf16.mxu0 0
    %1525 = vmatpush1.bf16.msra.mxu0 0
    %1526 = vmatprep.mubr.bf16.mxu0 0
    %1527 = vmatmul.mubr.bf16.gmra.mrb[0].mxu0 %v1492
    %v1528 = vpop.f32.mrb[0].mxu0
    %v1529 = vadd.f32 %v344, %v1528
    %v1530 = vpop.f32.mrb[0].mxu0
    %v1531 = vpop.f32.mrb[0].mxu0
    %v1532 = vpop.f32.mrb[0].mxu0
    %1533 = vdwg.mxu0
    %v1534 = vxor.u32 %v1529, 2147483648
    %v1535 = vmul.f32 %v1534, 1.442695
    %v1536 = vpow.pop %v1535
    %v1537 = vadd.f32 %v1536, 1.0
    %v1538 = vrcp.pop %v1537
    %v1539 = vmul.f32 1.0, %v1538
    %v1540 = vtanh.pop %v1529
    %v1541 = vmul.f32 %v1539, %v1389
    %1543 = vrot.lane.b32.xlu0 %v1540, 64
    %v1544 = vpop.permute.xlu0 %1543
    %v1546 = vmul.f32 %v1539, %v1544
    %1548 = vrot.lane.b32.xlu0 %v1546, 32
    %v1549 = vpop.permute.xlu0 %1548
    %v1551 = vadd.f32 %v1541, %v1549
    %v1552 = vtanh.pop %v1551
    %1554 = vrot.lane.b32.xlu0 %v1552, 64
    %v1555 = vpop.permute.xlu0 %1554
    %v1557 = vmul.f32 %v1539, %v1555
    %1559 = vrot.lane.b32.xlu0 %v1557, 32
    %v1560 = vpop.permute.xlu0 %1559
    %1562 = vst.msk [vmem:[#allocation2 + $0x1c] sm:$0xf] %vm442, %v1560
    %v1563 = vld [vmem:[#allocation2] sm:$0xff]
    %v1564 = vld [vmem:[#allocation2 + $0x8] sm:$0xff]
    %v1565 = vld [vmem:[#allocation2 + $0x10] sm:$0xff]
    %v1566 = vld [vmem:[#allocation2 + $0x18] sm:$0xff]
    %v1567 = vld [vmem:[%s8] sm:$0xf]
    %v1568 = vld [vmem:[%s8 + $0x4] sm:$0xf]
    %v1569 = vld [vmem:[%s8 + $0x8] sm:$0xf]
    %v1570 = vld [vmem:[%s8 + $0xc] sm:$0xf]
    %v1571 = vpack.c.bf16 %v1564, %v1563
    %v1572 = vpack.c.bf16 %v1566, %v1565
    %v1573 = vld [vmem:[#allocation4] sm:$0x1]
    %v1575 = vlaneseq
    %v1576 = vshrl.u32 %v1575, 7
    %v1577 = vsub.s32 0, %v1576
    %v1578 = vrot.slane %v1573, %v1577
    %v1584 = vunpack.c.l.b16 %v1567
    %v1585 = vunpack.c.l.b16 %v1568
    %v1586 = vunpack.c.l.b16 %v1569
    %v1587 = vunpack.c.l.b16 %v1570
    %v1588 = vpack.c.b16 %v1585, %v1584
    %v1589 = vpack.c.b16 %v1587, %v1586
    %v1593 = vsel %vm265, %v1571, 0
    %v1596 = vsel %vm265, %v1572, 0
    %1598 = vmatprep.subr.bf16.mxu0 0
    %1599 = vmatpush1.bf16.msra.mxu0 %v1588
    %1600 = vmatprep.subr.bf16.mxu0 0
    %1601 = vmatpush1.bf16.msra.mxu0 %v1589
    %1602 = vmatprep.subr.bf16.mxu0 0
    %1603 = vmatpush1.bf16.msra.mxu0 0
    %1604 = vmatprep.subr.bf16.mxu0 0
    %1605 = vmatpush1.bf16.msra.mxu0 0
    %1606 = vmatprep.subr.bf16.mxu0 0
    %1607 = vmatpush1.bf16.msra.mxu0 0
    %1608 = vmatprep.subr.bf16.mxu0 0
    %1609 = vmatpush1.bf16.msra.mxu0 0
    %1610 = vmatprep.subr.bf16.mxu0 0
    %1611 = vmatpush1.bf16.msra.mxu0 0
    %1612 = vmatprep.subr.bf16.mxu0 0
    %1613 = vmatpush1.bf16.msra.mxu0 0
    %1614 = vmatprep.subr.bf16.mxu0 0
    %1615 = vmatpush1.bf16.msra.mxu0 0
    %1616 = vmatprep.subr.bf16.mxu0 0
    %1617 = vmatpush1.bf16.msra.mxu0 0
    %1618 = vmatprep.subr.bf16.mxu0 0
    %1619 = vmatpush1.bf16.msra.mxu0 0
    %1620 = vmatprep.subr.bf16.mxu0 0
    %1621 = vmatpush1.bf16.msra.mxu0 0
    %1622 = vmatprep.subr.bf16.mxu0 0
    %1623 = vmatpush1.bf16.msra.mxu0 0
    %1624 = vmatprep.subr.bf16.mxu0 0
    %1625 = vmatpush1.bf16.msra.mxu0 0
    %1626 = vmatprep.subr.bf16.mxu0 0
    %1627 = vmatpush1.bf16.msra.mxu0 0
    %1628 = vmatprep.subr.bf16.mxu0 0
    %1629 = vmatpush1.bf16.msra.mxu0 0
    %1630 = vmatprep.mubr.bf16.mxu0 0
    %1631 = vmatmul.mubr.bf16.gmra.mrb[0].mxu0 %v1593
    %v1632 = vpop.f32.mrb[0].mxu0
    %v1633 = vadd.f32 %v1578, %v1632
    %v1634 = vpop.f32.mrb[0].mxu0
    %v1635 = vpop.f32.mrb[0].mxu0
    %v1636 = vadd.f32 %v1578, %v1635
    %v1637 = vpop.f32.mrb[0].mxu0
    %1638 = vmatprep.mubr.bf16.mxu0 0
    %1639 = vmatmul.mubr.bf16.gmra.mrb[0].mxu0 %v1596
    %v1640 = vpop.f32.mrb[0].mxu0
    %v1641 = vadd.f32 %v1578, %v1640
    %v1642 = vpop.f32.mrb[0].mxu0
    %v1643 = vpop.f32.mrb[0].mxu0
    %v1644 = vadd.f32 %v1578, %v1643
    %v1645 = vpop.f32.mrb[0].mxu0
    %1646 = vdwg.mxu0
    %vm1647 = vcmask 7168
    %v1648 = vsel %vm1647, %v1633, -inf
    %v1649 = vsel %vm1647, %v1636, -inf
    %v1650 = vsel %vm1647, %v1641, -inf
    %v1651 = vsel %vm1647, %v1644, -inf
    %v1652 = vmax.f32 %v1648, %v1649
    %v1653 = vmax.f32 %v1650, %v1651
    %v1654 = vmax.f32 %v1652, %v1653
    %1655 = vmax.xlane.f32.xlu0 %v1654
    %v1656 = vpop.xlane.xlu0 %1655
    %v1657 = vrot.slane %v1656, 4
    %v1658 = vmax.f32 %v1656, %v1657
    %v1659 = vrot.slane %v1658, 2
    %v1660 = vmax.f32 %v1658, %v1659
    %v1661 = vrot.slane %v1660, 1
    %v1662 = vmax.f32 %v1660, %v1661
    %s1663 = vtos %v1662
    %v1664 = vstv %s1663
    %v1665 = vsub.f32 %v1633, %v1664
    %v1666 = vsub.f32 %v1636, %v1664
    %v1667 = vsub.f32 %v1641, %v1664
    %v1668 = vsub.f32 %v1644, %v1664
    %v1669 = vld [vmem:[%s11] sm:$0xf]
    %v1670 = vld [vmem:[%s11 + $0x4] sm:$0xf]
    %v1671 = vld [vmem:[%s11 + $0x8] sm:$0xf]
    %v1672 = vld [vmem:[%s11 + $0xc] sm:$0xf]
    %v1677 = vunpack.c.l.b16 %v1669
    %v1678 = vunpack.c.l.b16 %v1670
    %v1679 = vunpack.c.l.b16 %v1671
    %v1680 = vunpack.c.l.b16 %v1672
    %v1681 = vpack.c.b16 %v1678, %v1677
    %v1682 = vpack.c.b16 %v1680, %v1679
    %1685 = vmatprep.subr.bf16.mxu0 0
    %1686 = vmatpush1.bf16.msra.mxu0 %v1681
    %1687 = vmatprep.subr.bf16.mxu0 0
    %1688 = vmatpush1.bf16.msra.mxu0 %v1682
    %1689 = vmatprep.subr.bf16.mxu0 0
    %1690 = vmatpush1.bf16.msra.mxu0 0
    %1691 = vmatprep.subr.bf16.mxu0 0
    %1692 = vmatpush1.bf16.msra.mxu0 0
    %1693 = vmatprep.subr.bf16.mxu0 0
    %1694 = vmatpush1.bf16.msra.mxu0 0
    %1695 = vmatprep.subr.bf16.mxu0 0
    %1696 = vmatpush1.bf16.msra.mxu0 0
    %1697 = vmatprep.subr.bf16.mxu0 0
    %1698 = vmatpush1.bf16.msra.mxu0 0
    %1699 = vmatprep.subr.bf16.mxu0 0
    %1700 = vmatpush1.bf16.msra.mxu0 0
    %1701 = vmatprep.subr.bf16.mxu0 0
    %1702 = vmatpush1.bf16.msra.mxu0 0
    %1703 = vmatprep.subr.bf16.mxu0 0
    %1704 = vmatpush1.bf16.msra.mxu0 0
    %1705 = vmatprep.subr.bf16.mxu0 0
    %1706 = vmatpush1.bf16.msra.mxu0 0
    %1707 = vmatprep.subr.bf16.mxu0 0
    %1708 = vmatpush1.bf16.msra.mxu0 0
    %1709 = vmatprep.subr.bf16.mxu0 0
    %1710 = vmatpush1.bf16.msra.mxu0 0
    %1711 = vmatprep.subr.bf16.mxu0 0
    %1712 = vmatpush1.bf16.msra.mxu0 0
    %1713 = vmatprep.subr.bf16.mxu0 0
    %1714 = vmatpush1.bf16.msra.mxu0 0
    %1715 = vmatprep.subr.bf16.mxu0 0
    %1716 = vmatpush1.bf16.msra.mxu0 0
    %1717 = vmatprep.mubr.bf16.mxu0 0
    %1718 = vmatmul.mubr.bf16.gmra.mrb[0].mxu0 %v1593
    %v1719 = vpop.f32.mrb[0].mxu0
    %v1720 = vadd.f32 0.0, %v1719
    %v1721 = vpop.f32.mrb[0].mxu0
    %v1722 = vpop.f32.mrb[0].mxu0
    %v1723 = vadd.f32 0.0, %v1722
    %v1724 = vpop.f32.mrb[0].mxu0
    %1725 = vmatprep.mubr.bf16.mxu0 0
    %1726 = vmatmul.mubr.bf16.gmra.mrb[0].mxu0 %v1596
    %v1727 = vpop.f32.mrb[0].mxu0
    %v1728 = vadd.f32 0.0, %v1727
    %v1729 = vpop.f32.mrb[0].mxu0
    %v1730 = vpop.f32.mrb[0].mxu0
    %v1731 = vadd.f32 0.0, %v1730
    %v1732 = vpop.f32.mrb[0].mxu0
    %1733 = vdwg.mxu0
    %v1734 = vpack.c.bf16 %v1478, %v1478
    %v1736 = vlaneseq
    %v1737 = vshrl.u32 %v1736, 7
    %v1738 = vsub.s32 0, %v1737
    %v1739 = vrot.slane %v77, %v1738
    %v1742 = vrot.slane %v1734, 2
    %1743 = vrot.lane.b32.xlu0 %v1742, 32
    %v1744 = vpop.permute.xlu0 %1743
    %v1746 = vsel %vm265, %v1744, 0
    %1748 = vmatprep.subr.bf16.mxu0 0
    %1749 = vmatpush1.bf16.msra.mxu0 %v261
    %1750 = vmatprep.subr.bf16.mxu0 0
    %1751 = vmatpush1.bf16.msra.mxu0 %v262
    %1752 = vmatprep.subr.bf16.mxu0 0
    %1753 = vmatpush1.bf16.msra.mxu0 0
    %1754 = vmatprep.subr.bf16.mxu0 0
    %1755 = vmatpush1.bf16.msra.mxu0 0
    %1756 = vmatprep.subr.bf16.mxu0 0
    %1757 = vmatpush1.bf16.msra.mxu0 0
    %1758 = vmatprep.subr.bf16.mxu0 0
    %1759 = vmatpush1.bf16.msra.mxu0 0
    %1760 = vmatprep.subr.bf16.mxu0 0
    %1761 = vmatpush1.bf16.msra.mxu0 0
    %1762 = vmatprep.subr.bf16.mxu0 0
    %1763 = vmatpush1.bf16.msra.mxu0 0
    %1764 = vmatprep.subr.bf16.mxu0 0
    %1765 = vmatpush1.bf16.msra.mxu0 0
    %1766 = vmatprep.subr.bf16.mxu0 0
    %1767 = vmatpush1.bf16.msra.mxu0 0
    %1768 = vmatprep.subr.bf16.mxu0 0
    %1769 = vmatpush1.bf16.msra.mxu0 0
    %1770 = vmatprep.subr.bf16.mxu0 0
    %1771 = vmatpush1.bf16.msra.mxu0 0
    %1772 = vmatprep.subr.bf16.mxu0 0
    %1773 = vmatpush1.bf16.msra.mxu0 0
    %1774 = vmatprep.subr.bf16.mxu0 0
    %1775 = vmatpush1.bf16.msra.mxu0 0
    %1776 = vmatprep.subr.bf16.mxu0 0
    %1777 = vmatpush1.bf16.msra.mxu0 0
    %1778 = vmatprep.subr.bf16.mxu0 0
    %1779 = vmatpush1.bf16.msra.mxu0 0
    %1780 = vmatprep.mubr.bf16.mxu0 0
    %1781 = vmatmul.mubr.bf16.gmra.mrb[0].mxu0 %v1746
    %v1782 = vpop.f32.mrb[0].mxu0
    %v1783 = vadd.f32 %v1739, %v1782
    %v1784 = vpop.f32.mrb[0].mxu0
    %v1785 = vpop.f32.mrb[0].mxu0
    %v1786 = vpop.f32.mrb[0].mxu0
    %1787 = vdwg.mxu0
    %v1788 = vxor.u32 %v1783, 2147483648
    %v1789 = vmul.f32 %v1788, 1.442695
    %v1790 = vpow.pop %v1789
    %v1791 = vadd.f32 %v1790, 1.0
    %v1792 = vrcp.pop %v1791
    %v1793 = vmul.f32 1.0, %v1792
    %v1794 = vtanh.pop %v1783
    %v1796 = vrot.slane %v1472, 4
    %v1798 = vmul.f32 %v1793, %v1796
    %1800 = vrot.lane.b32.xlu0 %v1794, 64
    %v1801 = vpop.permute.xlu0 %1800
    %v1803 = vmul.f32 %v1793, %v1801
    %1805 = vrot.lane.b32.xlu0 %v1803, 32
    %v1806 = vpop.permute.xlu0 %1805
    %v1808 = vadd.f32 %v1798, %v1806
    %v1809 = vtanh.pop %v1808
    %1811 = vrot.lane.b32.xlu0 %v1809, 64
    %v1812 = vpop.permute.xlu0 %1811
    %v1814 = vmul.f32 %v1793, %v1812
    %v1815 = vpack.c.bf16 %v1557, %v1557
    %1817 = vrot.lane.b32.xlu0 %v1815, 32
    %v1818 = vpop.permute.xlu0 %1817
    %v1823 = vunpack.c.l.b16 %v87
    %v1824 = vunpack.c.l.b16 %v88
    %v1825 = vunpack.c.l.b16 %v89
    %v1826 = vunpack.c.l.b16 %v90
    %v1827 = vpack.c.b16 %v1824, %v1823
    %v1828 = vpack.c.b16 %v1826, %v1825
    %v1832 = vsel %vm265, %v1818, 0
    %1834 = vmatprep.subr.bf16.mxu0 0
    %1835 = vmatpush1.bf16.msra.mxu0 %v1827
    %1836 = vmatprep.subr.bf16.mxu0 0
    %1837 = vmatpush1.bf16.msra.mxu0 %v1828
    %1838 = vmatprep.subr.bf16.mxu0 0
    %1839 = vmatpush1.bf16.msra.mxu0 0
    %1840 = vmatprep.subr.bf16.mxu0 0
    %1841 = vmatpush1.bf16.msra.mxu0 0
    %1842 = vmatprep.subr.bf16.mxu0 0
    %1843 = vmatpush1.bf16.msra.mxu0 0
    %1844 = vmatprep.subr.bf16.mxu0 0
    %1845 = vmatpush1.bf16.msra.mxu0 0
    %1846 = vmatprep.subr.bf16.mxu0 0
    %1847 = vmatpush1.bf16.msra.mxu0 0
    %1848 = vmatprep.subr.bf16.mxu0 0
    %1849 = vmatpush1.bf16.msra.mxu0 0
    %1850 = vmatprep.subr.bf16.mxu0 0
    %1851 = vmatpush1.bf16.msra.mxu0 0
    %1852 = vmatprep.subr.bf16.mxu0 0
    %1853 = vmatpush1.bf16.msra.mxu0 0
    %1854 = vmatprep.subr.bf16.mxu0 0
    %1855 = vmatpush1.bf16.msra.mxu0 0
    %1856 = vmatprep.subr.bf16.mxu0 0
    %1857 = vmatpush1.bf16.msra.mxu0 0
    %1858 = vmatprep.subr.bf16.mxu0 0
    %1859 = vmatpush1.bf16.msra.mxu0 0
    %1860 = vmatprep.subr.bf16.mxu0 0
    %1861 = vmatpush1.bf16.msra.mxu0 0
    %1862 = vmatprep.subr.bf16.mxu0 0
    %1863 = vmatpush1.bf16.msra.mxu0 0
    %1864 = vmatprep.subr.bf16.mxu0 0
    %1865 = vmatpush1.bf16.msra.mxu0 0
    %1866 = vmatprep.mubr.bf16.mxu0 0
    %1867 = vmatmul.mubr.bf16.gmra.mrb[0].mxu0 %v1832
    %v1868 = vpop.f32.mrb[0].mxu0
    %v1869 = vadd.f32 0.0, %v1868
    %v1870 = vpop.f32.mrb[0].mxu0
    %v1871 = vpop.f32.mrb[0].mxu0
    %v1872 = vpop.f32.mrb[0].mxu0
    %1873 = vdwg.mxu0
    %v1874 = vpack.c.bf16 %v1869, %v1869
    %v1879 = vunpack.c.l.b16 %v96
    %v1880 = vunpack.c.l.b16 %v97
    %v1881 = vunpack.c.l.b16 %v98
    %v1882 = vunpack.c.l.b16 %v99
    %v1883 = vpack.c.b16 %v1880, %v1879
    %v1884 = vpack.c.b16 %v1882, %v1881
    %vm1885 = vcmask 31744
    %v1887 = vsel %vm1885, %v1883, 0
    %v1890 = vsel %vm1885, %v1884, 0
    %vm1892 = vcmask 1041408
    %v1894 = vsel %vm1892, %v1874, 0
    %1896 = vmatprep.subr.bf16.mxu0 0
    %1897 = vmatpush1.bf16.msra.mxu0 %v1894
    %1898 = vmatprep.subr.bf16.mxu0 0
    %1899 = vmatpush1.bf16.msra.mxu0 0
    %1900 = vmatprep.subr.bf16.mxu0 0
    %1901 = vmatpush1.bf16.msra.mxu0 0
    %1902 = vmatprep.subr.bf16.mxu0 0
    %1903 = vmatpush1.bf16.msra.mxu0 0
    %1904 = vmatprep.subr.bf16.mxu0 0
    %1905 = vmatpush1.bf16.msra.mxu0 0
    %1906 = vmatprep.subr.bf16.mxu0 0
    %1907 = vmatpush1.bf16.msra.mxu0 0
    %1908 = vmatprep.subr.bf16.mxu0 0
    %1909 = vmatpush1.bf16.msra.mxu0 0
    %1910 = vmatprep.subr.bf16.mxu0 0
    %1911 = vmatpush1.bf16.msra.mxu0 0
    %1912 = vmatprep.subr.bf16.mxu0 0
    %1913 = vmatpush1.bf16.msra.mxu0 0
    %1914 = vmatprep.subr.bf16.mxu0 0
    %1915 = vmatpush1.bf16.msra.mxu0 0
    %1916 = vmatprep.subr.bf16.mxu0 0
    %1917 = vmatpush1.bf16.msra.mxu0 0
    %1918 = vmatprep.subr.bf16.mxu0 0
    %1919 = vmatpush1.bf16.msra.mxu0 0
    %1920 = vmatprep.subr.bf16.mxu0 0
    %1921 = vmatpush1.bf16.msra.mxu0 0
    %1922 = vmatprep.subr.bf16.mxu0 0
    %1923 = vmatpush1.bf16.msra.mxu0 0
    %1924 = vmatprep.subr.bf16.mxu0 0
    %1925 = vmatpush1.bf16.msra.mxu0 0
    %1926 = vmatprep.subr.bf16.mxu0 0
    %1927 = vmatpush1.bf16.msra.mxu0 0
    %1928 = vmatprep.mubr.bf16.mxu0 0
    %1929 = vmatmul.mubr.bf16.gmra.mrb[0].mxu0 %v1887
    %v1930 = vpop.f32.mrb[0].mxu0
    %v1931 = vadd.f32 0.0, %v1930
    %v1932 = vpop.f32.mrb[0].mxu0
    %v1933 = vpop.f32.mrb[0].mxu0
    %v1934 = vadd.f32 0.0, %v1933
    %v1935 = vpop.f32.mrb[0].mxu0
    %1936 = vmatprep.mubr.bf16.mxu0 0
    %1937 = vmatmul.mubr.bf16.gmra.mrb[0].mxu0 %v1890
    %v1938 = vpop.f32.mrb[0].mxu0
    %v1939 = vadd.f32 0.0, %v1938
    %v1940 = vpop.f32.mrb[0].mxu0
    %v1941 = vpop.f32.mrb[0].mxu0
    %v1942 = vadd.f32 0.0, %v1941
    %v1943 = vpop.f32.mrb[0].mxu0
    %1944 = vdwg.mxu0
    %v1945 = vadd.f32 %v1665, %v1931
    %v1946 = vadd.f32 %v1666, %v1934
    %v1947 = vadd.f32 %v1667, %v1939
    %v1948 = vadd.f32 %v1668, %v1942
    %v1949 = vmul.f32 %v1945, 1.442695
    %v1950 = vpow.pop %v1949
    %v1951 = vmul.f32 %v1946, 1.442695
    %v1952 = vpow.pop %v1951
    %v1953 = vmul.f32 %v1947, 1.442695
    %v1954 = vpow.pop %v1953
    %v1955 = vmul.f32 %v1948, 1.442695
    %v1956 = vpow.pop %v1955
    %v1957 = vpack.c.bf16 %v1952, %v1950
    %v1958 = vpack.c.bf16 %v1956, %v1954
    %v1963 = vunpack.c.l.b16 %v92
    %v1964 = vunpack.c.l.b16 %v93
    %v1965 = vunpack.c.l.b16 %v94
    %v1966 = vunpack.c.l.b16 %v95
    %v1967 = vpack.c.b16 %v1964, %v1963
    %v1968 = vpack.c.b16 %v1966, %v1965
    %v1970 = vsel %vm265, %v1967, 0
    %v1973 = vsel %vm265, %v1968, 0
    %1975 = vmatprep.subr.bf16.mxu0 0
    %1976 = vmatpush1.bf16.msra.mxu0 %v1957
    %1977 = vmatprep.subr.bf16.mxu0 0
    %1978 = vmatpush1.bf16.msra.mxu0 %v1958
    %1979 = vmatprep.subr.bf16.mxu0 0
    %1980 = vmatpush1.bf16.msra.mxu0 0
    %1981 = vmatprep.subr.bf16.mxu0 0
    %1982 = vmatpush1.bf16.msra.mxu0 0
    %1983 = vmatprep.subr.bf16.mxu0 0
    %1984 = vmatpush1.bf16.msra.mxu0 0
    %1985 = vmatprep.subr.bf16.mxu0 0
    %1986 = vmatpush1.bf16.msra.mxu0 0
    %1987 = vmatprep.subr.bf16.mxu0 0
    %1988 = vmatpush1.bf16.msra.mxu0 0
    %1989 = vmatprep.subr.bf16.mxu0 0
    %1990 = vmatpush1.bf16.msra.mxu0 0
    %1991 = vmatprep.subr.bf16.mxu0 0
    %1992 = vmatpush1.bf16.msra.mxu0 0
    %1993 = vmatprep.subr.bf16.mxu0 0
    %1994 = vmatpush1.bf16.msra.mxu0 0
    %1995 = vmatprep.subr.bf16.mxu0 0
    %1996 = vmatpush1.bf16.msra.mxu0 0
    %1997 = vmatprep.subr.bf16.mxu0 0
    %1998 = vmatpush1.bf16.msra.mxu0 0
    %1999 = vmatprep.subr.bf16.mxu0 0
    %2000 = vmatpush1.bf16.msra.mxu0 0
    %2001 = vmatprep.subr.bf16.mxu0 0
    %2002 = vmatpush1.bf16.msra.mxu0 0
    %2003 = vmatprep.subr.bf16.mxu0 0
    %2004 = vmatpush1.bf16.msra.mxu0 0
    %2005 = vmatprep.subr.bf16.mxu0 0
    %2006 = vmatpush1.bf16.msra.mxu0 0
    %2007 = vmatprep.mubr.bf16.mxu0 0
    %2008 = vmatmul.mubr.bf16.gmra.mrb[0].mxu0 %v1970
    %v2009 = vpop.f32.mrb[0].mxu0
    %v2010 = vadd.f32 0.0, %v2009
    %v2011 = vpop.f32.mrb[0].mxu0
    %v2012 = vpop.f32.mrb[0].mxu0
    %v2013 = vadd.f32 0.0, %v2012
    %v2014 = vpop.f32.mrb[0].mxu0
    %2015 = vmatprep.mubr.bf16.mxu0 0
    %2016 = vmatmul.mubr.bf16.gmra.mrb[0].mxu0 %v1973
    %v2017 = vpop.f32.mrb[0].mxu0
    %v2018 = vadd.f32 0.0, %v2017
    %v2019 = vpop.f32.mrb[0].mxu0
    %v2020 = vpop.f32.mrb[0].mxu0
    %v2021 = vadd.f32 0.0, %v2020
    %v2022 = vpop.f32.mrb[0].mxu0
    %2023 = vdwg.mxu0
    %v2024 = vrcp.pop %v2010
    %v2025 = vrcp.pop %v2013
    %v2026 = vrcp.pop %v2018
    %v2027 = vrcp.pop %v2021
    %v2028 = vmul.f32 %v1950, %v2024
    %v2029 = vmul.f32 %v1952, %v2025
    %v2030 = vmul.f32 %v1954, %v2026
    %v2031 = vmul.f32 %v1956, %v2027
    %2033 = vset.pattern.permute.xlu0 0
    %2034 = vperm.xlu0 %2033, %v2028
    %v2035 = vpop.permute.xlu0 %2034
    %2038 = vset.pattern.permute.xlu0 0
    %2039 = vperm.xlu0 %2038, %v2029
    %v2040 = vpop.permute.xlu0 %2039
    %2043 = vset.pattern.permute.xlu0 0
    %2044 = vperm.xlu0 %2043, %v2030
    %v2045 = vpop.permute.xlu0 %2044
    %2048 = vset.pattern.permute.xlu0 0
    %2049 = vperm.xlu0 %2048, %v2031
    %v2050 = vpop.permute.xlu0 %2049
    %v2052 = vmul.f32 %v2035, %v1720
    %v2053 = vmul.f32 %v2040, %v1723
    %v2054 = vmul.f32 %v2045, %v1728
    %v2055 = vmul.f32 %v2050, %v1731
    %v2056 = vpack.c.bf16 %v2053, %v2052
    %v2057 = vpack.c.bf16 %v2055, %v2054
    %v2059 = vsel %vm265, %v91, 0
    %2061 = vmatprep.subr.bf16.mxu0 0
    %2062 = vmatpush1.bf16.msra.mxu0 %v2056
    %2063 = vmatprep.subr.bf16.mxu0 0
    %2064 = vmatpush1.bf16.msra.mxu0 %v2057
    %2065 = vmatprep.subr.bf16.mxu0 0
    %2066 = vmatpush1.bf16.msra.mxu0 0
    %2067 = vmatprep.subr.bf16.mxu0 0
    %2068 = vmatpush1.bf16.msra.mxu0 0
    %2069 = vmatprep.subr.bf16.mxu0 0
    %2070 = vmatpush1.bf16.msra.mxu0 0
    %2071 = vmatprep.subr.bf16.mxu0 0
    %2072 = vmatpush1.bf16.msra.mxu0 0
    %2073 = vmatprep.subr.bf16.mxu0 0
    %2074 = vmatpush1.bf16.msra.mxu0 0
    %2075 = vmatprep.subr.bf16.mxu0 0
    %2076 = vmatpush1.bf16.msra.mxu0 0
    %2077 = vmatprep.subr.bf16.mxu0 0
    %2078 = vmatpush1.bf16.msra.mxu0 0
    %2079 = vmatprep.subr.bf16.mxu0 0
    %2080 = vmatpush1.bf16.msra.mxu0 0
    %2081 = vmatprep.subr.bf16.mxu0 0
    %2082 = vmatpush1.bf16.msra.mxu0 0
    %2083 = vmatprep.subr.bf16.mxu0 0
    %2084 = vmatpush1.bf16.msra.mxu0 0
    %2085 = vmatprep.subr.bf16.mxu0 0
    %2086 = vmatpush1.bf16.msra.mxu0 0
    %2087 = vmatprep.subr.bf16.mxu0 0
    %2088 = vmatpush1.bf16.msra.mxu0 0
    %2089 = vmatprep.subr.bf16.mxu0 0
    %2090 = vmatpush1.bf16.msra.mxu0 0
    %2091 = vmatprep.subr.bf16.mxu0 0
    %2092 = vmatpush1.bf16.msra.mxu0 0
    %2093 = vmatprep.mubr.bf16.mxu0 0
    %2094 = vmatmul.mubr.bf16.gmra.mrb[0].mxu0 %v2059
    %v2095 = vpop.f32.mrb[0].mxu0
    %v2096 = vadd.f32 0.0, %v2095
    %v2097 = vpop.f32.mrb[0].mxu0
    %v2098 = vpop.f32.mrb[0].mxu0
    %v2099 = vpop.f32.mrb[0].mxu0
    %2100 = vdwg.mxu0
    %v2101 = vadd.f32 %v239, %v2096
    %2103 = vrot.lane.b32.xlu0 %v1814, 32
    %v2104 = vpop.permute.xlu0 %2103
    %2106 = vrot.lane.b32.xlu0 %v1557, 64
    %v2107 = vpop.permute.xlu0 %2106
    %v2109 = vsel %vm265, %v2104, %v2107
    %v2110 = vpack.c.bf16 %v2109, %v2109
    %v2112 = vsel %vm370, %v2110, 0
    %2114 = vmatprep.subr.bf16.mxu0 0
    %2115 = vmatpush1.bf16.msra.mxu0 %v362
    %2116 = vmatprep.subr.bf16.mxu0 0
    %2117 = vmatpush1.bf16.msra.mxu0 %v363
    %2118 = vmatprep.subr.bf16.mxu0 0
    %2119 = vmatpush1.bf16.msra.mxu0 %v364
    %2120 = vmatprep.subr.bf16.mxu0 0
    %2121 = vmatpush1.bf16.msra.mxu0 %v365
    %2122 = vmatprep.subr.bf16.mxu0 0
    %2123 = vmatpush1.bf16.msra.mxu0 0
    %2124 = vmatprep.subr.bf16.mxu0 0
    %2125 = vmatpush1.bf16.msra.mxu0 0
    %2126 = vmatprep.subr.bf16.mxu0 0
    %2127 = vmatpush1.bf16.msra.mxu0 0
    %2128 = vmatprep.subr.bf16.mxu0 0
    %2129 = vmatpush1.bf16.msra.mxu0 0
    %2130 = vmatprep.subr.bf16.mxu0 0
    %2131 = vmatpush1.bf16.msra.mxu0 0
    %2132 = vmatprep.subr.bf16.mxu0 0
    %2133 = vmatpush1.bf16.msra.mxu0 0
    %2134 = vmatprep.subr.bf16.mxu0 0
    %2135 = vmatpush1.bf16.msra.mxu0 0
    %2136 = vmatprep.subr.bf16.mxu0 0
    %2137 = vmatpush1.bf16.msra.mxu0 0
    %2138 = vmatprep.subr.bf16.mxu0 0
    %2139 = vmatpush1.bf16.msra.mxu0 0
    %2140 = vmatprep.subr.bf16.mxu0 0
    %2141 = vmatpush1.bf16.msra.mxu0 0
    %2142 = vmatprep.subr.bf16.mxu0 0
    %2143 = vmatpush1.bf16.msra.mxu0 0
    %2144 = vmatprep.subr.bf16.mxu0 0
    %2145 = vmatpush1.bf16.msra.mxu0 0
    %2146 = vmatprep.mubr.bf16.mxu0 0
    %2147 = vmatmul.mubr.bf16.gmra.mrb[0].mxu0 %v2112
    %v2148 = vpop.f32.mrb[0].mxu0
    %v2149 = vadd.f32 0.0, %v2148
    %v2150 = vpop.f32.mrb[0].mxu0
    %v2151 = vpop.f32.mrb[0].mxu0
    %v2152 = vpop.f32.mrb[0].mxu0
    %2153 = vdwg.mxu0
    %v2154 = vadd.f32 %v2101, %v2149
    %v2155 = vxor.u32 %v2154, 2147483648
    %v2156 = vmul.f32 %v2155, 1.442695
    %v2157 = vpow.pop %v2156
    %v2158 = vadd.f32 %v2157, 1.0
    %v2159 = vrcp.pop %v2158
    %v2160 = vmul.f32 1.0, %v2159
    %v2161 = vtanh.pop %v2154
    %v2162 = vmul.f32 %v2160, %v1551
    %2164 = vrot.lane.b32.xlu0 %v2161, 64
    %v2165 = vpop.permute.xlu0 %2164
    %v2167 = vmul.f32 %v2160, %v2165
    %2169 = vrot.lane.b32.xlu0 %v2167, 32
    %v2170 = vpop.permute.xlu0 %2169
    %v2172 = vadd.f32 %v2162, %v2170
    %v2173 = vtanh.pop %v2172
    %2175 = vrot.lane.b32.xlu0 %v2173, 64
    %v2176 = vpop.permute.xlu0 %2175
    %v2178 = vmul.f32 %v2160, %v2176
    %2180 = vrot.lane.b32.xlu0 %v2178, 32
    %v2181 = vpop.permute.xlu0 %2180
    %2183 = vst.msk [vmem:[#allocation3] sm:$0xf] %vm442, %v2181
    %v2184 = vpack.c.bf16 %v1814, %v1814
    %2186 = vrot.lane.b32.xlu0 %v2184, 32
    %v2187 = vpop.permute.xlu0 %2186
    %v2189 = vsel %vm265, %v2187, 0
    %2191 = vmatprep.subr.bf16.mxu0 0
    %2192 = vmatpush1.bf16.msra.mxu0 %v261
    %2193 = vmatprep.subr.bf16.mxu0 0
    %2194 = vmatpush1.bf16.msra.mxu0 %v262
    %2195 = vmatprep.subr.bf16.mxu0 0
    %2196 = vmatpush1.bf16.msra.mxu0 0
    %2197 = vmatprep.subr.bf16.mxu0 0
    %2198 = vmatpush1.bf16.msra.mxu0 0
    %2199 = vmatprep.subr.bf16.mxu0 0
    %2200 = vmatpush1.bf16.msra.mxu0 0
    %2201 = vmatprep.subr.bf16.mxu0 0
    %2202 = vmatpush1.bf16.msra.mxu0 0
    %2203 = vmatprep.subr.bf16.mxu0 0
    %2204 = vmatpush1.bf16.msra.mxu0 0
    %2205 = vmatprep.subr.bf16.mxu0 0
    %2206 = vmatpush1.bf16.msra.mxu0 0
    %2207 = vmatprep.subr.bf16.mxu0 0
    %2208 = vmatpush1.bf16.msra.mxu0 0
    %2209 = vmatprep.subr.bf16.mxu0 0
    %2210 = vmatpush1.bf16.msra.mxu0 0
    %2211 = vmatprep.subr.bf16.mxu0 0
    %2212 = vmatpush1.bf16.msra.mxu0 0
    %2213 = vmatprep.subr.bf16.mxu0 0
    %2214 = vmatpush1.bf16.msra.mxu0 0
    %2215 = vmatprep.subr.bf16.mxu0 0
    %2216 = vmatpush1.bf16.msra.mxu0 0
    %2217 = vmatprep.subr.bf16.mxu0 0
    %2218 = vmatpush1.bf16.msra.mxu0 0
    %2219 = vmatprep.subr.bf16.mxu0 0
    %2220 = vmatpush1.bf16.msra.mxu0 0
    %2221 = vmatprep.subr.bf16.mxu0 0
    %2222 = vmatpush1.bf16.msra.mxu0 0
    %2223 = vmatprep.mubr.bf16.mxu0 0
    %2224 = vmatmul.mubr.bf16.gmra.mrb[0].mxu0 %v2189
    %v2225 = vpop.f32.mrb[0].mxu0
    %v2226 = vadd.f32 %v1739, %v2225
    %v2227 = vpop.f32.mrb[0].mxu0
    %v2228 = vpop.f32.mrb[0].mxu0
    %v2229 = vpop.f32.mrb[0].mxu0
    %2230 = vdwg.mxu0
    %v2231 = vxor.u32 %v2226, 2147483648
    %v2232 = vmul.f32 %v2231, 1.442695
    %v2233 = vpow.pop %v2232
    %v2234 = vadd.f32 %v2233, 1.0
    %v2235 = vrcp.pop %v2234
    %v2236 = vmul.f32 1.0, %v2235
    %v2237 = vtanh.pop %v2226
    %v2238 = vmul.f32 %v2236, %v1808
    %2240 = vrot.lane.b32.xlu0 %v2237, 64
    %v2241 = vpop.permute.xlu0 %2240
    %v2243 = vmul.f32 %v2236, %v2241
    %2245 = vrot.lane.b32.xlu0 %v2243, 32
    %v2246 = vpop.permute.xlu0 %2245
    %v2248 = vadd.f32 %v2238, %v2246
    %v2249 = vtanh.pop %v2248
    %2251 = vrot.lane.b32.xlu0 %v2249, 64
    %v2252 = vpop.permute.xlu0 %2251
    %v2254 = vmul.f32 %v2236, %v2252
    %v2255 = vpack.c.bf16 %v2178, %v2178
    %2257 = vrot.lane.b32.xlu0 %v2255, 32
    %v2258 = vpop.permute.xlu0 %2257
    %v2260 = vsel %vm265, %v2258, 0
    %2262 = vmatprep.subr.bf16.mxu0 0
    %2263 = vmatpush1.bf16.msra.mxu0 %v1827
    %2264 = vmatprep.subr.bf16.mxu0 0
    %2265 = vmatpush1.bf16.msra.mxu0 %v1828
    %2266 = vmatprep.subr.bf16.mxu0 0
    %2267 = vmatpush1.bf16.msra.mxu0 0
    %2268 = vmatprep.subr.bf16.mxu0 0
    %2269 = vmatpush1.bf16.msra.mxu0 0
    %2270 = vmatprep.subr.bf16.mxu0 0
    %2271 = vmatpush1.bf16.msra.mxu0 0
    %2272 = vmatprep.subr.bf16.mxu0 0
    %2273 = vmatpush1.bf16.msra.mxu0 0
    %2274 = vmatprep.subr.bf16.mxu0 0
    %2275 = vmatpush1.bf16.msra.mxu0 0
    %2276 = vmatprep.subr.bf16.mxu0 0
    %2277 = vmatpush1.bf16.msra.mxu0 0
    %2278 = vmatprep.subr.bf16.mxu0 0
    %2279 = vmatpush1.bf16.msra.mxu0 0
    %2280 = vmatprep.subr.bf16.mxu0 0
    %2281 = vmatpush1.bf16.msra.mxu0 0
    %2282 = vmatprep.subr.bf16.mxu0 0
    %2283 = vmatpush1.bf16.msra.mxu0 0
    %2284 = vmatprep.subr.bf16.mxu0 0
    %2285 = vmatpush1.bf16.msra.mxu0 0
    %2286 = vmatprep.subr.bf16.mxu0 0
    %2287 = vmatpush1.bf16.msra.mxu0 0
    %2288 = vmatprep.subr.bf16.mxu0 0
    %2289 = vmatpush1.bf16.msra.mxu0 0
    %2290 = vmatprep.subr.bf16.mxu0 0
    %2291 = vmatpush1.bf16.msra.mxu0 0
    %2292 = vmatprep.subr.bf16.mxu0 0
    %2293 = vmatpush1.bf16.msra.mxu0 0
    %2294 = vmatprep.mubr.bf16.mxu0 0
    %2295 = vmatmul.mubr.bf16.gmra.mrb[0].mxu0 %v2260
    %v2296 = vpop.f32.mrb[0].mxu0
    %v2297 = vadd.f32 0.0, %v2296
    %v2298 = vpop.f32.mrb[0].mxu0
    %v2299 = vpop.f32.mrb[0].mxu0
    %v2300 = vpop.f32.mrb[0].mxu0
    %2301 = vdwg.mxu0
    %v2302 = vpack.c.bf16 %v2297, %v2297
    %v2304 = vsel %vm1892, %v2302, 0
    %2306 = vmatprep.subr.bf16.mxu0 0
    %2307 = vmatpush1.bf16.msra.mxu0 %v2304
    %2308 = vmatprep.subr.bf16.mxu0 0
    %2309 = vmatpush1.bf16.msra.mxu0 0
    %2310 = vmatprep.subr.bf16.mxu0 0
    %2311 = vmatpush1.bf16.msra.mxu0 0
    %2312 = vmatprep.subr.bf16.mxu0 0
    %2313 = vmatpush1.bf16.msra.mxu0 0
    %2314 = vmatprep.subr.bf16.mxu0 0
    %2315 = vmatpush1.bf16.msra.mxu0 0
    %2316 = vmatprep.subr.bf16.mxu0 0
    %2317 = vmatpush1.bf16.msra.mxu0 0
    %2318 = vmatprep.subr.bf16.mxu0 0
    %2319 = vmatpush1.bf16.msra.mxu0 0
    %2320 = vmatprep.subr.bf16.mxu0 0
    %2321 = vmatpush1.bf16.msra.mxu0 0
    %2322 = vmatprep.subr.bf16.mxu0 0
    %2323 = vmatpush1.bf16.msra.mxu0 0
    %2324 = vmatprep.subr.bf16.mxu0 0
    %2325 = vmatpush1.bf16.msra.mxu0 0
    %2326 = vmatprep.subr.bf16.mxu0 0
    %2327 = vmatpush1.bf16.msra.mxu0 0
    %2328 = vmatprep.subr.bf16.mxu0 0
    %2329 = vmatpush1.bf16.msra.mxu0 0
    %2330 = vmatprep.subr.bf16.mxu0 0
    %2331 = vmatpush1.bf16.msra.mxu0 0
    %2332 = vmatprep.subr.bf16.mxu0 0
    %2333 = vmatpush1.bf16.msra.mxu0 0
    %2334 = vmatprep.subr.bf16.mxu0 0
    %2335 = vmatpush1.bf16.msra.mxu0 0
    %2336 = vmatprep.subr.bf16.mxu0 0
    %2337 = vmatpush1.bf16.msra.mxu0 0
    %2338 = vmatprep.mubr.bf16.mxu0 0
    %2339 = vmatmul.mubr.bf16.gmra.mrb[0].mxu0 %v1887
    %v2340 = vpop.f32.mrb[0].mxu0
    %v2341 = vadd.f32 0.0, %v2340
    %v2342 = vpop.f32.mrb[0].mxu0
    %v2343 = vpop.f32.mrb[0].mxu0
    %v2344 = vadd.f32 0.0, %v2343
    %v2345 = vpop.f32.mrb[0].mxu0
    %2346 = vmatprep.mubr.bf16.mxu0 0
    %2347 = vmatmul.mubr.bf16.gmra.mrb[0].mxu0 %v1890
    %v2348 = vpop.f32.mrb[0].mxu0
    %v2349 = vadd.f32 0.0, %v2348
    %v2350 = vpop.f32.mrb[0].mxu0
    %v2351 = vpop.f32.mrb[0].mxu0
    %v2352 = vadd.f32 0.0, %v2351
    %v2353 = vpop.f32.mrb[0].mxu0
    %2354 = vdwg.mxu0
    %v2355 = vadd.f32 %v1665, %v2341
    %v2356 = vadd.f32 %v1666, %v2344
    %v2357 = vadd.f32 %v1667, %v2349
    %v2358 = vadd.f32 %v1668, %v2352
    %v2359 = vmul.f32 %v2355, 1.442695
    %v2360 = vpow.pop %v2359
    %v2361 = vmul.f32 %v2356, 1.442695
    %v2362 = vpow.pop %v2361
    %v2363 = vmul.f32 %v2357, 1.442695
    %v2364 = vpow.pop %v2363
    %v2365 = vmul.f32 %v2358, 1.442695
    %v2366 = vpow.pop %v2365
    %v2367 = vpack.c.bf16 %v2362, %v2360
    %v2368 = vpack.c.bf16 %v2366, %v2364
    %2369 = vmatprep.subr.bf16.mxu0 0
    %2370 = vmatpush1.bf16.msra.mxu0 %v2367
    %2371 = vmatprep.subr.bf16.mxu0 0
    %2372 = vmatpush1.bf16.msra.mxu0 %v2368
    %2373 = vmatprep.subr.bf16.mxu0 0
    %2374 = vmatpush1.bf16.msra.mxu0 0
    %2375 = vmatprep.subr.bf16.mxu0 0
    %2376 = vmatpush1.bf16.msra.mxu0 0
    %2377 = vmatprep.subr.bf16.mxu0 0
    %2378 = vmatpush1.bf16.msra.mxu0 0
    %2379 = vmatprep.subr.bf16.mxu0 0
    %2380 = vmatpush1.bf16.msra.mxu0 0
    %2381 = vmatprep.subr.bf16.mxu0 0
    %2382 = vmatpush1.bf16.msra.mxu0 0
    %2383 = vmatprep.subr.bf16.mxu0 0
    %2384 = vmatpush1.bf16.msra.mxu0 0
    %2385 = vmatprep.subr.bf16.mxu0 0
    %2386 = vmatpush1.bf16.msra.mxu0 0
    %2387 = vmatprep.subr.bf16.mxu0 0
    %2388 = vmatpush1.bf16.msra.mxu0 0
    %2389 = vmatprep.subr.bf16.mxu0 0
    %2390 = vmatpush1.bf16.msra.mxu0 0
    %2391 = vmatprep.subr.bf16.mxu0 0
    %2392 = vmatpush1.bf16.msra.mxu0 0
    %2393 = vmatprep.subr.bf16.mxu0 0
    %2394 = vmatpush1.bf16.msra.mxu0 0
    %2395 = vmatprep.subr.bf16.mxu0 0
    %2396 = vmatpush1.bf16.msra.mxu0 0
    %2397 = vmatprep.subr.bf16.mxu0 0
    %2398 = vmatpush1.bf16.msra.mxu0 0
    %2399 = vmatprep.subr.bf16.mxu0 0
    %2400 = vmatpush1.bf16.msra.mxu0 0
    %2401 = vmatprep.mubr.bf16.mxu0 0
    %2402 = vmatmul.mubr.bf16.gmra.mrb[0].mxu0 %v1970
    %v2403 = vpop.f32.mrb[0].mxu0
    %v2404 = vadd.f32 0.0, %v2403
    %v2405 = vpop.f32.mrb[0].mxu0
    %v2406 = vpop.f32.mrb[0].mxu0
    %v2407 = vadd.f32 0.0, %v2406
    %v2408 = vpop.f32.mrb[0].mxu0
    %2409 = vmatprep.mubr.bf16.mxu0 0
    %2410 = vmatmul.mubr.bf16.gmra.mrb[0].mxu0 %v1973
    %v2411 = vpop.f32.mrb[0].mxu0
    %v2412 = vadd.f32 0.0, %v2411
    %v2413 = vpop.f32.mrb[0].mxu0
    %v2414 = vpop.f32.mrb[0].mxu0
    %v2415 = vadd.f32 0.0, %v2414
    %v2416 = vpop.f32.mrb[0].mxu0
    %2417 = vdwg.mxu0
    %v2418 = vrcp.pop %v2404
    %v2419 = vrcp.pop %v2407
    %v2420 = vrcp.pop %v2412
    %v2421 = vrcp.pop %v2415
    %v2422 = vmul.f32 %v2360, %v2418
    %v2423 = vmul.f32 %v2362, %v2419
    %v2424 = vmul.f32 %v2364, %v2420
    %v2425 = vmul.f32 %v2366, %v2421
    %2427 = vset.pattern.permute.xlu0 0
    %2428 = vperm.xlu0 %2427, %v2422
    %v2429 = vpop.permute.xlu0 %2428
    %2432 = vset.pattern.permute.xlu0 0
    %2433 = vperm.xlu0 %2432, %v2423
    %v2434 = vpop.permute.xlu0 %2433
    %2437 = vset.pattern.permute.xlu0 0
    %2438 = vperm.xlu0 %2437, %v2424
    %v2439 = vpop.permute.xlu0 %2438
    %2442 = vset.pattern.permute.xlu0 0
    %2443 = vperm.xlu0 %2442, %v2425
    %v2444 = vpop.permute.xlu0 %2443
    %v2446 = vmul.f32 %v2429, %v1720
    %v2447 = vmul.f32 %v2434, %v1723
    %v2448 = vmul.f32 %v2439, %v1728
    %v2449 = vmul.f32 %v2444, %v1731
    %v2450 = vpack.c.bf16 %v2447, %v2446
    %v2451 = vpack.c.bf16 %v2449, %v2448
    %2452 = vmatprep.subr.bf16.mxu0 0
    %2453 = vmatpush1.bf16.msra.mxu0 %v2450
    %2454 = vmatprep.subr.bf16.mxu0 0
    %2455 = vmatpush1.bf16.msra.mxu0 %v2451
    %2456 = vmatprep.subr.bf16.mxu0 0
    %2457 = vmatpush1.bf16.msra.mxu0 0
    %2458 = vmatprep.subr.bf16.mxu0 0
    %2459 = vmatpush1.bf16.msra.mxu0 0
    %2460 = vmatprep.subr.bf16.mxu0 0
    %2461 = vmatpush1.bf16.msra.mxu0 0
    %2462 = vmatprep.subr.bf16.mxu0 0
    %2463 = vmatpush1.bf16.msra.mxu0 0
    %2464 = vmatprep.subr.bf16.mxu0 0
    %2465 = vmatpush1.bf16.msra.mxu0 0
    %2466 = vmatprep.subr.bf16.mxu0 0
    %2467 = vmatpush1.bf16.msra.mxu0 0
    %2468 = vmatprep.subr.bf16.mxu0 0
    %2469 = vmatpush1.bf16.msra.mxu0 0
    %2470 = vmatprep.subr.bf16.mxu0 0
    %2471 = vmatpush1.bf16.msra.mxu0 0
    %2472 = vmatprep.subr.bf16.mxu0 0
    %2473 = vmatpush1.bf16.msra.mxu0 0
    %2474 = vmatprep.subr.bf16.mxu0 0
    %2475 = vmatpush1.bf16.msra.mxu0 0
    %2476 = vmatprep.subr.bf16.mxu0 0
    %2477 = vmatpush1.bf16.msra.mxu0 0
    %2478 = vmatprep.subr.bf16.mxu0 0
    %2479 = vmatpush1.bf16.msra.mxu0 0
    %2480 = vmatprep.subr.bf16.mxu0 0
    %2481 = vmatpush1.bf16.msra.mxu0 0
    %2482 = vmatprep.subr.bf16.mxu0 0
    %2483 = vmatpush1.bf16.msra.mxu0 0
    %2484 = vmatprep.mubr.bf16.mxu0 0
    %2485 = vmatmul.mubr.bf16.gmra.mrb[0].mxu0 %v2059
    %v2486 = vpop.f32.mrb[0].mxu0
    %v2487 = vadd.f32 0.0, %v2486
    %v2488 = vpop.f32.mrb[0].mxu0
    %v2489 = vpop.f32.mrb[0].mxu0
    %v2490 = vpop.f32.mrb[0].mxu0
    %2491 = vdwg.mxu0
    %v2493 = vrot.slane %v2487, 4
    %v2495 = vadd.f32 %v239, %v2493
    %2497 = vrot.lane.b32.xlu0 %v2254, 32
    %v2498 = vpop.permute.xlu0 %2497
    %2500 = vrot.lane.b32.xlu0 %v2178, 64
    %v2501 = vpop.permute.xlu0 %2500
    %v2503 = vsel %vm265, %v2498, %v2501
    %v2504 = vpack.c.bf16 %v2503, %v2503
    %v2506 = vsel %vm370, %v2504, 0
    %2508 = vmatprep.subr.bf16.mxu0 0
    %2509 = vmatpush1.bf16.msra.mxu0 %v362
    %2510 = vmatprep.subr.bf16.mxu0 0
    %2511 = vmatpush1.bf16.msra.mxu0 %v363
    %2512 = vmatprep.subr.bf16.mxu0 0
    %2513 = vmatpush1.bf16.msra.mxu0 %v364
    %2514 = vmatprep.subr.bf16.mxu0 0
    %2515 = vmatpush1.bf16.msra.mxu0 %v365
    %2516 = vmatprep.subr.bf16.mxu0 0
    %2517 = vmatpush1.bf16.msra.mxu0 0
    %2518 = vmatprep.subr.bf16.mxu0 0
    %2519 = vmatpush1.bf16.msra.mxu0 0
    %2520 = vmatprep.subr.bf16.mxu0 0
    %2521 = vmatpush1.bf16.msra.mxu0 0
    %2522 = vmatprep.subr.bf16.mxu0 0
    %2523 = vmatpush1.bf16.msra.mxu0 0
    %2524 = vmatprep.subr.bf16.mxu0 0
    %2525 = vmatpush1.bf16.msra.mxu0 0
    %2526 = vmatprep.subr.bf16.mxu0 0
    %2527 = vmatpush1.bf16.msra.mxu0 0
    %2528 = vmatprep.subr.bf16.mxu0 0
    %2529 = vmatpush1.bf16.msra.mxu0 0
    %2530 = vmatprep.subr.bf16.mxu0 0
    %2531 = vmatpush1.bf16.msra.mxu0 0
    %2532 = vmatprep.subr.bf16.mxu0 0
    %2533 = vmatpush1.bf16.msra.mxu0 0
    %2534 = vmatprep.subr.bf16.mxu0 0
    %2535 = vmatpush1.bf16.msra.mxu0 0
    %2536 = vmatprep.subr.bf16.mxu0 0
    %2537 = vmatpush1.bf16.msra.mxu0 0
    %2538 = vmatprep.subr.bf16.mxu0 0
    %2539 = vmatpush1.bf16.msra.mxu0 0
    %2540 = vmatprep.mubr.bf16.mxu0 0
    %2541 = vmatmul.mubr.bf16.gmra.mrb[0].mxu0 %v2506
    %v2542 = vpop.f32.mrb[0].mxu0
    %v2543 = vadd.f32 0.0, %v2542
    %v2544 = vpop.f32.mrb[0].mxu0
    %v2545 = vpop.f32.mrb[0].mxu0
    %v2546 = vpop.f32.mrb[0].mxu0
    %2547 = vdwg.mxu0
    %v2549 = vrot.slane %v2543, 4
    %v2551 = vadd.f32 %v2495, %v2549
    %v2552 = vxor.u32 %v2551, 2147483648
    %v2553 = vmul.f32 %v2552, 1.442695
    %v2554 = vpow.pop %v2553
    %v2555 = vadd.f32 %v2554, 1.0
    %v2556 = vrcp.pop %v2555
    %v2557 = vmul.f32 1.0, %v2556
    %v2558 = vtanh.pop %v2551
    %v2560 = vrot.slane %v2172, 4
    %v2562 = vmul.f32 %v2557, %v2560
    %2564 = vrot.lane.b32.xlu0 %v2558, 64
    %v2565 = vpop.permute.xlu0 %2564
    %v2567 = vmul.f32 %v2557, %v2565
    %2569 = vrot.lane.b32.xlu0 %v2567, 32
    %v2570 = vpop.permute.xlu0 %2569
    %v2572 = vadd.f32 %v2562, %v2570
    %v2573 = vtanh.pop %v2572
    %2575 = vrot.lane.b32.xlu0 %v2573, 64
    %v2576 = vpop.permute.xlu0 %2575
    %v2578 = vmul.f32 %v2557, %v2576
    %2580 = vrot.lane.b32.xlu0 %v2578, 32
    %v2581 = vpop.permute.xlu0 %2580
    %vm2583 = vcmask 261124
    %2584 = vst.msk [vmem:[#allocation3] sm:$0xf0] %vm2583, %v2581
    %v2585 = vpack.c.bf16 %v2254, %v2254
    %2587 = vrot.lane.b32.xlu0 %v2585, 32
    %v2588 = vpop.permute.xlu0 %2587
    %v2590 = vsel %vm265, %v2588, 0
    %2592 = vmatprep.subr.bf16.mxu0 0
    %2593 = vmatpush1.bf16.msra.mxu0 %v261
    %2594 = vmatprep.subr.bf16.mxu0 0
    %2595 = vmatpush1.bf16.msra.mxu0 %v262
    %2596 = vmatprep.subr.bf16.mxu0 0
    %2597 = vmatpush1.bf16.msra.mxu0 0
    %2598 = vmatprep.subr.bf16.mxu0 0
    %2599 = vmatpush1.bf16.msra.mxu0 0
    %2600 = vmatprep.subr.bf16.mxu0 0
    %2601 = vmatpush1.bf16.msra.mxu0 0
    %2602 = vmatprep.subr.bf16.mxu0 0
    %2603 = vmatpush1.bf16.msra.mxu0 0
    %2604 = vmatprep.subr.bf16.mxu0 0
    %2605 = vmatpush1.bf16.msra.mxu0 0
    %2606 = vmatprep.subr.bf16.mxu0 0
    %2607 = vmatpush1.bf16.msra.mxu0 0
    %2608 = vmatprep.subr.bf16.mxu0 0
    %2609 = vmatpush1.bf16.msra.mxu0 0
    %2610 = vmatprep.subr.bf16.mxu0 0
    %2611 = vmatpush1.bf16.msra.mxu0 0
    %2612 = vmatprep.subr.bf16.mxu0 0
    %2613 = vmatpush1.bf16.msra.mxu0 0
    %2614 = vmatprep.subr.bf16.mxu0 0
    %2615 = vmatpush1.bf16.msra.mxu0 0
    %2616 = vmatprep.subr.bf16.mxu0 0
    %2617 = vmatpush1.bf16.msra.mxu0 0
    %2618 = vmatprep.subr.bf16.mxu0 0
    %2619 = vmatpush1.bf16.msra.mxu0 0
    %2620 = vmatprep.subr.bf16.mxu0 0
    %2621 = vmatpush1.bf16.msra.mxu0 0
    %2622 = vmatprep.subr.bf16.mxu0 0
    %2623 = vmatpush1.bf16.msra.mxu0 0
    %2624 = vmatprep.mubr.bf16.mxu0 0
    %2625 = vmatmul.mubr.bf16.gmra.mrb[0].mxu0 %v2590
    %v2626 = vpop.f32.mrb[0].mxu0
    %v2627 = vadd.f32 %v1739, %v2626
    %v2628 = vpop.f32.mrb[0].mxu0
    %v2629 = vpop.f32.mrb[0].mxu0
    %v2630 = vpop.f32.mrb[0].mxu0
    %2631 = vdwg.mxu0
    %v2632 = vxor.u32 %v2627, 2147483648
    %v2633 = vmul.f32 %v2632, 1.442695
    %v2634 = vpow.pop %v2633
    %v2635 = vadd.f32 %v2634, 1.0
    %v2636 = vrcp.pop %v2635
    %v2637 = vmul.f32 1.0, %v2636
    %v2638 = vtanh.pop %v2627
    %v2639 = vmul.f32 %v2637, %v2248
    %2641 = vrot.lane.b32.xlu0 %v2638, 64
    %v2642 = vpop.permute.xlu0 %2641
    %v2644 = vmul.f32 %v2637, %v2642
    %2646 = vrot.lane.b32.xlu0 %v2644, 32
    %v2647 = vpop.permute.xlu0 %2646
    %v2649 = vadd.f32 %v2639, %v2647
    %v2650 = vtanh.pop %v2649
    %2652 = vrot.lane.b32.xlu0 %v2650, 64
    %v2653 = vpop.permute.xlu0 %2652
    %v2655 = vmul.f32 %v2637, %v2653
    %v2656 = vpack.c.bf16 %v2578, %v2578
    %v2658 = vrot.slane %v2656, 2
    %2659 = vrot.lane.b32.xlu0 %v2658, 32
    %v2660 = vpop.permute.xlu0 %2659
    %v2662 = vsel %vm265, %v2660, 0
    %2664 = vmatprep.subr.bf16.mxu0 0
    %2665 = vmatpush1.bf16.msra.mxu0 %v1827
    %2666 = vmatprep.subr.bf16.mxu0 0
    %2667 = vmatpush1.bf16.msra.mxu0 %v1828
    %2668 = vmatprep.subr.bf16.mxu0 0
    %2669 = vmatpush1.bf16.msra.mxu0 0
    %2670 = vmatprep.subr.bf16.mxu0 0
    %2671 = vmatpush1.bf16.msra.mxu0 0
    %2672 = vmatprep.subr.bf16.mxu0 0
    %2673 = vmatpush1.bf16.msra.mxu0 0
    %2674 = vmatprep.subr.bf16.mxu0 0
    %2675 = vmatpush1.bf16.msra.mxu0 0
    %2676 = vmatprep.subr.bf16.mxu0 0
    %2677 = vmatpush1.bf16.msra.mxu0 0
    %2678 = vmatprep.subr.bf16.mxu0 0
    %2679 = vmatpush1.bf16.msra.mxu0 0
    %2680 = vmatprep.subr.bf16.mxu0 0
    %2681 = vmatpush1.bf16.msra.mxu0 0
    %2682 = vmatprep.subr.bf16.mxu0 0
    %2683 = vmatpush1.bf16.msra.mxu0 0
    %2684 = vmatprep.subr.bf16.mxu0 0
    %2685 = vmatpush1.bf16.msra.mxu0 0
    %2686 = vmatprep.subr.bf16.mxu0 0
    %2687 = vmatpush1.bf16.msra.mxu0 0
    %2688 = vmatprep.subr.bf16.mxu0 0
    %2689 = vmatpush1.bf16.msra.mxu0 0
    %2690 = vmatprep.subr.bf16.mxu0 0
    %2691 = vmatpush1.bf16.msra.mxu0 0
    %2692 = vmatprep.subr.bf16.mxu0 0
    %2693 = vmatpush1.bf16.msra.mxu0 0
    %2694 = vmatprep.subr.bf16.mxu0 0
    %2695 = vmatpush1.bf16.msra.mxu0 0
    %2696 = vmatprep.mubr.bf16.mxu0 0
    %2697 = vmatmul.mubr.bf16.gmra.mrb[0].mxu0 %v2662
    %v2698 = vpop.f32.mrb[0].mxu0
    %v2699 = vadd.f32 0.0, %v2698
    %v2700 = vpop.f32.mrb[0].mxu0
    %v2701 = vpop.f32.mrb[0].mxu0
    %v2702 = vpop.f32.mrb[0].mxu0
    %2703 = vdwg.mxu0
    %v2704 = vpack.c.bf16 %v2699, %v2699
    %v2706 = vsel %vm1892, %v2704, 0
    %2708 = vmatprep.subr.bf16.mxu0 0
    %2709 = vmatpush1.bf16.msra.mxu0 %v2706
    %2710 = vmatprep.subr.bf16.mxu0 0
    %2711 = vmatpush1.bf16.msra.mxu0 0
    %2712 = vmatprep.subr.bf16.mxu0 0
    %2713 = vmatpush1.bf16.msra.mxu0 0
    %2714 = vmatprep.subr.bf16.mxu0 0
    %2715 = vmatpush1.bf16.msra.mxu0 0
    %2716 = vmatprep.subr.bf16.mxu0 0
    %2717 = vmatpush1.bf16.msra.mxu0 0
    %2718 = vmatprep.subr.bf16.mxu0 0
    %2719 = vmatpush1.bf16.msra.mxu0 0
    %2720 = vmatprep.subr.bf16.mxu0 0
    %2721 = vmatpush1.bf16.msra.mxu0 0
    %2722 = vmatprep.subr.bf16.mxu0 0
    %2723 = vmatpush1.bf16.msra.mxu0 0
    %2724 = vmatprep.subr.bf16.mxu0 0
    %2725 = vmatpush1.bf16.msra.mxu0 0
    %2726 = vmatprep.subr.bf16.mxu0 0
    %2727 = vmatpush1.bf16.msra.mxu0 0
    %2728 = vmatprep.subr.bf16.mxu0 0
    %2729 = vmatpush1.bf16.msra.mxu0 0
    %2730 = vmatprep.subr.bf16.mxu0 0
    %2731 = vmatpush1.bf16.msra.mxu0 0
    %2732 = vmatprep.subr.bf16.mxu0 0
    %2733 = vmatpush1.bf16.msra.mxu0 0
    %2734 = vmatprep.subr.bf16.mxu0 0
    %2735 = vmatpush1.bf16.msra.mxu0 0
    %2736 = vmatprep.subr.bf16.mxu0 0
    %2737 = vmatpush1.bf16.msra.mxu0 0
    %2738 = vmatprep.subr.bf16.mxu0 0
    %2739 = vmatpush1.bf16.msra.mxu0 0
    %2740 = vmatprep.mubr.bf16.mxu0 0
    %2741 = vmatmul.mubr.bf16.gmra.mrb[0].mxu0 %v1887
    %v2742 = vpop.f32.mrb[0].mxu0
    %v2743 = vadd.f32 0.0, %v2742
    %v2744 = vpop.f32.mrb[0].mxu0
    %v2745 = vpop.f32.mrb[0].mxu0
    %v2746 = vadd.f32 0.0, %v2745
    %v2747 = vpop.f32.mrb[0].mxu0
    %2748 = vmatprep.mubr.bf16.mxu0 0
    %2749 = vmatmul.mubr.bf16.gmra.mrb[0].mxu0 %v1890
    %v2750 = vpop.f32.mrb[0].mxu0
    %v2751 = vadd.f32 0.0, %v2750
    %v2752 = vpop.f32.mrb[0].mxu0
    %v2753 = vpop.f32.mrb[0].mxu0
    %v2754 = vadd.f32 0.0, %v2753
    %v2755 = vpop.f32.mrb[0].mxu0
    %2756 = vdwg.mxu0
    %v2757 = vadd.f32 %v1665, %v2743
    %v2758 = vadd.f32 %v1666, %v2746
    %v2759 = vadd.f32 %v1667, %v2751
    %v2760 = vadd.f32 %v1668, %v2754
    %v2761 = vmul.f32 %v2757, 1.442695
    %v2762 = vpow.pop %v2761
    %v2763 = vmul.f32 %v2758, 1.442695
    %v2764 = vpow.pop %v2763
    %v2765 = vmul.f32 %v2759, 1.442695
    %v2766 = vpow.pop %v2765
    %v2767 = vmul.f32 %v2760, 1.442695
    %v2768 = vpow.pop %v2767
    %v2769 = vpack.c.bf16 %v2764, %v2762
    %v2770 = vpack.c.bf16 %v2768, %v2766
    %2771 = vmatprep.subr.bf16.mxu0 0
    %2772 = vmatpush1.bf16.msra.mxu0 %v2769
    %2773 = vmatprep.subr.bf16.mxu0 0
    %2774 = vmatpush1.bf16.msra.mxu0 %v2770
    %2775 = vmatprep.subr.bf16.mxu0 0
    %2776 = vmatpush1.bf16.msra.mxu0 0
    %2777 = vmatprep.subr.bf16.mxu0 0
    %2778 = vmatpush1.bf16.msra.mxu0 0
    %2779 = vmatprep.subr.bf16.mxu0 0
    %2780 = vmatpush1.bf16.msra.mxu0 0
    %2781 = vmatprep.subr.bf16.mxu0 0
    %2782 = vmatpush1.bf16.msra.mxu0 0
    %2783 = vmatprep.subr.bf16.mxu0 0
    %2784 = vmatpush1.bf16.msra.mxu0 0
    %2785 = vmatprep.subr.bf16.mxu0 0
    %2786 = vmatpush1.bf16.msra.mxu0 0
    %2787 = vmatprep.subr.bf16.mxu0 0
    %2788 = vmatpush1.bf16.msra.mxu0 0
    %2789 = vmatprep.subr.bf16.mxu0 0
    %2790 = vmatpush1.bf16.msra.mxu0 0
    %2791 = vmatprep.subr.bf16.mxu0 0
    %2792 = vmatpush1.bf16.msra.mxu0 0
    %2793 = vmatprep.subr.bf16.mxu0 0
    %2794 = vmatpush1.bf16.msra.mxu0 0
    %2795 = vmatprep.subr.bf16.mxu0 0
    %2796 = vmatpush1.bf16.msra.mxu0 0
    %2797 = vmatprep.subr.bf16.mxu0 0
    %2798 = vmatpush1.bf16.msra.mxu0 0
    %2799 = vmatprep.subr.bf16.mxu0 0
    %2800 = vmatpush1.bf16.msra.mxu0 0
    %2801 = vmatprep.subr.bf16.mxu0 0
    %2802 = vmatpush1.bf16.msra.mxu0 0
    %2803 = vmatprep.mubr.bf16.mxu0 0
    %2804 = vmatmul.mubr.bf16.gmra.mrb[0].mxu0 %v1970
    %v2805 = vpop.f32.mrb[0].mxu0
    %v2806 = vadd.f32 0.0, %v2805
    %v2807 = vpop.f32.mrb[0].mxu0
    %v2808 = vpop.f32.mrb[0].mxu0
    %v2809 = vadd.f32 0.0, %v2808
    %v2810 = vpop.f32.mrb[0].mxu0
    %2811 = vmatprep.mubr.bf16.mxu0 0
    %2812 = vmatmul.mubr.bf16.gmra.mrb[0].mxu0 %v1973
    %v2813 = vpop.f32.mrb[0].mxu0
    %v2814 = vadd.f32 0.0, %v2813
    %v2815 = vpop.f32.mrb[0].mxu0
    %v2816 = vpop.f32.mrb[0].mxu0
    %v2817 = vadd.f32 0.0, %v2816
    %v2818 = vpop.f32.mrb[0].mxu0
    %2819 = vdwg.mxu0
    %v2820 = vrcp.pop %v2806
    %v2821 = vrcp.pop %v2809
    %v2822 = vrcp.pop %v2814
    %v2823 = vrcp.pop %v2817
    %v2824 = vmul.f32 %v2762, %v2820
    %v2825 = vmul.f32 %v2764, %v2821
    %v2826 = vmul.f32 %v2766, %v2822
    %v2827 = vmul.f32 %v2768, %v2823
    %2829 = vset.pattern.permute.xlu0 0
    %2830 = vperm.xlu0 %2829, %v2824
    %v2831 = vpop.permute.xlu0 %2830
    %2834 = vset.pattern.permute.xlu0 0
    %2835 = vperm.xlu0 %2834, %v2825
    %v2836 = vpop.permute.xlu0 %2835
    %2839 = vset.pattern.permute.xlu0 0
    %2840 = vperm.xlu0 %2839, %v2826
    %v2841 = vpop.permute.xlu0 %2840
    %2844 = vset.pattern.permute.xlu0 0
    %2845 = vperm.xlu0 %2844, %v2827
    %v2846 = vpop.permute.xlu0 %2845
    %v2848 = vmul.f32 %v2831, %v1720
    %v2849 = vmul.f32 %v2836, %v1723
    %v2850 = vmul.f32 %v2841, %v1728
    %v2851 = vmul.f32 %v2846, %v1731
    %v2852 = vpack.c.bf16 %v2849, %v2848
    %v2853 = vpack.c.bf16 %v2851, %v2850
    %2854 = vmatprep.subr.bf16.mxu0 0
    %2855 = vmatpush1.bf16.msra.mxu0 %v2852
    %2856 = vmatprep.subr.bf16.mxu0 0
    %2857 = vmatpush1.bf16.msra.mxu0 %v2853
    %2858 = vmatprep.subr.bf16.mxu0 0
    %2859 = vmatpush1.bf16.msra.mxu0 0
    %2860 = vmatprep.subr.bf16.mxu0 0
    %2861 = vmatpush1.bf16.msra.mxu0 0
    %2862 = vmatprep.subr.bf16.mxu0 0
    %2863 = vmatpush1.bf16.msra.mxu0 0
    %2864 = vmatprep.subr.bf16.mxu0 0
    %2865 = vmatpush1.bf16.msra.mxu0 0
    %2866 = vmatprep.subr.bf16.mxu0 0
    %2867 = vmatpush1.bf16.msra.mxu0 0
    %2868 = vmatprep.subr.bf16.mxu0 0
    %2869 = vmatpush1.bf16.msra.mxu0 0
    %2870 = vmatprep.subr.bf16.mxu0 0
    %2871 = vmatpush1.bf16.msra.mxu0 0
    %2872 = vmatprep.subr.bf16.mxu0 0
    %2873 = vmatpush1.bf16.msra.mxu0 0
    %2874 = vmatprep.subr.bf16.mxu0 0
    %2875 = vmatpush1.bf16.msra.mxu0 0
    %2876 = vmatprep.subr.bf16.mxu0 0
    %2877 = vmatpush1.bf16.msra.mxu0 0
    %2878 = vmatprep.subr.bf16.mxu0 0
    %2879 = vmatpush1.bf16.msra.mxu0 0
    %2880 = vmatprep.subr.bf16.mxu0 0
    %2881 = vmatpush1.bf16.msra.mxu0 0
    %2882 = vmatprep.subr.bf16.mxu0 0
    %2883 = vmatpush1.bf16.msra.mxu0 0
    %2884 = vmatprep.subr.bf16.mxu0 0
    %2885 = vmatpush1.bf16.msra.mxu0 0
    %2886 = vmatprep.mubr.bf16.mxu0 0
    %2887 = vmatmul.mubr.bf16.gmra.mrb[0].mxu0 %v2059
    %v2888 = vpop.f32.mrb[0].mxu0
    %v2889 = vadd.f32 0.0, %v2888
    %v2890 = vpop.f32.mrb[0].mxu0
    %v2891 = vpop.f32.mrb[0].mxu0
    %v2892 = vpop.f32.mrb[0].mxu0
    %2893 = vdwg.mxu0
    %v2894 = vadd.f32 %v242, %v2889
    %2896 = vrot.lane.b32.xlu0 %v2655, 32
    %v2897 = vpop.permute.xlu0 %2896
    %v2899 = vrot.slane %v2578, 4
    %2900 = vrot.lane.b32.xlu0 %v2899, 64
    %v2901 = vpop.permute.xlu0 %2900
    %v2903 = vsel %vm265, %v2897, %v2901
    %v2904 = vpack.c.bf16 %v2903, %v2903
    %v2906 = vsel %vm370, %v2904, 0
    %2908 = vmatprep.subr.bf16.mxu0 0
    %2909 = vmatpush1.bf16.msra.mxu0 %v362
    %2910 = vmatprep.subr.bf16.mxu0 0
    %2911 = vmatpush1.bf16.msra.mxu0 %v363
    %2912 = vmatprep.subr.bf16.mxu0 0
    %2913 = vmatpush1.bf16.msra.mxu0 %v364
    %2914 = vmatprep.subr.bf16.mxu0 0
    %2915 = vmatpush1.bf16.msra.mxu0 %v365
    %2916 = vmatprep.subr.bf16.mxu0 0
    %2917 = vmatpush1.bf16.msra.mxu0 0
    %2918 = vmatprep.subr.bf16.mxu0 0
    %2919 = vmatpush1.bf16.msra.mxu0 0
    %2920 = vmatprep.subr.bf16.mxu0 0
    %2921 = vmatpush1.bf16.msra.mxu0 0
    %2922 = vmatprep.subr.bf16.mxu0 0
    %2923 = vmatpush1.bf16.msra.mxu0 0
    %2924 = vmatprep.subr.bf16.mxu0 0
    %2925 = vmatpush1.bf16.msra.mxu0 0
    %2926 = vmatprep.subr.bf16.mxu0 0
    %2927 = vmatpush1.bf16.msra.mxu0 0
    %2928 = vmatprep.subr.bf16.mxu0 0
    %2929 = vmatpush1.bf16.msra.mxu0 0
    %2930 = vmatprep.subr.bf16.mxu0 0
    %2931 = vmatpush1.bf16.msra.mxu0 0
    %2932 = vmatprep.subr.bf16.mxu0 0
    %2933 = vmatpush1.bf16.msra.mxu0 0
    %2934 = vmatprep.subr.bf16.mxu0 0
    %2935 = vmatpush1.bf16.msra.mxu0 0
    %2936 = vmatprep.subr.bf16.mxu0 0
    %2937 = vmatpush1.bf16.msra.mxu0 0
    %2938 = vmatprep.subr.bf16.mxu0 0
    %2939 = vmatpush1.bf16.msra.mxu0 0
    %2940 = vmatprep.mubr.bf16.mxu0 0
    %2941 = vmatmul.mubr.bf16.gmra.mrb[0].mxu0 %v2906
    %v2942 = vpop.f32.mrb[0].mxu0
    %v2943 = vadd.f32 0.0, %v2942
    %v2944 = vpop.f32.mrb[0].mxu0
    %v2945 = vpop.f32.mrb[0].mxu0
    %v2946 = vpop.f32.mrb[0].mxu0
    %2947 = vdwg.mxu0
    %v2948 = vadd.f32 %v2894, %v2943
    %v2949 = vxor.u32 %v2948, 2147483648
    %v2950 = vmul.f32 %v2949, 1.442695
    %v2951 = vpow.pop %v2950
    %v2952 = vadd.f32 %v2951, 1.0
    %v2953 = vrcp.pop %v2952
    %v2954 = vmul.f32 1.0, %v2953
    %v2955 = vtanh.pop %v2948
    %v2957 = vrot.slane %v2572, 4
    %v2959 = vmul.f32 %v2954, %v2957
    %2961 = vrot.lane.b32.xlu0 %v2955, 64
    %v2962 = vpop.permute.xlu0 %2961
    %v2964 = vmul.f32 %v2954, %v2962
    %2966 = vrot.lane.b32.xlu0 %v2964, 32
    %v2967 = vpop.permute.xlu0 %2966
    %v2969 = vadd.f32 %v2959, %v2967
    %v2970 = vtanh.pop %v2969
    %2972 = vrot.lane.b32.xlu0 %v2970, 64
    %v2973 = vpop.permute.xlu0 %2972
    %v2975 = vmul.f32 %v2954, %v2973
    %2977 = vrot.lane.b32.xlu0 %v2975, 32
    %v2978 = vpop.permute.xlu0 %2977
    %2980 = vst.msk [vmem:[#allocation3 + $0x8] sm:$0xf] %vm442, %v2978
    %v2981 = vpack.c.bf16 %v2655, %v2655
    %2983 = vrot.lane.b32.xlu0 %v2981, 32
    %v2984 = vpop.permute.xlu0 %2983
    %v2986 = vsel %vm265, %v2984, 0
    %2988 = vmatprep.subr.bf16.mxu0 0
    %2989 = vmatpush1.bf16.msra.mxu0 %v261
    %2990 = vmatprep.subr.bf16.mxu0 0
    %2991 = vmatpush1.bf16.msra.mxu0 %v262
    %2992 = vmatprep.subr.bf16.mxu0 0
    %2993 = vmatpush1.bf16.msra.mxu0 0
    %2994 = vmatprep.subr.bf16.mxu0 0
    %2995 = vmatpush1.bf16.msra.mxu0 0
    %2996 = vmatprep.subr.bf16.mxu0 0
    %2997 = vmatpush1.bf16.msra.mxu0 0
    %2998 = vmatprep.subr.bf16.mxu0 0
    %2999 = vmatpush1.bf16.msra.mxu0 0
    %3000 = vmatprep.subr.bf16.mxu0 0
    %3001 = vmatpush1.bf16.msra.mxu0 0
    %3002 = vmatprep.subr.bf16.mxu0 0
    %3003 = vmatpush1.bf16.msra.mxu0 0
    %3004 = vmatprep.subr.bf16.mxu0 0
    %3005 = vmatpush1.bf16.msra.mxu0 0
    %3006 = vmatprep.subr.bf16.mxu0 0
    %3007 = vmatpush1.bf16.msra.mxu0 0
    %3008 = vmatprep.subr.bf16.mxu0 0
    %3009 = vmatpush1.bf16.msra.mxu0 0
    %3010 = vmatprep.subr.bf16.mxu0 0
    %3011 = vmatpush1.bf16.msra.mxu0 0
    %3012 = vmatprep.subr.bf16.mxu0 0
    %3013 = vmatpush1.bf16.msra.mxu0 0
    %3014 = vmatprep.subr.bf16.mxu0 0
    %3015 = vmatpush1.bf16.msra.mxu0 0
    %3016 = vmatprep.subr.bf16.mxu0 0
    %3017 = vmatpush1.bf16.msra.mxu0 0
    %3018 = vmatprep.subr.bf16.mxu0 0
    %3019 = vmatpush1.bf16.msra.mxu0 0
    %3020 = vmatprep.mubr.bf16.mxu0 0
    %3021 = vmatmul.mubr.bf16.gmra.mrb[0].mxu0 %v2986
    %v3022 = vpop.f32.mrb[0].mxu0
    %v3023 = vadd.f32 %v1739, %v3022
    %v3024 = vpop.f32.mrb[0].mxu0
    %v3025 = vpop.f32.mrb[0].mxu0
    %v3026 = vpop.f32.mrb[0].mxu0
    %3027 = vdwg.mxu0
    %v3028 = vxor.u32 %v3023, 2147483648
    %v3029 = vmul.f32 %v3028, 1.442695
    %v3030 = vpow.pop %v3029
    %v3031 = vadd.f32 %v3030, 1.0
    %v3032 = vrcp.pop %v3031
    %v3033 = vmul.f32 1.0, %v3032
    %v3034 = vtanh.pop %v3023
    %v3035 = vmul.f32 %v3033, %v2649
    %3037 = vrot.lane.b32.xlu0 %v3034, 64
    %v3038 = vpop.permute.xlu0 %3037
    %v3040 = vmul.f32 %v3033, %v3038
    %3042 = vrot.lane.b32.xlu0 %v3040, 32
    %v3043 = vpop.permute.xlu0 %3042
    %v3045 = vadd.f32 %v3035, %v3043
    %v3046 = vtanh.pop %v3045
    %3048 = vrot.lane.b32.xlu0 %v3046, 64
    %v3049 = vpop.permute.xlu0 %3048
    %v3051 = vmul.f32 %v3033, %v3049
    %v3052 = vpack.c.bf16 %v2975, %v2975
    %3054 = vrot.lane.b32.xlu0 %v3052, 32
    %v3055 = vpop.permute.xlu0 %3054
    %v3057 = vsel %vm265, %v3055, 0
    %3059 = vmatprep.subr.bf16.mxu0 0
    %3060 = vmatpush1.bf16.msra.mxu0 %v1827
    %3061 = vmatprep.subr.bf16.mxu0 0
    %3062 = vmatpush1.bf16.msra.mxu0 %v1828
    %3063 = vmatprep.subr.bf16.mxu0 0
    %3064 = vmatpush1.bf16.msra.mxu0 0
    %3065 = vmatprep.subr.bf16.mxu0 0
    %3066 = vmatpush1.bf16.msra.mxu0 0
    %3067 = vmatprep.subr.bf16.mxu0 0
    %3068 = vmatpush1.bf16.msra.mxu0 0
    %3069 = vmatprep.subr.bf16.mxu0 0
    %3070 = vmatpush1.bf16.msra.mxu0 0
    %3071 = vmatprep.subr.bf16.mxu0 0
    %3072 = vmatpush1.bf16.msra.mxu0 0
    %3073 = vmatprep.subr.bf16.mxu0 0
    %3074 = vmatpush1.bf16.msra.mxu0 0
    %3075 = vmatprep.subr.bf16.mxu0 0
    %3076 = vmatpush1.bf16.msra.mxu0 0
    %3077 = vmatprep.subr.bf16.mxu0 0
    %3078 = vmatpush1.bf16.msra.mxu0 0
    %3079 = vmatprep.subr.bf16.mxu0 0
    %3080 = vmatpush1.bf16.msra.mxu0 0
    %3081 = vmatprep.subr.bf16.mxu0 0
    %3082 = vmatpush1.bf16.msra.mxu0 0
    %3083 = vmatprep.subr.bf16.mxu0 0
    %3084 = vmatpush1.bf16.msra.mxu0 0
    %3085 = vmatprep.subr.bf16.mxu0 0
    %3086 = vmatpush1.bf16.msra.mxu0 0
    %3087 = vmatprep.subr.bf16.mxu0 0
    %3088 = vmatpush1.bf16.msra.mxu0 0
    %3089 = vmatprep.subr.bf16.mxu0 0
    %3090 = vmatpush1.bf16.msra.mxu0 0
    %3091 = vmatprep.mubr.bf16.mxu0 0
    %3092 = vmatmul.mubr.bf16.gmra.mrb[0].mxu0 %v3057
    %v3093 = vpop.f32.mrb[0].mxu0
    %v3094 = vadd.f32 0.0, %v3093
    %v3095 = vpop.f32.mrb[0].mxu0
    %v3096 = vpop.f32.mrb[0].mxu0
    %v3097 = vpop.f32.mrb[0].mxu0
    %3098 = vdwg.mxu0
    %v3099 = vpack.c.bf16 %v3094, %v3094
    %v3101 = vsel %vm1892, %v3099, 0
    %3103 = vmatprep.subr.bf16.mxu0 0
    %3104 = vmatpush1.bf16.msra.mxu0 %v3101
    %3105 = vmatprep.subr.bf16.mxu0 0
    %3106 = vmatpush1.bf16.msra.mxu0 0
    %3107 = vmatprep.subr.bf16.mxu0 0
    %3108 = vmatpush1.bf16.msra.mxu0 0
    %3109 = vmatprep.subr.bf16.mxu0 0
    %3110 = vmatpush1.bf16.msra.mxu0 0
    %3111 = vmatprep.subr.bf16.mxu0 0
    %3112 = vmatpush1.bf16.msra.mxu0 0
    %3113 = vmatprep.subr.bf16.mxu0 0
    %3114 = vmatpush1.bf16.msra.mxu0 0
    %3115 = vmatprep.subr.bf16.mxu0 0
    %3116 = vmatpush1.bf16.msra.mxu0 0
    %3117 = vmatprep.subr.bf16.mxu0 0
    %3118 = vmatpush1.bf16.msra.mxu0 0
    %3119 = vmatprep.subr.bf16.mxu0 0
    %3120 = vmatpush1.bf16.msra.mxu0 0
    %3121 = vmatprep.subr.bf16.mxu0 0
    %3122 = vmatpush1.bf16.msra.mxu0 0
    %3123 = vmatprep.subr.bf16.mxu0 0
    %3124 = vmatpush1.bf16.msra.mxu0 0
    %3125 = vmatprep.subr.bf16.mxu0 0
    %3126 = vmatpush1.bf16.msra.mxu0 0
    %3127 = vmatprep.subr.bf16.mxu0 0
    %3128 = vmatpush1.bf16.msra.mxu0 0
    %3129 = vmatprep.subr.bf16.mxu0 0
    %3130 = vmatpush1.bf16.msra.mxu0 0
    %3131 = vmatprep.subr.bf16.mxu0 0
    %3132 = vmatpush1.bf16.msra.mxu0 0
    %3133 = vmatprep.subr.bf16.mxu0 0
    %3134 = vmatpush1.bf16.msra.mxu0 0
    %3135 = vmatprep.mubr.bf16.mxu0 0
    %3136 = vmatmul.mubr.bf16.gmra.mrb[0].mxu0 %v1887
    %v3137 = vpop.f32.mrb[0].mxu0
    %v3138 = vadd.f32 0.0, %v3137
    %v3139 = vpop.f32.mrb[0].mxu0
    %v3140 = vpop.f32.mrb[0].mxu0
    %v3141 = vadd.f32 0.0, %v3140
    %v3142 = vpop.f32.mrb[0].mxu0
    %3143 = vmatprep.mubr.bf16.mxu0 0
    %3144 = vmatmul.mubr.bf16.gmra.mrb[0].mxu0 %v1890
    %v3145 = vpop.f32.mrb[0].mxu0
    %v3146 = vadd.f32 0.0, %v3145
    %v3147 = vpop.f32.mrb[0].mxu0
    %v3148 = vpop.f32.mrb[0].mxu0
    %v3149 = vadd.f32 0.0, %v3148
    %v3150 = vpop.f32.mrb[0].mxu0
    %3151 = vdwg.mxu0
    %v3152 = vadd.f32 %v1665, %v3138
    %v3153 = vadd.f32 %v1666, %v3141
    %v3154 = vadd.f32 %v1667, %v3146
    %v3155 = vadd.f32 %v1668, %v3149
    %v3156 = vmul.f32 %v3152, 1.442695
    %v3157 = vpow.pop %v3156
    %v3158 = vmul.f32 %v3153, 1.442695
    %v3159 = vpow.pop %v3158
    %v3160 = vmul.f32 %v3154, 1.442695
    %v3161 = vpow.pop %v3160
    %v3162 = vmul.f32 %v3155, 1.442695
    %v3163 = vpow.pop %v3162
    %v3164 = vpack.c.bf16 %v3159, %v3157
    %v3165 = vpack.c.bf16 %v3163, %v3161
    %3166 = vmatprep.subr.bf16.mxu0 0
    %3167 = vmatpush1.bf16.msra.mxu0 %v3164
    %3168 = vmatprep.subr.bf16.mxu0 0
    %3169 = vmatpush1.bf16.msra.mxu0 %v3165
    %3170 = vmatprep.subr.bf16.mxu0 0
    %3171 = vmatpush1.bf16.msra.mxu0 0
    %3172 = vmatprep.subr.bf16.mxu0 0
    %3173 = vmatpush1.bf16.msra.mxu0 0
    %3174 = vmatprep.subr.bf16.mxu0 0
    %3175 = vmatpush1.bf16.msra.mxu0 0
    %3176 = vmatprep.subr.bf16.mxu0 0
    %3177 = vmatpush1.bf16.msra.mxu0 0
    %3178 = vmatprep.subr.bf16.mxu0 0
    %3179 = vmatpush1.bf16.msra.mxu0 0
    %3180 = vmatprep.subr.bf16.mxu0 0
    %3181 = vmatpush1.bf16.msra.mxu0 0
    %3182 = vmatprep.subr.bf16.mxu0 0
    %3183 = vmatpush1.bf16.msra.mxu0 0
    %3184 = vmatprep.subr.bf16.mxu0 0
    %3185 = vmatpush1.bf16.msra.mxu0 0
    %3186 = vmatprep.subr.bf16.mxu0 0
    %3187 = vmatpush1.bf16.msra.mxu0 0
    %3188 = vmatprep.subr.bf16.mxu0 0
    %3189 = vmatpush1.bf16.msra.mxu0 0
    %3190 = vmatprep.subr.bf16.mxu0 0
    %3191 = vmatpush1.bf16.msra.mxu0 0
    %3192 = vmatprep.subr.bf16.mxu0 0
    %3193 = vmatpush1.bf16.msra.mxu0 0
    %3194 = vmatprep.subr.bf16.mxu0 0
    %3195 = vmatpush1.bf16.msra.mxu0 0
    %3196 = vmatprep.subr.bf16.mxu0 0
    %3197 = vmatpush1.bf16.msra.mxu0 0
    %3198 = vmatprep.mubr.bf16.mxu0 0
    %3199 = vmatmul.mubr.bf16.gmra.mrb[0].mxu0 %v1970
    %v3200 = vpop.f32.mrb[0].mxu0
    %v3201 = vadd.f32 0.0, %v3200
    %v3202 = vpop.f32.mrb[0].mxu0
    %v3203 = vpop.f32.mrb[0].mxu0
    %v3204 = vadd.f32 0.0, %v3203
    %v3205 = vpop.f32.mrb[0].mxu0
    %3206 = vmatprep.mubr.bf16.mxu0 0
    %3207 = vmatmul.mubr.bf16.gmra.mrb[0].mxu0 %v1973
    %v3208 = vpop.f32.mrb[0].mxu0
    %v3209 = vadd.f32 0.0, %v3208
    %v3210 = vpop.f32.mrb[0].mxu0
    %v3211 = vpop.f32.mrb[0].mxu0
    %v3212 = vadd.f32 0.0, %v3211
    %v3213 = vpop.f32.mrb[0].mxu0
    %3214 = vdwg.mxu0
    %v3215 = vrcp.pop %v3201
    %v3216 = vrcp.pop %v3204
    %v3217 = vrcp.pop %v3209
    %v3218 = vrcp.pop %v3212
    %v3219 = vmul.f32 %v3157, %v3215
    %v3220 = vmul.f32 %v3159, %v3216
    %v3221 = vmul.f32 %v3161, %v3217
    %v3222 = vmul.f32 %v3163, %v3218
    %3224 = vset.pattern.permute.xlu0 0
    %3225 = vperm.xlu0 %3224, %v3219
    %v3226 = vpop.permute.xlu0 %3225
    %3229 = vset.pattern.permute.xlu0 0
    %3230 = vperm.xlu0 %3229, %v3220
    %v3231 = vpop.permute.xlu0 %3230
    %3234 = vset.pattern.permute.xlu0 0
    %3235 = vperm.xlu0 %3234, %v3221
    %v3236 = vpop.permute.xlu0 %3235
    %3239 = vset.pattern.permute.xlu0 0
    %3240 = vperm.xlu0 %3239, %v3222
    %v3241 = vpop.permute.xlu0 %3240
    %v3243 = vmul.f32 %v3226, %v1720
    %v3244 = vmul.f32 %v3231, %v1723
    %v3245 = vmul.f32 %v3236, %v1728
    %v3246 = vmul.f32 %v3241, %v1731
    %v3247 = vpack.c.bf16 %v3244, %v3243
    %v3248 = vpack.c.bf16 %v3246, %v3245
    %3249 = vmatprep.subr.bf16.mxu0 0
    %3250 = vmatpush1.bf16.msra.mxu0 %v3247
    %3251 = vmatprep.subr.bf16.mxu0 0
    %3252 = vmatpush1.bf16.msra.mxu0 %v3248
    %3253 = vmatprep.subr.bf16.mxu0 0
    %3254 = vmatpush1.bf16.msra.mxu0 0
    %3255 = vmatprep.subr.bf16.mxu0 0
    %3256 = vmatpush1.bf16.msra.mxu0 0
    %3257 = vmatprep.subr.bf16.mxu0 0
    %3258 = vmatpush1.bf16.msra.mxu0 0
    %3259 = vmatprep.subr.bf16.mxu0 0
    %3260 = vmatpush1.bf16.msra.mxu0 0
    %3261 = vmatprep.subr.bf16.mxu0 0
    %3262 = vmatpush1.bf16.msra.mxu0 0
    %3263 = vmatprep.subr.bf16.mxu0 0
    %3264 = vmatpush1.bf16.msra.mxu0 0
    %3265 = vmatprep.subr.bf16.mxu0 0
    %3266 = vmatpush1.bf16.msra.mxu0 0
    %3267 = vmatprep.subr.bf16.mxu0 0
    %3268 = vmatpush1.bf16.msra.mxu0 0
    %3269 = vmatprep.subr.bf16.mxu0 0
    %3270 = vmatpush1.bf16.msra.mxu0 0
    %3271 = vmatprep.subr.bf16.mxu0 0
    %3272 = vmatpush1.bf16.msra.mxu0 0
    %3273 = vmatprep.subr.bf16.mxu0 0
    %3274 = vmatpush1.bf16.msra.mxu0 0
    %3275 = vmatprep.subr.bf16.mxu0 0
    %3276 = vmatpush1.bf16.msra.mxu0 0
    %3277 = vmatprep.subr.bf16.mxu0 0
    %3278 = vmatpush1.bf16.msra.mxu0 0
    %3279 = vmatprep.subr.bf16.mxu0 0
    %3280 = vmatpush1.bf16.msra.mxu0 0
    %3281 = vmatprep.mubr.bf16.mxu0 0
    %3282 = vmatmul.mubr.bf16.gmra.mrb[0].mxu0 %v2059
    %v3283 = vpop.f32.mrb[0].mxu0
    %v3284 = vadd.f32 0.0, %v3283
    %v3285 = vpop.f32.mrb[0].mxu0
    %v3286 = vpop.f32.mrb[0].mxu0
    %v3287 = vpop.f32.mrb[0].mxu0
    %3288 = vdwg.mxu0
    %v3290 = vrot.slane %v3284, 4
    %v3292 = vadd.f32 %v242, %v3290
    %3294 = vrot.lane.b32.xlu0 %v3051, 32
    %v3295 = vpop.permute.xlu0 %3294
    %3297 = vrot.lane.b32.xlu0 %v2975, 64
    %v3298 = vpop.permute.xlu0 %3297
    %v3300 = vsel %vm265, %v3295, %v3298
    %v3301 = vpack.c.bf16 %v3300, %v3300
    %v3303 = vsel %vm370, %v3301, 0
    %3305 = vmatprep.subr.bf16.mxu0 0
    %3306 = vmatpush1.bf16.msra.mxu0 %v362
    %3307 = vmatprep.subr.bf16.mxu0 0
    %3308 = vmatpush1.bf16.msra.mxu0 %v363
    %3309 = vmatprep.subr.bf16.mxu0 0
    %3310 = vmatpush1.bf16.msra.mxu0 %v364
    %3311 = vmatprep.subr.bf16.mxu0 0
    %3312 = vmatpush1.bf16.msra.mxu0 %v365
    %3313 = vmatprep.subr.bf16.mxu0 0
    %3314 = vmatpush1.bf16.msra.mxu0 0
    %3315 = vmatprep.subr.bf16.mxu0 0
    %3316 = vmatpush1.bf16.msra.mxu0 0
    %3317 = vmatprep.subr.bf16.mxu0 0
    %3318 = vmatpush1.bf16.msra.mxu0 0
    %3319 = vmatprep.subr.bf16.mxu0 0
    %3320 = vmatpush1.bf16.msra.mxu0 0
    %3321 = vmatprep.subr.bf16.mxu0 0
    %3322 = vmatpush1.bf16.msra.mxu0 0
    %3323 = vmatprep.subr.bf16.mxu0 0
    %3324 = vmatpush1.bf16.msra.mxu0 0
    %3325 = vmatprep.subr.bf16.mxu0 0
    %3326 = vmatpush1.bf16.msra.mxu0 0
    %3327 = vmatprep.subr.bf16.mxu0 0
    %3328 = vmatpush1.bf16.msra.mxu0 0
    %3329 = vmatprep.subr.bf16.mxu0 0
    %3330 = vmatpush1.bf16.msra.mxu0 0
    %3331 = vmatprep.subr.bf16.mxu0 0
    %3332 = vmatpush1.bf16.msra.mxu0 0
    %3333 = vmatprep.subr.bf16.mxu0 0
    %3334 = vmatpush1.bf16.msra.mxu0 0
    %3335 = vmatprep.subr.bf16.mxu0 0
    %3336 = vmatpush1.bf16.msra.mxu0 0
    %3337 = vmatprep.mubr.bf16.mxu0 0
    %3338 = vmatmul.mubr.bf16.gmra.mrb[0].mxu0 %v3303
    %v3339 = vpop.f32.mrb[0].mxu0
    %v3340 = vadd.f32 0.0, %v3339
    %v3341 = vpop.f32.mrb[0].mxu0
    %v3342 = vpop.f32.mrb[0].mxu0
    %v3343 = vpop.f32.mrb[0].mxu0
    %3344 = vdwg.mxu0
    %v3346 = vrot.slane %v3340, 4
    %v3348 = vadd.f32 %v3292, %v3346
    %v3349 = vxor.u32 %v3348, 2147483648
    %v3350 = vmul.f32 %v3349, 1.442695
    %v3351 = vpow.pop %v3350
    %v3352 = vadd.f32 %v3351, 1.0
    %v3353 = vrcp.pop %v3352
    %v3354 = vmul.f32 1.0, %v3353
    %v3355 = vtanh.pop %v3348
    %v3357 = vrot.slane %v2969, 4
    %v3359 = vmul.f32 %v3354, %v3357
    %3361 = vrot.lane.b32.xlu0 %v3355, 64
    %v3362 = vpop.permute.xlu0 %3361
    %v3364 = vmul.f32 %v3354, %v3362
    %3366 = vrot.lane.b32.xlu0 %v3364, 32
    %v3367 = vpop.permute.xlu0 %3366
    %v3369 = vadd.f32 %v3359, %v3367
    %v3370 = vtanh.pop %v3369
    %3372 = vrot.lane.b32.xlu0 %v3370, 64
    %v3373 = vpop.permute.xlu0 %3372
    %v3375 = vmul.f32 %v3354, %v3373
    %3377 = vrot.lane.b32.xlu0 %v3375, 32
    %v3378 = vpop.permute.xlu0 %3377
    %3380 = vst.msk [vmem:[#allocation3 + $0x8] sm:$0xf0] %vm2583, %v3378
    %v3381 = vpack.c.bf16 %v3051, %v3051
    %3383 = vrot.lane.b32.xlu0 %v3381, 32
    %v3384 = vpop.permute.xlu0 %3383
    %v3386 = vsel %vm265, %v3384, 0
    %3388 = vmatprep.subr.bf16.mxu0 0
    %3389 = vmatpush1.bf16.msra.mxu0 %v261
    %3390 = vmatprep.subr.bf16.mxu0 0
    %3391 = vmatpush1.bf16.msra.mxu0 %v262
    %3392 = vmatprep.subr.bf16.mxu0 0
    %3393 = vmatpush1.bf16.msra.mxu0 0
    %3394 = vmatprep.subr.bf16.mxu0 0
    %3395 = vmatpush1.bf16.msra.mxu0 0
    %3396 = vmatprep.subr.bf16.mxu0 0
    %3397 = vmatpush1.bf16.msra.mxu0 0
    %3398 = vmatprep.subr.bf16.mxu0 0
    %3399 = vmatpush1.bf16.msra.mxu0 0
    %3400 = vmatprep.subr.bf16.mxu0 0
    %3401 = vmatpush1.bf16.msra.mxu0 0
    %3402 = vmatprep.subr.bf16.mxu0 0
    %3403 = vmatpush1.bf16.msra.mxu0 0
    %3404 = vmatprep.subr.bf16.mxu0 0
    %3405 = vmatpush1.bf16.msra.mxu0 0
    %3406 = vmatprep.subr.bf16.mxu0 0
    %3407 = vmatpush1.bf16.msra.mxu0 0
    %3408 = vmatprep.subr.bf16.mxu0 0
    %3409 = vmatpush1.bf16.msra.mxu0 0
    %3410 = vmatprep.subr.bf16.mxu0 0
    %3411 = vmatpush1.bf16.msra.mxu0 0
    %3412 = vmatprep.subr.bf16.mxu0 0
    %3413 = vmatpush1.bf16.msra.mxu0 0
    %3414 = vmatprep.subr.bf16.mxu0 0
    %3415 = vmatpush1.bf16.msra.mxu0 0
    %3416 = vmatprep.subr.bf16.mxu0 0
    %3417 = vmatpush1.bf16.msra.mxu0 0
    %3418 = vmatprep.subr.bf16.mxu0 0
    %3419 = vmatpush1.bf16.msra.mxu0 0
    %3420 = vmatprep.mubr.bf16.mxu0 0
    %3421 = vmatmul.mubr.bf16.gmra.mrb[0].mxu0 %v3386
    %v3422 = vpop.f32.mrb[0].mxu0
    %v3423 = vadd.f32 %v1739, %v3422
    %v3424 = vpop.f32.mrb[0].mxu0
    %v3425 = vpop.f32.mrb[0].mxu0
    %v3426 = vpop.f32.mrb[0].mxu0
    %3427 = vdwg.mxu0
    %v3428 = vxor.u32 %v3423, 2147483648
    %v3429 = vmul.f32 %v3428, 1.442695
    %v3430 = vpow.pop %v3429
    %v3431 = vadd.f32 %v3430, 1.0
    %v3432 = vrcp.pop %v3431
    %v3433 = vmul.f32 1.0, %v3432
    %v3434 = vtanh.pop %v3423
    %v3435 = vmul.f32 %v3433, %v3045
    %3437 = vrot.lane.b32.xlu0 %v3434, 64
    %v3438 = vpop.permute.xlu0 %3437
    %v3440 = vmul.f32 %v3433, %v3438
    %3442 = vrot.lane.b32.xlu0 %v3440, 32
    %v3443 = vpop.permute.xlu0 %3442
    %v3445 = vadd.f32 %v3435, %v3443
    %v3446 = vtanh.pop %v3445
    %3448 = vrot.lane.b32.xlu0 %v3446, 64
    %v3449 = vpop.permute.xlu0 %3448
    %v3451 = vmul.f32 %v3433, %v3449
    %v3452 = vpack.c.bf16 %v3375, %v3375
    %v3454 = vrot.slane %v3452, 2
    %3455 = vrot.lane.b32.xlu0 %v3454, 32
    %v3456 = vpop.permute.xlu0 %3455
    %v3458 = vsel %vm265, %v3456, 0
    %3460 = vmatprep.subr.bf16.mxu0 0
    %3461 = vmatpush1.bf16.msra.mxu0 %v1827
    %3462 = vmatprep.subr.bf16.mxu0 0
    %3463 = vmatpush1.bf16.msra.mxu0 %v1828
    %3464 = vmatprep.subr.bf16.mxu0 0
    %3465 = vmatpush1.bf16.msra.mxu0 0
    %3466 = vmatprep.subr.bf16.mxu0 0
    %3467 = vmatpush1.bf16.msra.mxu0 0
    %3468 = vmatprep.subr.bf16.mxu0 0
    %3469 = vmatpush1.bf16.msra.mxu0 0
    %3470 = vmatprep.subr.bf16.mxu0 0
    %3471 = vmatpush1.bf16.msra.mxu0 0
    %3472 = vmatprep.subr.bf16.mxu0 0
    %3473 = vmatpush1.bf16.msra.mxu0 0
    %3474 = vmatprep.subr.bf16.mxu0 0
    %3475 = vmatpush1.bf16.msra.mxu0 0
    %3476 = vmatprep.subr.bf16.mxu0 0
    %3477 = vmatpush1.bf16.msra.mxu0 0
    %3478 = vmatprep.subr.bf16.mxu0 0
    %3479 = vmatpush1.bf16.msra.mxu0 0
    %3480 = vmatprep.subr.bf16.mxu0 0
    %3481 = vmatpush1.bf16.msra.mxu0 0
    %3482 = vmatprep.subr.bf16.mxu0 0
    %3483 = vmatpush1.bf16.msra.mxu0 0
    %3484 = vmatprep.subr.bf16.mxu0 0
    %3485 = vmatpush1.bf16.msra.mxu0 0
    %3486 = vmatprep.subr.bf16.mxu0 0
    %3487 = vmatpush1.bf16.msra.mxu0 0
    %3488 = vmatprep.subr.bf16.mxu0 0
    %3489 = vmatpush1.bf16.msra.mxu0 0
    %3490 = vmatprep.subr.bf16.mxu0 0
    %3491 = vmatpush1.bf16.msra.mxu0 0
    %3492 = vmatprep.mubr.bf16.mxu0 0
    %3493 = vmatmul.mubr.bf16.gmra.mrb[0].mxu0 %v3458
    %v3494 = vpop.f32.mrb[0].mxu0
    %v3495 = vadd.f32 0.0, %v3494
    %v3496 = vpop.f32.mrb[0].mxu0
    %v3497 = vpop.f32.mrb[0].mxu0
    %v3498 = vpop.f32.mrb[0].mxu0
    %3499 = vdwg.mxu0
    %v3500 = vpack.c.bf16 %v3495, %v3495
    %v3502 = vsel %vm1892, %v3500, 0
    %3504 = vmatprep.subr.bf16.mxu0 0
    %3505 = vmatpush1.bf16.msra.mxu0 %v3502
    %3506 = vmatprep.subr.bf16.mxu0 0
    %3507 = vmatpush1.bf16.msra.mxu0 0
    %3508 = vmatprep.subr.bf16.mxu0 0
    %3509 = vmatpush1.bf16.msra.mxu0 0
    %3510 = vmatprep.subr.bf16.mxu0 0
    %3511 = vmatpush1.bf16.msra.mxu0 0
    %3512 = vmatprep.subr.bf16.mxu0 0
    %3513 = vmatpush1.bf16.msra.mxu0 0
    %3514 = vmatprep.subr.bf16.mxu0 0
    %3515 = vmatpush1.bf16.msra.mxu0 0
    %3516 = vmatprep.subr.bf16.mxu0 0
    %3517 = vmatpush1.bf16.msra.mxu0 0
    %3518 = vmatprep.subr.bf16.mxu0 0
    %3519 = vmatpush1.bf16.msra.mxu0 0
    %3520 = vmatprep.subr.bf16.mxu0 0
    %3521 = vmatpush1.bf16.msra.mxu0 0
    %3522 = vmatprep.subr.bf16.mxu0 0
    %3523 = vmatpush1.bf16.msra.mxu0 0
    %3524 = vmatprep.subr.bf16.mxu0 0
    %3525 = vmatpush1.bf16.msra.mxu0 0
    %3526 = vmatprep.subr.bf16.mxu0 0
    %3527 = vmatpush1.bf16.msra.mxu0 0
    %3528 = vmatprep.subr.bf16.mxu0 0
    %3529 = vmatpush1.bf16.msra.mxu0 0
    %3530 = vmatprep.subr.bf16.mxu0 0
    %3531 = vmatpush1.bf16.msra.mxu0 0
    %3532 = vmatprep.subr.bf16.mxu0 0
    %3533 = vmatpush1.bf16.msra.mxu0 0
    %3534 = vmatprep.subr.bf16.mxu0 0
    %3535 = vmatpush1.bf16.msra.mxu0 0
    %3536 = vmatprep.mubr.bf16.mxu0 0
    %3537 = vmatmul.mubr.bf16.gmra.mrb[0].mxu0 %v1887
    %v3538 = vpop.f32.mrb[0].mxu0
    %v3539 = vadd.f32 0.0, %v3538
    %v3540 = vpop.f32.mrb[0].mxu0
    %v3541 = vpop.f32.mrb[0].mxu0
    %v3542 = vadd.f32 0.0, %v3541
    %v3543 = vpop.f32.mrb[0].mxu0
    %3544 = vmatprep.mubr.bf16.mxu0 0
    %3545 = vmatmul.mubr.bf16.gmra.mrb[0].mxu0 %v1890
    %v3546 = vpop.f32.mrb[0].mxu0
    %v3547 = vadd.f32 0.0, %v3546
    %v3548 = vpop.f32.mrb[0].mxu0
    %v3549 = vpop.f32.mrb[0].mxu0
    %v3550 = vadd.f32 0.0, %v3549
    %v3551 = vpop.f32.mrb[0].mxu0
    %3552 = vdwg.mxu0
    %v3553 = vadd.f32 %v1665, %v3539
    %v3554 = vadd.f32 %v1666, %v3542
    %v3555 = vadd.f32 %v1667, %v3547
    %v3556 = vadd.f32 %v1668, %v3550
    %v3557 = vmul.f32 %v3553, 1.442695
    %v3558 = vpow.pop %v3557
    %v3559 = vmul.f32 %v3554, 1.442695
    %v3560 = vpow.pop %v3559
    %v3561 = vmul.f32 %v3555, 1.442695
    %v3562 = vpow.pop %v3561
    %v3563 = vmul.f32 %v3556, 1.442695
    %v3564 = vpow.pop %v3563
    %v3565 = vpack.c.bf16 %v3560, %v3558
    %v3566 = vpack.c.bf16 %v3564, %v3562
    %3567 = vmatprep.subr.bf16.mxu0 0
    %3568 = vmatpush1.bf16.msra.mxu0 %v3565
    %3569 = vmatprep.subr.bf16.mxu0 0
    %3570 = vmatpush1.bf16.msra.mxu0 %v3566
    %3571 = vmatprep.subr.bf16.mxu0 0
    %3572 = vmatpush1.bf16.msra.mxu0 0
    %3573 = vmatprep.subr.bf16.mxu0 0
    %3574 = vmatpush1.bf16.msra.mxu0 0
    %3575 = vmatprep.subr.bf16.mxu0 0
    %3576 = vmatpush1.bf16.msra.mxu0 0
    %3577 = vmatprep.subr.bf16.mxu0 0
    %3578 = vmatpush1.bf16.msra.mxu0 0
    %3579 = vmatprep.subr.bf16.mxu0 0
    %3580 = vmatpush1.bf16.msra.mxu0 0
    %3581 = vmatprep.subr.bf16.mxu0 0
    %3582 = vmatpush1.bf16.msra.mxu0 0
    %3583 = vmatprep.subr.bf16.mxu0 0
    %3584 = vmatpush1.bf16.msra.mxu0 0
    %3585 = vmatprep.subr.bf16.mxu0 0
    %3586 = vmatpush1.bf16.msra.mxu0 0
    %3587 = vmatprep.subr.bf16.mxu0 0
    %3588 = vmatpush1.bf16.msra.mxu0 0
    %3589 = vmatprep.subr.bf16.mxu0 0
    %3590 = vmatpush1.bf16.msra.mxu0 0
    %3591 = vmatprep.subr.bf16.mxu0 0
    %3592 = vmatpush1.bf16.msra.mxu0 0
    %3593 = vmatprep.subr.bf16.mxu0 0
    %3594 = vmatpush1.bf16.msra.mxu0 0
    %3595 = vmatprep.subr.bf16.mxu0 0
    %3596 = vmatpush1.bf16.msra.mxu0 0
    %3597 = vmatprep.subr.bf16.mxu0 0
    %3598 = vmatpush1.bf16.msra.mxu0 0
    %3599 = vmatprep.mubr.bf16.mxu0 0
    %3600 = vmatmul.mubr.bf16.gmra.mrb[0].mxu0 %v1970
    %v3601 = vpop.f32.mrb[0].mxu0
    %v3602 = vadd.f32 0.0, %v3601
    %v3603 = vpop.f32.mrb[0].mxu0
    %v3604 = vpop.f32.mrb[0].mxu0
    %v3605 = vadd.f32 0.0, %v3604
    %v3606 = vpop.f32.mrb[0].mxu0
    %3607 = vmatprep.mubr.bf16.mxu0 0
    %3608 = vmatmul.mubr.bf16.gmra.mrb[0].mxu0 %v1973
    %v3609 = vpop.f32.mrb[0].mxu0
    %v3610 = vadd.f32 0.0, %v3609
    %v3611 = vpop.f32.mrb[0].mxu0
    %v3612 = vpop.f32.mrb[0].mxu0
    %v3613 = vadd.f32 0.0, %v3612
    %v3614 = vpop.f32.mrb[0].mxu0
    %3615 = vdwg.mxu0
    %v3616 = vrcp.pop %v3602
    %v3617 = vrcp.pop %v3605
    %v3618 = vrcp.pop %v3610
    %v3619 = vrcp.pop %v3613
    %v3620 = vmul.f32 %v3558, %v3616
    %v3621 = vmul.f32 %v3560, %v3617
    %v3622 = vmul.f32 %v3562, %v3618
    %v3623 = vmul.f32 %v3564, %v3619
    %3625 = vset.pattern.permute.xlu0 0
    %3626 = vperm.xlu0 %3625, %v3620
    %v3627 = vpop.permute.xlu0 %3626
    %3630 = vset.pattern.permute.xlu0 0
    %3631 = vperm.xlu0 %3630, %v3621
    %v3632 = vpop.permute.xlu0 %3631
    %3635 = vset.pattern.permute.xlu0 0
    %3636 = vperm.xlu0 %3635, %v3622
    %v3637 = vpop.permute.xlu0 %3636
    %3640 = vset.pattern.permute.xlu0 0
    %3641 = vperm.xlu0 %3640, %v3623
    %v3642 = vpop.permute.xlu0 %3641
    %v3644 = vmul.f32 %v3627, %v1720
    %v3645 = vmul.f32 %v3632, %v1723
    %v3646 = vmul.f32 %v3637, %v1728
    %v3647 = vmul.f32 %v3642, %v1731
    %v3648 = vpack.c.bf16 %v3645, %v3644
    %v3649 = vpack.c.bf16 %v3647, %v3646
    %3650 = vmatprep.subr.bf16.mxu0 0
    %3651 = vmatpush1.bf16.msra.mxu0 %v3648
    %3652 = vmatprep.subr.bf16.mxu0 0
    %3653 = vmatpush1.bf16.msra.mxu0 %v3649
    %3654 = vmatprep.subr.bf16.mxu0 0
    %3655 = vmatpush1.bf16.msra.mxu0 0
    %3656 = vmatprep.subr.bf16.mxu0 0
    %3657 = vmatpush1.bf16.msra.mxu0 0
    %3658 = vmatprep.subr.bf16.mxu0 0
    %3659 = vmatpush1.bf16.msra.mxu0 0
    %3660 = vmatprep.subr.bf16.mxu0 0
    %3661 = vmatpush1.bf16.msra.mxu0 0
    %3662 = vmatprep.subr.bf16.mxu0 0
    %3663 = vmatpush1.bf16.msra.mxu0 0
    %3664 = vmatprep.subr.bf16.mxu0 0
    %3665 = vmatpush1.bf16.msra.mxu0 0
    %3666 = vmatprep.subr.bf16.mxu0 0
    %3667 = vmatpush1.bf16.msra.mxu0 0
    %3668 = vmatprep.subr.bf16.mxu0 0
    %3669 = vmatpush1.bf16.msra.mxu0 0
    %3670 = vmatprep.subr.bf16.mxu0 0
    %3671 = vmatpush1.bf16.msra.mxu0 0
    %3672 = vmatprep.subr.bf16.mxu0 0
    %3673 = vmatpush1.bf16.msra.mxu0 0
    %3674 = vmatprep.subr.bf16.mxu0 0
    %3675 = vmatpush1.bf16.msra.mxu0 0
    %3676 = vmatprep.subr.bf16.mxu0 0
    %3677 = vmatpush1.bf16.msra.mxu0 0
    %3678 = vmatprep.subr.bf16.mxu0 0
    %3679 = vmatpush1.bf16.msra.mxu0 0
    %3680 = vmatprep.subr.bf16.mxu0 0
    %3681 = vmatpush1.bf16.msra.mxu0 0
    %3682 = vmatprep.mubr.bf16.mxu0 0
    %3683 = vmatmul.mubr.bf16.gmra.mrb[0].mxu0 %v2059
    %v3684 = vpop.f32.mrb[0].mxu0
    %v3685 = vadd.f32 0.0, %v3684
    %v3686 = vpop.f32.mrb[0].mxu0
    %v3687 = vpop.f32.mrb[0].mxu0
    %v3688 = vpop.f32.mrb[0].mxu0
    %3689 = vdwg.mxu0
    %v3690 = vadd.f32 %v247, %v3685
    %3692 = vrot.lane.b32.xlu0 %v3451, 32
    %v3693 = vpop.permute.xlu0 %3692
    %v3695 = vrot.slane %v3375, 4
    %3696 = vrot.lane.b32.xlu0 %v3695, 64
    %v3697 = vpop.permute.xlu0 %3696
    %v3699 = vsel %vm265, %v3693, %v3697
    %v3700 = vpack.c.bf16 %v3699, %v3699
    %v3702 = vsel %vm370, %v3700, 0
    %3704 = vmatprep.subr.bf16.mxu0 0
    %3705 = vmatpush1.bf16.msra.mxu0 %v362
    %3706 = vmatprep.subr.bf16.mxu0 0
    %3707 = vmatpush1.bf16.msra.mxu0 %v363
    %3708 = vmatprep.subr.bf16.mxu0 0
    %3709 = vmatpush1.bf16.msra.mxu0 %v364
    %3710 = vmatprep.subr.bf16.mxu0 0
    %3711 = vmatpush1.bf16.msra.mxu0 %v365
    %3712 = vmatprep.subr.bf16.mxu0 0
    %3713 = vmatpush1.bf16.msra.mxu0 0
    %3714 = vmatprep.subr.bf16.mxu0 0
    %3715 = vmatpush1.bf16.msra.mxu0 0
    %3716 = vmatprep.subr.bf16.mxu0 0
    %3717 = vmatpush1.bf16.msra.mxu0 0
    %3718 = vmatprep.subr.bf16.mxu0 0
    %3719 = vmatpush1.bf16.msra.mxu0 0
    %3720 = vmatprep.subr.bf16.mxu0 0
    %3721 = vmatpush1.bf16.msra.mxu0 0
    %3722 = vmatprep.subr.bf16.mxu0 0
    %3723 = vmatpush1.bf16.msra.mxu0 0
    %3724 = vmatprep.subr.bf16.mxu0 0
    %3725 = vmatpush1.bf16.msra.mxu0 0
    %3726 = vmatprep.subr.bf16.mxu0 0
    %3727 = vmatpush1.bf16.msra.mxu0 0
    %3728 = vmatprep.subr.bf16.mxu0 0
    %3729 = vmatpush1.bf16.msra.mxu0 0
    %3730 = vmatprep.subr.bf16.mxu0 0
    %3731 = vmatpush1.bf16.msra.mxu0 0
    %3732 = vmatprep.subr.bf16.mxu0 0
    %3733 = vmatpush1.bf16.msra.mxu0 0
    %3734 = vmatprep.subr.bf16.mxu0 0
    %3735 = vmatpush1.bf16.msra.mxu0 0
    %3736 = vmatprep.mubr.bf16.mxu0 0
    %3737 = vmatmul.mubr.bf16.gmra.mrb[0].mxu0 %v3702
    %v3738 = vpop.f32.mrb[0].mxu0
    %v3739 = vadd.f32 0.0, %v3738
    %v3740 = vpop.f32.mrb[0].mxu0
    %v3741 = vpop.f32.mrb[0].mxu0
    %v3742 = vpop.f32.mrb[0].mxu0
    %3743 = vdwg.mxu0
    %v3744 = vadd.f32 %v3690, %v3739
    %v3745 = vxor.u32 %v3744, 2147483648
    %v3746 = vmul.f32 %v3745, 1.442695
    %v3747 = vpow.pop %v3746
    %v3748 = vadd.f32 %v3747, 1.0
    %v3749 = vrcp.pop %v3748
    %v3750 = vmul.f32 1.0, %v3749
    %v3751 = vtanh.pop %v3744
    %v3753 = vrot.slane %v3369, 4
    %v3755 = vmul.f32 %v3750, %v3753
    %3757 = vrot.lane.b32.xlu0 %v3751, 64
    %v3758 = vpop.permute.xlu0 %3757
    %v3760 = vmul.f32 %v3750, %v3758
    %3762 = vrot.lane.b32.xlu0 %v3760, 32
    %v3763 = vpop.permute.xlu0 %3762
    %v3765 = vadd.f32 %v3755, %v3763
    %v3766 = vtanh.pop %v3765
    %3768 = vrot.lane.b32.xlu0 %v3766, 64
    %v3769 = vpop.permute.xlu0 %3768
    %v3771 = vmul.f32 %v3750, %v3769
    %3773 = vrot.lane.b32.xlu0 %v3771, 32
    %v3774 = vpop.permute.xlu0 %3773
    %3776 = vst.msk [vmem:[#allocation3 + $0x10] sm:$0xf] %vm442, %v3774
    %v3777 = vpack.c.bf16 %v3451, %v3451
    %3779 = vrot.lane.b32.xlu0 %v3777, 32
    %v3780 = vpop.permute.xlu0 %3779
    %v3782 = vsel %vm265, %v3780, 0
    %3784 = vmatprep.subr.bf16.mxu0 0
    %3785 = vmatpush1.bf16.msra.mxu0 %v261
    %3786 = vmatprep.subr.bf16.mxu0 0
    %3787 = vmatpush1.bf16.msra.mxu0 %v262
    %3788 = vmatprep.subr.bf16.mxu0 0
    %3789 = vmatpush1.bf16.msra.mxu0 0
    %3790 = vmatprep.subr.bf16.mxu0 0
    %3791 = vmatpush1.bf16.msra.mxu0 0
    %3792 = vmatprep.subr.bf16.mxu0 0
    %3793 = vmatpush1.bf16.msra.mxu0 0
    %3794 = vmatprep.subr.bf16.mxu0 0
    %3795 = vmatpush1.bf16.msra.mxu0 0
    %3796 = vmatprep.subr.bf16.mxu0 0
    %3797 = vmatpush1.bf16.msra.mxu0 0
    %3798 = vmatprep.subr.bf16.mxu0 0
    %3799 = vmatpush1.bf16.msra.mxu0 0
    %3800 = vmatprep.subr.bf16.mxu0 0
    %3801 = vmatpush1.bf16.msra.mxu0 0
    %3802 = vmatprep.subr.bf16.mxu0 0
    %3803 = vmatpush1.bf16.msra.mxu0 0
    %3804 = vmatprep.subr.bf16.mxu0 0
    %3805 = vmatpush1.bf16.msra.mxu0 0
    %3806 = vmatprep.subr.bf16.mxu0 0
    %3807 = vmatpush1.bf16.msra.mxu0 0
    %3808 = vmatprep.subr.bf16.mxu0 0
    %3809 = vmatpush1.bf16.msra.mxu0 0
    %3810 = vmatprep.subr.bf16.mxu0 0
    %3811 = vmatpush1.bf16.msra.mxu0 0
    %3812 = vmatprep.subr.bf16.mxu0 0
    %3813 = vmatpush1.bf16.msra.mxu0 0
    %3814 = vmatprep.subr.bf16.mxu0 0
    %3815 = vmatpush1.bf16.msra.mxu0 0
    %3816 = vmatprep.mubr.bf16.mxu0 0
    %3817 = vmatmul.mubr.bf16.gmra.mrb[0].mxu0 %v3782
    %v3818 = vpop.f32.mrb[0].mxu0
    %v3819 = vadd.f32 %v1739, %v3818
    %v3820 = vpop.f32.mrb[0].mxu0
    %v3821 = vpop.f32.mrb[0].mxu0
    %v3822 = vpop.f32.mrb[0].mxu0
    %3823 = vdwg.mxu0
    %v3824 = vxor.u32 %v3819, 2147483648
    %v3825 = vmul.f32 %v3824, 1.442695
    %v3826 = vpow.pop %v3825
    %v3827 = vadd.f32 %v3826, 1.0
    %v3828 = vrcp.pop %v3827
    %v3829 = vmul.f32 1.0, %v3828
    %v3830 = vtanh.pop %v3819
    %v3831 = vmul.f32 %v3829, %v3445
    %3833 = vrot.lane.b32.xlu0 %v3830, 64
    %v3834 = vpop.permute.xlu0 %3833
    %v3836 = vmul.f32 %v3829, %v3834
    %3838 = vrot.lane.b32.xlu0 %v3836, 32
    %v3839 = vpop.permute.xlu0 %3838
    %v3841 = vadd.f32 %v3831, %v3839
    %v3842 = vtanh.pop %v3841
    %3844 = vrot.lane.b32.xlu0 %v3842, 64
    %v3845 = vpop.permute.xlu0 %3844
    %v3847 = vmul.f32 %v3829, %v3845
    %v3848 = vpack.c.bf16 %v3771, %v3771
    %3850 = vrot.lane.b32.xlu0 %v3848, 32
    %v3851 = vpop.permute.xlu0 %3850
    %v3853 = vsel %vm265, %v3851, 0
    %3855 = vmatprep.subr.bf16.mxu0 0
    %3856 = vmatpush1.bf16.msra.mxu0 %v1827
    %3857 = vmatprep.subr.bf16.mxu0 0
    %3858 = vmatpush1.bf16.msra.mxu0 %v1828
    %3859 = vmatprep.subr.bf16.mxu0 0
    %3860 = vmatpush1.bf16.msra.mxu0 0
    %3861 = vmatprep.subr.bf16.mxu0 0
    %3862 = vmatpush1.bf16.msra.mxu0 0
    %3863 = vmatprep.subr.bf16.mxu0 0
    %3864 = vmatpush1.bf16.msra.mxu0 0
    %3865 = vmatprep.subr.bf16.mxu0 0
    %3866 = vmatpush1.bf16.msra.mxu0 0
    %3867 = vmatprep.subr.bf16.mxu0 0
    %3868 = vmatpush1.bf16.msra.mxu0 0
    %3869 = vmatprep.subr.bf16.mxu0 0
    %3870 = vmatpush1.bf16.msra.mxu0 0
    %3871 = vmatprep.subr.bf16.mxu0 0
    %3872 = vmatpush1.bf16.msra.mxu0 0
    %3873 = vmatprep.subr.bf16.mxu0 0
    %3874 = vmatpush1.bf16.msra.mxu0 0
    %3875 = vmatprep.subr.bf16.mxu0 0
    %3876 = vmatpush1.bf16.msra.mxu0 0
    %3877 = vmatprep.subr.bf16.mxu0 0
    %3878 = vmatpush1.bf16.msra.mxu0 0
    %3879 = vmatprep.subr.bf16.mxu0 0
    %3880 = vmatpush1.bf16.msra.mxu0 0
    %3881 = vmatprep.subr.bf16.mxu0 0
    %3882 = vmatpush1.bf16.msra.mxu0 0
    %3883 = vmatprep.subr.bf16.mxu0 0
    %3884 = vmatpush1.bf16.msra.mxu0 0
    %3885 = vmatprep.subr.bf16.mxu0 0
    %3886 = vmatpush1.bf16.msra.mxu0 0
    %3887 = vmatprep.mubr.bf16.mxu0 0
    %3888 = vmatmul.mubr.bf16.gmra.mrb[0].mxu0 %v3853
    %v3889 = vpop.f32.mrb[0].mxu0
    %v3890 = vadd.f32 0.0, %v3889
    %v3891 = vpop.f32.mrb[0].mxu0
    %v3892 = vpop.f32.mrb[0].mxu0
    %v3893 = vpop.f32.mrb[0].mxu0
    %3894 = vdwg.mxu0
    %v3895 = vpack.c.bf16 %v3890, %v3890
    %v3897 = vsel %vm1892, %v3895, 0
    %3899 = vmatprep.subr.bf16.mxu0 0
    %3900 = vmatpush1.bf16.msra.mxu0 %v3897
    %3901 = vmatprep.subr.bf16.mxu0 0
    %3902 = vmatpush1.bf16.msra.mxu0 0
    %3903 = vmatprep.subr.bf16.mxu0 0
    %3904 = vmatpush1.bf16.msra.mxu0 0
    %3905 = vmatprep.subr.bf16.mxu0 0
    %3906 = vmatpush1.bf16.msra.mxu0 0
    %3907 = vmatprep.subr.bf16.mxu0 0
    %3908 = vmatpush1.bf16.msra.mxu0 0
    %3909 = vmatprep.subr.bf16.mxu0 0
    %3910 = vmatpush1.bf16.msra.mxu0 0
    %3911 = vmatprep.subr.bf16.mxu0 0
    %3912 = vmatpush1.bf16.msra.mxu0 0
    %3913 = vmatprep.subr.bf16.mxu0 0
    %3914 = vmatpush1.bf16.msra.mxu0 0
    %3915 = vmatprep.subr.bf16.mxu0 0
    %3916 = vmatpush1.bf16.msra.mxu0 0
    %3917 = vmatprep.subr.bf16.mxu0 0
    %3918 = vmatpush1.bf16.msra.mxu0 0
    %3919 = vmatprep.subr.bf16.mxu0 0
    %3920 = vmatpush1.bf16.msra.mxu0 0
    %3921 = vmatprep.subr.bf16.mxu0 0
    %3922 = vmatpush1.bf16.msra.mxu0 0
    %3923 = vmatprep.subr.bf16.mxu0 0
    %3924 = vmatpush1.bf16.msra.mxu0 0
    %3925 = vmatprep.subr.bf16.mxu0 0
    %3926 = vmatpush1.bf16.msra.mxu0 0
    %3927 = vmatprep.subr.bf16.mxu0 0
    %3928 = vmatpush1.bf16.msra.mxu0 0
    %3929 = vmatprep.subr.bf16.mxu0 0
    %3930 = vmatpush1.bf16.msra.mxu0 0
    %3931 = vmatprep.mubr.bf16.mxu0 0
    %3932 = vmatmul.mubr.bf16.gmra.mrb[0].mxu0 %v1887
    %v3933 = vpop.f32.mrb[0].mxu0
    %v3934 = vadd.f32 0.0, %v3933
    %v3935 = vpop.f32.mrb[0].mxu0
    %v3936 = vpop.f32.mrb[0].mxu0
    %v3937 = vadd.f32 0.0, %v3936
    %v3938 = vpop.f32.mrb[0].mxu0
    %3939 = vmatprep.mubr.bf16.mxu0 0
    %3940 = vmatmul.mubr.bf16.gmra.mrb[0].mxu0 %v1890
    %v3941 = vpop.f32.mrb[0].mxu0
    %v3942 = vadd.f32 0.0, %v3941
    %v3943 = vpop.f32.mrb[0].mxu0
    %v3944 = vpop.f32.mrb[0].mxu0
    %v3945 = vadd.f32 0.0, %v3944
    %v3946 = vpop.f32.mrb[0].mxu0
    %3947 = vdwg.mxu0
    %v3948 = vadd.f32 %v1665, %v3934
    %v3949 = vadd.f32 %v1666, %v3937
    %v3950 = vadd.f32 %v1667, %v3942
    %v3951 = vadd.f32 %v1668, %v3945
    %v3952 = vmul.f32 %v3948, 1.442695
    %v3953 = vpow.pop %v3952
    %v3954 = vmul.f32 %v3949, 1.442695
    %v3955 = vpow.pop %v3954
    %v3956 = vmul.f32 %v3950, 1.442695
    %v3957 = vpow.pop %v3956
    %v3958 = vmul.f32 %v3951, 1.442695
    %v3959 = vpow.pop %v3958
    %v3960 = vpack.c.bf16 %v3955, %v3953
    %v3961 = vpack.c.bf16 %v3959, %v3957
    %3962 = vmatprep.subr.bf16.mxu0 0
    %3963 = vmatpush1.bf16.msra.mxu0 %v3960
    %3964 = vmatprep.subr.bf16.mxu0 0
    %3965 = vmatpush1.bf16.msra.mxu0 %v3961
    %3966 = vmatprep.subr.bf16.mxu0 0
    %3967 = vmatpush1.bf16.msra.mxu0 0
    %3968 = vmatprep.subr.bf16.mxu0 0
    %3969 = vmatpush1.bf16.msra.mxu0 0
    %3970 = vmatprep.subr.bf16.mxu0 0
    %3971 = vmatpush1.bf16.msra.mxu0 0
    %3972 = vmatprep.subr.bf16.mxu0 0
    %3973 = vmatpush1.bf16.msra.mxu0 0
    %3974 = vmatprep.subr.bf16.mxu0 0
    %3975 = vmatpush1.bf16.msra.mxu0 0
    %3976 = vmatprep.subr.bf16.mxu0 0
    %3977 = vmatpush1.bf16.msra.mxu0 0
    %3978 = vmatprep.subr.bf16.mxu0 0
    %3979 = vmatpush1.bf16.msra.mxu0 0
    %3980 = vmatprep.subr.bf16.mxu0 0
    %3981 = vmatpush1.bf16.msra.mxu0 0
    %3982 = vmatprep.subr.bf16.mxu0 0
    %3983 = vmatpush1.bf16.msra.mxu0 0
    %3984 = vmatprep.subr.bf16.mxu0 0
    %3985 = vmatpush1.bf16.msra.mxu0 0
    %3986 = vmatprep.subr.bf16.mxu0 0
    %3987 = vmatpush1.bf16.msra.mxu0 0
    %3988 = vmatprep.subr.bf16.mxu0 0
    %3989 = vmatpush1.bf16.msra.mxu0 0
    %3990 = vmatprep.subr.bf16.mxu0 0
    %3991 = vmatpush1.bf16.msra.mxu0 0
    %3992 = vmatprep.subr.bf16.mxu0 0
    %3993 = vmatpush1.bf16.msra.mxu0 0
    %3994 = vmatprep.mubr.bf16.mxu0 0
    %3995 = vmatmul.mubr.bf16.gmra.mrb[0].mxu0 %v1970
    %v3996 = vpop.f32.mrb[0].mxu0
    %v3997 = vadd.f32 0.0, %v3996
    %v3998 = vpop.f32.mrb[0].mxu0
    %v3999 = vpop.f32.mrb[0].mxu0
    %v4000 = vadd.f32 0.0, %v3999
    %v4001 = vpop.f32.mrb[0].mxu0
    %4002 = vmatprep.mubr.bf16.mxu0 0
    %4003 = vmatmul.mubr.bf16.gmra.mrb[0].mxu0 %v1973
    %v4004 = vpop.f32.mrb[0].mxu0
    %v4005 = vadd.f32 0.0, %v4004
    %v4006 = vpop.f32.mrb[0].mxu0
    %v4007 = vpop.f32.mrb[0].mxu0
    %v4008 = vadd.f32 0.0, %v4007
    %v4009 = vpop.f32.mrb[0].mxu0
    %4010 = vdwg.mxu0
    %v4011 = vrcp.pop %v3997
    %v4012 = vrcp.pop %v4000
    %v4013 = vrcp.pop %v4005
    %v4014 = vrcp.pop %v4008
    %v4015 = vmul.f32 %v3953, %v4011
    %v4016 = vmul.f32 %v3955, %v4012
    %v4017 = vmul.f32 %v3957, %v4013
    %v4018 = vmul.f32 %v3959, %v4014
    %4020 = vset.pattern.permute.xlu0 0
    %4021 = vperm.xlu0 %4020, %v4015
    %v4022 = vpop.permute.xlu0 %4021
    %4025 = vset.pattern.permute.xlu0 0
    %4026 = vperm.xlu0 %4025, %v4016
    %v4027 = vpop.permute.xlu0 %4026
    %4030 = vset.pattern.permute.xlu0 0
    %4031 = vperm.xlu0 %4030, %v4017
    %v4032 = vpop.permute.xlu0 %4031
    %4035 = vset.pattern.permute.xlu0 0
    %4036 = vperm.xlu0 %4035, %v4018
    %v4037 = vpop.permute.xlu0 %4036
    %v4039 = vmul.f32 %v4022, %v1720
    %v4040 = vmul.f32 %v4027, %v1723
    %v4041 = vmul.f32 %v4032, %v1728
    %v4042 = vmul.f32 %v4037, %v1731
    %v4043 = vpack.c.bf16 %v4040, %v4039
    %v4044 = vpack.c.bf16 %v4042, %v4041
    %4045 = vmatprep.subr.bf16.mxu0 0
    %4046 = vmatpush1.bf16.msra.mxu0 %v4043
    %4047 = vmatprep.subr.bf16.mxu0 0
    %4048 = vmatpush1.bf16.msra.mxu0 %v4044
    %4049 = vmatprep.subr.bf16.mxu0 0
    %4050 = vmatpush1.bf16.msra.mxu0 0
    %4051 = vmatprep.subr.bf16.mxu0 0
    %4052 = vmatpush1.bf16.msra.mxu0 0
    %4053 = vmatprep.subr.bf16.mxu0 0
    %4054 = vmatpush1.bf16.msra.mxu0 0
    %4055 = vmatprep.subr.bf16.mxu0 0
    %4056 = vmatpush1.bf16.msra.mxu0 0
    %4057 = vmatprep.subr.bf16.mxu0 0
    %4058 = vmatpush1.bf16.msra.mxu0 0
    %4059 = vmatprep.subr.bf16.mxu0 0
    %4060 = vmatpush1.bf16.msra.mxu0 0
    %4061 = vmatprep.subr.bf16.mxu0 0
    %4062 = vmatpush1.bf16.msra.mxu0 0
    %4063 = vmatprep.subr.bf16.mxu0 0
    %4064 = vmatpush1.bf16.msra.mxu0 0
    %4065 = vmatprep.subr.bf16.mxu0 0
    %4066 = vmatpush1.bf16.msra.mxu0 0
    %4067 = vmatprep.subr.bf16.mxu0 0
    %4068 = vmatpush1.bf16.msra.mxu0 0
    %4069 = vmatprep.subr.bf16.mxu0 0
    %4070 = vmatpush1.bf16.msra.mxu0 0
    %4071 = vmatprep.subr.bf16.mxu0 0
    %4072 = vmatpush1.bf16.msra.mxu0 0
    %4073 = vmatprep.subr.bf16.mxu0 0
    %4074 = vmatpush1.bf16.msra.mxu0 0
    %4075 = vmatprep.subr.bf16.mxu0 0
    %4076 = vmatpush1.bf16.msra.mxu0 0
    %4077 = vmatprep.mubr.bf16.mxu0 0
    %4078 = vmatmul.mubr.bf16.gmra.mrb[0].mxu0 %v2059
    %v4079 = vpop.f32.mrb[0].mxu0
    %v4080 = vadd.f32 0.0, %v4079
    %v4081 = vpop.f32.mrb[0].mxu0
    %v4082 = vpop.f32.mrb[0].mxu0
    %v4083 = vpop.f32.mrb[0].mxu0
    %4084 = vdwg.mxu0
    %v4086 = vrot.slane %v4080, 4
    %v4088 = vadd.f32 %v247, %v4086
    %4090 = vrot.lane.b32.xlu0 %v3847, 32
    %v4091 = vpop.permute.xlu0 %4090
    %4093 = vrot.lane.b32.xlu0 %v3771, 64
    %v4094 = vpop.permute.xlu0 %4093
    %v4096 = vsel %vm265, %v4091, %v4094
    %v4097 = vpack.c.bf16 %v4096, %v4096
    %v4099 = vsel %vm370, %v4097, 0
    %4101 = vmatprep.subr.bf16.mxu0 0
    %4102 = vmatpush1.bf16.msra.mxu0 %v362
    %4103 = vmatprep.subr.bf16.mxu0 0
    %4104 = vmatpush1.bf16.msra.mxu0 %v363
    %4105 = vmatprep.subr.bf16.mxu0 0
    %4106 = vmatpush1.bf16.msra.mxu0 %v364
    %4107 = vmatprep.subr.bf16.mxu0 0
    %4108 = vmatpush1.bf16.msra.mxu0 %v365
    %4109 = vmatprep.subr.bf16.mxu0 0
    %4110 = vmatpush1.bf16.msra.mxu0 0
    %4111 = vmatprep.subr.bf16.mxu0 0
    %4112 = vmatpush1.bf16.msra.mxu0 0
    %4113 = vmatprep.subr.bf16.mxu0 0
    %4114 = vmatpush1.bf16.msra.mxu0 0
    %4115 = vmatprep.subr.bf16.mxu0 0
    %4116 = vmatpush1.bf16.msra.mxu0 0
    %4117 = vmatprep.subr.bf16.mxu0 0
    %4118 = vmatpush1.bf16.msra.mxu0 0
    %4119 = vmatprep.subr.bf16.mxu0 0
    %4120 = vmatpush1.bf16.msra.mxu0 0
    %4121 = vmatprep.subr.bf16.mxu0 0
    %4122 = vmatpush1.bf16.msra.mxu0 0
    %4123 = vmatprep.subr.bf16.mxu0 0
    %4124 = vmatpush1.bf16.msra.mxu0 0
    %4125 = vmatprep.subr.bf16.mxu0 0
    %4126 = vmatpush1.bf16.msra.mxu0 0
    %4127 = vmatprep.subr.bf16.mxu0 0
    %4128 = vmatpush1.bf16.msra.mxu0 0
    %4129 = vmatprep.subr.bf16.mxu0 0
    %4130 = vmatpush1.bf16.msra.mxu0 0
    %4131 = vmatprep.subr.bf16.mxu0 0
    %4132 = vmatpush1.bf16.msra.mxu0 0
    %4133 = vmatprep.mubr.bf16.mxu0 0
    %4134 = vmatmul.mubr.bf16.gmra.mrb[0].mxu0 %v4099
    %v4135 = vpop.f32.mrb[0].mxu0
    %v4136 = vadd.f32 0.0, %v4135
    %v4137 = vpop.f32.mrb[0].mxu0
    %v4138 = vpop.f32.mrb[0].mxu0
    %v4139 = vpop.f32.mrb[0].mxu0
    %4140 = vdwg.mxu0
    %v4142 = vrot.slane %v4136, 4
    %v4144 = vadd.f32 %v4088, %v4142
    %v4145 = vxor.u32 %v4144, 2147483648
    %v4146 = vmul.f32 %v4145, 1.442695
    %v4147 = vpow.pop %v4146
    %v4148 = vadd.f32 %v4147, 1.0
    %v4149 = vrcp.pop %v4148
    %v4150 = vmul.f32 1.0, %v4149
    %v4151 = vtanh.pop %v4144
    %v4153 = vrot.slane %v3765, 4
    %v4155 = vmul.f32 %v4150, %v4153
    %4157 = vrot.lane.b32.xlu0 %v4151, 64
    %v4158 = vpop.permute.xlu0 %4157
    %v4160 = vmul.f32 %v4150, %v4158
    %4162 = vrot.lane.b32.xlu0 %v4160, 32
    %v4163 = vpop.permute.xlu0 %4162
    %v4165 = vadd.f32 %v4155, %v4163
    %v4166 = vtanh.pop %v4165
    %4168 = vrot.lane.b32.xlu0 %v4166, 64
    %v4169 = vpop.permute.xlu0 %4168
    %v4171 = vmul.f32 %v4150, %v4169
    %4173 = vrot.lane.b32.xlu0 %v4171, 32
    %v4174 = vpop.permute.xlu0 %4173
    %4176 = vst.msk [vmem:[#allocation3 + $0x10] sm:$0xf0] %vm2583, %v4174
    %v4177 = vpack.c.bf16 %v3847, %v3847
    %4179 = vrot.lane.b32.xlu0 %v4177, 32
    %v4180 = vpop.permute.xlu0 %4179
    %v4182 = vsel %vm265, %v4180, 0
    %4184 = vmatprep.subr.bf16.mxu0 0
    %4185 = vmatpush1.bf16.msra.mxu0 %v261
    %4186 = vmatprep.subr.bf16.mxu0 0
    %4187 = vmatpush1.bf16.msra.mxu0 %v262
    %4188 = vmatprep.subr.bf16.mxu0 0
    %4189 = vmatpush1.bf16.msra.mxu0 0
    %4190 = vmatprep.subr.bf16.mxu0 0
    %4191 = vmatpush1.bf16.msra.mxu0 0
    %4192 = vmatprep.subr.bf16.mxu0 0
    %4193 = vmatpush1.bf16.msra.mxu0 0
    %4194 = vmatprep.subr.bf16.mxu0 0
    %4195 = vmatpush1.bf16.msra.mxu0 0
    %4196 = vmatprep.subr.bf16.mxu0 0
    %4197 = vmatpush1.bf16.msra.mxu0 0
    %4198 = vmatprep.subr.bf16.mxu0 0
    %4199 = vmatpush1.bf16.msra.mxu0 0
    %4200 = vmatprep.subr.bf16.mxu0 0
    %4201 = vmatpush1.bf16.msra.mxu0 0
    %4202 = vmatprep.subr.bf16.mxu0 0
    %4203 = vmatpush1.bf16.msra.mxu0 0
    %4204 = vmatprep.subr.bf16.mxu0 0
    %4205 = vmatpush1.bf16.msra.mxu0 0
    %4206 = vmatprep.subr.bf16.mxu0 0
    %4207 = vmatpush1.bf16.msra.mxu0 0
    %4208 = vmatprep.subr.bf16.mxu0 0
    %4209 = vmatpush1.bf16.msra.mxu0 0
    %4210 = vmatprep.subr.bf16.mxu0 0
    %4211 = vmatpush1.bf16.msra.mxu0 0
    %4212 = vmatprep.subr.bf16.mxu0 0
    %4213 = vmatpush1.bf16.msra.mxu0 0
    %4214 = vmatprep.subr.bf16.mxu0 0
    %4215 = vmatpush1.bf16.msra.mxu0 0
    %4216 = vmatprep.mubr.bf16.mxu0 0
    %4217 = vmatmul.mubr.bf16.gmra.mrb[0].mxu0 %v4182
    %v4218 = vpop.f32.mrb[0].mxu0
    %v4219 = vadd.f32 %v1739, %v4218
    %v4220 = vpop.f32.mrb[0].mxu0
    %v4221 = vpop.f32.mrb[0].mxu0
    %v4222 = vpop.f32.mrb[0].mxu0
    %4223 = vdwg.mxu0
    %v4224 = vxor.u32 %v4219, 2147483648
    %v4225 = vmul.f32 %v4224, 1.442695
    %v4226 = vpow.pop %v4225
    %v4227 = vadd.f32 %v4226, 1.0
    %v4228 = vrcp.pop %v4227
    %v4229 = vmul.f32 1.0, %v4228
    %v4230 = vtanh.pop %v4219
    %v4231 = vmul.f32 %v4229, %v3841
    %4233 = vrot.lane.b32.xlu0 %v4230, 64
    %v4234 = vpop.permute.xlu0 %4233
    %v4236 = vmul.f32 %v4229, %v4234
    %4238 = vrot.lane.b32.xlu0 %v4236, 32
    %v4239 = vpop.permute.xlu0 %4238
    %v4241 = vadd.f32 %v4231, %v4239
    %v4242 = vtanh.pop %v4241
    %4244 = vrot.lane.b32.xlu0 %v4242, 64
    %v4245 = vpop.permute.xlu0 %4244
    %v4247 = vmul.f32 %v4229, %v4245
    %v4248 = vpack.c.bf16 %v4171, %v4171
    %v4250 = vrot.slane %v4248, 2
    %4251 = vrot.lane.b32.xlu0 %v4250, 32
    %v4252 = vpop.permute.xlu0 %4251
    %v4254 = vsel %vm265, %v4252, 0
    %4256 = vmatprep.subr.bf16.mxu0 0
    %4257 = vmatpush1.bf16.msra.mxu0 %v1827
    %4258 = vmatprep.subr.bf16.mxu0 0
    %4259 = vmatpush1.bf16.msra.mxu0 %v1828
    %4260 = vmatprep.subr.bf16.mxu0 0
    %4261 = vmatpush1.bf16.msra.mxu0 0
    %4262 = vmatprep.subr.bf16.mxu0 0
    %4263 = vmatpush1.bf16.msra.mxu0 0
    %4264 = vmatprep.subr.bf16.mxu0 0
    %4265 = vmatpush1.bf16.msra.mxu0 0
    %4266 = vmatprep.subr.bf16.mxu0 0
    %4267 = vmatpush1.bf16.msra.mxu0 0
    %4268 = vmatprep.subr.bf16.mxu0 0
    %4269 = vmatpush1.bf16.msra.mxu0 0
    %4270 = vmatprep.subr.bf16.mxu0 0
    %4271 = vmatpush1.bf16.msra.mxu0 0
    %4272 = vmatprep.subr.bf16.mxu0 0
    %4273 = vmatpush1.bf16.msra.mxu0 0
    %4274 = vmatprep.subr.bf16.mxu0 0
    %4275 = vmatpush1.bf16.msra.mxu0 0
    %4276 = vmatprep.subr.bf16.mxu0 0
    %4277 = vmatpush1.bf16.msra.mxu0 0
    %4278 = vmatprep.subr.bf16.mxu0 0
    %4279 = vmatpush1.bf16.msra.mxu0 0
    %4280 = vmatprep.subr.bf16.mxu0 0
    %4281 = vmatpush1.bf16.msra.mxu0 0
    %4282 = vmatprep.subr.bf16.mxu0 0
    %4283 = vmatpush1.bf16.msra.mxu0 0
    %4284 = vmatprep.subr.bf16.mxu0 0
    %4285 = vmatpush1.bf16.msra.mxu0 0
    %4286 = vmatprep.subr.bf16.mxu0 0
    %4287 = vmatpush1.bf16.msra.mxu0 0
    %4288 = vmatprep.mubr.bf16.mxu0 0
    %4289 = vmatmul.mubr.bf16.gmra.mrb[0].mxu0 %v4254
    %v4290 = vpop.f32.mrb[0].mxu0
    %v4291 = vadd.f32 0.0, %v4290
    %v4292 = vpop.f32.mrb[0].mxu0
    %v4293 = vpop.f32.mrb[0].mxu0
    %v4294 = vpop.f32.mrb[0].mxu0
    %4295 = vdwg.mxu0
    %v4296 = vpack.c.bf16 %v4291, %v4291
    %v4298 = vsel %vm1892, %v4296, 0
    %4300 = vmatprep.subr.bf16.mxu0 0
    %4301 = vmatpush1.bf16.msra.mxu0 %v4298
    %4302 = vmatprep.subr.bf16.mxu0 0
    %4303 = vmatpush1.bf16.msra.mxu0 0
    %4304 = vmatprep.subr.bf16.mxu0 0
    %4305 = vmatpush1.bf16.msra.mxu0 0
    %4306 = vmatprep.subr.bf16.mxu0 0
    %4307 = vmatpush1.bf16.msra.mxu0 0
    %4308 = vmatprep.subr.bf16.mxu0 0
    %4309 = vmatpush1.bf16.msra.mxu0 0
    %4310 = vmatprep.subr.bf16.mxu0 0
    %4311 = vmatpush1.bf16.msra.mxu0 0
    %4312 = vmatprep.subr.bf16.mxu0 0
    %4313 = vmatpush1.bf16.msra.mxu0 0
    %4314 = vmatprep.subr.bf16.mxu0 0
    %4315 = vmatpush1.bf16.msra.mxu0 0
    %4316 = vmatprep.subr.bf16.mxu0 0
    %4317 = vmatpush1.bf16.msra.mxu0 0
    %4318 = vmatprep.subr.bf16.mxu0 0
    %4319 = vmatpush1.bf16.msra.mxu0 0
    %4320 = vmatprep.subr.bf16.mxu0 0
    %4321 = vmatpush1.bf16.msra.mxu0 0
    %4322 = vmatprep.subr.bf16.mxu0 0
    %4323 = vmatpush1.bf16.msra.mxu0 0
    %4324 = vmatprep.subr.bf16.mxu0 0
    %4325 = vmatpush1.bf16.msra.mxu0 0
    %4326 = vmatprep.subr.bf16.mxu0 0
    %4327 = vmatpush1.bf16.msra.mxu0 0
    %4328 = vmatprep.subr.bf16.mxu0 0
    %4329 = vmatpush1.bf16.msra.mxu0 0
    %4330 = vmatprep.subr.bf16.mxu0 0
    %4331 = vmatpush1.bf16.msra.mxu0 0
    %4332 = vmatprep.mubr.bf16.mxu0 0
    %4333 = vmatmul.mubr.bf16.gmra.mrb[0].mxu0 %v1887
    %v4334 = vpop.f32.mrb[0].mxu0
    %v4335 = vadd.f32 0.0, %v4334
    %v4336 = vpop.f32.mrb[0].mxu0
    %v4337 = vpop.f32.mrb[0].mxu0
    %v4338 = vadd.f32 0.0, %v4337
    %v4339 = vpop.f32.mrb[0].mxu0
    %4340 = vmatprep.mubr.bf16.mxu0 0
    %4341 = vmatmul.mubr.bf16.gmra.mrb[0].mxu0 %v1890
    %v4342 = vpop.f32.mrb[0].mxu0
    %v4343 = vadd.f32 0.0, %v4342
    %v4344 = vpop.f32.mrb[0].mxu0
    %v4345 = vpop.f32.mrb[0].mxu0
    %v4346 = vadd.f32 0.0, %v4345
    %v4347 = vpop.f32.mrb[0].mxu0
    %4348 = vdwg.mxu0
    %v4349 = vadd.f32 %v1665, %v4335
    %v4350 = vadd.f32 %v1666, %v4338
    %v4351 = vadd.f32 %v1667, %v4343
    %v4352 = vadd.f32 %v1668, %v4346
    %v4353 = vmul.f32 %v4349, 1.442695
    %v4354 = vpow.pop %v4353
    %v4355 = vmul.f32 %v4350, 1.442695
    %v4356 = vpow.pop %v4355
    %v4357 = vmul.f32 %v4351, 1.442695
    %v4358 = vpow.pop %v4357
    %v4359 = vmul.f32 %v4352, 1.442695
    %v4360 = vpow.pop %v4359
    %v4361 = vpack.c.bf16 %v4356, %v4354
    %v4362 = vpack.c.bf16 %v4360, %v4358
    %4363 = vmatprep.subr.bf16.mxu0 0
    %4364 = vmatpush1.bf16.msra.mxu0 %v4361
    %4365 = vmatprep.subr.bf16.mxu0 0
    %4366 = vmatpush1.bf16.msra.mxu0 %v4362
    %4367 = vmatprep.subr.bf16.mxu0 0
    %4368 = vmatpush1.bf16.msra.mxu0 0
    %4369 = vmatprep.subr.bf16.mxu0 0
    %4370 = vmatpush1.bf16.msra.mxu0 0
    %4371 = vmatprep.subr.bf16.mxu0 0
    %4372 = vmatpush1.bf16.msra.mxu0 0
    %4373 = vmatprep.subr.bf16.mxu0 0
    %4374 = vmatpush1.bf16.msra.mxu0 0
    %4375 = vmatprep.subr.bf16.mxu0 0
    %4376 = vmatpush1.bf16.msra.mxu0 0
    %4377 = vmatprep.subr.bf16.mxu0 0
    %4378 = vmatpush1.bf16.msra.mxu0 0
    %4379 = vmatprep.subr.bf16.mxu0 0
    %4380 = vmatpush1.bf16.msra.mxu0 0
    %4381 = vmatprep.subr.bf16.mxu0 0
    %4382 = vmatpush1.bf16.msra.mxu0 0
    %4383 = vmatprep.subr.bf16.mxu0 0
    %4384 = vmatpush1.bf16.msra.mxu0 0
    %4385 = vmatprep.subr.bf16.mxu0 0
    %4386 = vmatpush1.bf16.msra.mxu0 0
    %4387 = vmatprep.subr.bf16.mxu0 0
    %4388 = vmatpush1.bf16.msra.mxu0 0
    %4389 = vmatprep.subr.bf16.mxu0 0
    %4390 = vmatpush1.bf16.msra.mxu0 0
    %4391 = vmatprep.subr.bf16.mxu0 0
    %4392 = vmatpush1.bf16.msra.mxu0 0
    %4393 = vmatprep.subr.bf16.mxu0 0
    %4394 = vmatpush1.bf16.msra.mxu0 0
    %4395 = vmatprep.mubr.bf16.mxu0 0
    %4396 = vmatmul.mubr.bf16.gmra.mrb[0].mxu0 %v1970
    %v4397 = vpop.f32.mrb[0].mxu0
    %v4398 = vadd.f32 0.0, %v4397
    %v4399 = vpop.f32.mrb[0].mxu0
    %v4400 = vpop.f32.mrb[0].mxu0
    %v4401 = vadd.f32 0.0, %v4400
    %v4402 = vpop.f32.mrb[0].mxu0
    %4403 = vmatprep.mubr.bf16.mxu0 0
    %4404 = vmatmul.mubr.bf16.gmra.mrb[0].mxu0 %v1973
    %v4405 = vpop.f32.mrb[0].mxu0
    %v4406 = vadd.f32 0.0, %v4405
    %v4407 = vpop.f32.mrb[0].mxu0
    %v4408 = vpop.f32.mrb[0].mxu0
    %v4409 = vadd.f32 0.0, %v4408
    %v4410 = vpop.f32.mrb[0].mxu0
    %4411 = vdwg.mxu0
    %v4412 = vrcp.pop %v4398
    %v4413 = vrcp.pop %v4401
    %v4414 = vrcp.pop %v4406
    %v4415 = vrcp.pop %v4409
    %v4416 = vmul.f32 %v4354, %v4412
    %v4417 = vmul.f32 %v4356, %v4413
    %v4418 = vmul.f32 %v4358, %v4414
    %v4419 = vmul.f32 %v4360, %v4415
    %4421 = vset.pattern.permute.xlu0 0
    %4422 = vperm.xlu0 %4421, %v4416
    %v4423 = vpop.permute.xlu0 %4422
    %4426 = vset.pattern.permute.xlu0 0
    %4427 = vperm.xlu0 %4426, %v4417
    %v4428 = vpop.permute.xlu0 %4427
    %4431 = vset.pattern.permute.xlu0 0
    %4432 = vperm.xlu0 %4431, %v4418
    %v4433 = vpop.permute.xlu0 %4432
    %4436 = vset.pattern.permute.xlu0 0
    %4437 = vperm.xlu0 %4436, %v4419
    %v4438 = vpop.permute.xlu0 %4437
    %v4440 = vmul.f32 %v4423, %v1720
    %v4441 = vmul.f32 %v4428, %v1723
    %v4442 = vmul.f32 %v4433, %v1728
    %v4443 = vmul.f32 %v4438, %v1731
    %v4444 = vpack.c.bf16 %v4441, %v4440
    %v4445 = vpack.c.bf16 %v4443, %v4442
    %4446 = vmatprep.subr.bf16.mxu0 0
    %4447 = vmatpush1.bf16.msra.mxu0 %v4444
    %4448 = vmatprep.subr.bf16.mxu0 0
    %4449 = vmatpush1.bf16.msra.mxu0 %v4445
    %4450 = vmatprep.subr.bf16.mxu0 0
    %4451 = vmatpush1.bf16.msra.mxu0 0
    %4452 = vmatprep.subr.bf16.mxu0 0
    %4453 = vmatpush1.bf16.msra.mxu0 0
    %4454 = vmatprep.subr.bf16.mxu0 0
    %4455 = vmatpush1.bf16.msra.mxu0 0
    %4456 = vmatprep.subr.bf16.mxu0 0
    %4457 = vmatpush1.bf16.msra.mxu0 0
    %4458 = vmatprep.subr.bf16.mxu0 0
    %4459 = vmatpush1.bf16.msra.mxu0 0
    %4460 = vmatprep.subr.bf16.mxu0 0
    %4461 = vmatpush1.bf16.msra.mxu0 0
    %4462 = vmatprep.subr.bf16.mxu0 0
    %4463 = vmatpush1.bf16.msra.mxu0 0
    %4464 = vmatprep.subr.bf16.mxu0 0
    %4465 = vmatpush1.bf16.msra.mxu0 0
    %4466 = vmatprep.subr.bf16.mxu0 0
    %4467 = vmatpush1.bf16.msra.mxu0 0
    %4468 = vmatprep.subr.bf16.mxu0 0
    %4469 = vmatpush1.bf16.msra.mxu0 0
    %4470 = vmatprep.subr.bf16.mxu0 0
    %4471 = vmatpush1.bf16.msra.mxu0 0
    %4472 = vmatprep.subr.bf16.mxu0 0
    %4473 = vmatpush1.bf16.msra.mxu0 0
    %4474 = vmatprep.subr.bf16.mxu0 0
    %4475 = vmatpush1.bf16.msra.mxu0 0
    %4476 = vmatprep.subr.bf16.mxu0 0
    %4477 = vmatpush1.bf16.msra.mxu0 0
    %4478 = vmatprep.mubr.bf16.mxu0 0
    %4479 = vmatmul.mubr.bf16.gmra.mrb[0].mxu0 %v2059
    %v4480 = vpop.f32.mrb[0].mxu0
    %v4481 = vadd.f32 0.0, %v4480
    %v4482 = vpop.f32.mrb[0].mxu0
    %v4483 = vpop.f32.mrb[0].mxu0
    %v4484 = vpop.f32.mrb[0].mxu0
    %4485 = vdwg.mxu0
    %v4486 = vadd.f32 %v250, %v4481
    %4488 = vrot.lane.b32.xlu0 %v4247, 32
    %v4489 = vpop.permute.xlu0 %4488
    %v4491 = vrot.slane %v4171, 4
    %4492 = vrot.lane.b32.xlu0 %v4491, 64
    %v4493 = vpop.permute.xlu0 %4492
    %v4495 = vsel %vm265, %v4489, %v4493
    %v4496 = vpack.c.bf16 %v4495, %v4495
    %v4498 = vsel %vm370, %v4496, 0
    %4500 = vmatprep.subr.bf16.mxu0 0
    %4501 = vmatpush1.bf16.msra.mxu0 %v362
    %4502 = vmatprep.subr.bf16.mxu0 0
    %4503 = vmatpush1.bf16.msra.mxu0 %v363
    %4504 = vmatprep.subr.bf16.mxu0 0
    %4505 = vmatpush1.bf16.msra.mxu0 %v364
    %4506 = vmatprep.subr.bf16.mxu0 0
    %4507 = vmatpush1.bf16.msra.mxu0 %v365
    %4508 = vmatprep.subr.bf16.mxu0 0
    %4509 = vmatpush1.bf16.msra.mxu0 0
    %4510 = vmatprep.subr.bf16.mxu0 0
    %4511 = vmatpush1.bf16.msra.mxu0 0
    %4512 = vmatprep.subr.bf16.mxu0 0
    %4513 = vmatpush1.bf16.msra.mxu0 0
    %4514 = vmatprep.subr.bf16.mxu0 0
    %4515 = vmatpush1.bf16.msra.mxu0 0
    %4516 = vmatprep.subr.bf16.mxu0 0
    %4517 = vmatpush1.bf16.msra.mxu0 0
    %4518 = vmatprep.subr.bf16.mxu0 0
    %4519 = vmatpush1.bf16.msra.mxu0 0
    %4520 = vmatprep.subr.bf16.mxu0 0
    %4521 = vmatpush1.bf16.msra.mxu0 0
    %4522 = vmatprep.subr.bf16.mxu0 0
    %4523 = vmatpush1.bf16.msra.mxu0 0
    %4524 = vmatprep.subr.bf16.mxu0 0
    %4525 = vmatpush1.bf16.msra.mxu0 0
    %4526 = vmatprep.subr.bf16.mxu0 0
    %4527 = vmatpush1.bf16.msra.mxu0 0
    %4528 = vmatprep.subr.bf16.mxu0 0
    %4529 = vmatpush1.bf16.msra.mxu0 0
    %4530 = vmatprep.subr.bf16.mxu0 0
    %4531 = vmatpush1.bf16.msra.mxu0 0
    %4532 = vmatprep.mubr.bf16.mxu0 0
    %4533 = vmatmul.mubr.bf16.gmra.mrb[0].mxu0 %v4498
    %v4534 = vpop.f32.mrb[0].mxu0
    %v4535 = vadd.f32 0.0, %v4534
    %v4536 = vpop.f32.mrb[0].mxu0
    %v4537 = vpop.f32.mrb[0].mxu0
    %v4538 = vpop.f32.mrb[0].mxu0
    %4539 = vdwg.mxu0
    %v4540 = vadd.f32 %v4486, %v4535
    %v4541 = vxor.u32 %v4540, 2147483648
    %v4542 = vmul.f32 %v4541, 1.442695
    %v4543 = vpow.pop %v4542
    %v4544 = vadd.f32 %v4543, 1.0
    %v4545 = vrcp.pop %v4544
    %v4546 = vmul.f32 1.0, %v4545
    %v4547 = vtanh.pop %v4540
    %v4549 = vrot.slane %v4165, 4
    %v4551 = vmul.f32 %v4546, %v4549
    %4553 = vrot.lane.b32.xlu0 %v4547, 64
    %v4554 = vpop.permute.xlu0 %4553
    %v4556 = vmul.f32 %v4546, %v4554
    %4558 = vrot.lane.b32.xlu0 %v4556, 32
    %v4559 = vpop.permute.xlu0 %4558
    %v4561 = vadd.f32 %v4551, %v4559
    %v4562 = vtanh.pop %v4561
    %4564 = vrot.lane.b32.xlu0 %v4562, 64
    %v4565 = vpop.permute.xlu0 %4564
    %v4567 = vmul.f32 %v4546, %v4565
    %4569 = vrot.lane.b32.xlu0 %v4567, 32
    %v4570 = vpop.permute.xlu0 %4569
    %4572 = vst.msk [vmem:[#allocation3 + $0x18] sm:$0xf] %vm442, %v4570
    %v4573 = vpack.c.bf16 %v4247, %v4247
    %4575 = vrot.lane.b32.xlu0 %v4573, 32
    %v4576 = vpop.permute.xlu0 %4575
    %v4578 = vsel %vm265, %v4576, 0
    %4580 = vmatprep.subr.bf16.mxu0 0
    %4581 = vmatpush1.bf16.msra.mxu0 %v261
    %4582 = vmatprep.subr.bf16.mxu0 0
    %4583 = vmatpush1.bf16.msra.mxu0 %v262
    %4584 = vmatprep.subr.bf16.mxu0 0
    %4585 = vmatpush1.bf16.msra.mxu0 0
    %4586 = vmatprep.subr.bf16.mxu0 0
    %4587 = vmatpush1.bf16.msra.mxu0 0
    %4588 = vmatprep.subr.bf16.mxu0 0
    %4589 = vmatpush1.bf16.msra.mxu0 0
    %4590 = vmatprep.subr.bf16.mxu0 0
    %4591 = vmatpush1.bf16.msra.mxu0 0
    %4592 = vmatprep.subr.bf16.mxu0 0
    %4593 = vmatpush1.bf16.msra.mxu0 0
    %4594 = vmatprep.subr.bf16.mxu0 0
    %4595 = vmatpush1.bf16.msra.mxu0 0
    %4596 = vmatprep.subr.bf16.mxu0 0
    %4597 = vmatpush1.bf16.msra.mxu0 0
    %4598 = vmatprep.subr.bf16.mxu0 0
    %4599 = vmatpush1.bf16.msra.mxu0 0
    %4600 = vmatprep.subr.bf16.mxu0 0
    %4601 = vmatpush1.bf16.msra.mxu0 0
    %4602 = vmatprep.subr.bf16.mxu0 0
    %4603 = vmatpush1.bf16.msra.mxu0 0
    %4604 = vmatprep.subr.bf16.mxu0 0
    %4605 = vmatpush1.bf16.msra.mxu0 0
    %4606 = vmatprep.subr.bf16.mxu0 0
    %4607 = vmatpush1.bf16.msra.mxu0 0
    %4608 = vmatprep.subr.bf16.mxu0 0
    %4609 = vmatpush1.bf16.msra.mxu0 0
    %4610 = vmatprep.subr.bf16.mxu0 0
    %4611 = vmatpush1.bf16.msra.mxu0 0
    %4612 = vmatprep.mubr.bf16.mxu0 0
    %4613 = vmatmul.mubr.bf16.gmra.mrb[0].mxu0 %v4578
    %v4614 = vpop.f32.mrb[0].mxu0
    %v4615 = vadd.f32 %v1739, %v4614
    %v4616 = vpop.f32.mrb[0].mxu0
    %v4617 = vpop.f32.mrb[0].mxu0
    %v4618 = vpop.f32.mrb[0].mxu0
    %4619 = vdwg.mxu0
    %v4620 = vxor.u32 %v4615, 2147483648
    %v4621 = vmul.f32 %v4620, 1.442695
    %v4622 = vpow.pop %v4621
    %v4623 = vadd.f32 %v4622, 1.0
    %v4624 = vrcp.pop %v4623
    %v4625 = vmul.f32 1.0, %v4624
    %v4626 = vtanh.pop %v4615
    %v4627 = vmul.f32 %v4625, %v4241
    %4629 = vrot.lane.b32.xlu0 %v4626, 64
    %v4630 = vpop.permute.xlu0 %4629
    %v4632 = vmul.f32 %v4625, %v4630
    %4634 = vrot.lane.b32.xlu0 %v4632, 32
    %v4635 = vpop.permute.xlu0 %4634
    %v4637 = vadd.f32 %v4627, %v4635
    %v4638 = vtanh.pop %v4637
    %4640 = vrot.lane.b32.xlu0 %v4638, 64
    %v4641 = vpop.permute.xlu0 %4640
    %v4643 = vmul.f32 %v4625, %v4641
    %v4644 = vpack.c.bf16 %v4567, %v4567
    %4646 = vrot.lane.b32.xlu0 %v4644, 32
    %v4647 = vpop.permute.xlu0 %4646
    %v4649 = vsel %vm265, %v4647, 0
    %4651 = vmatprep.subr.bf16.mxu0 0
    %4652 = vmatpush1.bf16.msra.mxu0 %v1827
    %4653 = vmatprep.subr.bf16.mxu0 0
    %4654 = vmatpush1.bf16.msra.mxu0 %v1828
    %4655 = vmatprep.subr.bf16.mxu0 0
    %4656 = vmatpush1.bf16.msra.mxu0 0
    %4657 = vmatprep.subr.bf16.mxu0 0
    %4658 = vmatpush1.bf16.msra.mxu0 0
    %4659 = vmatprep.subr.bf16.mxu0 0
    %4660 = vmatpush1.bf16.msra.mxu0 0
    %4661 = vmatprep.subr.bf16.mxu0 0
    %4662 = vmatpush1.bf16.msra.mxu0 0
    %4663 = vmatprep.subr.bf16.mxu0 0
    %4664 = vmatpush1.bf16.msra.mxu0 0
    %4665 = vmatprep.subr.bf16.mxu0 0
    %4666 = vmatpush1.bf16.msra.mxu0 0
    %4667 = vmatprep.subr.bf16.mxu0 0
    %4668 = vmatpush1.bf16.msra.mxu0 0
    %4669 = vmatprep.subr.bf16.mxu0 0
    %4670 = vmatpush1.bf16.msra.mxu0 0
    %4671 = vmatprep.subr.bf16.mxu0 0
    %4672 = vmatpush1.bf16.msra.mxu0 0
    %4673 = vmatprep.subr.bf16.mxu0 0
    %4674 = vmatpush1.bf16.msra.mxu0 0
    %4675 = vmatprep.subr.bf16.mxu0 0
    %4676 = vmatpush1.bf16.msra.mxu0 0
    %4677 = vmatprep.subr.bf16.mxu0 0
    %4678 = vmatpush1.bf16.msra.mxu0 0
    %4679 = vmatprep.subr.bf16.mxu0 0
    %4680 = vmatpush1.bf16.msra.mxu0 0
    %4681 = vmatprep.subr.bf16.mxu0 0
    %4682 = vmatpush1.bf16.msra.mxu0 0
    %4683 = vmatprep.mubr.bf16.mxu0 0
    %4684 = vmatmul.mubr.bf16.gmra.mrb[0].mxu0 %v4649
    %v4685 = vpop.f32.mrb[0].mxu0
    %v4686 = vadd.f32 0.0, %v4685
    %v4687 = vpop.f32.mrb[0].mxu0
    %v4688 = vpop.f32.mrb[0].mxu0
    %v4689 = vpop.f32.mrb[0].mxu0
    %4690 = vdwg.mxu0
    %v4691 = vpack.c.bf16 %v4686, %v4686
    %v4693 = vsel %vm1892, %v4691, 0
    %4695 = vmatprep.subr.bf16.mxu0 0
    %4696 = vmatpush1.bf16.msra.mxu0 %v4693
    %4697 = vmatprep.subr.bf16.mxu0 0
    %4698 = vmatpush1.bf16.msra.mxu0 0
    %4699 = vmatprep.subr.bf16.mxu0 0
    %4700 = vmatpush1.bf16.msra.mxu0 0
    %4701 = vmatprep.subr.bf16.mxu0 0
    %4702 = vmatpush1.bf16.msra.mxu0 0
    %4703 = vmatprep.subr.bf16.mxu0 0
    %4704 = vmatpush1.bf16.msra.mxu0 0
    %4705 = vmatprep.subr.bf16.mxu0 0
    %4706 = vmatpush1.bf16.msra.mxu0 0
    %4707 = vmatprep.subr.bf16.mxu0 0
    %4708 = vmatpush1.bf16.msra.mxu0 0
    %4709 = vmatprep.subr.bf16.mxu0 0
    %4710 = vmatpush1.bf16.msra.mxu0 0
    %4711 = vmatprep.subr.bf16.mxu0 0
    %4712 = vmatpush1.bf16.msra.mxu0 0
    %4713 = vmatprep.subr.bf16.mxu0 0
    %4714 = vmatpush1.bf16.msra.mxu0 0
    %4715 = vmatprep.subr.bf16.mxu0 0
    %4716 = vmatpush1.bf16.msra.mxu0 0
    %4717 = vmatprep.subr.bf16.mxu0 0
    %4718 = vmatpush1.bf16.msra.mxu0 0
    %4719 = vmatprep.subr.bf16.mxu0 0
    %4720 = vmatpush1.bf16.msra.mxu0 0
    %4721 = vmatprep.subr.bf16.mxu0 0
    %4722 = vmatpush1.bf16.msra.mxu0 0
    %4723 = vmatprep.subr.bf16.mxu0 0
    %4724 = vmatpush1.bf16.msra.mxu0 0
    %4725 = vmatprep.subr.bf16.mxu0 0
    %4726 = vmatpush1.bf16.msra.mxu0 0
    %4727 = vmatprep.mubr.bf16.mxu0 0
    %4728 = vmatmul.mubr.bf16.gmra.mrb[0].mxu0 %v1887
    %v4729 = vpop.f32.mrb[0].mxu0
    %v4730 = vadd.f32 0.0, %v4729
    %v4731 = vpop.f32.mrb[0].mxu0
    %v4732 = vpop.f32.mrb[0].mxu0
    %v4733 = vadd.f32 0.0, %v4732
    %v4734 = vpop.f32.mrb[0].mxu0
    %4735 = vmatprep.mubr.bf16.mxu0 0
    %4736 = vmatmul.mubr.bf16.gmra.mrb[0].mxu0 %v1890
    %v4737 = vpop.f32.mrb[0].mxu0
    %v4738 = vadd.f32 0.0, %v4737
    %v4739 = vpop.f32.mrb[0].mxu0
    %v4740 = vpop.f32.mrb[0].mxu0
    %v4741 = vadd.f32 0.0, %v4740
    %v4742 = vpop.f32.mrb[0].mxu0
    %4743 = vdwg.mxu0
    %v4744 = vadd.f32 %v1665, %v4730
    %v4745 = vadd.f32 %v1666, %v4733
    %v4746 = vadd.f32 %v1667, %v4738
    %v4747 = vadd.f32 %v1668, %v4741
    %v4748 = vmul.f32 %v4744, 1.442695
    %v4749 = vpow.pop %v4748
    %v4750 = vmul.f32 %v4745, 1.442695
    %v4751 = vpow.pop %v4750
    %v4752 = vmul.f32 %v4746, 1.442695
    %v4753 = vpow.pop %v4752
    %v4754 = vmul.f32 %v4747, 1.442695
    %v4755 = vpow.pop %v4754
    %v4756 = vpack.c.bf16 %v4751, %v4749
    %v4757 = vpack.c.bf16 %v4755, %v4753
    %4758 = vmatprep.subr.bf16.mxu0 0
    %4759 = vmatpush1.bf16.msra.mxu0 %v4756
    %4760 = vmatprep.subr.bf16.mxu0 0
    %4761 = vmatpush1.bf16.msra.mxu0 %v4757
    %4762 = vmatprep.subr.bf16.mxu0 0
    %4763 = vmatpush1.bf16.msra.mxu0 0
    %4764 = vmatprep.subr.bf16.mxu0 0
    %4765 = vmatpush1.bf16.msra.mxu0 0
    %4766 = vmatprep.subr.bf16.mxu0 0
    %4767 = vmatpush1.bf16.msra.mxu0 0
    %4768 = vmatprep.subr.bf16.mxu0 0
    %4769 = vmatpush1.bf16.msra.mxu0 0
    %4770 = vmatprep.subr.bf16.mxu0 0
    %4771 = vmatpush1.bf16.msra.mxu0 0
    %4772 = vmatprep.subr.bf16.mxu0 0
    %4773 = vmatpush1.bf16.msra.mxu0 0
    %4774 = vmatprep.subr.bf16.mxu0 0
    %4775 = vmatpush1.bf16.msra.mxu0 0
    %4776 = vmatprep.subr.bf16.mxu0 0
    %4777 = vmatpush1.bf16.msra.mxu0 0
    %4778 = vmatprep.subr.bf16.mxu0 0
    %4779 = vmatpush1.bf16.msra.mxu0 0
    %4780 = vmatprep.subr.bf16.mxu0 0
    %4781 = vmatpush1.bf16.msra.mxu0 0
    %4782 = vmatprep.subr.bf16.mxu0 0
    %4783 = vmatpush1.bf16.msra.mxu0 0
    %4784 = vmatprep.subr.bf16.mxu0 0
    %4785 = vmatpush1.bf16.msra.mxu0 0
    %4786 = vmatprep.subr.bf16.mxu0 0
    %4787 = vmatpush1.bf16.msra.mxu0 0
    %4788 = vmatprep.subr.bf16.mxu0 0
    %4789 = vmatpush1.bf16.msra.mxu0 0
    %4790 = vmatprep.mubr.bf16.mxu0 0
    %4791 = vmatmul.mubr.bf16.gmra.mrb[0].mxu0 %v1970
    %v4792 = vpop.f32.mrb[0].mxu0
    %v4793 = vadd.f32 0.0, %v4792
    %v4794 = vpop.f32.mrb[0].mxu0
    %v4795 = vpop.f32.mrb[0].mxu0
    %v4796 = vadd.f32 0.0, %v4795
    %v4797 = vpop.f32.mrb[0].mxu0
    %4798 = vmatprep.mubr.bf16.mxu0 0
    %4799 = vmatmul.mubr.bf16.gmra.mrb[0].mxu0 %v1973
    %v4800 = vpop.f32.mrb[0].mxu0
    %v4801 = vadd.f32 0.0, %v4800
    %v4802 = vpop.f32.mrb[0].mxu0
    %v4803 = vpop.f32.mrb[0].mxu0
    %v4804 = vadd.f32 0.0, %v4803
    %v4805 = vpop.f32.mrb[0].mxu0
    %4806 = vdwg.mxu0
    %v4807 = vrcp.pop %v4793
    %v4808 = vrcp.pop %v4796
    %v4809 = vrcp.pop %v4801
    %v4810 = vrcp.pop %v4804
    %v4811 = vmul.f32 %v4749, %v4807
    %v4812 = vmul.f32 %v4751, %v4808
    %v4813 = vmul.f32 %v4753, %v4809
    %v4814 = vmul.f32 %v4755, %v4810
    %4816 = vset.pattern.permute.xlu0 0
    %4817 = vperm.xlu0 %4816, %v4811
    %v4818 = vpop.permute.xlu0 %4817
    %4821 = vset.pattern.permute.xlu0 0
    %4822 = vperm.xlu0 %4821, %v4812
    %v4823 = vpop.permute.xlu0 %4822
    %4826 = vset.pattern.permute.xlu0 0
    %4827 = vperm.xlu0 %4826, %v4813
    %v4828 = vpop.permute.xlu0 %4827
    %4831 = vset.pattern.permute.xlu0 0
    %4832 = vperm.xlu0 %4831, %v4814
    %v4833 = vpop.permute.xlu0 %4832
    %v4835 = vmul.f32 %v4818, %v1720
    %v4836 = vmul.f32 %v4823, %v1723
    %v4837 = vmul.f32 %v4828, %v1728
    %v4838 = vmul.f32 %v4833, %v1731
    %v4839 = vpack.c.bf16 %v4836, %v4835
    %v4840 = vpack.c.bf16 %v4838, %v4837
    %4841 = vmatprep.subr.bf16.mxu0 0
    %4842 = vmatpush1.bf16.msra.mxu0 %v4839
    %4843 = vmatprep.subr.bf16.mxu0 0
    %4844 = vmatpush1.bf16.msra.mxu0 %v4840
    %4845 = vmatprep.subr.bf16.mxu0 0
    %4846 = vmatpush1.bf16.msra.mxu0 0
    %4847 = vmatprep.subr.bf16.mxu0 0
    %4848 = vmatpush1.bf16.msra.mxu0 0
    %4849 = vmatprep.subr.bf16.mxu0 0
    %4850 = vmatpush1.bf16.msra.mxu0 0
    %4851 = vmatprep.subr.bf16.mxu0 0
    %4852 = vmatpush1.bf16.msra.mxu0 0
    %4853 = vmatprep.subr.bf16.mxu0 0
    %4854 = vmatpush1.bf16.msra.mxu0 0
    %4855 = vmatprep.subr.bf16.mxu0 0
    %4856 = vmatpush1.bf16.msra.mxu0 0
    %4857 = vmatprep.subr.bf16.mxu0 0
    %4858 = vmatpush1.bf16.msra.mxu0 0
    %4859 = vmatprep.subr.bf16.mxu0 0
    %4860 = vmatpush1.bf16.msra.mxu0 0
    %4861 = vmatprep.subr.bf16.mxu0 0
    %4862 = vmatpush1.bf16.msra.mxu0 0
    %4863 = vmatprep.subr.bf16.mxu0 0
    %4864 = vmatpush1.bf16.msra.mxu0 0
    %4865 = vmatprep.subr.bf16.mxu0 0
    %4866 = vmatpush1.bf16.msra.mxu0 0
    %4867 = vmatprep.subr.bf16.mxu0 0
    %4868 = vmatpush1.bf16.msra.mxu0 0
    %4869 = vmatprep.subr.bf16.mxu0 0
    %4870 = vmatpush1.bf16.msra.mxu0 0
    %4871 = vmatprep.subr.bf16.mxu0 0
    %4872 = vmatpush1.bf16.msra.mxu0 0
    %4873 = vmatprep.mubr.bf16.mxu0 0
    %4874 = vmatmul.mubr.bf16.gmra.mrb[0].mxu0 %v2059
    %v4875 = vpop.f32.mrb[0].mxu0
    %v4876 = vadd.f32 0.0, %v4875
    %v4877 = vpop.f32.mrb[0].mxu0
    %v4878 = vpop.f32.mrb[0].mxu0
    %v4879 = vpop.f32.mrb[0].mxu0
    %4880 = vdwg.mxu0
    %v4882 = vrot.slane %v4876, 4
    %v4884 = vadd.f32 %v250, %v4882
    %4886 = vrot.lane.b32.xlu0 %v4643, 32
    %v4887 = vpop.permute.xlu0 %4886
    %4889 = vrot.lane.b32.xlu0 %v4567, 64
    %v4890 = vpop.permute.xlu0 %4889
    %v4892 = vsel %vm265, %v4887, %v4890
    %v4893 = vpack.c.bf16 %v4892, %v4892
    %v4895 = vsel %vm370, %v4893, 0
    %4897 = vmatprep.subr.bf16.mxu0 0
    %4898 = vmatpush1.bf16.msra.mxu0 %v362
    %4899 = vmatprep.subr.bf16.mxu0 0
    %4900 = vmatpush1.bf16.msra.mxu0 %v363
    %4901 = vmatprep.subr.bf16.mxu0 0
    %4902 = vmatpush1.bf16.msra.mxu0 %v364
    %4903 = vmatprep.subr.bf16.mxu0 0
    %4904 = vmatpush1.bf16.msra.mxu0 %v365
    %4905 = vmatprep.subr.bf16.mxu0 0
    %4906 = vmatpush1.bf16.msra.mxu0 0
    %4907 = vmatprep.subr.bf16.mxu0 0
    %4908 = vmatpush1.bf16.msra.mxu0 0
    %4909 = vmatprep.subr.bf16.mxu0 0
    %4910 = vmatpush1.bf16.msra.mxu0 0
    %4911 = vmatprep.subr.bf16.mxu0 0
    %4912 = vmatpush1.bf16.msra.mxu0 0
    %4913 = vmatprep.subr.bf16.mxu0 0
    %4914 = vmatpush1.bf16.msra.mxu0 0
    %4915 = vmatprep.subr.bf16.mxu0 0
    %4916 = vmatpush1.bf16.msra.mxu0 0
    %4917 = vmatprep.subr.bf16.mxu0 0
    %4918 = vmatpush1.bf16.msra.mxu0 0
    %4919 = vmatprep.subr.bf16.mxu0 0
    %4920 = vmatpush1.bf16.msra.mxu0 0
    %4921 = vmatprep.subr.bf16.mxu0 0
    %4922 = vmatpush1.bf16.msra.mxu0 0
    %4923 = vmatprep.subr.bf16.mxu0 0
    %4924 = vmatpush1.bf16.msra.mxu0 0
    %4925 = vmatprep.subr.bf16.mxu0 0
    %4926 = vmatpush1.bf16.msra.mxu0 0
    %4927 = vmatprep.subr.bf16.mxu0 0
    %4928 = vmatpush1.bf16.msra.mxu0 0
    %4929 = vmatprep.mubr.bf16.mxu0 0
    %4930 = vmatmul.mubr.bf16.gmra.mrb[0].mxu0 %v4895
    %v4931 = vpop.f32.mrb[0].mxu0
    %v4932 = vadd.f32 0.0, %v4931
    %v4933 = vpop.f32.mrb[0].mxu0
    %v4934 = vpop.f32.mrb[0].mxu0
    %v4935 = vpop.f32.mrb[0].mxu0
    %4936 = vdwg.mxu0
    %v4938 = vrot.slane %v4932, 4
    %v4940 = vadd.f32 %v4884, %v4938
    %v4941 = vxor.u32 %v4940, 2147483648
    %v4942 = vmul.f32 %v4941, 1.442695
    %v4943 = vpow.pop %v4942
    %v4944 = vadd.f32 %v4943, 1.0
    %v4945 = vrcp.pop %v4944
    %v4946 = vmul.f32 1.0, %v4945
    %v4947 = vtanh.pop %v4940
    %v4949 = vrot.slane %v4561, 4
    %v4951 = vmul.f32 %v4946, %v4949
    %4953 = vrot.lane.b32.xlu0 %v4947, 64
    %v4954 = vpop.permute.xlu0 %4953
    %v4956 = vmul.f32 %v4946, %v4954
    %4958 = vrot.lane.b32.xlu0 %v4956, 32
    %v4959 = vpop.permute.xlu0 %4958
    %v4961 = vadd.f32 %v4951, %v4959
    %v4962 = vtanh.pop %v4961
    %4964 = vrot.lane.b32.xlu0 %v4962, 64
    %v4965 = vpop.permute.xlu0 %4964
    %v4967 = vmul.f32 %v4946, %v4965
    %4969 = vrot.lane.b32.xlu0 %v4967, 32
    %v4970 = vpop.permute.xlu0 %4969
    %4972 = vst.msk [vmem:[#allocation3 + $0x18] sm:$0xf0] %vm2583, %v4970
    %v4973 = vld [vmem:[#allocation3] sm:$0xff]
    %v4974 = vld [vmem:[#allocation3 + $0x8] sm:$0xff]
    %v4975 = vld [vmem:[#allocation3 + $0x10] sm:$0xff]
    %v4976 = vld [vmem:[#allocation3 + $0x18] sm:$0xff]
    %v4977 = vld [vmem:[%s14] sm:$0xf]
    %v4978 = vld [vmem:[%s14 + $0x4] sm:$0xf]
    %v4979 = vld [vmem:[%s14 + $0x8] sm:$0xf]
    %v4980 = vld [vmem:[%s14 + $0xc] sm:$0xf]
    %v4981 = vpack.c.bf16 %v4974, %v4973
    %v4982 = vpack.c.bf16 %v4976, %v4975
    %v4983 = vld [vmem:[%s15] sm:$0x1]
    %v4985 = vlaneseq
    %v4986 = vshrl.u32 %v4985, 7
    %v4987 = vsub.s32 0, %v4986
    %v4988 = vrot.slane %v4983, %v4987
    %v4994 = vunpack.c.l.b16 %v4977
    %v4995 = vunpack.c.l.b16 %v4978
    %v4996 = vunpack.c.l.b16 %v4979
    %v4997 = vunpack.c.l.b16 %v4980
    %v4998 = vpack.c.b16 %v4995, %v4994
    %v4999 = vpack.c.b16 %v4997, %v4996
    %v5003 = vsel %vm265, %v4981, 0
    %v5006 = vsel %vm265, %v4982, 0
    %5008 = vmatprep.subr.bf16.mxu0 0
    %5009 = vmatpush1.bf16.msra.mxu0 %v4998
    %5010 = vmatprep.subr.bf16.mxu0 0
    %5011 = vmatpush1.bf16.msra.mxu0 %v4999
    %5012 = vmatprep.subr.bf16.mxu0 0
    %5013 = vmatpush1.bf16.msra.mxu0 0
    %5014 = vmatprep.subr.bf16.mxu0 0
    %5015 = vmatpush1.bf16.msra.mxu0 0
    %5016 = vmatprep.subr.bf16.mxu0 0
    %5017 = vmatpush1.bf16.msra.mxu0 0
    %5018 = vmatprep.subr.bf16.mxu0 0
    %5019 = vmatpush1.bf16.msra.mxu0 0
    %5020 = vmatprep.subr.bf16.mxu0 0
    %5021 = vmatpush1.bf16.msra.mxu0 0
    %5022 = vmatprep.subr.bf16.mxu0 0
    %5023 = vmatpush1.bf16.msra.mxu0 0
    %5024 = vmatprep.subr.bf16.mxu0 0
    %5025 = vmatpush1.bf16.msra.mxu0 0
    %5026 = vmatprep.subr.bf16.mxu0 0
    %5027 = vmatpush1.bf16.msra.mxu0 0
    %5028 = vmatprep.subr.bf16.mxu0 0
    %5029 = vmatpush1.bf16.msra.mxu0 0
    %5030 = vmatprep.subr.bf16.mxu0 0
    %5031 = vmatpush1.bf16.msra.mxu0 0
    %5032 = vmatprep.subr.bf16.mxu0 0
    %5033 = vmatpush1.bf16.msra.mxu0 0
    %5034 = vmatprep.subr.bf16.mxu0 0
    %5035 = vmatpush1.bf16.msra.mxu0 0
    %5036 = vmatprep.subr.bf16.mxu0 0
    %5037 = vmatpush1.bf16.msra.mxu0 0
    %5038 = vmatprep.subr.bf16.mxu0 0
    %5039 = vmatpush1.bf16.msra.mxu0 0
    %5040 = vmatprep.mubr.bf16.mxu0 0
    %5041 = vmatmul.mubr.bf16.gmra.mrb[0].mxu0 %v5003
    %v5042 = vpop.f32.mrb[0].mxu0
    %v5043 = vadd.f32 %v4988, %v5042
    %v5044 = vpop.f32.mrb[0].mxu0
    %v5045 = vpop.f32.mrb[0].mxu0
    %v5046 = vadd.f32 %v4988, %v5045
    %v5047 = vpop.f32.mrb[0].mxu0
    %5048 = vmatprep.mubr.bf16.mxu0 0
    %5049 = vmatmul.mubr.bf16.gmra.mrb[0].mxu0 %v5006
    %v5050 = vpop.f32.mrb[0].mxu0
    %v5051 = vadd.f32 %v4988, %v5050
    %v5052 = vpop.f32.mrb[0].mxu0
    %v5053 = vpop.f32.mrb[0].mxu0
    %v5054 = vadd.f32 %v4988, %v5053
    %v5055 = vpop.f32.mrb[0].mxu0
    %5056 = vdwg.mxu0
    %5057 = vst [vmem:[#allocation5] sm:$0xff] %v5043
    %5058 = vst [vmem:[#allocation5 + $0x8] sm:$0xff] %v5046
    %5059 = vst [vmem:[#allocation5 + $0x10] sm:$0xff] %v5051
    %5060 = vst [vmem:[#allocation5 + $0x18] sm:$0xff] %v5054
    %5061 = vst.msk [vmem:[#allocation7] sm:$0xf] %vm442, %v4887
    %5063 = vrot.lane.b32.xlu0 %v4637, 96
    %v5064 = vpop.permute.xlu0 %5063
    %5066 = vst.msk [vmem:[#allocation9] sm:$0xf] %vm442, %v5064
    %5067 = vst.msk [vmem:[#allocation10 - $0x4] sm:$0xf0] %vm2583, %v4970
    %5069 = vrot.lane.b32.xlu0 %v4961, 96
    %v5070 = vpop.permute.xlu0 %5069
    %5072 = vst.msk [vmem:[#allocation12 - $0x4] sm:$0xf0] %vm2583, %v5070
    // Predicated region
    $region78: #{tpu_custom_call.1} parent=1 // pred_check
      _
    $region79: #{tpu_custom_call.1} parent=1 // pred_check_branch
      %5074 = sbr.rel (0) target = $region81
    $region80: #{tpu_custom_call.1} parent=1 // pred_region
      %s5076 = ssub.s32 512, 512
      %5077 = vsyncadd [#allocation6], %s5076
      %s5078 = sshll.u32 [#allocation5], 4
      %s5079 = int_to_ptr.vmem [resolvable:$true] %s5078
      %5084 = dma.vmem_to_hbm [thread:$0]  %s5079, 512, %s19, [#allocation6], 128, 128, 8
    $region81: #{tpu_custom_call.1} parent=1 // pred_fallthru
      _
    // Predicated region
    $region82: #{tpu_custom_call.1} parent=1 // pred_check
      _
    $region83: #{tpu_custom_call.1} parent=1 // pred_check_branch
      %5086 = sbr.rel (0) target = $region85
    $region84: #{tpu_custom_call.1} parent=1 // pred_region
      %s5088 = ssub.s32 64, 64
      %5089 = vsyncadd [#allocation8], %s5088
      %s5091 = sshll.u32 [#allocation7], 4
      %s5092 = int_to_ptr.vmem [resolvable:$true] %s5091
      %5094 = dma.vmem_to_hbm [thread:$0]  %s5092, 64, %s20, [#allocation8]
    $region85: #{tpu_custom_call.1} parent=1 // pred_fallthru
      _
    // Predicated region
    $region86: #{tpu_custom_call.1} parent=1 // pred_check
      _
    $region87: #{tpu_custom_call.1} parent=1 // pred_check_branch
      %5096 = sbr.rel (0) target = $region89
    $region88: #{tpu_custom_call.1} parent=1 // pred_region
      %s5098 = ssub.s32 64, 64
      %5099 = vsyncadd [#allocation8], %s5098
      %s5101 = sshll.u32 [#allocation9], 4
      %s5102 = int_to_ptr.vmem [resolvable:$true] %s5101
      %5104 = dma.vmem_to_hbm [thread:$0]  %s5102, 64, %s21, [#allocation8]
    $region89: #{tpu_custom_call.1} parent=1 // pred_fallthru
      _
    // Predicated region
    $region90: #{tpu_custom_call.1} parent=1 // pred_check
      _
    $region91: #{tpu_custom_call.1} parent=1 // pred_check_branch
      %5106 = sbr.rel (0) target = $region93
    $region92: #{tpu_custom_call.1} parent=1 // pred_region
      %s5108 = ssub.s32 64, 64
      %5109 = vsyncadd [#allocation11], %s5108
      %s5111 = sshll.u32 [#allocation10], 4
      %s5112 = int_to_ptr.vmem [resolvable:$true] %s5111
      %5114 = dma.vmem_to_hbm [thread:$0]  %s5112, 64, %s22, [#allocation11]
    $region93: #{tpu_custom_call.1} parent=1 // pred_fallthru
      _
    // Predicated region
    $region94: #{tpu_custom_call.1} parent=1 // pred_check
      _
    $region95: #{tpu_custom_call.1} parent=1 // pred_check_branch
      %5116 = sbr.rel (0) target = $region97
    $region96: #{tpu_custom_call.1} parent=1 // pred_region
      %s5118 = ssub.s32 64, 64
      %5119 = vsyncadd [#allocation11], %s5118
      %s5121 = sshll.u32 [#allocation12], 4
      %s5122 = int_to_ptr.vmem [resolvable:$true] %s5121
      %5124 = dma.vmem_to_hbm [thread:$0]  %s5122, 64, %s23, [#allocation11]
    $region97: #{tpu_custom_call.1} parent=1 // pred_fallthru
      _
    // Predicated region
    $region98: #{tpu_custom_call.1} parent=1 // pred_check
      _
    $region99: #{tpu_custom_call.1} parent=1 // pred_check_branch
      %5126 = sbr.rel (0) target = $region101
    $region100: #{tpu_custom_call.1} parent=1 // pred_region
      %5127 = dma.done [#allocation6], 512
    $region101: #{tpu_custom_call.1} parent=1 // pred_fallthru
      _
    // Predicated region
    $region102: #{tpu_custom_call.1} parent=1 // pred_check
      _
    $region103: #{tpu_custom_call.1} parent=1 // pred_check_branch
      %5129 = sbr.rel (0) target = $region105
    $region104: #{tpu_custom_call.1} parent=1 // pred_region
      %5130 = dma.done [#allocation8], 64
    $region105: #{tpu_custom_call.1} parent=1 // pred_fallthru
      _
    // Predicated region
    $region106: #{tpu_custom_call.1} parent=1 // pred_check
      _
    $region107: #{tpu_custom_call.1} parent=1 // pred_check_branch
      %5132 = sbr.rel (0) target = $region109
    $region108: #{tpu_custom_call.1} parent=1 // pred_region
      %5133 = dma.done [#allocation8], 64
    $region109: #{tpu_custom_call.1} parent=1 // pred_fallthru
      _
    // Predicated region
    $region110: #{tpu_custom_call.1} parent=1 // pred_check
      _
    $region111: #{tpu_custom_call.1} parent=1 // pred_check_branch
      %5135 = sbr.rel (0) target = $region113
    $region112: #{tpu_custom_call.1} parent=1 // pred_region
      %5136 = dma.done [#allocation11], 64
    $region113: #{tpu_custom_call.1} parent=1 // pred_fallthru
      _
    // Predicated region
    $region114: #{tpu_custom_call.1} parent=1 // pred_check
      _
    $region115: #{tpu_custom_call.1} parent=1 // pred_check_branch
      %5138 = sbr.rel (0) target = $region117
    $region116: #{tpu_custom_call.1} parent=1 // pred_region
      %5139 = dma.done [#allocation11], 64
    $region117: #{tpu_custom_call.1} parent=1 // pred_fallthru
      _
    %5140 = vsyncpa [#allocation6], 1
    %5141 = vsyncpa [#allocation8], 1
    %5142 = vsyncpa [#allocation11], 1

</llo_original>
